<compile_context>
chip_gen: v7x
topology: tpu7x:2x2x1
jax: 0.10.0
libtpu: 0.0.40
codegen_flags: <defaults>
</compile_context>

<pallas_src>
import functools
import inspect

import numpy as np
import jax
import jax.numpy as jnp
from jax.experimental import pallas as pl
from jax.experimental.pallas import tpu as pltpu

MARGIN = 1.0

_MIB = 1024 * 1024
_VMEM_HEADROOM = 16 * _MIB            # leave room for compiler-internal scratch
_DEFAULT_VMEM_CAP = 64 * _MIB         # fallback = smallest generation (v7x)
_TILE_CANDIDATES = (512, 384, 256, 128)   # row-tile candidates (multiples of 128)


# --------------------- hardware / capability helpers ------------------------

@functools.lru_cache(maxsize=None)
def _tpu_vmem_capacity():
    try:
        cap = getattr(pltpu.get_tpu_info(), "vmem_capacity_bytes", None)
        if cap:
            return int(cap)
    except Exception:
        pass
    return _DEFAULT_VMEM_CAP


@functools.lru_cache(maxsize=None)
def _supports_single_buffering():
    try:
        return (hasattr(pl, "Buffered")
                and "pipeline_mode" in inspect.signature(pl.BlockSpec).parameters)
    except Exception:
        return False


def _const_block_spec(block_shape, index_map):
    """Grid-invariant block: single-buffer it (saves VMEM; matters on v7x's 64 MiB)."""
    if _supports_single_buffering():
        return pl.BlockSpec(block_shape, index_map, pipeline_mode=pl.Buffered(1))
    return pl.BlockSpec(block_shape, index_map)


def _round_up(x, m):
    return ((x + m - 1) // m) * m


def _kernel_vmem_estimate(tile, d):
    # 3 row-tile inputs double-buffered + live centered/projected temporaries
    # + resident (d, d) block (accumulator or PCA), counted generously.
    return 4 * (9 * tile * d + 3 * d * d) + 2 * _MIB


def _choose_tile(rows, d):
    """Largest row tile (<=512, multiple of 128) whose footprint fits the VMEM budget."""
    budget = max(_tpu_vmem_capacity() - _VMEM_HEADROOM, 16 * _MIB) * 3 // 4
    tile = _TILE_CANDIDATES[-1]
    for cand in _TILE_CANDIDATES:
        if _kernel_vmem_estimate(cand, d) <= budget:
            tile = cand
            break
    if rows < tile:
        return _round_up(max(rows, 1), 8)
    return tile


def _vmem_limit(est_bytes):
    """Scoped-VMEM request: 2x the estimate, >= the 32 MiB default, never above the
    physical capacity of the current generation (64 MiB on v7x) minus headroom."""
    capacity = _tpu_vmem_capacity()
    cap = min(capacity, max(capacity - _VMEM_HEADROOM, 32 * _MIB))
    return int(min(cap, max(2 * est_bytes, 32 * _MIB)))


def _split_grid(t, tile):
    """Split the row-tile axis over (up to) 2 TensorCores; harmless on 1-TC chips."""
    num_row_tiles = max(1, -(-t // tile))
    num_parallel = 2 if num_row_tiles >= 2 else 1
    tiles_per_core = -(-num_row_tiles // num_parallel)
    return num_row_tiles, num_parallel, tiles_per_core


def _make_row_map(tiles_per_core, num_parallel, num_row_tiles):
    clamp = tiles_per_core * num_parallel > num_row_tiles

    def row_map(c, i):
        g = c * tiles_per_core + i
        if clamp:                       # fully-OOB steps re-read the last tile (skipped in-kernel)
            g = jnp.minimum(g, num_row_tiles - 1)
        return (g, 0)

    return row_map


# ----------------------------- Pallas kernel 1 ------------------------------
# Accumulates  sum_rows (x - mean)^T (x - mean)  over the (conceptually concatenated)
# anchor/positive/negative rows, tiled over the row axis, 2-way core-parallel partials.

def centered_gram(anchor, positive, negative, mean, *, gram_dtype=jnp.float32):
    t, d = anchor.shape
    tile = _choose_tile(t, d)
    num_row_tiles, num_parallel, tiles_per_core = _split_grid(t, tile)
    row_map = _make_row_map(tiles_per_core, num_parallel, num_row_tiles)

    def kernel(a_ref, p_ref, n_ref, mean_ref, o_ref):
        c = pl.program_id(0)
        i = pl.program_id(1)
        g = c * tiles_per_core + i

        @pl.when(i == 0)
        def _init():
            o_ref[...] = jnp.zeros_like(o_ref)

        mean_row = mean_ref[...]                                   # (1, d), resident

        def accumulate(mask_rows):
            xa = a_ref[...] - mean_row
            xp = p_ref[...] - mean_row
            xn = n_ref[...] - mean_row
            if mask_rows:                                          # select (not multiply) keeps NaN garbage out
                row = g * tile + jax.lax.broadcasted_iota(jnp.int32, (tile, 1), 0)
                valid = row < t
                xa = jnp.where(valid, xa, 0.0)
                xp = jnp.where(valid, xp, 0.0)
                xn = jnp.where(valid, xn, 0.0)
            xa = xa.astype(gram_dtype)
            xp = xp.astype(gram_dtype)
            xn = xn.astype(gram_dtype)
            # dim-0 contraction == x^T x; the lhs transpose rides the (free) XLU slot.
            dims = (((0,), (0,)), ((), ()))
            # Accumulate each matmul straight into the resident output (one live (d,d) temp).
            o_ref[...] += jax.lax.dot_general(xa, xa, dims, preferred_element_type=jnp.float32)
            o_ref[...] += jax.lax.dot_general(xp, xp, dims, preferred_element_type=jnp.float32)
            o_ref[...] += jax.lax.dot_general(xn, xn, dims, preferred_element_type=jnp.float32)

        row_start = g * tile
        is_full = row_start + tile <= t                            # steady state: no masking
        is_partial = jnp.logical_and(row_start < t, jnp.logical_not(is_full))

        @pl.when(is_full)
        def _steady():
            accumulate(mask_rows=False)

        @pl.when(is_partial)
        def _tail():
            accumulate(mask_rows=True)
        # fully out-of-range steps (odd tile count split over 2 cores) do no compute.

    est = _kernel_vmem_estimate(tile, d)
    partials = pl.pallas_call(
        kernel,
        out_shape=jax.ShapeDtypeStruct((num_parallel, d, d), jnp.float32),
        grid=(num_parallel, tiles_per_core),
        in_specs=[
            pl.BlockSpec((tile, d), row_map),
            pl.BlockSpec((tile, d), row_map),
            pl.BlockSpec((tile, d), row_map),
            _const_block_spec((1, d), lambda c, i: (0, 0)),        # mean stays resident
        ],
        out_specs=pl.BlockSpec((None, d, d), lambda c, i: (c, 0, 0)),  # per-core resident acc
        compiler_params=pltpu.CompilerParams(
            dimension_semantics=("parallel", "arbitrary"),
            vmem_limit_bytes=_vmem_limit(est)),
    )(anchor, positive, negative, mean)
    return partials.sum(axis=0)                                    # combine (<=2) core partials


# ----------------------------- Pallas kernel 2 ------------------------------
# Projects the triplet differences through the PCA matrix (bf16 MXU inputs, f32 acc) and
# accumulates sum relu(|P(a-p)|^2 - |P(a-n)|^2 + margin) into a per-core scalar.

def triplet_loss_sum(anchor, positive, negative, pca, *, margin=MARGIN,
                     project_dtype=jnp.bfloat16):
    t, d = anchor.shape
    tile = _choose_tile(t, d)
    num_row_tiles, num_parallel, tiles_per_core = _split_grid(t, tile)
    row_map = _make_row_map(tiles_per_core, num_parallel, num_row_tiles)
    pca = pca.astype(project_dtype)   # cast once in glue: halves HBM/VMEM, no per-tile VPU cast

    def kernel(a_ref, p_ref, n_ref, pca_ref, o_ref, acc_ref):
        c = pl.program_id(0)
        i = pl.program_id(1)
        g = c * tiles_per_core + i

        @pl.when(i == 0)
        def _init():
            acc_ref[...] = jnp.zeros_like(acc_ref)

        pca_m = pca_ref[...]                                       # resident, already project_dtype

        def accumulate(mask_rows):
            a = a_ref[...]
            # Projection is linear -> project the differences (2 matmuls instead of 3).
            d_ap = (a - p_ref[...]).astype(project_dtype)
            d_an = (a - n_ref[...]).astype(project_dtype)
            pap = jnp.dot(d_ap, pca_m, preferred_element_type=jnp.float32)
            pan = jnp.dot(d_an, pca_m, preferred_element_type=jnp.float32)
            dist_pos = jnp.sum(pap * pap, axis=1, keepdims=True)   # (tile, 1)
            dist_neg = jnp.sum(pan * pan, axis=1, keepdims=True)
            losses = jnp.maximum(dist_pos - dist_neg + margin, 0.0)  # F.relu
            if mask_rows:                                          # select, NOT multiply-by-mask
                row = g * tile + jax.lax.broadcasted_iota(jnp.int32, (tile, 1), 0)
                losses = jnp.where(row < t, losses, 0.0)
            acc_ref[...] += jnp.sum(losses, axis=0, keepdims=True)

        row_start = g * tile
        is_full = row_start + tile <= t
        is_partial = jnp.logical_and(row_start < t, jnp.logical_not(is_full))

        @pl.when(is_full)
        def _steady():
            accumulate(mask_rows=False)

        @pl.when(is_partial)
        def _tail():
            accumulate(mask_rows=True)

        @pl.when(i == tiles_per_core - 1)                          # one store per core-sweep
        def _finalize():
            o_ref[...] = acc_ref[...]

    est = _kernel_vmem_estimate(tile, d)
    partials = pl.pallas_call(
        kernel,
        out_shape=jax.ShapeDtypeStruct((num_parallel, 1, 1), jnp.float32),
        grid=(num_parallel, tiles_per_core),
        in_specs=[
            pl.BlockSpec((tile, d), row_map),
            pl.BlockSpec((tile, d), row_map),
            pl.BlockSpec((tile, d), row_map),
            _const_block_spec((d, d), lambda c, i: (0, 0)),        # PCA stays resident
        ],
        out_specs=pl.BlockSpec((None, 1, 1), lambda c, i: (c, 0, 0)),
        scratch_shapes=[pltpu.VMEM((1, 1), jnp.float32)],          # running loss sum
        compiler_params=pltpu.CompilerParams(
            dimension_semantics=("parallel", "arbitrary"),
            vmem_limit_bytes=_vmem_limit(est)),
    )(anchor, positive, negative, pca)
    return partials.sum()


# ------------------------------ glue (plain JAX) ----------------------------

def scaled_covariance(anchor, positive, negative, *, gram_dtype=jnp.float32):
    """diag(sqrt(1/diag(cov))) @ cov of the (conceptual) concat([a, p, n]) rows."""
    t, d = anchor.shape
    n_total = 3 * t
    # Two-pass mean (tiny XLA reduce) avoids single-pass E[x^2]-E[x]^2 cancellation.
    # TODO(synk): fold the column-sum into kernel 1 for the small-D / huge-T regime.
    mean = ((anchor.sum(axis=0) + positive.sum(axis=0) + negative.sum(axis=0))
            / n_total).reshape(1, d).astype(jnp.float32)
    gram = centered_gram(anchor, positive, negative, mean, gram_dtype=gram_dtype)
    cov = gram / (n_total - 1)
    # NOTE: like the torch original, a zero-variance feature gives inf here.
    scaling = jax.lax.rsqrt(jnp.diagonal(cov))                     # sqrt(1 / diag(cov))
    return scaling[:, None] * cov                                  # diag(scaling) @ cov


def pca_components_masked(scaled_cov, k):
    """PCA_scale's eigen step + top-k%-of-eigenvalue-mass component selection.

    torch.symeig(..., upper=True) only reads the upper triangle, so we symmetrize from
    the upper triangle before eigh (ascending eigenvalues, same as torch.symeig).
    argmax(rev_cumsum >= total*k) picks the FIRST crossing index -- the same stopping
    rule as torch's accumulate-until-break loop (trace > 0, so it is always reachable).
    The dropped eigenvector COLUMNS are zeroed instead of sliced (data-dependent width);
    zero columns contribute exactly 0 to the squared distances, so the loss is identical."""
    p = scaled_cov.shape[0]
    sym = jnp.triu(scaled_cov) + jnp.triu(scaled_cov, 1).T
    eigenvalues, eigenvectors = jnp.linalg.eigh(sym, symmetrize_input=False)
    total = eigenvalues.sum()
    rev_cumsum = jnp.cumsum(eigenvalues[::-1])
    i = jnp.argmax(rev_cumsum >= total * k)
    index = (p - 1) - i
    mask = (jnp.arange(p) >= index).astype(eigenvectors.dtype)
    return eigenvectors * mask[None, :]


def simple_triplet_selector(labels):
    """Deterministic stand-in for triplet_selector.get_triplets (host-side numpy)."""
    labels = np.asarray(labels)
    n = len(labels)
    trips = []
    for i in range(n):
        pos = [j for j in range(n) if j != i and labels[j] == labels[i]]
        neg = [j for j in range(n) if labels[j] != labels[i]]
        if pos and neg:
            trips.append((i, pos[0], neg[0]))
    return np.asarray(trips, dtype=np.int32)


@functools.partial(jax.jit, static_argnames=("size_average", "project_dtype", "gram_dtype"))
def online_triplet_pca_loss(embeddings, triplets, size_average=True,
                            project_dtype=jnp.bfloat16, gram_dtype=jnp.float32):
    # TODO(synk): for small D / huge T, gather rows inside the kernels via
    # PrefetchScalarGridSpec instead of materializing a/p/n in HBM.
    anchor = jnp.take(embeddings, triplets[:, 0], axis=0)
    positive = jnp.take(embeddings, triplets[:, 1], axis=0)
    negative = jnp.take(embeddings, triplets[:, 2], axis=0)

    scov = scaled_covariance(anchor, positive, negative, gram_dtype=gram_dtype)
    pca = pca_components_masked(scov, k=0.7)                       # eigh in XLA glue
    total = triplet_loss_sum(anchor, positive, negative, pca,      # Pallas kernel 2
                             project_dtype=project_dtype)
    t = anchor.shape[0]
    return total / t if size_average else total


# ------------------------------ main ----------------------------------------

if __name__ == "__main__":
    key = jax.random.PRNGKey(0)
    batch, dim = 16, 128                                           # lane-aligned feature dim
    embeddings = jax.random.normal(key, (batch, dim), dtype=jnp.float32)
    target = np.arange(batch) % 4                                  # 4 classes, 4 samples each

    triplets = jnp.asarray(simple_triplet_selector(target))        # (T, 3) int32

    loss = online_triplet_pca_loss(embeddings, triplets, size_average=True)
    jax.block_until_ready(loss)
    print("KERNEL_OK")
</pallas_src>

<mosaic_0001>
module attributes {stable_mosaic.version = 11 : i64} {
  func.func @kernel(%arg0: i32, %arg1: i32, %arg2: memref<16x128xf32, #tpu.memory_space<vmem>>, %arg3: memref<16x128xf32, #tpu.memory_space<vmem>>, %arg4: memref<16x128xf32, #tpu.memory_space<vmem>>, %arg5: memref<1x128xf32, #tpu.memory_space<vmem>>, %arg6: memref<1x128x128xf32, #tpu.memory_space<vmem>>) attributes {dimension_semantics = [#tpu.dimension_semantics<parallel>, #tpu.dimension_semantics<arbitrary>], iteration_bounds = array<i64: 1, 1>, scalar_prefetch = 0 : i64, scratch_operands = 0 : i64, tpu.core_type = #tpu.core_type<tc>, window_params = [{transform_indices = @transform_0, window_bounds = array<i64: 16, 128>}, {transform_indices = @transform_1, window_bounds = array<i64: 16, 128>}, {transform_indices = @transform_2, window_bounds = array<i64: 16, 128>}, {pipeline_mode = #tpu.pipeline_mode<synchronous>, transform_indices = @transform_3, window_bounds = array<i64: 1, 128>}, {transform_indices = @transform_4, window_bounds = array<i64: 1, 128, 128>}]} {
    %c1_i32 = arith.constant 1 : i32
    %0 = arith.muli %arg0, %c1_i32 : i32
    %1 = arith.addi %0, %arg1 : i32
    %c0_i32 = arith.constant 0 : i32
    %2 = arith.cmpi eq, %arg1, %c0_i32 : i32
    %3 = arith.extui %2 : i1 to i32
    %c0_i32_0 = arith.constant 0 : i32
    %4 = arith.cmpi ne, %3, %c0_i32_0 : i32
    scf.if %4 {
      %cst = arith.constant 0.000000e+00 : f32
      %16 = vector.broadcast %cst : f32 to vector<128x128xf32>
      %c0_7 = arith.constant 0 : index
      %c0_8 = arith.constant 0 : index
      %c0_9 = arith.constant 0 : index
      %17 = vector.load %arg6[%c0_7, %c0_8, %c0_9] : memref<1x128x128xf32, #tpu.memory_space<vmem>>, vector<1x128x128xf32>
      %18 = vector.shape_cast %17 : vector<1x128x128xf32> to vector<128x128xf32>
      %19 = vector.shape_cast %16 : vector<128x128xf32> to vector<1x128x128xf32>
      tpu.vector_store %arg6[%c0_7, %c0_8, %c0_9], %19 {strides = array<i32>} : memref<1x128x128xf32, #tpu.memory_space<vmem>>, vector<1x128x128xf32>,
    } else {
    }
    %c0 = arith.constant 0 : index
    %c0_1 = arith.constant 0 : index
    %5 = vector.load %arg5[%c0, %c0_1] : memref<1x128xf32, #tpu.memory_space<vmem>>, vector<1x128xf32>
    %c16_i32 = arith.constant 16 : i32
    %6 = arith.muli %1, %c16_i32 : i32
    %c16_i32_2 = arith.constant 16 : i32
    %7 = arith.addi %6, %c16_i32_2 : i32
    %c16_i32_3 = arith.constant 16 : i32
    %8 = arith.cmpi sle, %7, %c16_i32_3 : i32
    %c16_i32_4 = arith.constant 16 : i32
    %9 = arith.cmpi slt, %6, %c16_i32_4 : i32
    %true = arith.constant true
    %10 = arith.xori %8, %true : i1
    %11 = arith.andi %9, %10 : i1
    %12 = arith.extui %8 : i1 to i32
    %c0_i32_5 = arith.constant 0 : i32
    %13 = arith.cmpi ne, %12, %c0_i32_5 : i32
    scf.if %13 {
      %c0_7 = arith.constant 0 : index
      %c0_8 = arith.constant 0 : index
      %16 = vector.load %arg2[%c0_7, %c0_8] : memref<16x128xf32, #tpu.memory_space<vmem>>, vector<16x128xf32>
      %17 = vector.broadcast %5 : vector<1x128xf32> to vector<16x128xf32>
      %18 = arith.subf %16, %17 : vector<16x128xf32>
      %c0_9 = arith.constant 0 : index
      %c0_10 = arith.constant 0 : index
      %19 = vector.load %arg3[%c0_9, %c0_10] : memref<16x128xf32, #tpu.memory_space<vmem>>, vector<16x128xf32>
      %20 = vector.broadcast %5 : vector<1x128xf32> to vector<16x128xf32>
      %21 = arith.subf %19, %20 : vector<16x128xf32>
      %c0_11 = arith.constant 0 : index
      %c0_12 = arith.constant 0 : index
      %22 = vector.load %arg4[%c0_11, %c0_12] : memref<16x128xf32, #tpu.memory_space<vmem>>, vector<16x128xf32>
      %23 = vector.broadcast %5 : vector<1x128xf32> to vector<16x128xf32>
      %24 = arith.subf %22, %23 : vector<16x128xf32>
      %c0_13 = arith.constant 0 : index
      %c0_14 = arith.constant 0 : index
      %c0_15 = arith.constant 0 : index
      %25 = vector.load %arg6[%c0_13, %c0_14, %c0_15] : memref<1x128x128xf32, #tpu.memory_space<vmem>>, vector<1x128x128xf32>
      %26 = vector.shape_cast %25 : vector<1x128x128xf32> to vector<128x128xf32>
      %cst = arith.constant dense<0.000000e+00> : vector<128x128xf32>
      %27 = tpu.matmul %18, %18, %cst {dimension_numbers = #tpu.dot_dimension_numbers<[0], [0], [1], [1], [0, 1, 1, 1], [], []>} : vector<16x128xf32>, vector<16x128xf32>, vector<128x128xf32> -> vector<128x128xf32>
      %28 = arith.addf %26, %27 : vector<128x128xf32>
      %c0_16 = arith.constant 0 : index
      %c0_17 = arith.constant 0 : index
      %c0_18 = arith.constant 0 : index
      %29 = vector.load %arg6[%c0_16, %c0_17, %c0_18] : memref<1x128x128xf32, #tpu.memory_space<vmem>>, vector<1x128x128xf32>
      %30 = vector.shape_cast %29 : vector<1x128x128xf32> to vector<128x128xf32>
      %31 = vector.shape_cast %28 : vector<128x128xf32> to vector<1x128x128xf32>
      tpu.vector_store %arg6[%c0_16, %c0_17, %c0_18], %31 {strides = array<i32>} : memref<1x128x128xf32, #tpu.memory_space<vmem>>, vector<1x128x128xf32>,
      %c0_19 = arith.constant 0 : index
      %c0_20 = arith.constant 0 : index
      %c0_21 = arith.constant 0 : index
      %32 = vector.load %arg6[%c0_19, %c0_20, %c0_21] : memref<1x128x128xf32, #tpu.memory_space<vmem>>, vector<1x128x128xf32>
      %33 = vector.shape_cast %32 : vector<1x128x128xf32> to vector<128x128xf32>
      %cst_22 = arith.constant dense<0.000000e+00> : vector<128x128xf32>
      %34 = tpu.matmul %21, %21, %cst_22 {dimension_numbers = #tpu.dot_dimension_numbers<[0], [0], [1], [1], [0, 1, 1, 1], [], []>} : vector<16x128xf32>, vector<16x128xf32>, vector<128x128xf32> -> vector<128x128xf32>
      %35 = arith.addf %33, %34 : vector<128x128xf32>
      %c0_23 = arith.constant 0 : index
      %c0_24 = arith.constant 0 : index
      %c0_25 = arith.constant 0 : index
      %36 = vector.load %arg6[%c0_23, %c0_24, %c0_25] : memref<1x128x128xf32, #tpu.memory_space<vmem>>, vector<1x128x128xf32>
      %37 = vector.shape_cast %36 : vector<1x128x128xf32> to vector<128x128xf32>
      %38 = vector.shape_cast %35 : vector<128x128xf32> to vector<1x128x128xf32>
      tpu.vector_store %arg6[%c0_23, %c0_24, %c0_25], %38 {strides = array<i32>} : memref<1x128x128xf32, #tpu.memory_space<vmem>>, vector<1x128x128xf32>,
      %c0_26 = arith.constant 0 : index
      %c0_27 = arith.constant 0 : index
      %c0_28 = arith.constant 0 : index
      %39 = vector.load %arg6[%c0_26, %c0_27, %c0_28] : memref<1x128x128xf32, #tpu.memory_space<vmem>>, vector<1x128x128xf32>
      %40 = vector.shape_cast %39 : vector<1x128x128xf32> to vector<128x128xf32>
      %cst_29 = arith.constant dense<0.000000e+00> : vector<128x128xf32>
      %41 = tpu.matmul %24, %24, %cst_29 {dimension_numbers = #tpu.dot_dimension_numbers<[0], [0], [1], [1], [0, 1, 1, 1], [], []>} : vector<16x128xf32>, vector<16x128xf32>, vector<128x128xf32> -> vector<128x128xf32>
      %42 = arith.addf %40, %41 : vector<128x128xf32>
      %c0_30 = arith.constant 0 : index
      %c0_31 = arith.constant 0 : index
      %c0_32 = arith.constant 0 : index
      %43 = vector.load %arg6[%c0_30, %c0_31, %c0_32] : memref<1x128x128xf32, #tpu.memory_space<vmem>>, vector<1x128x128xf32>
      %44 = vector.shape_cast %43 : vector<1x128x128xf32> to vector<128x128xf32>
      %45 = vector.shape_cast %42 : vector<128x128xf32> to vector<1x128x128xf32>
      tpu.vector_store %arg6[%c0_30, %c0_31, %c0_32], %45 {strides = array<i32>} : memref<1x128x128xf32, #tpu.memory_space<vmem>>, vector<1x128x128xf32>,
    } else {
    }
    %14 = arith.extui %11 : i1 to i32
    %c0_i32_6 = arith.constant 0 : i32
    %15 = arith.cmpi ne, %14, %c0_i32_6 : i32
    scf.if %15 {
      %c0_7 = arith.constant 0 : index
      %c0_8 = arith.constant 0 : index
      %16 = vector.load %arg2[%c0_7, %c0_8] : memref<16x128xf32, #tpu.memory_space<vmem>>, vector<16x128xf32>
      %17 = vector.broadcast %5 : vector<1x128xf32> to vector<16x128xf32>
      %18 = arith.subf %16, %17 : vector<16x128xf32>
      %c0_9 = arith.constant 0 : index
      %c0_10 = arith.constant 0 : index
      %19 = vector.load %arg3[%c0_9, %c0_10] : memref<16x128xf32, #tpu.memory_space<vmem>>, vector<16x128xf32>
      %20 = vector.broadcast %5 : vector<1x128xf32> to vector<16x128xf32>
      %21 = arith.subf %19, %20 : vector<16x128xf32>
      %c0_11 = arith.constant 0 : index
      %c0_12 = arith.constant 0 : index
      %22 = vector.load %arg4[%c0_11, %c0_12] : memref<16x128xf32, #tpu.memory_space<vmem>>, vector<16x128xf32>
      %23 = vector.broadcast %5 : vector<1x128xf32> to vector<16x128xf32>
      %24 = arith.subf %22, %23 : vector<16x128xf32>
      %c16_i32_13 = arith.constant 16 : i32
      %25 = arith.muli %1, %c16_i32_13 : i32
      %26 = tpu.iota {dimensions = array<i32: 0>} : vector<16x1xi32>
      %27 = vector.broadcast %25 : i32 to vector<16x1xi32>
      %28 = arith.addi %27, %26 : vector<16x1xi32>
      %c16_i32_14 = arith.constant 16 : i32
      %29 = vector.broadcast %c16_i32_14 : i32 to vector<16x1xi32>
      %30 = arith.cmpi slt, %28, %29 : vector<16x1xi32>
      %cst = arith.constant 0.000000e+00 : f32
      %31 = vector.shape_cast %30 : vector<16x1xi1> to vector<16x1xi1>
      %32 = vector.broadcast %31 : vector<16x1xi1> to vector<16x128xi1>
      %33 = vector.broadcast %cst : f32 to vector<16x128xf32>
      %34 = arith.select %32, %18, %33 : vector<16x128xi1>, vector<16x128xf32>
      %cst_15 = arith.constant 0.000000e+00 : f32
      %35 = vector.shape_cast %30 : vector<16x1xi1> to vector<16x1xi1>
      %36 = vector.broadcast %35 : vector<16x1xi1> to vector<16x128xi1>
      %37 = vector.broadcast %cst_15 : f32 to vector<16x128xf32>
      %38 = arith.select %36, %21, %37 : vector<16x128xi1>, vector<16x128xf32>
      %cst_16 = arith.constant 0.000000e+00 : f32
      %39 = vector.shape_cast %30 : vector<16x1xi1> to vector<16x1xi1>
      %40 = vector.broadcast %39 : vector<16x1xi1> to vector<16x128xi1>
      %41 = vector.broadcast %cst_16 : f32 to vector<16x128xf32>
      %42 = arith.select %40, %24, %41 : vector<16x128xi1>, vector<16x128xf32>
      %c0_17 = arith.constant 0 : index
      %c0_18 = arith.constant 0 : index
      %c0_19 = arith.constant 0 : index
      %43 = vector.load %arg6[%c0_17, %c0_18, %c0_19] : memref<1x128x128xf32, #tpu.memory_space<vmem>>, vector<1x128x128xf32>
      %44 = vector.shape_cast %43 : vector<1x128x128xf32> to vector<128x128xf32>
      %cst_20 = arith.constant dense<0.000000e+00> : vector<128x128xf32>
      %45 = tpu.matmul %34, %34, %cst_20 {dimension_numbers = #tpu.dot_dimension_numbers<[0], [0], [1], [1], [0, 1, 1, 1], [], []>} : vector<16x128xf32>, vector<16x128xf32>, vector<128x128xf32> -> vector<128x128xf32>
      %46 = arith.addf %44, %45 : vector<128x128xf32>
      %c0_21 = arith.constant 0 : index
      %c0_22 = arith.constant 0 : index
      %c0_23 = arith.constant 0 : index
      %47 = vector.load %arg6[%c0_21, %c0_22, %c0_23] : memref<1x128x128xf32, #tpu.memory_space<vmem>>, vector<1x128x128xf32>
      %48 = vector.shape_cast %47 : vector<1x128x128xf32> to vector<128x128xf32>
      %49 = vector.shape_cast %46 : vector<128x128xf32> to vector<1x128x128xf32>
      tpu.vector_store %arg6[%c0_21, %c0_22, %c0_23], %49 {strides = array<i32>} : memref<1x128x128xf32, #tpu.memory_space<vmem>>, vector<1x128x128xf32>,
      %c0_24 = arith.constant 0 : index
      %c0_25 = arith.constant 0 : index
      %c0_26 = arith.constant 0 : index
      %50 = vector.load %arg6[%c0_24, %c0_25, %c0_26] : memref<1x128x128xf32, #tpu.memory_space<vmem>>, vector<1x128x128xf32>
      %51 = vector.shape_cast %50 : vector<1x128x128xf32> to vector<128x128xf32>
      %cst_27 = arith.constant dense<0.000000e+00> : vector<128x128xf32>
      %52 = tpu.matmul %38, %38, %cst_27 {dimension_numbers = #tpu.dot_dimension_numbers<[0], [0], [1], [1], [0, 1, 1, 1], [], []>} : vector<16x128xf32>, vector<16x128xf32>, vector<128x128xf32> -> vector<128x128xf32>
      %53 = arith.addf %51, %52 : vector<128x128xf32>
      %c0_28 = arith.constant 0 : index
      %c0_29 = arith.constant 0 : index
      %c0_30 = arith.constant 0 : index
      %54 = vector.load %arg6[%c0_28, %c0_29, %c0_30] : memref<1x128x128xf32, #tpu.memory_space<vmem>>, vector<1x128x128xf32>
      %55 = vector.shape_cast %54 : vector<1x128x128xf32> to vector<128x128xf32>
      %56 = vector.shape_cast %53 : vector<128x128xf32> to vector<1x128x128xf32>
      tpu.vector_store %arg6[%c0_28, %c0_29, %c0_30], %56 {strides = array<i32>} : memref<1x128x128xf32, #tpu.memory_space<vmem>>, vector<1x128x128xf32>,
      %c0_31 = arith.constant 0 : index
      %c0_32 = arith.constant 0 : index
      %c0_33 = arith.constant 0 : index
      %57 = vector.load %arg6[%c0_31, %c0_32, %c0_33] : memref<1x128x128xf32, #tpu.memory_space<vmem>>, vector<1x128x128xf32>
      %58 = vector.shape_cast %57 : vector<1x128x128xf32> to vector<128x128xf32>
      %cst_34 = arith.constant dense<0.000000e+00> : vector<128x128xf32>
      %59 = tpu.matmul %42, %42, %cst_34 {dimension_numbers = #tpu.dot_dimension_numbers<[0], [0], [1], [1], [0, 1, 1, 1], [], []>} : vector<16x128xf32>, vector<16x128xf32>, vector<128x128xf32> -> vector<128x128xf32>
      %60 = arith.addf %58, %59 : vector<128x128xf32>
      %c0_35 = arith.constant 0 : index
      %c0_36 = arith.constant 0 : index
      %c0_37 = arith.constant 0 : index
      %61 = vector.load %arg6[%c0_35, %c0_36, %c0_37] : memref<1x128x128xf32, #tpu.memory_space<vmem>>, vector<1x128x128xf32>
      %62 = vector.shape_cast %61 : vector<1x128x128xf32> to vector<128x128xf32>
      %63 = vector.shape_cast %60 : vector<128x128xf32> to vector<1x128x128xf32>
      tpu.vector_store %arg6[%c0_35, %c0_36, %c0_37], %63 {strides = array<i32>} : memref<1x128x128xf32, #tpu.memory_space<vmem>>, vector<1x128x128xf32>,
    } else {
    }
    return
  }
  func.func @transform_0(%arg0: i32, %arg1: i32) -> (i32, i32) {
    %c1_i32 = arith.constant 1 : i32
    %0 = arith.muli %arg0, %c1_i32 : i32
    %1 = arith.addi %0, %arg1 : i32
    %c0_i32 = arith.constant 0 : i32
    %c0_i32_0 = arith.constant 0 : i32
    return %1, %c0_i32 : i32, i32
  }
  func.func @transform_1(%arg0: i32, %arg1: i32) -> (i32, i32) {
    %c1_i32 = arith.constant 1 : i32
    %0 = arith.muli %arg0, %c1_i32 : i32
    %1 = arith.addi %0, %arg1 : i32
    %c0_i32 = arith.constant 0 : i32
    %c0_i32_0 = arith.constant 0 : i32
    return %1, %c0_i32 : i32, i32
  }
  func.func @transform_2(%arg0: i32, %arg1: i32) -> (i32, i32) {
    %c1_i32 = arith.constant 1 : i32
    %0 = arith.muli %arg0, %c1_i32 : i32
    %1 = arith.addi %0, %arg1 : i32
    %c0_i32 = arith.constant 0 : i32
    %c0_i32_0 = arith.constant 0 : i32
    return %1, %c0_i32 : i32, i32
  }
  func.func @transform_3(%arg0: i32, %arg1: i32) -> (i32, i32) {
    %c0_i32 = arith.constant 0 : i32
    %c0_i32_0 = arith.constant 0 : i32
    %c0_i32_1 = arith.constant 0 : i32
    return %c0_i32, %c0_i32_0 : i32, i32
  }
  func.func @transform_4(%arg0: i32, %arg1: i32) -> (i32, i32, i32) {
    %c0_i32 = arith.constant 0 : i32
    %c0_i32_0 = arith.constant 0 : i32
    %c0_i32_1 = arith.constant 0 : i32
    return %arg0, %c0_i32, %c0_i32_0 : i32, i32, i32
  }
}

module attributes {stable_mosaic.version = 11 : i64} {
  func.func @kernel(%arg0: i32, %arg1: i32, %arg2: memref<16x128xf32, #tpu.memory_space<vmem>>, %arg3: memref<16x128xf32, #tpu.memory_space<vmem>>, %arg4: memref<16x128xf32, #tpu.memory_space<vmem>>, %arg5: memref<128x128xbf16, #tpu.memory_space<vmem>>, %arg6: memref<1x1x1xf32, #tpu.memory_space<vmem>>, %arg7: memref<1x1xf32, #tpu.memory_space<vmem>>) attributes {dimension_semantics = [#tpu.dimension_semantics<parallel>, #tpu.dimension_semantics<arbitrary>], iteration_bounds = array<i64: 1, 1>, scalar_prefetch = 0 : i64, scratch_operands = 1 : i64, tpu.core_type = #tpu.core_type<tc>, window_params = [{transform_indices = @transform_0, window_bounds = array<i64: 16, 128>}, {transform_indices = @transform_1, window_bounds = array<i64: 16, 128>}, {transform_indices = @transform_2, window_bounds = array<i64: 16, 128>}, {pipeline_mode = #tpu.pipeline_mode<synchronous>, transform_indices = @transform_3, window_bounds = array<i64: 128, 128>}, {transform_indices = @transform_4, window_bounds = array<i64: 1, 1, 1>}]} {
    %c1_i32 = arith.constant 1 : i32
    %0 = arith.muli %arg0, %c1_i32 : i32
    %1 = arith.addi %0, %arg1 : i32
    %c0_i32 = arith.constant 0 : i32
    %2 = arith.cmpi eq, %arg1, %c0_i32 : i32
    %3 = arith.extui %2 : i1 to i32
    %c0_i32_0 = arith.constant 0 : i32
    %4 = arith.cmpi ne, %3, %c0_i32_0 : i32
    scf.if %4 {
      %cst = arith.constant 0.000000e+00 : f32
      %19 = vector.broadcast %cst : f32 to vector<1x1xf32>
      %c0_9 = arith.constant 0 : index
      %c0_10 = arith.constant 0 : index
      %20 = vector.load %arg7[%c0_9, %c0_10] : memref<1x1xf32, #tpu.memory_space<vmem>>, vector<1x1xf32>
      tpu.vector_store %arg7[%c0_9, %c0_10], %19 {strides = array<i32>} : memref<1x1xf32, #tpu.memory_space<vmem>>, vector<1x1xf32>,
    } else {
    }
    %c0 = arith.constant 0 : index
    %c0_1 = arith.constant 0 : index
    %5 = vector.load %arg5[%c0, %c0_1] : memref<128x128xbf16, #tpu.memory_space<vmem>>, vector<128x128xbf16>
    %c16_i32 = arith.constant 16 : i32
    %6 = arith.muli %1, %c16_i32 : i32
    %c16_i32_2 = arith.constant 16 : i32
    %7 = arith.addi %6, %c16_i32_2 : i32
    %c16_i32_3 = arith.constant 16 : i32
    %8 = arith.cmpi sle, %7, %c16_i32_3 : i32
    %c16_i32_4 = arith.constant 16 : i32
    %9 = arith.cmpi slt, %6, %c16_i32_4 : i32
    %true = arith.constant true
    %10 = arith.xori %8, %true : i1
    %11 = arith.andi %9, %10 : i1
    %12 = arith.extui %8 : i1 to i32
    %c0_i32_5 = arith.constant 0 : i32
    %13 = arith.cmpi ne, %12, %c0_i32_5 : i32
    scf.if %13 {
      %c0_9 = arith.constant 0 : index
      %c0_10 = arith.constant 0 : index
      %19 = vector.load %arg2[%c0_9, %c0_10] : memref<16x128xf32, #tpu.memory_space<vmem>>, vector<16x128xf32>
      %c0_11 = arith.constant 0 : index
      %c0_12 = arith.constant 0 : index
      %20 = vector.load %arg3[%c0_11, %c0_12] : memref<16x128xf32, #tpu.memory_space<vmem>>, vector<16x128xf32>
      %21 = arith.subf %19, %20 : vector<16x128xf32>
      %22 = arith.truncf %21 : vector<16x128xf32> to vector<16x128xbf16>
      %c0_13 = arith.constant 0 : index
      %c0_14 = arith.constant 0 : index
      %23 = vector.load %arg4[%c0_13, %c0_14] : memref<16x128xf32, #tpu.memory_space<vmem>>, vector<16x128xf32>
      %24 = arith.subf %19, %23 : vector<16x128xf32>
      %25 = arith.truncf %24 : vector<16x128xf32> to vector<16x128xbf16>
      %cst = arith.constant dense<0.000000e+00> : vector<16x128xf32>
      %26 = tpu.matmul %22, %5, %cst {dimension_numbers = #tpu.dot_dimension_numbers<[1], [0], [0], [1], [0, 0, 1, 1], [], []>} : vector<16x128xbf16>, vector<128x128xbf16>, vector<16x128xf32> -> vector<16x128xf32>
      %cst_15 = arith.constant dense<0.000000e+00> : vector<16x128xf32>
      %27 = tpu.matmul %25, %5, %cst_15 {dimension_numbers = #tpu.dot_dimension_numbers<[1], [0], [0], [1], [0, 0, 1, 1], [], []>} : vector<16x128xbf16>, vector<128x128xbf16>, vector<16x128xf32> -> vector<16x128xf32>
      %28 = arith.mulf %26, %26 : vector<16x128xf32>
      %cst_16 = arith.constant dense<0.000000e+00> : vector<16xf32>
      %29 = vector.multi_reduction <add>, %28, %cst_16 [1] : vector<16x128xf32> to vector<16xf32>
      %30 = vector.shape_cast %29 : vector<16xf32> to vector<16x1xf32>
      %31 = arith.mulf %27, %27 : vector<16x128xf32>
      %cst_17 = arith.constant dense<0.000000e+00> : vector<16xf32>
      %32 = vector.multi_reduction <add>, %31, %cst_17 [1] : vector<16x128xf32> to vector<16xf32>
      %33 = vector.shape_cast %32 : vector<16xf32> to vector<16x1xf32>
      %34 = arith.subf %30, %33 : vector<16x1xf32>
      %cst_18 = arith.constant 1.000000e+00 : f32
      %35 = vector.broadcast %cst_18 : f32 to vector<16x1xf32>
      %36 = arith.addf %34, %35 : vector<16x1xf32>
      %cst_19 = arith.constant 0.000000e+00 : f32
      %37 = vector.broadcast %cst_19 : f32 to vector<16x1xf32>
      %38 = arith.maximumf %36, %37 : vector<16x1xf32>
      %c0_20 = arith.constant 0 : index
      %c0_21 = arith.constant 0 : index
      %39 = vector.load %arg7[%c0_20, %c0_21] : memref<1x1xf32, #tpu.memory_space<vmem>>, vector<1x1xf32>
      %cst_22 = arith.constant dense<0.000000e+00> : vector<1xf32>
      %40 = vector.multi_reduction <add>, %38, %cst_22 [0] : vector<16x1xf32> to vector<1xf32>
      %41 = vector.shape_cast %40 : vector<1xf32> to vector<1x1xf32>
      %42 = arith.addf %39, %41 : vector<1x1xf32>
      %c0_23 = arith.constant 0 : index
      %c0_24 = arith.constant 0 : index
      %43 = vector.load %arg7[%c0_23, %c0_24] : memref<1x1xf32, #tpu.memory_space<vmem>>, vector<1x1xf32>
      tpu.vector_store %arg7[%c0_23, %c0_24], %42 {strides = array<i32>} : memref<1x1xf32, #tpu.memory_space<vmem>>, vector<1x1xf32>,
    } else {
    }
    %14 = arith.extui %11 : i1 to i32
    %c0_i32_6 = arith.constant 0 : i32
    %15 = arith.cmpi ne, %14, %c0_i32_6 : i32
    scf.if %15 {
      %c0_9 = arith.constant 0 : index
      %c0_10 = arith.constant 0 : index
      %19 = vector.load %arg2[%c0_9, %c0_10] : memref<16x128xf32, #tpu.memory_space<vmem>>, vector<16x128xf32>
      %c0_11 = arith.constant 0 : index
      %c0_12 = arith.constant 0 : index
      %20 = vector.load %arg3[%c0_11, %c0_12] : memref<16x128xf32, #tpu.memory_space<vmem>>, vector<16x128xf32>
      %21 = arith.subf %19, %20 : vector<16x128xf32>
      %22 = arith.truncf %21 : vector<16x128xf32> to vector<16x128xbf16>
      %c0_13 = arith.constant 0 : index
      %c0_14 = arith.constant 0 : index
      %23 = vector.load %arg4[%c0_13, %c0_14] : memref<16x128xf32, #tpu.memory_space<vmem>>, vector<16x128xf32>
      %24 = arith.subf %19, %23 : vector<16x128xf32>
      %25 = arith.truncf %24 : vector<16x128xf32> to vector<16x128xbf16>
      %cst = arith.constant dense<0.000000e+00> : vector<16x128xf32>
      %26 = tpu.matmul %22, %5, %cst {dimension_numbers = #tpu.dot_dimension_numbers<[1], [0], [0], [1], [0, 0, 1, 1], [], []>} : vector<16x128xbf16>, vector<128x128xbf16>, vector<16x128xf32> -> vector<16x128xf32>
      %cst_15 = arith.constant dense<0.000000e+00> : vector<16x128xf32>
      %27 = tpu.matmul %25, %5, %cst_15 {dimension_numbers = #tpu.dot_dimension_numbers<[1], [0], [0], [1], [0, 0, 1, 1], [], []>} : vector<16x128xbf16>, vector<128x128xbf16>, vector<16x128xf32> -> vector<16x128xf32>
      %28 = arith.mulf %26, %26 : vector<16x128xf32>
      %cst_16 = arith.constant dense<0.000000e+00> : vector<16xf32>
      %29 = vector.multi_reduction <add>, %28, %cst_16 [1] : vector<16x128xf32> to vector<16xf32>
      %30 = vector.shape_cast %29 : vector<16xf32> to vector<16x1xf32>
      %31 = arith.mulf %27, %27 : vector<16x128xf32>
      %cst_17 = arith.constant dense<0.000000e+00> : vector<16xf32>
      %32 = vector.multi_reduction <add>, %31, %cst_17 [1] : vector<16x128xf32> to vector<16xf32>
      %33 = vector.shape_cast %32 : vector<16xf32> to vector<16x1xf32>
      %34 = arith.subf %30, %33 : vector<16x1xf32>
      %cst_18 = arith.constant 1.000000e+00 : f32
      %35 = vector.broadcast %cst_18 : f32 to vector<16x1xf32>
      %36 = arith.addf %34, %35 : vector<16x1xf32>
      %cst_19 = arith.constant 0.000000e+00 : f32
      %37 = vector.broadcast %cst_19 : f32 to vector<16x1xf32>
      %38 = arith.maximumf %36, %37 : vector<16x1xf32>
      %c16_i32_20 = arith.constant 16 : i32
      %39 = arith.muli %1, %c16_i32_20 : i32
      %40 = tpu.iota {dimensions = array<i32: 0>} : vector<16x1xi32>
      %41 = vector.broadcast %39 : i32 to vector<16x1xi32>
      %42 = arith.addi %41, %40 : vector<16x1xi32>
      %c16_i32_21 = arith.constant 16 : i32
      %43 = vector.broadcast %c16_i32_21 : i32 to vector<16x1xi32>
      %44 = arith.cmpi slt, %42, %43 : vector<16x1xi32>
      %cst_22 = arith.constant 0.000000e+00 : f32
      %45 = vector.broadcast %cst_22 : f32 to vector<16x1xf32>
      %46 = arith.select %44, %38, %45 : vector<16x1xi1>, vector<16x1xf32>
      %c0_23 = arith.constant 0 : index
      %c0_24 = arith.constant 0 : index
      %47 = vector.load %arg7[%c0_23, %c0_24] : memref<1x1xf32, #tpu.memory_space<vmem>>, vector<1x1xf32>
      %cst_25 = arith.constant dense<0.000000e+00> : vector<1xf32>
      %48 = vector.multi_reduction <add>, %46, %cst_25 [0] : vector<16x1xf32> to vector<1xf32>
      %49 = vector.shape_cast %48 : vector<1xf32> to vector<1x1xf32>
      %50 = arith.addf %47, %49 : vector<1x1xf32>
      %c0_26 = arith.constant 0 : index
      %c0_27 = arith.constant 0 : index
      %51 = vector.load %arg7[%c0_26, %c0_27] : memref<1x1xf32, #tpu.memory_space<vmem>>, vector<1x1xf32>
      tpu.vector_store %arg7[%c0_26, %c0_27], %50 {strides = array<i32>} : memref<1x1xf32, #tpu.memory_space<vmem>>, vector<1x1xf32>,
    } else {
    }
    %c0_i32_7 = arith.constant 0 : i32
    %16 = arith.cmpi eq, %arg1, %c0_i32_7 : i32
    %17 = arith.extui %16 : i1 to i32
    %c0_i32_8 = arith.constant 0 : i32
    %18 = arith.cmpi ne, %17, %c0_i32_8 : i32
    scf.if %18 {
      %c0_9 = arith.constant 0 : index
      %c0_10 = arith.constant 0 : index
      %19 = vector.load %arg7[%c0_9, %c0_10] : memref<1x1xf32, #tpu.memory_space<vmem>>, vector<1x1xf32>
      %c0_11 = arith.constant 0 : index
      %c0_12 = arith.constant 0 : index
      %c0_13 = arith.constant 0 : index
      %20 = vector.load %arg6[%c0_11, %c0_12, %c0_13] : memref<1x1x1xf32, #tpu.memory_space<vmem>>, vector<1x1x1xf32>
      %21 = vector.shape_cast %20 : vector<1x1x1xf32> to vector<1x1xf32>
      %22 = vector.shape_cast %19 : vector<1x1xf32> to vector<1x1x1xf32>
      tpu.vector_store %arg6[%c0_11, %c0_12, %c0_13], %22 {strides = array<i32>} : memref<1x1x1xf32, #tpu.memory_space<vmem>>, vector<1x1x1xf32>,
    } else {
    }
    return
  }
  func.func @transform_0(%arg0: i32, %arg1: i32) -> (i32, i32) {
    %c1_i32 = arith.constant 1 : i32
    %0 = arith.muli %arg0, %c1_i32 : i32
    %1 = arith.addi %0, %arg1 : i32
    %c0_i32 = arith.constant 0 : i32
    %c0_i32_0 = arith.constant 0 : i32
    return %1, %c0_i32 : i32, i32
  }
  func.func @transform_1(%arg0: i32, %arg1: i32) -> (i32, i32) {
    %c1_i32 = arith.constant 1 : i32
    %0 = arith.muli %arg0, %c1_i32 : i32
    %1 = arith.addi %0, %arg1 : i32
    %c0_i32 = arith.constant 0 : i32
    %c0_i32_0 = arith.constant 0 : i32
    return %1, %c0_i32 : i32, i32
  }
  func.func @transform_2(%arg0: i32, %arg1: i32) -> (i32, i32) {
    %c1_i32 = arith.constant 1 : i32
    %0 = arith.muli %arg0, %c1_i32 : i32
    %1 = arith.addi %0, %arg1 : i32
    %c0_i32 = arith.constant 0 : i32
    %c0_i32_0 = arith.constant 0 : i32
    return %1, %c0_i32 : i32, i32
  }
  func.func @transform_3(%arg0: i32, %arg1: i32) -> (i32, i32) {
    %c0_i32 = arith.constant 0 : i32
    %c0_i32_0 = arith.constant 0 : i32
    %c0_i32_1 = arith.constant 0 : i32
    return %c0_i32, %c0_i32_0 : i32, i32
  }
  func.func @transform_4(%arg0: i32, %arg1: i32) -> (i32, i32, i32) {
    %c0_i32 = arith.constant 0 : i32
    %c0_i32_0 = arith.constant 0 : i32
    %c0_i32_1 = arith.constant 0 : i32
    return %arg0, %c0_i32, %c0_i32_0 : i32, i32, i32
  }
}

</mosaic_0001>

<llo_original>
// kernel: custom-call.2
$region0: #{custom-call.2}
  %s0 = inlined_call_operand.vmem [shape: f32[64,64], index: 0, kind: input, shape index: {}]
  %s1 = inlined_call_operand.vmem [shape: f32[64,64], index: 1, kind: input, shape index: {}]
  %s2 = inlined_call_operand.vmem [shape: f32[64,64], index: 2, kind: input, shape index: {}]
  %s3 = inlined_call_operand.vmem [shape: f32[64,64], index: 3, kind: input, shape index: {}]
  %s4 = inlined_call_operand.vmem [shape: f32[64], index: 4, kind: output, shape index: {0}]
  %s5 = inlined_call_operand.vmem [shape: f32[64], index: 5, kind: output, shape index: {1}]
  %s6 = inlined_call_operand.vmem [shape: f32[64,64], index: 6, kind: output, shape index: {2}]
  %s7 = inlined_call_operand.vmem [shape: f32[64,64], index: 7, kind: output, shape index: {3}]
  %s8 = inlined_call_operand.vmem [shape: f32[64,64], index: 8, kind: output, shape index: {4}]
  %s9 = inlined_call_operand.vmem [shape: f32[64,64], index: 9, kind: output, shape index: {5}]
  %10 = xla_tuple %s4, %s5, %s6, %s7, %s8, %s9
  $region1: #{custom-call.2} parent=0
    #allocation0 [shape = 'u8[32768]{0}', space=vmem, size = 0x8000, scoped, tag = 'operand span for operand 0']
    #allocation1 [shape = 'u8[32768]{0}', space=vmem, size = 0x8000, scoped, tag = 'operand span for operand 1']
    #allocation2 [shape = 'u8[32768]{0}', space=vmem, size = 0x8000, scoped, tag = 'operand span for operand 2']
    #allocation3 [shape = 'u8[32768]{0}', space=vmem, size = 0x8000, scoped, tag = 'operand span for operand 3']
    #allocation4 [shape = 'u8[4096]{0}', space=vmem, size = 0x1000, scoped, tag = 'operand span for operand 4']
    #allocation5 [shape = 'u8[512]{0}', space=vmem, size = 0x400, scoped, tag = 'packed  for operand 4']
    #allocation6 [shape = 'u8[4096]{0}', space=vmem, size = 0x1000, scoped, tag = 'operand span for operand 5']
    #allocation7 [shape = 'u8[512]{0}', space=vmem, size = 0x400, scoped, tag = 'packed  for operand 5']
    #allocation8 [shape = 'u8[32768]{0}', space=vmem, size = 0x8000, scoped, tag = 'operand span for operand 6']
    #allocation9 [shape = 'u8[32768]{0}', space=vmem, size = 0x8000, scoped, tag = 'operand span for operand 7']
    #allocation10 [shape = 'u8[32768]{0}', space=vmem, size = 0x8000, scoped, tag = 'operand span for operand 8']
    #allocation11 [shape = 'u8[32768]{0}', space=vmem, size = 0x8000, scoped, tag = 'operand span for operand 9']
    #allocation12 [shape = 'f32[64,64]{1,0}', space=vmem, size = 0x8000, scoped, tag = 'a top-left matrix']
    #allocation13 [shape = 'f32[64,64]{1,0}', space=vmem, size = 0x8000, scoped, tag = 'a top-right matrix']
    #allocation14 [shape = 'f32[64,64]{1,0}', space=vmem, size = 0x8000, scoped, tag = 'a bottom-left matrix']
    #allocation15 [shape = 'f32[64,64]{1,0}', space=vmem, size = 0x8000, scoped, tag = 'a bottom-right matrix']
    %p12 = scmp.gt.s32.totalorder 64, 0
    // Predicated region
    $region2: #{custom-call.2} parent=1 // pred_check
      %p13 = pneg %p12
    $region3: #{custom-call.2} parent=1 // pred_check_branch
      %15 = sbr.rel (%p13) target = $region5
    $region4: #{custom-call.2} parent=1 // pred_region
      %s16 = sshra.s32 64, 3
      %p17 = scmp.gt.s32.totalorder %s16, 0
      // Predicated region
      $region6: #{custom-call.2} parent=4 // pred_check
        %p18 = pneg %p17
      $region7: #{custom-call.2} parent=4 // pred_check_branch
        %20 = sbr.rel (%p18) target = $region9
      $region8: #{custom-call.2} parent=4 // pred_region
        %s21 = ssub.s32 %s16, 1
        %s22 = smul.u32 %s21, 128
        %s23 = sshra.s32 %s22, 4
        %s24 = scalar_lea.vmem %s0, %s23
        %v25 = vld [vmem:[%s0] sm:$0xff]
        // While loop
        $region10: #{custom-call.2} parent=8 // loop_pre_header
          _
        $region11: #{custom-call.2} parent=8 // loop_header
          %s26 = sphi %s0, %s48
          %s27 = sphi [#allocation0], %s49
          %v28 = vphi %v25, %v50
          %s29 = ssub.s32 %s24, 64
          %p30 = scmp.gt.s32.totalorder %s26, %s29
        $region12: #{custom-call.2} parent=8 // loop_header_branch
          %32 = sbr.rel (%p30) target = $region16
        $region13: #{custom-call.2} parent=8 // loop_body
          %33 = vst [vmem:[%s27] sm:$0xff] %v28
          %v34 = vld [vmem:[%s26 + $0x8] sm:$0xff]
          %35 = vst [vmem:[%s27 + $0x8] sm:$0xff] %v34
          %v36 = vld [vmem:[%s26 + $0x10] sm:$0xff]
          %37 = vst [vmem:[%s27 + $0x10] sm:$0xff] %v36
          %v38 = vld [vmem:[%s26 + $0x18] sm:$0xff]
          %39 = vst [vmem:[%s27 + $0x18] sm:$0xff] %v38
          %v40 = vld [vmem:[%s26 + $0x20] sm:$0xff]
          %41 = vst [vmem:[%s27 + $0x20] sm:$0xff] %v40
          %v42 = vld [vmem:[%s26 + $0x28] sm:$0xff]
          %43 = vst [vmem:[%s27 + $0x28] sm:$0xff] %v42
          %v44 = vld [vmem:[%s26 + $0x30] sm:$0xff]
          %45 = vst [vmem:[%s27 + $0x30] sm:$0xff] %v44
          %v46 = vld [vmem:[%s26 + $0x38] sm:$0xff]
          %47 = vst [vmem:[%s27 + $0x38] sm:$0xff] %v46
        $region14: #{custom-call.2} parent=8 // loop_footer
          %s48 = scalar_lea.vmem %s26, 64
          %s49 = scalar_lea.vmem %s27, 64
          %v50 = vld [vmem:[%s26 + $0x40] sm:$0xff]
        $region15: #{custom-call.2} parent=8 // loop_footer_branch
          %51 = sbr.rel target = $region11
        $region16: #{custom-call.2} parent=8 // loop_exit
          _
        // While loop
        $region17: #{custom-call.2} parent=8 // loop_pre_header
          _
        $region18: #{custom-call.2} parent=8 // loop_header
          %s52 = sphi %s26, %s60
          %s53 = sphi %s27, %s61
          %v54 = vphi %v28, %v54
          %p55 = scmp.gt.s32.totalorder %s52, %s24
        $region19: #{custom-call.2} parent=8 // loop_header_branch
          %57 = sbr.rel (%p55) target = $region23
        $region20: #{custom-call.2} parent=8 // loop_body
          %v58 = vld [vmem:[%s52] sm:$0xff]
          %59 = vst [vmem:[%s53] sm:$0xff] %v58
        $region21: #{custom-call.2} parent=8 // loop_footer
          %s60 = scalar_lea.vmem %s52, 8
          %s61 = scalar_lea.vmem %s53, 8
        $region22: #{custom-call.2} parent=8 // loop_footer_branch
          %62 = sbr.rel target = $region18
        $region23: #{custom-call.2} parent=8 // loop_exit
          _
      $region9: #{custom-call.2} parent=4 // pred_fallthru
        _
      %s63 = sand.u32 64, 7
      %s64 = sshllo.u32 0, %s63
      %s65 = smul.u32 %s16, 128
      %s66 = sshra.s32 %s65, 4
      %s67 = scalar_lea.vmem [#allocation0], %s66
      %s68 = smul.u32 %s16, 128
      %s69 = sshra.s32 %s68, 4
      %s70 = scalar_lea.vmem %s0, %s69
      %v71 = vld [vmem:[%s70] sm:%s64]
      %72 = vst [vmem:[%s67] sm:%s64] %v71
    $region5: #{custom-call.2} parent=1 // pred_fallthru
      _
    %p74 = scmp.gt.s32.totalorder 64, 0
    // Predicated region
    $region24: #{custom-call.2} parent=1 // pred_check
      %p75 = pneg %p74
    $region25: #{custom-call.2} parent=1 // pred_check_branch
      %77 = sbr.rel (%p75) target = $region27
    $region26: #{custom-call.2} parent=1 // pred_region
      %s78 = sshra.s32 64, 3
      %p79 = scmp.gt.s32.totalorder %s78, 0
      // Predicated region
      $region28: #{custom-call.2} parent=26 // pred_check
        %p80 = pneg %p79
      $region29: #{custom-call.2} parent=26 // pred_check_branch
        %82 = sbr.rel (%p80) target = $region31
      $region30: #{custom-call.2} parent=26 // pred_region
        %s83 = ssub.s32 %s78, 1
        %s84 = smul.u32 %s83, 128
        %s85 = sshra.s32 %s84, 4
        %s86 = scalar_lea.vmem %s1, %s85
        %v87 = vld [vmem:[%s1] sm:$0xff]
        // While loop
        $region32: #{custom-call.2} parent=30 // loop_pre_header
          _
        $region33: #{custom-call.2} parent=30 // loop_header
          %s88 = sphi %s1, %s110
          %s89 = sphi [#allocation1], %s111
          %v90 = vphi %v87, %v112
          %s91 = ssub.s32 %s86, 64
          %p92 = scmp.gt.s32.totalorder %s88, %s91
        $region34: #{custom-call.2} parent=30 // loop_header_branch
          %94 = sbr.rel (%p92) target = $region38
        $region35: #{custom-call.2} parent=30 // loop_body
          %95 = vst [vmem:[%s89] sm:$0xff] %v90
          %v96 = vld [vmem:[%s88 + $0x8] sm:$0xff]
          %97 = vst [vmem:[%s89 + $0x8] sm:$0xff] %v96
          %v98 = vld [vmem:[%s88 + $0x10] sm:$0xff]
          %99 = vst [vmem:[%s89 + $0x10] sm:$0xff] %v98
          %v100 = vld [vmem:[%s88 + $0x18] sm:$0xff]
          %101 = vst [vmem:[%s89 + $0x18] sm:$0xff] %v100
          %v102 = vld [vmem:[%s88 + $0x20] sm:$0xff]
          %103 = vst [vmem:[%s89 + $0x20] sm:$0xff] %v102
          %v104 = vld [vmem:[%s88 + $0x28] sm:$0xff]
          %105 = vst [vmem:[%s89 + $0x28] sm:$0xff] %v104
          %v106 = vld [vmem:[%s88 + $0x30] sm:$0xff]
          %107 = vst [vmem:[%s89 + $0x30] sm:$0xff] %v106
          %v108 = vld [vmem:[%s88 + $0x38] sm:$0xff]
          %109 = vst [vmem:[%s89 + $0x38] sm:$0xff] %v108
        $region36: #{custom-call.2} parent=30 // loop_footer
          %s110 = scalar_lea.vmem %s88, 64
          %s111 = scalar_lea.vmem %s89, 64
          %v112 = vld [vmem:[%s88 + $0x40] sm:$0xff]
        $region37: #{custom-call.2} parent=30 // loop_footer_branch
          %113 = sbr.rel target = $region33
        $region38: #{custom-call.2} parent=30 // loop_exit
          _
        // While loop
        $region39: #{custom-call.2} parent=30 // loop_pre_header
          _
        $region40: #{custom-call.2} parent=30 // loop_header
          %s114 = sphi %s88, %s122
          %s115 = sphi %s89, %s123
          %v116 = vphi %v90, %v116
          %p117 = scmp.gt.s32.totalorder %s114, %s86
        $region41: #{custom-call.2} parent=30 // loop_header_branch
          %119 = sbr.rel (%p117) target = $region45
        $region42: #{custom-call.2} parent=30 // loop_body
          %v120 = vld [vmem:[%s114] sm:$0xff]
          %121 = vst [vmem:[%s115] sm:$0xff] %v120
        $region43: #{custom-call.2} parent=30 // loop_footer
          %s122 = scalar_lea.vmem %s114, 8
          %s123 = scalar_lea.vmem %s115, 8
        $region44: #{custom-call.2} parent=30 // loop_footer_branch
          %124 = sbr.rel target = $region40
        $region45: #{custom-call.2} parent=30 // loop_exit
          _
      $region31: #{custom-call.2} parent=26 // pred_fallthru
        _
      %s125 = sand.u32 64, 7
      %s126 = sshllo.u32 0, %s125
      %s127 = smul.u32 %s78, 128
      %s128 = sshra.s32 %s127, 4
      %s129 = scalar_lea.vmem [#allocation1], %s128
      %s130 = smul.u32 %s78, 128
      %s131 = sshra.s32 %s130, 4
      %s132 = scalar_lea.vmem %s1, %s131
      %v133 = vld [vmem:[%s132] sm:%s126]
      %134 = vst [vmem:[%s129] sm:%s126] %v133
    $region27: #{custom-call.2} parent=1 // pred_fallthru
      _
    %p136 = scmp.gt.s32.totalorder 64, 0
    // Predicated region
    $region46: #{custom-call.2} parent=1 // pred_check
      %p137 = pneg %p136
    $region47: #{custom-call.2} parent=1 // pred_check_branch
      %139 = sbr.rel (%p137) target = $region49
    $region48: #{custom-call.2} parent=1 // pred_region
      %s140 = sshra.s32 64, 3
      %p141 = scmp.gt.s32.totalorder %s140, 0
      // Predicated region
      $region50: #{custom-call.2} parent=48 // pred_check
        %p142 = pneg %p141
      $region51: #{custom-call.2} parent=48 // pred_check_branch
        %144 = sbr.rel (%p142) target = $region53
      $region52: #{custom-call.2} parent=48 // pred_region
        %s145 = ssub.s32 %s140, 1
        %s146 = smul.u32 %s145, 128
        %s147 = sshra.s32 %s146, 4
        %s148 = scalar_lea.vmem %s2, %s147
        %v149 = vld [vmem:[%s2] sm:$0xff]
        // While loop
        $region54: #{custom-call.2} parent=52 // loop_pre_header
          _
        $region55: #{custom-call.2} parent=52 // loop_header
          %s150 = sphi %s2, %s172
          %s151 = sphi [#allocation2], %s173
          %v152 = vphi %v149, %v174
          %s153 = ssub.s32 %s148, 64
          %p154 = scmp.gt.s32.totalorder %s150, %s153
        $region56: #{custom-call.2} parent=52 // loop_header_branch
          %156 = sbr.rel (%p154) target = $region60
        $region57: #{custom-call.2} parent=52 // loop_body
          %157 = vst [vmem:[%s151] sm:$0xff] %v152
          %v158 = vld [vmem:[%s150 + $0x8] sm:$0xff]
          %159 = vst [vmem:[%s151 + $0x8] sm:$0xff] %v158
          %v160 = vld [vmem:[%s150 + $0x10] sm:$0xff]
          %161 = vst [vmem:[%s151 + $0x10] sm:$0xff] %v160
          %v162 = vld [vmem:[%s150 + $0x18] sm:$0xff]
          %163 = vst [vmem:[%s151 + $0x18] sm:$0xff] %v162
          %v164 = vld [vmem:[%s150 + $0x20] sm:$0xff]
          %165 = vst [vmem:[%s151 + $0x20] sm:$0xff] %v164
          %v166 = vld [vmem:[%s150 + $0x28] sm:$0xff]
          %167 = vst [vmem:[%s151 + $0x28] sm:$0xff] %v166
          %v168 = vld [vmem:[%s150 + $0x30] sm:$0xff]
          %169 = vst [vmem:[%s151 + $0x30] sm:$0xff] %v168
          %v170 = vld [vmem:[%s150 + $0x38] sm:$0xff]
          %171 = vst [vmem:[%s151 + $0x38] sm:$0xff] %v170
        $region58: #{custom-call.2} parent=52 // loop_footer
          %s172 = scalar_lea.vmem %s150, 64
          %s173 = scalar_lea.vmem %s151, 64
          %v174 = vld [vmem:[%s150 + $0x40] sm:$0xff]
        $region59: #{custom-call.2} parent=52 // loop_footer_branch
          %175 = sbr.rel target = $region55
        $region60: #{custom-call.2} parent=52 // loop_exit
          _
        // While loop
        $region61: #{custom-call.2} parent=52 // loop_pre_header
          _
        $region62: #{custom-call.2} parent=52 // loop_header
          %s176 = sphi %s150, %s184
          %s177 = sphi %s151, %s185
          %v178 = vphi %v152, %v178
          %p179 = scmp.gt.s32.totalorder %s176, %s148
        $region63: #{custom-call.2} parent=52 // loop_header_branch
          %181 = sbr.rel (%p179) target = $region67
        $region64: #{custom-call.2} parent=52 // loop_body
          %v182 = vld [vmem:[%s176] sm:$0xff]
          %183 = vst [vmem:[%s177] sm:$0xff] %v182
        $region65: #{custom-call.2} parent=52 // loop_footer
          %s184 = scalar_lea.vmem %s176, 8
          %s185 = scalar_lea.vmem %s177, 8
        $region66: #{custom-call.2} parent=52 // loop_footer_branch
          %186 = sbr.rel target = $region62
        $region67: #{custom-call.2} parent=52 // loop_exit
          _
      $region53: #{custom-call.2} parent=48 // pred_fallthru
        _
      %s187 = sand.u32 64, 7
      %s188 = sshllo.u32 0, %s187
      %s189 = smul.u32 %s140, 128
      %s190 = sshra.s32 %s189, 4
      %s191 = scalar_lea.vmem [#allocation2], %s190
      %s192 = smul.u32 %s140, 128
      %s193 = sshra.s32 %s192, 4
      %s194 = scalar_lea.vmem %s2, %s193
      %v195 = vld [vmem:[%s194] sm:%s188]
      %196 = vst [vmem:[%s191] sm:%s188] %v195
    $region49: #{custom-call.2} parent=1 // pred_fallthru
      _
    %p198 = scmp.gt.s32.totalorder 64, 0
    // Predicated region
    $region68: #{custom-call.2} parent=1 // pred_check
      %p199 = pneg %p198
    $region69: #{custom-call.2} parent=1 // pred_check_branch
      %201 = sbr.rel (%p199) target = $region71
    $region70: #{custom-call.2} parent=1 // pred_region
      %s202 = sshra.s32 64, 3
      %p203 = scmp.gt.s32.totalorder %s202, 0
      // Predicated region
      $region72: #{custom-call.2} parent=70 // pred_check
        %p204 = pneg %p203
      $region73: #{custom-call.2} parent=70 // pred_check_branch
        %206 = sbr.rel (%p204) target = $region75
      $region74: #{custom-call.2} parent=70 // pred_region
        %s207 = ssub.s32 %s202, 1
        %s208 = smul.u32 %s207, 128
        %s209 = sshra.s32 %s208, 4
        %s210 = scalar_lea.vmem %s3, %s209
        %v211 = vld [vmem:[%s3] sm:$0xff]
        // While loop
        $region76: #{custom-call.2} parent=74 // loop_pre_header
          _
        $region77: #{custom-call.2} parent=74 // loop_header
          %s212 = sphi %s3, %s234
          %s213 = sphi [#allocation3], %s235
          %v214 = vphi %v211, %v236
          %s215 = ssub.s32 %s210, 64
          %p216 = scmp.gt.s32.totalorder %s212, %s215
        $region78: #{custom-call.2} parent=74 // loop_header_branch
          %218 = sbr.rel (%p216) target = $region82
        $region79: #{custom-call.2} parent=74 // loop_body
          %219 = vst [vmem:[%s213] sm:$0xff] %v214
          %v220 = vld [vmem:[%s212 + $0x8] sm:$0xff]
          %221 = vst [vmem:[%s213 + $0x8] sm:$0xff] %v220
          %v222 = vld [vmem:[%s212 + $0x10] sm:$0xff]
          %223 = vst [vmem:[%s213 + $0x10] sm:$0xff] %v222
          %v224 = vld [vmem:[%s212 + $0x18] sm:$0xff]
          %225 = vst [vmem:[%s213 + $0x18] sm:$0xff] %v224
          %v226 = vld [vmem:[%s212 + $0x20] sm:$0xff]
          %227 = vst [vmem:[%s213 + $0x20] sm:$0xff] %v226
          %v228 = vld [vmem:[%s212 + $0x28] sm:$0xff]
          %229 = vst [vmem:[%s213 + $0x28] sm:$0xff] %v228
          %v230 = vld [vmem:[%s212 + $0x30] sm:$0xff]
          %231 = vst [vmem:[%s213 + $0x30] sm:$0xff] %v230
          %v232 = vld [vmem:[%s212 + $0x38] sm:$0xff]
          %233 = vst [vmem:[%s213 + $0x38] sm:$0xff] %v232
        $region80: #{custom-call.2} parent=74 // loop_footer
          %s234 = scalar_lea.vmem %s212, 64
          %s235 = scalar_lea.vmem %s213, 64
          %v236 = vld [vmem:[%s212 + $0x40] sm:$0xff]
        $region81: #{custom-call.2} parent=74 // loop_footer_branch
          %237 = sbr.rel target = $region77
        $region82: #{custom-call.2} parent=74 // loop_exit
          _
        // While loop
        $region83: #{custom-call.2} parent=74 // loop_pre_header
          _
        $region84: #{custom-call.2} parent=74 // loop_header
          %s238 = sphi %s212, %s246
          %s239 = sphi %s213, %s247
          %v240 = vphi %v214, %v240
          %p241 = scmp.gt.s32.totalorder %s238, %s210
        $region85: #{custom-call.2} parent=74 // loop_header_branch
          %243 = sbr.rel (%p241) target = $region89
        $region86: #{custom-call.2} parent=74 // loop_body
          %v244 = vld [vmem:[%s238] sm:$0xff]
          %245 = vst [vmem:[%s239] sm:$0xff] %v244
        $region87: #{custom-call.2} parent=74 // loop_footer
          %s246 = scalar_lea.vmem %s238, 8
          %s247 = scalar_lea.vmem %s239, 8
        $region88: #{custom-call.2} parent=74 // loop_footer_branch
          %248 = sbr.rel target = $region84
        $region89: #{custom-call.2} parent=74 // loop_exit
          _
      $region75: #{custom-call.2} parent=70 // pred_fallthru
        _
      %s249 = sand.u32 64, 7
      %s250 = sshllo.u32 0, %s249
      %s251 = smul.u32 %s202, 128
      %s252 = sshra.s32 %s251, 4
      %s253 = scalar_lea.vmem [#allocation3], %s252
      %s254 = smul.u32 %s202, 128
      %s255 = sshra.s32 %s254, 4
      %s256 = scalar_lea.vmem %s3, %s255
      %v257 = vld [vmem:[%s256] sm:%s250]
      %258 = vst [vmem:[%s253] sm:%s250] %v257
    $region71: #{custom-call.2} parent=1 // pred_fallthru
      _
    %s259 = smov [#allocation12]
    %v260 = vld [vmem:[#allocation0] sm:$0xff]
    %261 = vst [vmem:[%s259] sm:$0xff] %v260
    %s262 = scalar_lea.vmem %s259, 8
    %s263 = scalar_lea.vmem [#allocation0], 8
    %v264 = vld [vmem:[%s263] sm:$0xff]
    %265 = vst [vmem:[%s262] sm:$0xff] %v264
    %s266 = scalar_lea.vmem %s259, 16
    %s267 = scalar_lea.vmem [#allocation0], 16
    %v268 = vld [vmem:[%s267] sm:$0xff]
    %269 = vst [vmem:[%s266] sm:$0xff] %v268
    %s270 = scalar_lea.vmem %s259, 24
    %s271 = scalar_lea.vmem [#allocation0], 24
    %v272 = vld [vmem:[%s271] sm:$0xff]
    %273 = vst [vmem:[%s270] sm:$0xff] %v272
    %s274 = scalar_lea.vmem %s259, 32
    %s275 = scalar_lea.vmem [#allocation0], 32
    %v276 = vld [vmem:[%s275] sm:$0xff]
    %277 = vst [vmem:[%s274] sm:$0xff] %v276
    %s278 = scalar_lea.vmem %s259, 40
    %s279 = scalar_lea.vmem [#allocation0], 40
    %v280 = vld [vmem:[%s279] sm:$0xff]
    %281 = vst [vmem:[%s278] sm:$0xff] %v280
    %s282 = scalar_lea.vmem %s259, 48
    %s283 = scalar_lea.vmem [#allocation0], 48
    %v284 = vld [vmem:[%s283] sm:$0xff]
    %285 = vst [vmem:[%s282] sm:$0xff] %v284
    %s286 = scalar_lea.vmem %s259, 56
    %s287 = scalar_lea.vmem [#allocation0], 56
    %v288 = vld [vmem:[%s287] sm:$0xff]
    %289 = vst [vmem:[%s286] sm:$0xff] %v288
    %s290 = smov [#allocation13]
    %v291 = vld [vmem:[#allocation1] sm:$0xff]
    %292 = vst [vmem:[%s290] sm:$0xff] %v291
    %s293 = scalar_lea.vmem %s290, 8
    %s294 = scalar_lea.vmem [#allocation1], 8
    %v295 = vld [vmem:[%s294] sm:$0xff]
    %296 = vst [vmem:[%s293] sm:$0xff] %v295
    %s297 = scalar_lea.vmem %s290, 16
    %s298 = scalar_lea.vmem [#allocation1], 16
    %v299 = vld [vmem:[%s298] sm:$0xff]
    %300 = vst [vmem:[%s297] sm:$0xff] %v299
    %s301 = scalar_lea.vmem %s290, 24
    %s302 = scalar_lea.vmem [#allocation1], 24
    %v303 = vld [vmem:[%s302] sm:$0xff]
    %304 = vst [vmem:[%s301] sm:$0xff] %v303
    %s305 = scalar_lea.vmem %s290, 32
    %s306 = scalar_lea.vmem [#allocation1], 32
    %v307 = vld [vmem:[%s306] sm:$0xff]
    %308 = vst [vmem:[%s305] sm:$0xff] %v307
    %s309 = scalar_lea.vmem %s290, 40
    %s310 = scalar_lea.vmem [#allocation1], 40
    %v311 = vld [vmem:[%s310] sm:$0xff]
    %312 = vst [vmem:[%s309] sm:$0xff] %v311
    %s313 = scalar_lea.vmem %s290, 48
    %s314 = scalar_lea.vmem [#allocation1], 48
    %v315 = vld [vmem:[%s314] sm:$0xff]
    %316 = vst [vmem:[%s313] sm:$0xff] %v315
    %s317 = scalar_lea.vmem %s290, 56
    %s318 = scalar_lea.vmem [#allocation1], 56
    %v319 = vld [vmem:[%s318] sm:$0xff]
    %320 = vst [vmem:[%s317] sm:$0xff] %v319
    %s321 = smov [#allocation14]
    %v322 = vld [vmem:[#allocation2] sm:$0xff]
    %323 = vst [vmem:[%s321] sm:$0xff] %v322
    %s324 = scalar_lea.vmem %s321, 8
    %s325 = scalar_lea.vmem [#allocation2], 8
    %v326 = vld [vmem:[%s325] sm:$0xff]
    %327 = vst [vmem:[%s324] sm:$0xff] %v326
    %s328 = scalar_lea.vmem %s321, 16
    %s329 = scalar_lea.vmem [#allocation2], 16
    %v330 = vld [vmem:[%s329] sm:$0xff]
    %331 = vst [vmem:[%s328] sm:$0xff] %v330
    %s332 = scalar_lea.vmem %s321, 24
    %s333 = scalar_lea.vmem [#allocation2], 24
    %v334 = vld [vmem:[%s333] sm:$0xff]
    %335 = vst [vmem:[%s332] sm:$0xff] %v334
    %s336 = scalar_lea.vmem %s321, 32
    %s337 = scalar_lea.vmem [#allocation2], 32
    %v338 = vld [vmem:[%s337] sm:$0xff]
    %339 = vst [vmem:[%s336] sm:$0xff] %v338
    %s340 = scalar_lea.vmem %s321, 40
    %s341 = scalar_lea.vmem [#allocation2], 40
    %v342 = vld [vmem:[%s341] sm:$0xff]
    %343 = vst [vmem:[%s340] sm:$0xff] %v342
    %s344 = scalar_lea.vmem %s321, 48
    %s345 = scalar_lea.vmem [#allocation2], 48
    %v346 = vld [vmem:[%s345] sm:$0xff]
    %347 = vst [vmem:[%s344] sm:$0xff] %v346
    %s348 = scalar_lea.vmem %s321, 56
    %s349 = scalar_lea.vmem [#allocation2], 56
    %v350 = vld [vmem:[%s349] sm:$0xff]
    %351 = vst [vmem:[%s348] sm:$0xff] %v350
    %s352 = smov [#allocation15]
    %v353 = vld [vmem:[#allocation3] sm:$0xff]
    %354 = vst [vmem:[%s352] sm:$0xff] %v353
    %s355 = scalar_lea.vmem %s352, 8
    %s356 = scalar_lea.vmem [#allocation3], 8
    %v357 = vld [vmem:[%s356] sm:$0xff]
    %358 = vst [vmem:[%s355] sm:$0xff] %v357
    %s359 = scalar_lea.vmem %s352, 16
    %s360 = scalar_lea.vmem [#allocation3], 16
    %v361 = vld [vmem:[%s360] sm:$0xff]
    %362 = vst [vmem:[%s359] sm:$0xff] %v361
    %s363 = scalar_lea.vmem %s352, 24
    %s364 = scalar_lea.vmem [#allocation3], 24
    %v365 = vld [vmem:[%s364] sm:$0xff]
    %366 = vst [vmem:[%s363] sm:$0xff] %v365
    %s367 = scalar_lea.vmem %s352, 32
    %s368 = scalar_lea.vmem [#allocation3], 32
    %v369 = vld [vmem:[%s368] sm:$0xff]
    %370 = vst [vmem:[%s367] sm:$0xff] %v369
    %s371 = scalar_lea.vmem %s352, 40
    %s372 = scalar_lea.vmem [#allocation3], 40
    %v373 = vld [vmem:[%s372] sm:$0xff]
    %374 = vst [vmem:[%s371] sm:$0xff] %v373
    %s375 = scalar_lea.vmem %s352, 48
    %s376 = scalar_lea.vmem [#allocation3], 48
    %v377 = vld [vmem:[%s376] sm:$0xff]
    %378 = vst [vmem:[%s375] sm:$0xff] %v377
    %s379 = scalar_lea.vmem %s352, 56
    %s380 = scalar_lea.vmem [#allocation3], 56
    %v381 = vld [vmem:[%s380] sm:$0xff]
    %382 = vst [vmem:[%s379] sm:$0xff] %v381
    %383 = vst [vmem:[#allocation8] sm:$0xff] 0.0
    %s384 = scalar_lea.vmem [#allocation8], 8
    %385 = vst [vmem:[%s384] sm:$0xff] 0.0
    %s386 = scalar_lea.vmem [#allocation8], 16
    %387 = vst [vmem:[%s386] sm:$0xff] 0.0
    %s388 = scalar_lea.vmem [#allocation8], 24
    %389 = vst [vmem:[%s388] sm:$0xff] 0.0
    %s390 = scalar_lea.vmem [#allocation8], 32
    %391 = vst [vmem:[%s390] sm:$0xff] 0.0
    %s392 = scalar_lea.vmem [#allocation8], 40
    %393 = vst [vmem:[%s392] sm:$0xff] 0.0
    %s394 = scalar_lea.vmem [#allocation8], 48
    %395 = vst [vmem:[%s394] sm:$0xff] 0.0
    %s396 = scalar_lea.vmem [#allocation8], 56
    %397 = vst [vmem:[%s396] sm:$0xff] 0.0
    %398 = vst [vmem:[#allocation9] sm:$0xff] 0.0
    %s399 = scalar_lea.vmem [#allocation9], 8
    %400 = vst [vmem:[%s399] sm:$0xff] 0.0
    %s401 = scalar_lea.vmem [#allocation9], 16
    %402 = vst [vmem:[%s401] sm:$0xff] 0.0
    %s403 = scalar_lea.vmem [#allocation9], 24
    %404 = vst [vmem:[%s403] sm:$0xff] 0.0
    %s405 = scalar_lea.vmem [#allocation9], 32
    %406 = vst [vmem:[%s405] sm:$0xff] 0.0
    %s407 = scalar_lea.vmem [#allocation9], 40
    %408 = vst [vmem:[%s407] sm:$0xff] 0.0
    %s409 = scalar_lea.vmem [#allocation9], 48
    %410 = vst [vmem:[%s409] sm:$0xff] 0.0
    %s411 = scalar_lea.vmem [#allocation9], 56
    %412 = vst [vmem:[%s411] sm:$0xff] 0.0
    %413 = vst [vmem:[#allocation10] sm:$0xff] 0.0
    %s414 = scalar_lea.vmem [#allocation10], 8
    %415 = vst [vmem:[%s414] sm:$0xff] 0.0
    %s416 = scalar_lea.vmem [#allocation10], 16
    %417 = vst [vmem:[%s416] sm:$0xff] 0.0
    %s418 = scalar_lea.vmem [#allocation10], 24
    %419 = vst [vmem:[%s418] sm:$0xff] 0.0
    %s420 = scalar_lea.vmem [#allocation10], 32
    %421 = vst [vmem:[%s420] sm:$0xff] 0.0
    %s422 = scalar_lea.vmem [#allocation10], 40
    %423 = vst [vmem:[%s422] sm:$0xff] 0.0
    %s424 = scalar_lea.vmem [#allocation10], 48
    %425 = vst [vmem:[%s424] sm:$0xff] 0.0
    %s426 = scalar_lea.vmem [#allocation10], 56
    %427 = vst [vmem:[%s426] sm:$0xff] 0.0
    %428 = vst [vmem:[#allocation11] sm:$0xff] 0.0
    %s429 = scalar_lea.vmem [#allocation11], 8
    %430 = vst [vmem:[%s429] sm:$0xff] 0.0
    %s431 = scalar_lea.vmem [#allocation11], 16
    %432 = vst [vmem:[%s431] sm:$0xff] 0.0
    %s433 = scalar_lea.vmem [#allocation11], 24
    %434 = vst [vmem:[%s433] sm:$0xff] 0.0
    %s435 = scalar_lea.vmem [#allocation11], 32
    %436 = vst [vmem:[%s435] sm:$0xff] 0.0
    %s437 = scalar_lea.vmem [#allocation11], 40
    %438 = vst [vmem:[%s437] sm:$0xff] 0.0
    %s439 = scalar_lea.vmem [#allocation11], 48
    %440 = vst [vmem:[%s439] sm:$0xff] 0.0
    %s441 = scalar_lea.vmem [#allocation11], 56
    %442 = vst [vmem:[%s441] sm:$0xff] 0.0
    %s443 = smov [#allocation8]
    %v444 = vlaneseq
    %v445 = vand.u32 %v444, 127
    %v446 = vmov %v445
    %v447 = vlaneseq
    %v448 = vshrl.u32 %v447, 7
    %v449 = vmov %v448
    %v450 = vld [vmem:[%s443] sm:$0xff]
    %vm453 = vcmp.eq.s32.totalorder %v449, %v446
    %v454 = vsel %vm453, 1.0, %v450
    %455 = vst [vmem:[%s443] sm:$0xff] %v454
    %s456 = scalar_lea.vmem %s443, 8
    %v457 = vld [vmem:[%s456] sm:$0xff]
    %v459 = vadd.s32 %v449, 8
    %vm460 = vcmp.eq.s32.totalorder %v459, %v446
    %v461 = vsel %vm460, 1.0, %v457
    %462 = vst [vmem:[%s456] sm:$0xff] %v461
    %s463 = scalar_lea.vmem %s443, 16
    %v464 = vld [vmem:[%s463] sm:$0xff]
    %v466 = vadd.s32 %v449, 16
    %vm467 = vcmp.eq.s32.totalorder %v466, %v446
    %v468 = vsel %vm467, 1.0, %v464
    %469 = vst [vmem:[%s463] sm:$0xff] %v468
    %s470 = scalar_lea.vmem %s443, 24
    %v471 = vld [vmem:[%s470] sm:$0xff]
    %v473 = vadd.s32 %v449, 24
    %vm474 = vcmp.eq.s32.totalorder %v473, %v446
    %v475 = vsel %vm474, 1.0, %v471
    %476 = vst [vmem:[%s470] sm:$0xff] %v475
    %s477 = scalar_lea.vmem %s443, 32
    %v478 = vld [vmem:[%s477] sm:$0xff]
    %v480 = vadd.s32 %v449, 32
    %vm481 = vcmp.eq.s32.totalorder %v480, %v446
    %v482 = vsel %vm481, 1.0, %v478
    %483 = vst [vmem:[%s477] sm:$0xff] %v482
    %s484 = scalar_lea.vmem %s443, 40
    %v485 = vld [vmem:[%s484] sm:$0xff]
    %v487 = vadd.s32 %v449, 40
    %vm488 = vcmp.eq.s32.totalorder %v487, %v446
    %v489 = vsel %vm488, 1.0, %v485
    %490 = vst [vmem:[%s484] sm:$0xff] %v489
    %s491 = scalar_lea.vmem %s443, 48
    %v492 = vld [vmem:[%s491] sm:$0xff]
    %v494 = vadd.s32 %v449, 48
    %vm495 = vcmp.eq.s32.totalorder %v494, %v446
    %v496 = vsel %vm495, 1.0, %v492
    %497 = vst [vmem:[%s491] sm:$0xff] %v496
    %s498 = scalar_lea.vmem %s443, 56
    %v499 = vld [vmem:[%s498] sm:$0xff]
    %v501 = vadd.s32 %v449, 56
    %vm502 = vcmp.eq.s32.totalorder %v501, %v446
    %v503 = vsel %vm502, 1.0, %v499
    %504 = vst [vmem:[%s498] sm:$0xff] %v503
    %s505 = smov [#allocation11]
    %v506 = vlaneseq
    %v507 = vand.u32 %v506, 127
    %v508 = vmov %v507
    %v509 = vlaneseq
    %v510 = vshrl.u32 %v509, 7
    %v511 = vmov %v510
    %v512 = vld [vmem:[%s505] sm:$0xff]
    %vm515 = vcmp.eq.s32.totalorder %v511, %v508
    %v516 = vsel %vm515, 1.0, %v512
    %517 = vst [vmem:[%s505] sm:$0xff] %v516
    %s518 = scalar_lea.vmem %s505, 8
    %v519 = vld [vmem:[%s518] sm:$0xff]
    %v521 = vadd.s32 %v511, 8
    %vm522 = vcmp.eq.s32.totalorder %v521, %v508
    %v523 = vsel %vm522, 1.0, %v519
    %524 = vst [vmem:[%s518] sm:$0xff] %v523
    %s525 = scalar_lea.vmem %s505, 16
    %v526 = vld [vmem:[%s525] sm:$0xff]
    %v528 = vadd.s32 %v511, 16
    %vm529 = vcmp.eq.s32.totalorder %v528, %v508
    %v530 = vsel %vm529, 1.0, %v526
    %531 = vst [vmem:[%s525] sm:$0xff] %v530
    %s532 = scalar_lea.vmem %s505, 24
    %v533 = vld [vmem:[%s532] sm:$0xff]
    %v535 = vadd.s32 %v511, 24
    %vm536 = vcmp.eq.s32.totalorder %v535, %v508
    %v537 = vsel %vm536, 1.0, %v533
    %538 = vst [vmem:[%s532] sm:$0xff] %v537
    %s539 = scalar_lea.vmem %s505, 32
    %v540 = vld [vmem:[%s539] sm:$0xff]
    %v542 = vadd.s32 %v511, 32
    %vm543 = vcmp.eq.s32.totalorder %v542, %v508
    %v544 = vsel %vm543, 1.0, %v540
    %545 = vst [vmem:[%s539] sm:$0xff] %v544
    %s546 = scalar_lea.vmem %s505, 40
    %v547 = vld [vmem:[%s546] sm:$0xff]
    %v549 = vadd.s32 %v511, 40
    %vm550 = vcmp.eq.s32.totalorder %v549, %v508
    %v551 = vsel %vm550, 1.0, %v547
    %552 = vst [vmem:[%s546] sm:$0xff] %v551
    %s553 = scalar_lea.vmem %s505, 48
    %v554 = vld [vmem:[%s553] sm:$0xff]
    %v556 = vadd.s32 %v511, 48
    %vm557 = vcmp.eq.s32.totalorder %v556, %v508
    %v558 = vsel %vm557, 1.0, %v554
    %559 = vst [vmem:[%s553] sm:$0xff] %v558
    %s560 = scalar_lea.vmem %s505, 56
    %v561 = vld [vmem:[%s560] sm:$0xff]
    %v563 = vadd.s32 %v511, 56
    %vm564 = vcmp.eq.s32.totalorder %v563, %v508
    %v565 = vsel %vm564, 1.0, %v561
    %566 = vst [vmem:[%s560] sm:$0xff] %v565
    // While loop
    $region90: #{custom-call.2} parent=1 // loop_pre_header
      _
    $region91: #{custom-call.2} parent=1 // loop_header
      %s568 = sphi 0, %s3602
      %v569 = vlaneseq
      %v570 = vand.u32 %v569, 127
      %v571 = vmov %v570
      %v572 = vlaneseq
      %v573 = vshrl.u32 %v572, 7
      %v574 = vmov %v573
      %s575 = smov [#allocation12]
      %v576 = vlaneseq
      %v577 = vand.u32 %v576, 127
      %vm578 = vcmp.ge.s32.totalorder %v577, 0
      %vm579 = vcmp.lt.s32.totalorder %v577, 64
      %vm580 = vmand %vm578, %vm579
      %v581 = vld [vmem:[%s575] sm:$0xff]
      %v582 = vsel %vm580, %v581, 0.0
      %v583 = vmul.f32 %v582, %v582
      %vm586 = vcmp.eq.s32.totalorder %v574, %v571
      %v587 = vsel %vm586, 0.0, %v583
      %s588 = scalar_lea.vmem %s575, 8
      %v589 = vld [vmem:[%s588] sm:$0xff]
      %v590 = vsel %vm580, %v589, 0.0
      %v591 = vmul.f32 %v590, %v590
      %v593 = vadd.s32 %v574, 8
      %vm594 = vcmp.eq.s32.totalorder %v593, %v571
      %v595 = vsel %vm594, 0.0, %v591
      %v596 = vadd.f32 %v587, %v595
      %v597 = vadd.f32 %v583, %v591
      %s598 = scalar_lea.vmem %s575, 16
      %v599 = vld [vmem:[%s598] sm:$0xff]
      %v600 = vsel %vm580, %v599, 0.0
      %v601 = vmul.f32 %v600, %v600
      %v603 = vadd.s32 %v574, 16
      %vm604 = vcmp.eq.s32.totalorder %v603, %v571
      %v605 = vsel %vm604, 0.0, %v601
      %v606 = vadd.f32 %v596, %v605
      %v607 = vadd.f32 %v597, %v601
      %s608 = scalar_lea.vmem %s575, 24
      %v609 = vld [vmem:[%s608] sm:$0xff]
      %v610 = vsel %vm580, %v609, 0.0
      %v611 = vmul.f32 %v610, %v610
      %v613 = vadd.s32 %v574, 24
      %vm614 = vcmp.eq.s32.totalorder %v613, %v571
      %v615 = vsel %vm614, 0.0, %v611
      %v616 = vadd.f32 %v606, %v615
      %v617 = vadd.f32 %v607, %v611
      %s618 = scalar_lea.vmem %s575, 32
      %v619 = vld [vmem:[%s618] sm:$0xff]
      %v620 = vsel %vm580, %v619, 0.0
      %v621 = vmul.f32 %v620, %v620
      %v623 = vadd.s32 %v574, 32
      %vm624 = vcmp.eq.s32.totalorder %v623, %v571
      %v625 = vsel %vm624, 0.0, %v621
      %v626 = vadd.f32 %v616, %v625
      %v627 = vadd.f32 %v617, %v621
      %s628 = scalar_lea.vmem %s575, 40
      %v629 = vld [vmem:[%s628] sm:$0xff]
      %v630 = vsel %vm580, %v629, 0.0
      %v631 = vmul.f32 %v630, %v630
      %v633 = vadd.s32 %v574, 40
      %vm634 = vcmp.eq.s32.totalorder %v633, %v571
      %v635 = vsel %vm634, 0.0, %v631
      %v636 = vadd.f32 %v626, %v635
      %v637 = vadd.f32 %v627, %v631
      %s638 = scalar_lea.vmem %s575, 48
      %v639 = vld [vmem:[%s638] sm:$0xff]
      %v640 = vsel %vm580, %v639, 0.0
      %v641 = vmul.f32 %v640, %v640
      %v643 = vadd.s32 %v574, 48
      %vm644 = vcmp.eq.s32.totalorder %v643, %v571
      %v645 = vsel %vm644, 0.0, %v641
      %v646 = vadd.f32 %v636, %v645
      %v647 = vadd.f32 %v637, %v641
      %s648 = scalar_lea.vmem %s575, 56
      %v649 = vld [vmem:[%s648] sm:$0xff]
      %v650 = vsel %vm580, %v649, 0.0
      %v651 = vmul.f32 %v650, %v650
      %v653 = vadd.s32 %v574, 56
      %vm654 = vcmp.eq.s32.totalorder %v653, %v571
      %v655 = vsel %vm654, 0.0, %v651
      %v656 = vadd.f32 %v646, %v655
      %v657 = vadd.f32 %v647, %v651
      %v658 = vlaneseq
      %v659 = vand.u32 %v658, 127
      %v660 = vmov %v659
      %v661 = vlaneseq
      %v662 = vshrl.u32 %v661, 7
      %v663 = vmov %v662
      %s664 = smov [#allocation13]
      %v665 = vlaneseq
      %v666 = vand.u32 %v665, 127
      %vm667 = vcmp.ge.s32.totalorder %v666, 0
      %vm668 = vcmp.lt.s32.totalorder %v666, 64
      %vm669 = vmand %vm667, %vm668
      %v670 = vld [vmem:[%s664] sm:$0xff]
      %v671 = vsel %vm669, %v670, 0.0
      %v672 = vmul.f32 %v671, %v671
      %v673 = vadd.f32 %v656, %v672
      %v674 = vadd.f32 %v657, %v672
      %s675 = scalar_lea.vmem %s664, 8
      %v676 = vld [vmem:[%s675] sm:$0xff]
      %v677 = vsel %vm669, %v676, 0.0
      %v678 = vmul.f32 %v677, %v677
      %v679 = vadd.f32 %v673, %v678
      %v680 = vadd.f32 %v674, %v678
      %s681 = scalar_lea.vmem %s664, 16
      %v682 = vld [vmem:[%s681] sm:$0xff]
      %v683 = vsel %vm669, %v682, 0.0
      %v684 = vmul.f32 %v683, %v683
      %v685 = vadd.f32 %v679, %v684
      %v686 = vadd.f32 %v680, %v684
      %s687 = scalar_lea.vmem %s664, 24
      %v688 = vld [vmem:[%s687] sm:$0xff]
      %v689 = vsel %vm669, %v688, 0.0
      %v690 = vmul.f32 %v689, %v689
      %v691 = vadd.f32 %v685, %v690
      %v692 = vadd.f32 %v686, %v690
      %s693 = scalar_lea.vmem %s664, 32
      %v694 = vld [vmem:[%s693] sm:$0xff]
      %v695 = vsel %vm669, %v694, 0.0
      %v696 = vmul.f32 %v695, %v695
      %v697 = vadd.f32 %v691, %v696
      %v698 = vadd.f32 %v692, %v696
      %s699 = scalar_lea.vmem %s664, 40
      %v700 = vld [vmem:[%s699] sm:$0xff]
      %v701 = vsel %vm669, %v700, 0.0
      %v702 = vmul.f32 %v701, %v701
      %v703 = vadd.f32 %v697, %v702
      %v704 = vadd.f32 %v698, %v702
      %s705 = scalar_lea.vmem %s664, 48
      %v706 = vld [vmem:[%s705] sm:$0xff]
      %v707 = vsel %vm669, %v706, 0.0
      %v708 = vmul.f32 %v707, %v707
      %v709 = vadd.f32 %v703, %v708
      %v710 = vadd.f32 %v704, %v708
      %s711 = scalar_lea.vmem %s664, 56
      %v712 = vld [vmem:[%s711] sm:$0xff]
      %v713 = vsel %vm669, %v712, 0.0
      %v714 = vmul.f32 %v713, %v713
      %v715 = vadd.f32 %v709, %v714
      %v716 = vadd.f32 %v710, %v714
      %v717 = vlaneseq
      %v718 = vand.u32 %v717, 127
      %v719 = vmov %v718
      %v720 = vlaneseq
      %v721 = vshrl.u32 %v720, 7
      %v722 = vmov %v721
      %s723 = smov [#allocation14]
      %v724 = vlaneseq
      %v725 = vand.u32 %v724, 127
      %vm726 = vcmp.ge.s32.totalorder %v725, 0
      %vm727 = vcmp.lt.s32.totalorder %v725, 64
      %vm728 = vmand %vm726, %vm727
      %v729 = vld [vmem:[%s723] sm:$0xff]
      %v730 = vsel %vm728, %v729, 0.0
      %v731 = vmul.f32 %v730, %v730
      %v732 = vadd.f32 %v715, %v731
      %v733 = vadd.f32 %v716, %v731
      %s734 = scalar_lea.vmem %s723, 8
      %v735 = vld [vmem:[%s734] sm:$0xff]
      %v736 = vsel %vm728, %v735, 0.0
      %v737 = vmul.f32 %v736, %v736
      %v738 = vadd.f32 %v732, %v737
      %v739 = vadd.f32 %v733, %v737
      %s740 = scalar_lea.vmem %s723, 16
      %v741 = vld [vmem:[%s740] sm:$0xff]
      %v742 = vsel %vm728, %v741, 0.0
      %v743 = vmul.f32 %v742, %v742
      %v744 = vadd.f32 %v738, %v743
      %v745 = vadd.f32 %v739, %v743
      %s746 = scalar_lea.vmem %s723, 24
      %v747 = vld [vmem:[%s746] sm:$0xff]
      %v748 = vsel %vm728, %v747, 0.0
      %v749 = vmul.f32 %v748, %v748
      %v750 = vadd.f32 %v744, %v749
      %v751 = vadd.f32 %v745, %v749
      %s752 = scalar_lea.vmem %s723, 32
      %v753 = vld [vmem:[%s752] sm:$0xff]
      %v754 = vsel %vm728, %v753, 0.0
      %v755 = vmul.f32 %v754, %v754
      %v756 = vadd.f32 %v750, %v755
      %v757 = vadd.f32 %v751, %v755
      %s758 = scalar_lea.vmem %s723, 40
      %v759 = vld [vmem:[%s758] sm:$0xff]
      %v760 = vsel %vm728, %v759, 0.0
      %v761 = vmul.f32 %v760, %v760
      %v762 = vadd.f32 %v756, %v761
      %v763 = vadd.f32 %v757, %v761
      %s764 = scalar_lea.vmem %s723, 48
      %v765 = vld [vmem:[%s764] sm:$0xff]
      %v766 = vsel %vm728, %v765, 0.0
      %v767 = vmul.f32 %v766, %v766
      %v768 = vadd.f32 %v762, %v767
      %v769 = vadd.f32 %v763, %v767
      %s770 = scalar_lea.vmem %s723, 56
      %v771 = vld [vmem:[%s770] sm:$0xff]
      %v772 = vsel %vm728, %v771, 0.0
      %v773 = vmul.f32 %v772, %v772
      %v774 = vadd.f32 %v768, %v773
      %v775 = vadd.f32 %v769, %v773
      %v776 = vlaneseq
      %v777 = vand.u32 %v776, 127
      %v778 = vmov %v777
      %v779 = vlaneseq
      %v780 = vshrl.u32 %v779, 7
      %v781 = vmov %v780
      %s782 = smov [#allocation15]
      %v783 = vlaneseq
      %v784 = vand.u32 %v783, 127
      %vm785 = vcmp.ge.s32.totalorder %v784, 0
      %vm786 = vcmp.lt.s32.totalorder %v784, 64
      %vm787 = vmand %vm785, %vm786
      %v788 = vld [vmem:[%s782] sm:$0xff]
      %v789 = vsel %vm787, %v788, 0.0
      %v790 = vmul.f32 %v789, %v789
      %vm793 = vcmp.eq.s32.totalorder %v781, %v778
      %v794 = vsel %vm793, 0.0, %v790
      %v795 = vadd.f32 %v774, %v794
      %v796 = vadd.f32 %v775, %v790
      %s797 = scalar_lea.vmem %s782, 8
      %v798 = vld [vmem:[%s797] sm:$0xff]
      %v799 = vsel %vm787, %v798, 0.0
      %v800 = vmul.f32 %v799, %v799
      %v802 = vadd.s32 %v781, 8
      %vm803 = vcmp.eq.s32.totalorder %v802, %v778
      %v804 = vsel %vm803, 0.0, %v800
      %v805 = vadd.f32 %v795, %v804
      %v806 = vadd.f32 %v796, %v800
      %s807 = scalar_lea.vmem %s782, 16
      %v808 = vld [vmem:[%s807] sm:$0xff]
      %v809 = vsel %vm787, %v808, 0.0
      %v810 = vmul.f32 %v809, %v809
      %v812 = vadd.s32 %v781, 16
      %vm813 = vcmp.eq.s32.totalorder %v812, %v778
      %v814 = vsel %vm813, 0.0, %v810
      %v815 = vadd.f32 %v805, %v814
      %v816 = vadd.f32 %v806, %v810
      %s817 = scalar_lea.vmem %s782, 24
      %v818 = vld [vmem:[%s817] sm:$0xff]
      %v819 = vsel %vm787, %v818, 0.0
      %v820 = vmul.f32 %v819, %v819
      %v822 = vadd.s32 %v781, 24
      %vm823 = vcmp.eq.s32.totalorder %v822, %v778
      %v824 = vsel %vm823, 0.0, %v820
      %v825 = vadd.f32 %v815, %v824
      %v826 = vadd.f32 %v816, %v820
      %s827 = scalar_lea.vmem %s782, 32
      %v828 = vld [vmem:[%s827] sm:$0xff]
      %v829 = vsel %vm787, %v828, 0.0
      %v830 = vmul.f32 %v829, %v829
      %v832 = vadd.s32 %v781, 32
      %vm833 = vcmp.eq.s32.totalorder %v832, %v778
      %v834 = vsel %vm833, 0.0, %v830
      %v835 = vadd.f32 %v825, %v834
      %v836 = vadd.f32 %v826, %v830
      %s837 = scalar_lea.vmem %s782, 40
      %v838 = vld [vmem:[%s837] sm:$0xff]
      %v839 = vsel %vm787, %v838, 0.0
      %v840 = vmul.f32 %v839, %v839
      %v842 = vadd.s32 %v781, 40
      %vm843 = vcmp.eq.s32.totalorder %v842, %v778
      %v844 = vsel %vm843, 0.0, %v840
      %v845 = vadd.f32 %v835, %v844
      %v846 = vadd.f32 %v836, %v840
      %s847 = scalar_lea.vmem %s782, 48
      %v848 = vld [vmem:[%s847] sm:$0xff]
      %v849 = vsel %vm787, %v848, 0.0
      %v850 = vmul.f32 %v849, %v849
      %v852 = vadd.s32 %v781, 48
      %vm853 = vcmp.eq.s32.totalorder %v852, %v778
      %v854 = vsel %vm853, 0.0, %v850
      %v855 = vadd.f32 %v845, %v854
      %v856 = vadd.f32 %v846, %v850
      %s857 = scalar_lea.vmem %s782, 56
      %v858 = vld [vmem:[%s857] sm:$0xff]
      %v859 = vsel %vm787, %v858, 0.0
      %v860 = vmul.f32 %v859, %v859
      %v862 = vadd.s32 %v781, 56
      %vm863 = vcmp.eq.s32.totalorder %v862, %v778
      %v864 = vsel %vm863, 0.0, %v860
      %v865 = vadd.f32 %v855, %v864
      %v866 = vadd.f32 %v856, %v860
      %867 = vadd.xlane.f32.xlu0 %v866
      %v868 = vpop.xlane.xlu0 %867
      %v869 = vrot.slane %v868, 4
      %v870 = vadd.f32 %v868, %v869
      %v871 = vrot.slane %v870, 2
      %v872 = vadd.f32 %v870, %v871
      %v873 = vrot.slane %v872, 1
      %v874 = vadd.f32 %v872, %v873
      %875 = vadd.xlane.f32.xlu0 %v865
      %v876 = vpop.xlane.xlu0 %875
      %v877 = vrot.slane %v876, 4
      %v878 = vadd.f32 %v876, %v877
      %v879 = vrot.slane %v878, 2
      %v880 = vadd.f32 %v878, %v879
      %v881 = vrot.slane %v880, 1
      %v882 = vadd.f32 %v880, %v881
      %s883 = vtos %v882
      %s884 = vtos %v874
      %s885 = smul.f32 1e-10, %s884
      %p886 = scmp.le.f32.partialorder %s883, %s885
      %p887 = scmp.ge.s32.totalorder %s568, 15
      %p888 = por %p886, %p887
    $region92: #{custom-call.2} parent=1 // loop_header_branch
      %3604 = sbr.rel (%p888) target = $region96
    $region93: #{custom-call.2} parent=1 // loop_body
      loop: start=0, step=1, limit=127
      $region97: #{custom-call.2} parent=93 // loop_pre_header
        _
      $region98: #{custom-call.2} parent=93 // loop_header
        %s890 = sphi 0, %s894
        %p891 = scmp.ge.s32.totalorder %s890, 127
      $region99: #{custom-call.2} parent=93 // loop_header_branch
        %893 = sbr.rel (%p891) target = $region103
      $region100: #{custom-call.2} parent=93 // loop_body
        #allocation16 [shape = 'f32[1024]{0}', space=vmem, size = 0x1000, scoped, tag = 'a_tl_diag vmem']
        #allocation17 [shape = 'f32[1024]{0}', space=vmem, size = 0x1000, scoped, tag = 'a_tr_diag vmem']
        #allocation18 [shape = 'f32[1024]{0}', space=vmem, size = 0x1000, scoped, tag = 'a_br_diag vmem']
        #allocation19 [shape = 'f32[1024]{0}', space=vmem, size = 0x1000, scoped, tag = 'rt1 vmem']
        #allocation20 [shape = 'f32[1024]{0}', space=vmem, size = 0x1000, scoped, tag = 'rt2 vmem']
        #allocation21 [shape = 'f32[1024]{0}', space=vmem, size = 0x1000, scoped, tag = 'c vmem']
        #allocation22 [shape = 'f32[1024]{0}', space=vmem, size = 0x1000, scoped, tag = 's vmem']
        #allocation23 [shape = 'f32[32768]{0}', space=vmem, size = 0x20000, scoped, tag = 'c broadcast']
        #allocation24 [shape = 'f32[32768]{0}', space=vmem, size = 0x20000, scoped, tag = 's broadcast']
        %s895 = smov [#allocation12]
        %s896 = smov [#allocation16]
        %v897 = vlaneseq
        %v898 = vand.u32 %v897, 127
        %v899 = vmov %v898
        %v900 = vlaneseq
        %v901 = vshrl.u32 %v900, 7
        %v902 = vmov %v901
        %v903 = vld [vmem:[%s895] sm:$0xff]
        %vm906 = vcmp.eq.s32.totalorder %v902, %v899
        %v907 = vsel %vm906, %v903, 0.0
        %s908 = scalar_lea.vmem %s895, 8
        %v909 = vld [vmem:[%s908] sm:$0xff]
        %v911 = vadd.s32 %v902, 8
        %vm912 = vcmp.eq.s32.totalorder %v911, %v899
        %v913 = vsel %vm912, %v909, %v907
        %s914 = scalar_lea.vmem %s895, 16
        %v915 = vld [vmem:[%s914] sm:$0xff]
        %v917 = vadd.s32 %v902, 16
        %vm918 = vcmp.eq.s32.totalorder %v917, %v899
        %v919 = vsel %vm918, %v915, %v913
        %s920 = scalar_lea.vmem %s895, 24
        %v921 = vld [vmem:[%s920] sm:$0xff]
        %v923 = vadd.s32 %v902, 24
        %vm924 = vcmp.eq.s32.totalorder %v923, %v899
        %v925 = vsel %vm924, %v921, %v919
        %s926 = scalar_lea.vmem %s895, 32
        %v927 = vld [vmem:[%s926] sm:$0xff]
        %v929 = vadd.s32 %v902, 32
        %vm930 = vcmp.eq.s32.totalorder %v929, %v899
        %v931 = vsel %vm930, %v927, %v925
        %s932 = scalar_lea.vmem %s895, 40
        %v933 = vld [vmem:[%s932] sm:$0xff]
        %v935 = vadd.s32 %v902, 40
        %vm936 = vcmp.eq.s32.totalorder %v935, %v899
        %v937 = vsel %vm936, %v933, %v931
        %s938 = scalar_lea.vmem %s895, 48
        %v939 = vld [vmem:[%s938] sm:$0xff]
        %v941 = vadd.s32 %v902, 48
        %vm942 = vcmp.eq.s32.totalorder %v941, %v899
        %v943 = vsel %vm942, %v939, %v937
        %s944 = scalar_lea.vmem %s895, 56
        %v945 = vld [vmem:[%s944] sm:$0xff]
        %v947 = vadd.s32 %v902, 56
        %vm948 = vcmp.eq.s32.totalorder %v947, %v899
        %v949 = vsel %vm948, %v945, %v943
        %v950 = vrot.slane %v949, 4
        %v951 = vadd.f32 %v949, %v950
        %v952 = vrot.slane %v951, 2
        %v953 = vadd.f32 %v951, %v952
        %v954 = vrot.slane %v953, 1
        %v955 = vadd.f32 %v953, %v954
        %956 = vst [vmem:[%s896] sm:$0x1] %v955
        %s957 = smov [#allocation13]
        %s958 = smov [#allocation17]
        %v959 = vlaneseq
        %v960 = vand.u32 %v959, 127
        %v961 = vmov %v960
        %v962 = vlaneseq
        %v963 = vshrl.u32 %v962, 7
        %v964 = vmov %v963
        %v965 = vld [vmem:[%s957] sm:$0xff]
        %vm968 = vcmp.eq.s32.totalorder %v964, %v961
        %v969 = vsel %vm968, %v965, 0.0
        %s970 = scalar_lea.vmem %s957, 8
        %v971 = vld [vmem:[%s970] sm:$0xff]
        %v973 = vadd.s32 %v964, 8
        %vm974 = vcmp.eq.s32.totalorder %v973, %v961
        %v975 = vsel %vm974, %v971, %v969
        %s976 = scalar_lea.vmem %s957, 16
        %v977 = vld [vmem:[%s976] sm:$0xff]
        %v979 = vadd.s32 %v964, 16
        %vm980 = vcmp.eq.s32.totalorder %v979, %v961
        %v981 = vsel %vm980, %v977, %v975
        %s982 = scalar_lea.vmem %s957, 24
        %v983 = vld [vmem:[%s982] sm:$0xff]
        %v985 = vadd.s32 %v964, 24
        %vm986 = vcmp.eq.s32.totalorder %v985, %v961
        %v987 = vsel %vm986, %v983, %v981
        %s988 = scalar_lea.vmem %s957, 32
        %v989 = vld [vmem:[%s988] sm:$0xff]
        %v991 = vadd.s32 %v964, 32
        %vm992 = vcmp.eq.s32.totalorder %v991, %v961
        %v993 = vsel %vm992, %v989, %v987
        %s994 = scalar_lea.vmem %s957, 40
        %v995 = vld [vmem:[%s994] sm:$0xff]
        %v997 = vadd.s32 %v964, 40
        %vm998 = vcmp.eq.s32.totalorder %v997, %v961
        %v999 = vsel %vm998, %v995, %v993
        %s1000 = scalar_lea.vmem %s957, 48
        %v1001 = vld [vmem:[%s1000] sm:$0xff]
        %v1003 = vadd.s32 %v964, 48
        %vm1004 = vcmp.eq.s32.totalorder %v1003, %v961
        %v1005 = vsel %vm1004, %v1001, %v999
        %s1006 = scalar_lea.vmem %s957, 56
        %v1007 = vld [vmem:[%s1006] sm:$0xff]
        %v1009 = vadd.s32 %v964, 56
        %vm1010 = vcmp.eq.s32.totalorder %v1009, %v961
        %v1011 = vsel %vm1010, %v1007, %v1005
        %v1012 = vrot.slane %v1011, 4
        %v1013 = vadd.f32 %v1011, %v1012
        %v1014 = vrot.slane %v1013, 2
        %v1015 = vadd.f32 %v1013, %v1014
        %v1016 = vrot.slane %v1015, 1
        %v1017 = vadd.f32 %v1015, %v1016
        %1018 = vst [vmem:[%s958] sm:$0x1] %v1017
        %s1019 = smov [#allocation15]
        %s1020 = smov [#allocation18]
        %v1021 = vlaneseq
        %v1022 = vand.u32 %v1021, 127
        %v1023 = vmov %v1022
        %v1024 = vlaneseq
        %v1025 = vshrl.u32 %v1024, 7
        %v1026 = vmov %v1025
        %v1027 = vld [vmem:[%s1019] sm:$0xff]
        %vm1030 = vcmp.eq.s32.totalorder %v1026, %v1023
        %v1031 = vsel %vm1030, %v1027, 0.0
        %s1032 = scalar_lea.vmem %s1019, 8
        %v1033 = vld [vmem:[%s1032] sm:$0xff]
        %v1035 = vadd.s32 %v1026, 8
        %vm1036 = vcmp.eq.s32.totalorder %v1035, %v1023
        %v1037 = vsel %vm1036, %v1033, %v1031
        %s1038 = scalar_lea.vmem %s1019, 16
        %v1039 = vld [vmem:[%s1038] sm:$0xff]
        %v1041 = vadd.s32 %v1026, 16
        %vm1042 = vcmp.eq.s32.totalorder %v1041, %v1023
        %v1043 = vsel %vm1042, %v1039, %v1037
        %s1044 = scalar_lea.vmem %s1019, 24
        %v1045 = vld [vmem:[%s1044] sm:$0xff]
        %v1047 = vadd.s32 %v1026, 24
        %vm1048 = vcmp.eq.s32.totalorder %v1047, %v1023
        %v1049 = vsel %vm1048, %v1045, %v1043
        %s1050 = scalar_lea.vmem %s1019, 32
        %v1051 = vld [vmem:[%s1050] sm:$0xff]
        %v1053 = vadd.s32 %v1026, 32
        %vm1054 = vcmp.eq.s32.totalorder %v1053, %v1023
        %v1055 = vsel %vm1054, %v1051, %v1049
        %s1056 = scalar_lea.vmem %s1019, 40
        %v1057 = vld [vmem:[%s1056] sm:$0xff]
        %v1059 = vadd.s32 %v1026, 40
        %vm1060 = vcmp.eq.s32.totalorder %v1059, %v1023
        %v1061 = vsel %vm1060, %v1057, %v1055
        %s1062 = scalar_lea.vmem %s1019, 48
        %v1063 = vld [vmem:[%s1062] sm:$0xff]
        %v1065 = vadd.s32 %v1026, 48
        %vm1066 = vcmp.eq.s32.totalorder %v1065, %v1023
        %v1067 = vsel %vm1066, %v1063, %v1061
        %s1068 = scalar_lea.vmem %s1019, 56
        %v1069 = vld [vmem:[%s1068] sm:$0xff]
        %v1071 = vadd.s32 %v1026, 56
        %vm1072 = vcmp.eq.s32.totalorder %v1071, %v1023
        %v1073 = vsel %vm1072, %v1069, %v1067
        %v1074 = vrot.slane %v1073, 4
        %v1075 = vadd.f32 %v1073, %v1074
        %v1076 = vrot.slane %v1075, 2
        %v1077 = vadd.f32 %v1075, %v1076
        %v1078 = vrot.slane %v1077, 1
        %v1079 = vadd.f32 %v1077, %v1078
        %1080 = vst [vmem:[%s1020] sm:$0x1] %v1079
        %s1081 = smov [#allocation21]
        %s1082 = smov [#allocation22]
        %s1083 = smov [#allocation16]
        %v1084 = vld [vmem:[%s1083] sm:$0xff]
        %s1085 = smov [#allocation17]
        %v1086 = vld [vmem:[%s1085] sm:$0xff]
        %s1087 = smov [#allocation18]
        %v1088 = vld [vmem:[%s1087] sm:$0xff]
        %v1089 = vsub.f32 %v1088, %v1084
        %v1090 = vmul.f32 2.0, %v1086
        %v1091 = vrcp.pop %v1090
        %v1092 = vmul.f32 %v1089, %v1091
        %vm1093 = vcmp.ge.f32.partialorder %v1092, 0.0
        %v1094 = vmul.f32 %v1092, %v1092
        %v1095 = vadd.f32 1.0, %v1094
        %v1096 = vrsqrt.pop %v1095
        %v1097 = vmul.f32 %v1095, %v1096
        %vm1098 = vcmp.eq.f32.partialorder %v1095, inf
        %v1099 = vsel %vm1098, %v1095, %v1097
        %vm1100 = vcmp.eq.f32.partialorder %v1095, 0.0
        %v1101 = vand.u32 %v1095, 2147483648
        %v1102 = vsel %vm1100, %v1101, %v1099
        %v1103 = vxor.u32 %v1102, 2147483648
        %v1104 = vsel %vm1093, %v1102, %v1103
        %v1105 = vadd.f32 %v1092, %v1104
        %v1106 = vrcp.pop %v1105
        %v1107 = vand.u32 2147483647, %v1084
        %v1108 = vand.u32 2147483647, %v1086
        %v1109 = vand.u32 2147483647, %v1088
        %v1110 = vmin.f32 %v1107, %v1109
        %v1111 = vmul.f32 1.1920929e-08, %v1110
        %vm1112 = vcmp.le.f32.partialorder %v1108, %v1111
        %v1113 = vsel %vm1112, 0.0, %v1106
        %v1114 = vmul.f32 %v1113, %v1113
        %v1115 = vadd.f32 1.0, %v1114
        %v1116 = vrsqrt.pop %v1115
        %v1117 = vmul.f32 %v1113, %v1116
        %v1118 = vmul.f32 %v1113, %v1086
        %v1119 = vsub.f32 %v1084, %v1118
        %v1120 = vmul.f32 %v1113, %v1086
        %v1121 = vadd.f32 %v1088, %v1120
        %s1122 = smov [#allocation19]
        %1123 = vst [vmem:[%s1122] sm:$0xff] %v1119
        %s1124 = smov [#allocation20]
        %1125 = vst [vmem:[%s1124] sm:$0xff] %v1121
        %s1126 = smov %s1081
        %1127 = vst [vmem:[%s1126] sm:$0xff] %v1116
        %s1128 = smov %s1082
        %1129 = vst [vmem:[%s1128] sm:$0xff] %v1117
        %s1130 = smov [#allocation21]
        %v1131 = vld [vmem:[%s1130] ss:$0 sm:$0xff]
        %v1132 = vlaneseq
        %v1133 = vand.u32 %v1132, 127
        %v1134 = vmov %v1133
        %v1135 = vlaneseq
        %v1136 = vshrl.u32 %v1135, 7
        %v1137 = vmov %v1136
        %vm1139 = vcmp.eq.s32.totalorder %v1137, %v1134
        %v1140 = vsel %vm1139, %v1131, 0.0
        %1141 = vadd.xlane.f32.xlu0 %v1140
        %v1142 = vpop.xlane.xlu0 %1141
        %s1143 = smov [#allocation23]
        %1144 = vst [vmem:[%s1143] sm:$0xff] %v1142
        %s1145 = smov [#allocation21]
        %v1146 = vld [vmem:[%s1145] ss:$0 sm:$0xff]
        %v1147 = vlaneseq
        %v1148 = vand.u32 %v1147, 127
        %v1149 = vmov %v1148
        %v1150 = vlaneseq
        %v1151 = vshrl.u32 %v1150, 7
        %v1152 = vmov %v1151
        %v1153 = vadd.s32 %v1152, 8
        %vm1154 = vcmp.eq.s32.totalorder %v1153, %v1149
        %v1155 = vsel %vm1154, %v1146, 0.0
        %1156 = vadd.xlane.f32.xlu0 %v1155
        %v1157 = vpop.xlane.xlu0 %1156
        %s1158 = smov [#allocation23]
        %s1159 = scalar_lea.vmem %s1158, 8
        %1160 = vst [vmem:[%s1159] sm:$0xff] %v1157
        %s1161 = smov [#allocation21]
        %v1162 = vld [vmem:[%s1161] ss:$0 sm:$0xff]
        %v1163 = vlaneseq
        %v1164 = vand.u32 %v1163, 127
        %v1165 = vmov %v1164
        %v1166 = vlaneseq
        %v1167 = vshrl.u32 %v1166, 7
        %v1168 = vmov %v1167
        %v1169 = vadd.s32 %v1168, 16
        %vm1170 = vcmp.eq.s32.totalorder %v1169, %v1165
        %v1171 = vsel %vm1170, %v1162, 0.0
        %1172 = vadd.xlane.f32.xlu0 %v1171
        %v1173 = vpop.xlane.xlu0 %1172
        %s1174 = smov [#allocation23]
        %s1175 = scalar_lea.vmem %s1174, 16
        %1176 = vst [vmem:[%s1175] sm:$0xff] %v1173
        %s1177 = smov [#allocation21]
        %v1178 = vld [vmem:[%s1177] ss:$0 sm:$0xff]
        %v1179 = vlaneseq
        %v1180 = vand.u32 %v1179, 127
        %v1181 = vmov %v1180
        %v1182 = vlaneseq
        %v1183 = vshrl.u32 %v1182, 7
        %v1184 = vmov %v1183
        %v1185 = vadd.s32 %v1184, 24
        %vm1186 = vcmp.eq.s32.totalorder %v1185, %v1181
        %v1187 = vsel %vm1186, %v1178, 0.0
        %1188 = vadd.xlane.f32.xlu0 %v1187
        %v1189 = vpop.xlane.xlu0 %1188
        %s1190 = smov [#allocation23]
        %s1191 = scalar_lea.vmem %s1190, 24
        %1192 = vst [vmem:[%s1191] sm:$0xff] %v1189
        %s1193 = smov [#allocation21]
        %v1194 = vld [vmem:[%s1193] ss:$0 sm:$0xff]
        %v1195 = vlaneseq
        %v1196 = vand.u32 %v1195, 127
        %v1197 = vmov %v1196
        %v1198 = vlaneseq
        %v1199 = vshrl.u32 %v1198, 7
        %v1200 = vmov %v1199
        %v1201 = vadd.s32 %v1200, 32
        %vm1202 = vcmp.eq.s32.totalorder %v1201, %v1197
        %v1203 = vsel %vm1202, %v1194, 0.0
        %1204 = vadd.xlane.f32.xlu0 %v1203
        %v1205 = vpop.xlane.xlu0 %1204
        %s1206 = smov [#allocation23]
        %s1207 = scalar_lea.vmem %s1206, 32
        %1208 = vst [vmem:[%s1207] sm:$0xff] %v1205
        %s1209 = smov [#allocation21]
        %v1210 = vld [vmem:[%s1209] ss:$0 sm:$0xff]
        %v1211 = vlaneseq
        %v1212 = vand.u32 %v1211, 127
        %v1213 = vmov %v1212
        %v1214 = vlaneseq
        %v1215 = vshrl.u32 %v1214, 7
        %v1216 = vmov %v1215
        %v1217 = vadd.s32 %v1216, 40
        %vm1218 = vcmp.eq.s32.totalorder %v1217, %v1213
        %v1219 = vsel %vm1218, %v1210, 0.0
        %1220 = vadd.xlane.f32.xlu0 %v1219
        %v1221 = vpop.xlane.xlu0 %1220
        %s1222 = smov [#allocation23]
        %s1223 = scalar_lea.vmem %s1222, 40
        %1224 = vst [vmem:[%s1223] sm:$0xff] %v1221
        %s1225 = smov [#allocation21]
        %v1226 = vld [vmem:[%s1225] ss:$0 sm:$0xff]
        %v1227 = vlaneseq
        %v1228 = vand.u32 %v1227, 127
        %v1229 = vmov %v1228
        %v1230 = vlaneseq
        %v1231 = vshrl.u32 %v1230, 7
        %v1232 = vmov %v1231
        %v1233 = vadd.s32 %v1232, 48
        %vm1234 = vcmp.eq.s32.totalorder %v1233, %v1229
        %v1235 = vsel %vm1234, %v1226, 0.0
        %1236 = vadd.xlane.f32.xlu0 %v1235
        %v1237 = vpop.xlane.xlu0 %1236
        %s1238 = smov [#allocation23]
        %s1239 = scalar_lea.vmem %s1238, 48
        %1240 = vst [vmem:[%s1239] sm:$0xff] %v1237
        %s1241 = smov [#allocation21]
        %v1242 = vld [vmem:[%s1241] ss:$0 sm:$0xff]
        %v1243 = vlaneseq
        %v1244 = vand.u32 %v1243, 127
        %v1245 = vmov %v1244
        %v1246 = vlaneseq
        %v1247 = vshrl.u32 %v1246, 7
        %v1248 = vmov %v1247
        %v1249 = vadd.s32 %v1248, 56
        %vm1250 = vcmp.eq.s32.totalorder %v1249, %v1245
        %v1251 = vsel %vm1250, %v1242, 0.0
        %1252 = vadd.xlane.f32.xlu0 %v1251
        %v1253 = vpop.xlane.xlu0 %1252
        %s1254 = smov [#allocation23]
        %s1255 = scalar_lea.vmem %s1254, 56
        %1256 = vst [vmem:[%s1255] sm:$0xff] %v1253
        %s1257 = smov [#allocation22]
        %v1258 = vld [vmem:[%s1257] ss:$0 sm:$0xff]
        %v1259 = vlaneseq
        %v1260 = vand.u32 %v1259, 127
        %v1261 = vmov %v1260
        %v1262 = vlaneseq
        %v1263 = vshrl.u32 %v1262, 7
        %v1264 = vmov %v1263
        %vm1266 = vcmp.eq.s32.totalorder %v1264, %v1261
        %v1267 = vsel %vm1266, %v1258, 0.0
        %1268 = vadd.xlane.f32.xlu0 %v1267
        %v1269 = vpop.xlane.xlu0 %1268
        %s1270 = smov [#allocation24]
        %1271 = vst [vmem:[%s1270] sm:$0xff] %v1269
        %s1272 = smov [#allocation22]
        %v1273 = vld [vmem:[%s1272] ss:$0 sm:$0xff]
        %v1274 = vlaneseq
        %v1275 = vand.u32 %v1274, 127
        %v1276 = vmov %v1275
        %v1277 = vlaneseq
        %v1278 = vshrl.u32 %v1277, 7
        %v1279 = vmov %v1278
        %v1280 = vadd.s32 %v1279, 8
        %vm1281 = vcmp.eq.s32.totalorder %v1280, %v1276
        %v1282 = vsel %vm1281, %v1273, 0.0
        %1283 = vadd.xlane.f32.xlu0 %v1282
        %v1284 = vpop.xlane.xlu0 %1283
        %s1285 = smov [#allocation24]
        %s1286 = scalar_lea.vmem %s1285, 8
        %1287 = vst [vmem:[%s1286] sm:$0xff] %v1284
        %s1288 = smov [#allocation22]
        %v1289 = vld [vmem:[%s1288] ss:$0 sm:$0xff]
        %v1290 = vlaneseq
        %v1291 = vand.u32 %v1290, 127
        %v1292 = vmov %v1291
        %v1293 = vlaneseq
        %v1294 = vshrl.u32 %v1293, 7
        %v1295 = vmov %v1294
        %v1296 = vadd.s32 %v1295, 16
        %vm1297 = vcmp.eq.s32.totalorder %v1296, %v1292
        %v1298 = vsel %vm1297, %v1289, 0.0
        %1299 = vadd.xlane.f32.xlu0 %v1298
        %v1300 = vpop.xlane.xlu0 %1299
        %s1301 = smov [#allocation24]
        %s1302 = scalar_lea.vmem %s1301, 16
        %1303 = vst [vmem:[%s1302] sm:$0xff] %v1300
        %s1304 = smov [#allocation22]
        %v1305 = vld [vmem:[%s1304] ss:$0 sm:$0xff]
        %v1306 = vlaneseq
        %v1307 = vand.u32 %v1306, 127
        %v1308 = vmov %v1307
        %v1309 = vlaneseq
        %v1310 = vshrl.u32 %v1309, 7
        %v1311 = vmov %v1310
        %v1312 = vadd.s32 %v1311, 24
        %vm1313 = vcmp.eq.s32.totalorder %v1312, %v1308
        %v1314 = vsel %vm1313, %v1305, 0.0
        %1315 = vadd.xlane.f32.xlu0 %v1314
        %v1316 = vpop.xlane.xlu0 %1315
        %s1317 = smov [#allocation24]
        %s1318 = scalar_lea.vmem %s1317, 24
        %1319 = vst [vmem:[%s1318] sm:$0xff] %v1316
        %s1320 = smov [#allocation22]
        %v1321 = vld [vmem:[%s1320] ss:$0 sm:$0xff]
        %v1322 = vlaneseq
        %v1323 = vand.u32 %v1322, 127
        %v1324 = vmov %v1323
        %v1325 = vlaneseq
        %v1326 = vshrl.u32 %v1325, 7
        %v1327 = vmov %v1326
        %v1328 = vadd.s32 %v1327, 32
        %vm1329 = vcmp.eq.s32.totalorder %v1328, %v1324
        %v1330 = vsel %vm1329, %v1321, 0.0
        %1331 = vadd.xlane.f32.xlu0 %v1330
        %v1332 = vpop.xlane.xlu0 %1331
        %s1333 = smov [#allocation24]
        %s1334 = scalar_lea.vmem %s1333, 32
        %1335 = vst [vmem:[%s1334] sm:$0xff] %v1332
        %s1336 = smov [#allocation22]
        %v1337 = vld [vmem:[%s1336] ss:$0 sm:$0xff]
        %v1338 = vlaneseq
        %v1339 = vand.u32 %v1338, 127
        %v1340 = vmov %v1339
        %v1341 = vlaneseq
        %v1342 = vshrl.u32 %v1341, 7
        %v1343 = vmov %v1342
        %v1344 = vadd.s32 %v1343, 40
        %vm1345 = vcmp.eq.s32.totalorder %v1344, %v1340
        %v1346 = vsel %vm1345, %v1337, 0.0
        %1347 = vadd.xlane.f32.xlu0 %v1346
        %v1348 = vpop.xlane.xlu0 %1347
        %s1349 = smov [#allocation24]
        %s1350 = scalar_lea.vmem %s1349, 40
        %1351 = vst [vmem:[%s1350] sm:$0xff] %v1348
        %s1352 = smov [#allocation22]
        %v1353 = vld [vmem:[%s1352] ss:$0 sm:$0xff]
        %v1354 = vlaneseq
        %v1355 = vand.u32 %v1354, 127
        %v1356 = vmov %v1355
        %v1357 = vlaneseq
        %v1358 = vshrl.u32 %v1357, 7
        %v1359 = vmov %v1358
        %v1360 = vadd.s32 %v1359, 48
        %vm1361 = vcmp.eq.s32.totalorder %v1360, %v1356
        %v1362 = vsel %vm1361, %v1353, 0.0
        %1363 = vadd.xlane.f32.xlu0 %v1362
        %v1364 = vpop.xlane.xlu0 %1363
        %s1365 = smov [#allocation24]
        %s1366 = scalar_lea.vmem %s1365, 48
        %1367 = vst [vmem:[%s1366] sm:$0xff] %v1364
        %s1368 = smov [#allocation22]
        %v1369 = vld [vmem:[%s1368] ss:$0 sm:$0xff]
        %v1370 = vlaneseq
        %v1371 = vand.u32 %v1370, 127
        %v1372 = vmov %v1371
        %v1373 = vlaneseq
        %v1374 = vshrl.u32 %v1373, 7
        %v1375 = vmov %v1374
        %v1376 = vadd.s32 %v1375, 56
        %vm1377 = vcmp.eq.s32.totalorder %v1376, %v1372
        %v1378 = vsel %vm1377, %v1369, 0.0
        %1379 = vadd.xlane.f32.xlu0 %v1378
        %v1380 = vpop.xlane.xlu0 %1379
        %s1381 = smov [#allocation24]
        %s1382 = scalar_lea.vmem %s1381, 56
        %1383 = vst [vmem:[%s1382] sm:$0xff] %v1380
        %s1384 = smov [#allocation23]
        %v1385 = vld [vmem:[%s1384] sm:$0xff]
        %s1386 = smov [#allocation24]
        %v1387 = vld [vmem:[%s1386] sm:$0xff]
        %s1388 = smov [#allocation12]
        %s1389 = smov [#allocation13]
        %s1390 = smov [#allocation14]
        %s1391 = smov [#allocation15]
        %v1392 = vld [vmem:[%s1388] sm:$0xff]
        %v1393 = vld [vmem:[%s1389] sm:$0xff]
        %v1394 = vld [vmem:[%s1390] sm:$0xff]
        %v1395 = vld [vmem:[%s1391] sm:$0xff]
        %v1396 = vmul.f32 %v1385, %v1392
        %v1397 = vmul.f32 %v1387, %v1394
        %v1398 = vsub.f32 %v1396, %v1397
        %v1399 = vmul.f32 %v1385, %v1393
        %v1400 = vmul.f32 %v1387, %v1395
        %v1401 = vsub.f32 %v1399, %v1400
        %v1402 = vmul.f32 %v1387, %v1392
        %v1403 = vmul.f32 %v1385, %v1394
        %v1404 = vadd.f32 %v1402, %v1403
        %v1405 = vmul.f32 %v1387, %v1393
        %v1406 = vmul.f32 %v1385, %v1395
        %v1407 = vadd.f32 %v1405, %v1406
        %1408 = vst [vmem:[%s1388] sm:$0xff] %v1398
        %1409 = vst [vmem:[%s1389] sm:$0xff] %v1401
        %1410 = vst [vmem:[%s1390] sm:$0xff] %v1404
        %1411 = vst [vmem:[%s1391] sm:$0xff] %v1407
        %s1412 = smov [#allocation23]
        %s1413 = scalar_lea.vmem %s1412, 8
        %v1414 = vld [vmem:[%s1413] sm:$0xff]
        %s1415 = smov [#allocation24]
        %s1416 = scalar_lea.vmem %s1415, 8
        %v1417 = vld [vmem:[%s1416] sm:$0xff]
        %s1418 = smov [#allocation12]
        %s1419 = scalar_lea.vmem %s1418, 8
        %s1420 = smov [#allocation13]
        %s1421 = scalar_lea.vmem %s1420, 8
        %s1422 = smov [#allocation14]
        %s1423 = scalar_lea.vmem %s1422, 8
        %s1424 = smov [#allocation15]
        %s1425 = scalar_lea.vmem %s1424, 8
        %v1426 = vld [vmem:[%s1419] sm:$0xff]
        %v1427 = vld [vmem:[%s1421] sm:$0xff]
        %v1428 = vld [vmem:[%s1423] sm:$0xff]
        %v1429 = vld [vmem:[%s1425] sm:$0xff]
        %v1430 = vmul.f32 %v1414, %v1426
        %v1431 = vmul.f32 %v1417, %v1428
        %v1432 = vsub.f32 %v1430, %v1431
        %v1433 = vmul.f32 %v1414, %v1427
        %v1434 = vmul.f32 %v1417, %v1429
        %v1435 = vsub.f32 %v1433, %v1434
        %v1436 = vmul.f32 %v1417, %v1426
        %v1437 = vmul.f32 %v1414, %v1428
        %v1438 = vadd.f32 %v1436, %v1437
        %v1439 = vmul.f32 %v1417, %v1427
        %v1440 = vmul.f32 %v1414, %v1429
        %v1441 = vadd.f32 %v1439, %v1440
        %1442 = vst [vmem:[%s1419] sm:$0xff] %v1432
        %1443 = vst [vmem:[%s1421] sm:$0xff] %v1435
        %1444 = vst [vmem:[%s1423] sm:$0xff] %v1438
        %1445 = vst [vmem:[%s1425] sm:$0xff] %v1441
        %s1446 = smov [#allocation23]
        %s1447 = scalar_lea.vmem %s1446, 16
        %v1448 = vld [vmem:[%s1447] sm:$0xff]
        %s1449 = smov [#allocation24]
        %s1450 = scalar_lea.vmem %s1449, 16
        %v1451 = vld [vmem:[%s1450] sm:$0xff]
        %s1452 = smov [#allocation12]
        %s1453 = scalar_lea.vmem %s1452, 16
        %s1454 = smov [#allocation13]
        %s1455 = scalar_lea.vmem %s1454, 16
        %s1456 = smov [#allocation14]
        %s1457 = scalar_lea.vmem %s1456, 16
        %s1458 = smov [#allocation15]
        %s1459 = scalar_lea.vmem %s1458, 16
        %v1460 = vld [vmem:[%s1453] sm:$0xff]
        %v1461 = vld [vmem:[%s1455] sm:$0xff]
        %v1462 = vld [vmem:[%s1457] sm:$0xff]
        %v1463 = vld [vmem:[%s1459] sm:$0xff]
        %v1464 = vmul.f32 %v1448, %v1460
        %v1465 = vmul.f32 %v1451, %v1462
        %v1466 = vsub.f32 %v1464, %v1465
        %v1467 = vmul.f32 %v1448, %v1461
        %v1468 = vmul.f32 %v1451, %v1463
        %v1469 = vsub.f32 %v1467, %v1468
        %v1470 = vmul.f32 %v1451, %v1460
        %v1471 = vmul.f32 %v1448, %v1462
        %v1472 = vadd.f32 %v1470, %v1471
        %v1473 = vmul.f32 %v1451, %v1461
        %v1474 = vmul.f32 %v1448, %v1463
        %v1475 = vadd.f32 %v1473, %v1474
        %1476 = vst [vmem:[%s1453] sm:$0xff] %v1466
        %1477 = vst [vmem:[%s1455] sm:$0xff] %v1469
        %1478 = vst [vmem:[%s1457] sm:$0xff] %v1472
        %1479 = vst [vmem:[%s1459] sm:$0xff] %v1475
        %s1480 = smov [#allocation23]
        %s1481 = scalar_lea.vmem %s1480, 24
        %v1482 = vld [vmem:[%s1481] sm:$0xff]
        %s1483 = smov [#allocation24]
        %s1484 = scalar_lea.vmem %s1483, 24
        %v1485 = vld [vmem:[%s1484] sm:$0xff]
        %s1486 = smov [#allocation12]
        %s1487 = scalar_lea.vmem %s1486, 24
        %s1488 = smov [#allocation13]
        %s1489 = scalar_lea.vmem %s1488, 24
        %s1490 = smov [#allocation14]
        %s1491 = scalar_lea.vmem %s1490, 24
        %s1492 = smov [#allocation15]
        %s1493 = scalar_lea.vmem %s1492, 24
        %v1494 = vld [vmem:[%s1487] sm:$0xff]
        %v1495 = vld [vmem:[%s1489] sm:$0xff]
        %v1496 = vld [vmem:[%s1491] sm:$0xff]
        %v1497 = vld [vmem:[%s1493] sm:$0xff]
        %v1498 = vmul.f32 %v1482, %v1494
        %v1499 = vmul.f32 %v1485, %v1496
        %v1500 = vsub.f32 %v1498, %v1499
        %v1501 = vmul.f32 %v1482, %v1495
        %v1502 = vmul.f32 %v1485, %v1497
        %v1503 = vsub.f32 %v1501, %v1502
        %v1504 = vmul.f32 %v1485, %v1494
        %v1505 = vmul.f32 %v1482, %v1496
        %v1506 = vadd.f32 %v1504, %v1505
        %v1507 = vmul.f32 %v1485, %v1495
        %v1508 = vmul.f32 %v1482, %v1497
        %v1509 = vadd.f32 %v1507, %v1508
        %1510 = vst [vmem:[%s1487] sm:$0xff] %v1500
        %1511 = vst [vmem:[%s1489] sm:$0xff] %v1503
        %1512 = vst [vmem:[%s1491] sm:$0xff] %v1506
        %1513 = vst [vmem:[%s1493] sm:$0xff] %v1509
        %s1514 = smov [#allocation23]
        %s1515 = scalar_lea.vmem %s1514, 32
        %v1516 = vld [vmem:[%s1515] sm:$0xff]
        %s1517 = smov [#allocation24]
        %s1518 = scalar_lea.vmem %s1517, 32
        %v1519 = vld [vmem:[%s1518] sm:$0xff]
        %s1520 = smov [#allocation12]
        %s1521 = scalar_lea.vmem %s1520, 32
        %s1522 = smov [#allocation13]
        %s1523 = scalar_lea.vmem %s1522, 32
        %s1524 = smov [#allocation14]
        %s1525 = scalar_lea.vmem %s1524, 32
        %s1526 = smov [#allocation15]
        %s1527 = scalar_lea.vmem %s1526, 32
        %v1528 = vld [vmem:[%s1521] sm:$0xff]
        %v1529 = vld [vmem:[%s1523] sm:$0xff]
        %v1530 = vld [vmem:[%s1525] sm:$0xff]
        %v1531 = vld [vmem:[%s1527] sm:$0xff]
        %v1532 = vmul.f32 %v1516, %v1528
        %v1533 = vmul.f32 %v1519, %v1530
        %v1534 = vsub.f32 %v1532, %v1533
        %v1535 = vmul.f32 %v1516, %v1529
        %v1536 = vmul.f32 %v1519, %v1531
        %v1537 = vsub.f32 %v1535, %v1536
        %v1538 = vmul.f32 %v1519, %v1528
        %v1539 = vmul.f32 %v1516, %v1530
        %v1540 = vadd.f32 %v1538, %v1539
        %v1541 = vmul.f32 %v1519, %v1529
        %v1542 = vmul.f32 %v1516, %v1531
        %v1543 = vadd.f32 %v1541, %v1542
        %1544 = vst [vmem:[%s1521] sm:$0xff] %v1534
        %1545 = vst [vmem:[%s1523] sm:$0xff] %v1537
        %1546 = vst [vmem:[%s1525] sm:$0xff] %v1540
        %1547 = vst [vmem:[%s1527] sm:$0xff] %v1543
        %s1548 = smov [#allocation23]
        %s1549 = scalar_lea.vmem %s1548, 40
        %v1550 = vld [vmem:[%s1549] sm:$0xff]
        %s1551 = smov [#allocation24]
        %s1552 = scalar_lea.vmem %s1551, 40
        %v1553 = vld [vmem:[%s1552] sm:$0xff]
        %s1554 = smov [#allocation12]
        %s1555 = scalar_lea.vmem %s1554, 40
        %s1556 = smov [#allocation13]
        %s1557 = scalar_lea.vmem %s1556, 40
        %s1558 = smov [#allocation14]
        %s1559 = scalar_lea.vmem %s1558, 40
        %s1560 = smov [#allocation15]
        %s1561 = scalar_lea.vmem %s1560, 40
        %v1562 = vld [vmem:[%s1555] sm:$0xff]
        %v1563 = vld [vmem:[%s1557] sm:$0xff]
        %v1564 = vld [vmem:[%s1559] sm:$0xff]
        %v1565 = vld [vmem:[%s1561] sm:$0xff]
        %v1566 = vmul.f32 %v1550, %v1562
        %v1567 = vmul.f32 %v1553, %v1564
        %v1568 = vsub.f32 %v1566, %v1567
        %v1569 = vmul.f32 %v1550, %v1563
        %v1570 = vmul.f32 %v1553, %v1565
        %v1571 = vsub.f32 %v1569, %v1570
        %v1572 = vmul.f32 %v1553, %v1562
        %v1573 = vmul.f32 %v1550, %v1564
        %v1574 = vadd.f32 %v1572, %v1573
        %v1575 = vmul.f32 %v1553, %v1563
        %v1576 = vmul.f32 %v1550, %v1565
        %v1577 = vadd.f32 %v1575, %v1576
        %1578 = vst [vmem:[%s1555] sm:$0xff] %v1568
        %1579 = vst [vmem:[%s1557] sm:$0xff] %v1571
        %1580 = vst [vmem:[%s1559] sm:$0xff] %v1574
        %1581 = vst [vmem:[%s1561] sm:$0xff] %v1577
        %s1582 = smov [#allocation23]
        %s1583 = scalar_lea.vmem %s1582, 48
        %v1584 = vld [vmem:[%s1583] sm:$0xff]
        %s1585 = smov [#allocation24]
        %s1586 = scalar_lea.vmem %s1585, 48
        %v1587 = vld [vmem:[%s1586] sm:$0xff]
        %s1588 = smov [#allocation12]
        %s1589 = scalar_lea.vmem %s1588, 48
        %s1590 = smov [#allocation13]
        %s1591 = scalar_lea.vmem %s1590, 48
        %s1592 = smov [#allocation14]
        %s1593 = scalar_lea.vmem %s1592, 48
        %s1594 = smov [#allocation15]
        %s1595 = scalar_lea.vmem %s1594, 48
        %v1596 = vld [vmem:[%s1589] sm:$0xff]
        %v1597 = vld [vmem:[%s1591] sm:$0xff]
        %v1598 = vld [vmem:[%s1593] sm:$0xff]
        %v1599 = vld [vmem:[%s1595] sm:$0xff]
        %v1600 = vmul.f32 %v1584, %v1596
        %v1601 = vmul.f32 %v1587, %v1598
        %v1602 = vsub.f32 %v1600, %v1601
        %v1603 = vmul.f32 %v1584, %v1597
        %v1604 = vmul.f32 %v1587, %v1599
        %v1605 = vsub.f32 %v1603, %v1604
        %v1606 = vmul.f32 %v1587, %v1596
        %v1607 = vmul.f32 %v1584, %v1598
        %v1608 = vadd.f32 %v1606, %v1607
        %v1609 = vmul.f32 %v1587, %v1597
        %v1610 = vmul.f32 %v1584, %v1599
        %v1611 = vadd.f32 %v1609, %v1610
        %1612 = vst [vmem:[%s1589] sm:$0xff] %v1602
        %1613 = vst [vmem:[%s1591] sm:$0xff] %v1605
        %1614 = vst [vmem:[%s1593] sm:$0xff] %v1608
        %1615 = vst [vmem:[%s1595] sm:$0xff] %v1611
        %s1616 = smov [#allocation23]
        %s1617 = scalar_lea.vmem %s1616, 56
        %v1618 = vld [vmem:[%s1617] sm:$0xff]
        %s1619 = smov [#allocation24]
        %s1620 = scalar_lea.vmem %s1619, 56
        %v1621 = vld [vmem:[%s1620] sm:$0xff]
        %s1622 = smov [#allocation12]
        %s1623 = scalar_lea.vmem %s1622, 56
        %s1624 = smov [#allocation13]
        %s1625 = scalar_lea.vmem %s1624, 56
        %s1626 = smov [#allocation14]
        %s1627 = scalar_lea.vmem %s1626, 56
        %s1628 = smov [#allocation15]
        %s1629 = scalar_lea.vmem %s1628, 56
        %v1630 = vld [vmem:[%s1623] sm:$0xff]
        %v1631 = vld [vmem:[%s1625] sm:$0xff]
        %v1632 = vld [vmem:[%s1627] sm:$0xff]
        %v1633 = vld [vmem:[%s1629] sm:$0xff]
        %v1634 = vmul.f32 %v1618, %v1630
        %v1635 = vmul.f32 %v1621, %v1632
        %v1636 = vsub.f32 %v1634, %v1635
        %v1637 = vmul.f32 %v1618, %v1631
        %v1638 = vmul.f32 %v1621, %v1633
        %v1639 = vsub.f32 %v1637, %v1638
        %v1640 = vmul.f32 %v1621, %v1630
        %v1641 = vmul.f32 %v1618, %v1632
        %v1642 = vadd.f32 %v1640, %v1641
        %v1643 = vmul.f32 %v1621, %v1631
        %v1644 = vmul.f32 %v1618, %v1633
        %v1645 = vadd.f32 %v1643, %v1644
        %1646 = vst [vmem:[%s1623] sm:$0xff] %v1636
        %1647 = vst [vmem:[%s1625] sm:$0xff] %v1639
        %1648 = vst [vmem:[%s1627] sm:$0xff] %v1642
        %1649 = vst [vmem:[%s1629] sm:$0xff] %v1645
        %s1650 = smov [#allocation21]
        %v1651 = vld [vmem:[%s1650] ss:$0 sm:$0xff]
        %s1652 = smov [#allocation22]
        %v1653 = vld [vmem:[%s1652] ss:$0 sm:$0xff]
        %s1654 = smov [#allocation12]
        %s1655 = smov [#allocation13]
        %s1656 = smov [#allocation14]
        %s1657 = smov [#allocation15]
        %v1658 = vld [vmem:[%s1654] sm:$0xff]
        %v1659 = vld [vmem:[%s1655] sm:$0xff]
        %v1660 = vld [vmem:[%s1656] sm:$0xff]
        %v1661 = vld [vmem:[%s1657] sm:$0xff]
        %v1662 = vmul.f32 %v1651, %v1658
        %v1663 = vmul.f32 %v1653, %v1659
        %v1664 = vsub.f32 %v1662, %v1663
        %v1665 = vmul.f32 %v1653, %v1658
        %v1666 = vmul.f32 %v1651, %v1659
        %v1667 = vadd.f32 %v1665, %v1666
        %v1668 = vmul.f32 %v1651, %v1660
        %v1669 = vmul.f32 %v1653, %v1661
        %v1670 = vsub.f32 %v1668, %v1669
        %v1671 = vmul.f32 %v1653, %v1660
        %v1672 = vmul.f32 %v1651, %v1661
        %v1673 = vadd.f32 %v1671, %v1672
        %1674 = vst [vmem:[%s1654] sm:$0xff] %v1664
        %1675 = vst [vmem:[%s1655] sm:$0xff] %v1667
        %1676 = vst [vmem:[%s1656] sm:$0xff] %v1670
        %1677 = vst [vmem:[%s1657] sm:$0xff] %v1673
        %s1678 = smov [#allocation12]
        %s1679 = scalar_lea.vmem %s1678, 8
        %s1680 = smov [#allocation13]
        %s1681 = scalar_lea.vmem %s1680, 8
        %s1682 = smov [#allocation14]
        %s1683 = scalar_lea.vmem %s1682, 8
        %s1684 = smov [#allocation15]
        %s1685 = scalar_lea.vmem %s1684, 8
        %v1686 = vld [vmem:[%s1679] sm:$0xff]
        %v1687 = vld [vmem:[%s1681] sm:$0xff]
        %v1688 = vld [vmem:[%s1683] sm:$0xff]
        %v1689 = vld [vmem:[%s1685] sm:$0xff]
        %v1690 = vmul.f32 %v1651, %v1686
        %v1691 = vmul.f32 %v1653, %v1687
        %v1692 = vsub.f32 %v1690, %v1691
        %v1693 = vmul.f32 %v1653, %v1686
        %v1694 = vmul.f32 %v1651, %v1687
        %v1695 = vadd.f32 %v1693, %v1694
        %v1696 = vmul.f32 %v1651, %v1688
        %v1697 = vmul.f32 %v1653, %v1689
        %v1698 = vsub.f32 %v1696, %v1697
        %v1699 = vmul.f32 %v1653, %v1688
        %v1700 = vmul.f32 %v1651, %v1689
        %v1701 = vadd.f32 %v1699, %v1700
        %1702 = vst [vmem:[%s1679] sm:$0xff] %v1692
        %1703 = vst [vmem:[%s1681] sm:$0xff] %v1695
        %1704 = vst [vmem:[%s1683] sm:$0xff] %v1698
        %1705 = vst [vmem:[%s1685] sm:$0xff] %v1701
        %s1706 = smov [#allocation12]
        %s1707 = scalar_lea.vmem %s1706, 16
        %s1708 = smov [#allocation13]
        %s1709 = scalar_lea.vmem %s1708, 16
        %s1710 = smov [#allocation14]
        %s1711 = scalar_lea.vmem %s1710, 16
        %s1712 = smov [#allocation15]
        %s1713 = scalar_lea.vmem %s1712, 16
        %v1714 = vld [vmem:[%s1707] sm:$0xff]
        %v1715 = vld [vmem:[%s1709] sm:$0xff]
        %v1716 = vld [vmem:[%s1711] sm:$0xff]
        %v1717 = vld [vmem:[%s1713] sm:$0xff]
        %v1718 = vmul.f32 %v1651, %v1714
        %v1719 = vmul.f32 %v1653, %v1715
        %v1720 = vsub.f32 %v1718, %v1719
        %v1721 = vmul.f32 %v1653, %v1714
        %v1722 = vmul.f32 %v1651, %v1715
        %v1723 = vadd.f32 %v1721, %v1722
        %v1724 = vmul.f32 %v1651, %v1716
        %v1725 = vmul.f32 %v1653, %v1717
        %v1726 = vsub.f32 %v1724, %v1725
        %v1727 = vmul.f32 %v1653, %v1716
        %v1728 = vmul.f32 %v1651, %v1717
        %v1729 = vadd.f32 %v1727, %v1728
        %1730 = vst [vmem:[%s1707] sm:$0xff] %v1720
        %1731 = vst [vmem:[%s1709] sm:$0xff] %v1723
        %1732 = vst [vmem:[%s1711] sm:$0xff] %v1726
        %1733 = vst [vmem:[%s1713] sm:$0xff] %v1729
        %s1734 = smov [#allocation12]
        %s1735 = scalar_lea.vmem %s1734, 24
        %s1736 = smov [#allocation13]
        %s1737 = scalar_lea.vmem %s1736, 24
        %s1738 = smov [#allocation14]
        %s1739 = scalar_lea.vmem %s1738, 24
        %s1740 = smov [#allocation15]
        %s1741 = scalar_lea.vmem %s1740, 24
        %v1742 = vld [vmem:[%s1735] sm:$0xff]
        %v1743 = vld [vmem:[%s1737] sm:$0xff]
        %v1744 = vld [vmem:[%s1739] sm:$0xff]
        %v1745 = vld [vmem:[%s1741] sm:$0xff]
        %v1746 = vmul.f32 %v1651, %v1742
        %v1747 = vmul.f32 %v1653, %v1743
        %v1748 = vsub.f32 %v1746, %v1747
        %v1749 = vmul.f32 %v1653, %v1742
        %v1750 = vmul.f32 %v1651, %v1743
        %v1751 = vadd.f32 %v1749, %v1750
        %v1752 = vmul.f32 %v1651, %v1744
        %v1753 = vmul.f32 %v1653, %v1745
        %v1754 = vsub.f32 %v1752, %v1753
        %v1755 = vmul.f32 %v1653, %v1744
        %v1756 = vmul.f32 %v1651, %v1745
        %v1757 = vadd.f32 %v1755, %v1756
        %1758 = vst [vmem:[%s1735] sm:$0xff] %v1748
        %1759 = vst [vmem:[%s1737] sm:$0xff] %v1751
        %1760 = vst [vmem:[%s1739] sm:$0xff] %v1754
        %1761 = vst [vmem:[%s1741] sm:$0xff] %v1757
        %s1762 = smov [#allocation12]
        %s1763 = scalar_lea.vmem %s1762, 32
        %s1764 = smov [#allocation13]
        %s1765 = scalar_lea.vmem %s1764, 32
        %s1766 = smov [#allocation14]
        %s1767 = scalar_lea.vmem %s1766, 32
        %s1768 = smov [#allocation15]
        %s1769 = scalar_lea.vmem %s1768, 32
        %v1770 = vld [vmem:[%s1763] sm:$0xff]
        %v1771 = vld [vmem:[%s1765] sm:$0xff]
        %v1772 = vld [vmem:[%s1767] sm:$0xff]
        %v1773 = vld [vmem:[%s1769] sm:$0xff]
        %v1774 = vmul.f32 %v1651, %v1770
        %v1775 = vmul.f32 %v1653, %v1771
        %v1776 = vsub.f32 %v1774, %v1775
        %v1777 = vmul.f32 %v1653, %v1770
        %v1778 = vmul.f32 %v1651, %v1771
        %v1779 = vadd.f32 %v1777, %v1778
        %v1780 = vmul.f32 %v1651, %v1772
        %v1781 = vmul.f32 %v1653, %v1773
        %v1782 = vsub.f32 %v1780, %v1781
        %v1783 = vmul.f32 %v1653, %v1772
        %v1784 = vmul.f32 %v1651, %v1773
        %v1785 = vadd.f32 %v1783, %v1784
        %1786 = vst [vmem:[%s1763] sm:$0xff] %v1776
        %1787 = vst [vmem:[%s1765] sm:$0xff] %v1779
        %1788 = vst [vmem:[%s1767] sm:$0xff] %v1782
        %1789 = vst [vmem:[%s1769] sm:$0xff] %v1785
        %s1790 = smov [#allocation12]
        %s1791 = scalar_lea.vmem %s1790, 40
        %s1792 = smov [#allocation13]
        %s1793 = scalar_lea.vmem %s1792, 40
        %s1794 = smov [#allocation14]
        %s1795 = scalar_lea.vmem %s1794, 40
        %s1796 = smov [#allocation15]
        %s1797 = scalar_lea.vmem %s1796, 40
        %v1798 = vld [vmem:[%s1791] sm:$0xff]
        %v1799 = vld [vmem:[%s1793] sm:$0xff]
        %v1800 = vld [vmem:[%s1795] sm:$0xff]
        %v1801 = vld [vmem:[%s1797] sm:$0xff]
        %v1802 = vmul.f32 %v1651, %v1798
        %v1803 = vmul.f32 %v1653, %v1799
        %v1804 = vsub.f32 %v1802, %v1803
        %v1805 = vmul.f32 %v1653, %v1798
        %v1806 = vmul.f32 %v1651, %v1799
        %v1807 = vadd.f32 %v1805, %v1806
        %v1808 = vmul.f32 %v1651, %v1800
        %v1809 = vmul.f32 %v1653, %v1801
        %v1810 = vsub.f32 %v1808, %v1809
        %v1811 = vmul.f32 %v1653, %v1800
        %v1812 = vmul.f32 %v1651, %v1801
        %v1813 = vadd.f32 %v1811, %v1812
        %1814 = vst [vmem:[%s1791] sm:$0xff] %v1804
        %1815 = vst [vmem:[%s1793] sm:$0xff] %v1807
        %1816 = vst [vmem:[%s1795] sm:$0xff] %v1810
        %1817 = vst [vmem:[%s1797] sm:$0xff] %v1813
        %s1818 = smov [#allocation12]
        %s1819 = scalar_lea.vmem %s1818, 48
        %s1820 = smov [#allocation13]
        %s1821 = scalar_lea.vmem %s1820, 48
        %s1822 = smov [#allocation14]
        %s1823 = scalar_lea.vmem %s1822, 48
        %s1824 = smov [#allocation15]
        %s1825 = scalar_lea.vmem %s1824, 48
        %v1826 = vld [vmem:[%s1819] sm:$0xff]
        %v1827 = vld [vmem:[%s1821] sm:$0xff]
        %v1828 = vld [vmem:[%s1823] sm:$0xff]
        %v1829 = vld [vmem:[%s1825] sm:$0xff]
        %v1830 = vmul.f32 %v1651, %v1826
        %v1831 = vmul.f32 %v1653, %v1827
        %v1832 = vsub.f32 %v1830, %v1831
        %v1833 = vmul.f32 %v1653, %v1826
        %v1834 = vmul.f32 %v1651, %v1827
        %v1835 = vadd.f32 %v1833, %v1834
        %v1836 = vmul.f32 %v1651, %v1828
        %v1837 = vmul.f32 %v1653, %v1829
        %v1838 = vsub.f32 %v1836, %v1837
        %v1839 = vmul.f32 %v1653, %v1828
        %v1840 = vmul.f32 %v1651, %v1829
        %v1841 = vadd.f32 %v1839, %v1840
        %1842 = vst [vmem:[%s1819] sm:$0xff] %v1832
        %1843 = vst [vmem:[%s1821] sm:$0xff] %v1835
        %1844 = vst [vmem:[%s1823] sm:$0xff] %v1838
        %1845 = vst [vmem:[%s1825] sm:$0xff] %v1841
        %s1846 = smov [#allocation12]
        %s1847 = scalar_lea.vmem %s1846, 56
        %s1848 = smov [#allocation13]
        %s1849 = scalar_lea.vmem %s1848, 56
        %s1850 = smov [#allocation14]
        %s1851 = scalar_lea.vmem %s1850, 56
        %s1852 = smov [#allocation15]
        %s1853 = scalar_lea.vmem %s1852, 56
        %v1854 = vld [vmem:[%s1847] sm:$0xff]
        %v1855 = vld [vmem:[%s1849] sm:$0xff]
        %v1856 = vld [vmem:[%s1851] sm:$0xff]
        %v1857 = vld [vmem:[%s1853] sm:$0xff]
        %v1858 = vmul.f32 %v1651, %v1854
        %v1859 = vmul.f32 %v1653, %v1855
        %v1860 = vsub.f32 %v1858, %v1859
        %v1861 = vmul.f32 %v1653, %v1854
        %v1862 = vmul.f32 %v1651, %v1855
        %v1863 = vadd.f32 %v1861, %v1862
        %v1864 = vmul.f32 %v1651, %v1856
        %v1865 = vmul.f32 %v1653, %v1857
        %v1866 = vsub.f32 %v1864, %v1865
        %v1867 = vmul.f32 %v1653, %v1856
        %v1868 = vmul.f32 %v1651, %v1857
        %v1869 = vadd.f32 %v1867, %v1868
        %1870 = vst [vmem:[%s1847] sm:$0xff] %v1860
        %1871 = vst [vmem:[%s1849] sm:$0xff] %v1863
        %1872 = vst [vmem:[%s1851] sm:$0xff] %v1866
        %1873 = vst [vmem:[%s1853] sm:$0xff] %v1869
        %s1874 = smov [#allocation12]
        %s1875 = smov [#allocation19]
        %v1876 = vlaneseq
        %v1877 = vand.u32 %v1876, 127
        %v1878 = vmov %v1877
        %v1879 = vlaneseq
        %v1880 = vshrl.u32 %v1879, 7
        %v1881 = vmov %v1880
        %v1882 = vld [vmem:[%s1875] ss:$0 sm:$0xff]
        %v1883 = vld [vmem:[%s1874] sm:$0xff]
        %vm1886 = vcmp.eq.s32.totalorder %v1881, %v1878
        %v1887 = vsel %vm1886, %v1882, %v1883
        %1888 = vst [vmem:[%s1874] sm:$0xff] %v1887
        %v1889 = vld [vmem:[%s1875] ss:$0 sm:$0xff]
        %s1890 = scalar_lea.vmem %s1874, 8
        %v1891 = vld [vmem:[%s1890] sm:$0xff]
        %v1893 = vadd.s32 %v1881, 8
        %vm1894 = vcmp.eq.s32.totalorder %v1893, %v1878
        %v1895 = vsel %vm1894, %v1889, %v1891
        %1896 = vst [vmem:[%s1890] sm:$0xff] %v1895
        %v1897 = vld [vmem:[%s1875] ss:$0 sm:$0xff]
        %s1898 = scalar_lea.vmem %s1874, 16
        %v1899 = vld [vmem:[%s1898] sm:$0xff]
        %v1901 = vadd.s32 %v1881, 16
        %vm1902 = vcmp.eq.s32.totalorder %v1901, %v1878
        %v1903 = vsel %vm1902, %v1897, %v1899
        %1904 = vst [vmem:[%s1898] sm:$0xff] %v1903
        %v1905 = vld [vmem:[%s1875] ss:$0 sm:$0xff]
        %s1906 = scalar_lea.vmem %s1874, 24
        %v1907 = vld [vmem:[%s1906] sm:$0xff]
        %v1909 = vadd.s32 %v1881, 24
        %vm1910 = vcmp.eq.s32.totalorder %v1909, %v1878
        %v1911 = vsel %vm1910, %v1905, %v1907
        %1912 = vst [vmem:[%s1906] sm:$0xff] %v1911
        %v1913 = vld [vmem:[%s1875] ss:$0 sm:$0xff]
        %s1914 = scalar_lea.vmem %s1874, 32
        %v1915 = vld [vmem:[%s1914] sm:$0xff]
        %v1917 = vadd.s32 %v1881, 32
        %vm1918 = vcmp.eq.s32.totalorder %v1917, %v1878
        %v1919 = vsel %vm1918, %v1913, %v1915
        %1920 = vst [vmem:[%s1914] sm:$0xff] %v1919
        %v1921 = vld [vmem:[%s1875] ss:$0 sm:$0xff]
        %s1922 = scalar_lea.vmem %s1874, 40
        %v1923 = vld [vmem:[%s1922] sm:$0xff]
        %v1925 = vadd.s32 %v1881, 40
        %vm1926 = vcmp.eq.s32.totalorder %v1925, %v1878
        %v1927 = vsel %vm1926, %v1921, %v1923
        %1928 = vst [vmem:[%s1922] sm:$0xff] %v1927
        %v1929 = vld [vmem:[%s1875] ss:$0 sm:$0xff]
        %s1930 = scalar_lea.vmem %s1874, 48
        %v1931 = vld [vmem:[%s1930] sm:$0xff]
        %v1933 = vadd.s32 %v1881, 48
        %vm1934 = vcmp.eq.s32.totalorder %v1933, %v1878
        %v1935 = vsel %vm1934, %v1929, %v1931
        %1936 = vst [vmem:[%s1930] sm:$0xff] %v1935
        %v1937 = vld [vmem:[%s1875] ss:$0 sm:$0xff]
        %s1938 = scalar_lea.vmem %s1874, 56
        %v1939 = vld [vmem:[%s1938] sm:$0xff]
        %v1941 = vadd.s32 %v1881, 56
        %vm1942 = vcmp.eq.s32.totalorder %v1941, %v1878
        %v1943 = vsel %vm1942, %v1937, %v1939
        %1944 = vst [vmem:[%s1938] sm:$0xff] %v1943
        %s1945 = smov [#allocation13]
        %v1946 = vlaneseq
        %v1947 = vand.u32 %v1946, 127
        %v1948 = vmov %v1947
        %v1949 = vlaneseq
        %v1950 = vshrl.u32 %v1949, 7
        %v1951 = vmov %v1950
        %v1952 = vld [vmem:[%s1945] sm:$0xff]
        %vm1955 = vcmp.eq.s32.totalorder %v1951, %v1948
        %v1956 = vsel %vm1955, 0.0, %v1952
        %1957 = vst [vmem:[%s1945] sm:$0xff] %v1956
        %s1958 = scalar_lea.vmem %s1945, 8
        %v1959 = vld [vmem:[%s1958] sm:$0xff]
        %v1961 = vadd.s32 %v1951, 8
        %vm1962 = vcmp.eq.s32.totalorder %v1961, %v1948
        %v1963 = vsel %vm1962, 0.0, %v1959
        %1964 = vst [vmem:[%s1958] sm:$0xff] %v1963
        %s1965 = scalar_lea.vmem %s1945, 16
        %v1966 = vld [vmem:[%s1965] sm:$0xff]
        %v1968 = vadd.s32 %v1951, 16
        %vm1969 = vcmp.eq.s32.totalorder %v1968, %v1948
        %v1970 = vsel %vm1969, 0.0, %v1966
        %1971 = vst [vmem:[%s1965] sm:$0xff] %v1970
        %s1972 = scalar_lea.vmem %s1945, 24
        %v1973 = vld [vmem:[%s1972] sm:$0xff]
        %v1975 = vadd.s32 %v1951, 24
        %vm1976 = vcmp.eq.s32.totalorder %v1975, %v1948
        %v1977 = vsel %vm1976, 0.0, %v1973
        %1978 = vst [vmem:[%s1972] sm:$0xff] %v1977
        %s1979 = scalar_lea.vmem %s1945, 32
        %v1980 = vld [vmem:[%s1979] sm:$0xff]
        %v1982 = vadd.s32 %v1951, 32
        %vm1983 = vcmp.eq.s32.totalorder %v1982, %v1948
        %v1984 = vsel %vm1983, 0.0, %v1980
        %1985 = vst [vmem:[%s1979] sm:$0xff] %v1984
        %s1986 = scalar_lea.vmem %s1945, 40
        %v1987 = vld [vmem:[%s1986] sm:$0xff]
        %v1989 = vadd.s32 %v1951, 40
        %vm1990 = vcmp.eq.s32.totalorder %v1989, %v1948
        %v1991 = vsel %vm1990, 0.0, %v1987
        %1992 = vst [vmem:[%s1986] sm:$0xff] %v1991
        %s1993 = scalar_lea.vmem %s1945, 48
        %v1994 = vld [vmem:[%s1993] sm:$0xff]
        %v1996 = vadd.s32 %v1951, 48
        %vm1997 = vcmp.eq.s32.totalorder %v1996, %v1948
        %v1998 = vsel %vm1997, 0.0, %v1994
        %1999 = vst [vmem:[%s1993] sm:$0xff] %v1998
        %s2000 = scalar_lea.vmem %s1945, 56
        %v2001 = vld [vmem:[%s2000] sm:$0xff]
        %v2003 = vadd.s32 %v1951, 56
        %vm2004 = vcmp.eq.s32.totalorder %v2003, %v1948
        %v2005 = vsel %vm2004, 0.0, %v2001
        %2006 = vst [vmem:[%s2000] sm:$0xff] %v2005
        %s2007 = smov [#allocation14]
        %v2008 = vlaneseq
        %v2009 = vand.u32 %v2008, 127
        %v2010 = vmov %v2009
        %v2011 = vlaneseq
        %v2012 = vshrl.u32 %v2011, 7
        %v2013 = vmov %v2012
        %v2014 = vld [vmem:[%s2007] sm:$0xff]
        %vm2017 = vcmp.eq.s32.totalorder %v2013, %v2010
        %v2018 = vsel %vm2017, 0.0, %v2014
        %2019 = vst [vmem:[%s2007] sm:$0xff] %v2018
        %s2020 = scalar_lea.vmem %s2007, 8
        %v2021 = vld [vmem:[%s2020] sm:$0xff]
        %v2023 = vadd.s32 %v2013, 8
        %vm2024 = vcmp.eq.s32.totalorder %v2023, %v2010
        %v2025 = vsel %vm2024, 0.0, %v2021
        %2026 = vst [vmem:[%s2020] sm:$0xff] %v2025
        %s2027 = scalar_lea.vmem %s2007, 16
        %v2028 = vld [vmem:[%s2027] sm:$0xff]
        %v2030 = vadd.s32 %v2013, 16
        %vm2031 = vcmp.eq.s32.totalorder %v2030, %v2010
        %v2032 = vsel %vm2031, 0.0, %v2028
        %2033 = vst [vmem:[%s2027] sm:$0xff] %v2032
        %s2034 = scalar_lea.vmem %s2007, 24
        %v2035 = vld [vmem:[%s2034] sm:$0xff]
        %v2037 = vadd.s32 %v2013, 24
        %vm2038 = vcmp.eq.s32.totalorder %v2037, %v2010
        %v2039 = vsel %vm2038, 0.0, %v2035
        %2040 = vst [vmem:[%s2034] sm:$0xff] %v2039
        %s2041 = scalar_lea.vmem %s2007, 32
        %v2042 = vld [vmem:[%s2041] sm:$0xff]
        %v2044 = vadd.s32 %v2013, 32
        %vm2045 = vcmp.eq.s32.totalorder %v2044, %v2010
        %v2046 = vsel %vm2045, 0.0, %v2042
        %2047 = vst [vmem:[%s2041] sm:$0xff] %v2046
        %s2048 = scalar_lea.vmem %s2007, 40
        %v2049 = vld [vmem:[%s2048] sm:$0xff]
        %v2051 = vadd.s32 %v2013, 40
        %vm2052 = vcmp.eq.s32.totalorder %v2051, %v2010
        %v2053 = vsel %vm2052, 0.0, %v2049
        %2054 = vst [vmem:[%s2048] sm:$0xff] %v2053
        %s2055 = scalar_lea.vmem %s2007, 48
        %v2056 = vld [vmem:[%s2055] sm:$0xff]
        %v2058 = vadd.s32 %v2013, 48
        %vm2059 = vcmp.eq.s32.totalorder %v2058, %v2010
        %v2060 = vsel %vm2059, 0.0, %v2056
        %2061 = vst [vmem:[%s2055] sm:$0xff] %v2060
        %s2062 = scalar_lea.vmem %s2007, 56
        %v2063 = vld [vmem:[%s2062] sm:$0xff]
        %v2065 = vadd.s32 %v2013, 56
        %vm2066 = vcmp.eq.s32.totalorder %v2065, %v2010
        %v2067 = vsel %vm2066, 0.0, %v2063
        %2068 = vst [vmem:[%s2062] sm:$0xff] %v2067
        %s2069 = smov [#allocation15]
        %s2070 = smov [#allocation20]
        %v2071 = vlaneseq
        %v2072 = vand.u32 %v2071, 127
        %v2073 = vmov %v2072
        %v2074 = vlaneseq
        %v2075 = vshrl.u32 %v2074, 7
        %v2076 = vmov %v2075
        %v2077 = vld [vmem:[%s2070] ss:$0 sm:$0xff]
        %v2078 = vld [vmem:[%s2069] sm:$0xff]
        %vm2081 = vcmp.eq.s32.totalorder %v2076, %v2073
        %v2082 = vsel %vm2081, %v2077, %v2078
        %2083 = vst [vmem:[%s2069] sm:$0xff] %v2082
        %v2084 = vld [vmem:[%s2070] ss:$0 sm:$0xff]
        %s2085 = scalar_lea.vmem %s2069, 8
        %v2086 = vld [vmem:[%s2085] sm:$0xff]
        %v2088 = vadd.s32 %v2076, 8
        %vm2089 = vcmp.eq.s32.totalorder %v2088, %v2073
        %v2090 = vsel %vm2089, %v2084, %v2086
        %2091 = vst [vmem:[%s2085] sm:$0xff] %v2090
        %v2092 = vld [vmem:[%s2070] ss:$0 sm:$0xff]
        %s2093 = scalar_lea.vmem %s2069, 16
        %v2094 = vld [vmem:[%s2093] sm:$0xff]
        %v2096 = vadd.s32 %v2076, 16
        %vm2097 = vcmp.eq.s32.totalorder %v2096, %v2073
        %v2098 = vsel %vm2097, %v2092, %v2094
        %2099 = vst [vmem:[%s2093] sm:$0xff] %v2098
        %v2100 = vld [vmem:[%s2070] ss:$0 sm:$0xff]
        %s2101 = scalar_lea.vmem %s2069, 24
        %v2102 = vld [vmem:[%s2101] sm:$0xff]
        %v2104 = vadd.s32 %v2076, 24
        %vm2105 = vcmp.eq.s32.totalorder %v2104, %v2073
        %v2106 = vsel %vm2105, %v2100, %v2102
        %2107 = vst [vmem:[%s2101] sm:$0xff] %v2106
        %v2108 = vld [vmem:[%s2070] ss:$0 sm:$0xff]
        %s2109 = scalar_lea.vmem %s2069, 32
        %v2110 = vld [vmem:[%s2109] sm:$0xff]
        %v2112 = vadd.s32 %v2076, 32
        %vm2113 = vcmp.eq.s32.totalorder %v2112, %v2073
        %v2114 = vsel %vm2113, %v2108, %v2110
        %2115 = vst [vmem:[%s2109] sm:$0xff] %v2114
        %v2116 = vld [vmem:[%s2070] ss:$0 sm:$0xff]
        %s2117 = scalar_lea.vmem %s2069, 40
        %v2118 = vld [vmem:[%s2117] sm:$0xff]
        %v2120 = vadd.s32 %v2076, 40
        %vm2121 = vcmp.eq.s32.totalorder %v2120, %v2073
        %v2122 = vsel %vm2121, %v2116, %v2118
        %2123 = vst [vmem:[%s2117] sm:$0xff] %v2122
        %v2124 = vld [vmem:[%s2070] ss:$0 sm:$0xff]
        %s2125 = scalar_lea.vmem %s2069, 48
        %v2126 = vld [vmem:[%s2125] sm:$0xff]
        %v2128 = vadd.s32 %v2076, 48
        %vm2129 = vcmp.eq.s32.totalorder %v2128, %v2073
        %v2130 = vsel %vm2129, %v2124, %v2126
        %2131 = vst [vmem:[%s2125] sm:$0xff] %v2130
        %v2132 = vld [vmem:[%s2070] ss:$0 sm:$0xff]
        %s2133 = scalar_lea.vmem %s2069, 56
        %v2134 = vld [vmem:[%s2133] sm:$0xff]
        %v2136 = vadd.s32 %v2076, 56
        %vm2137 = vcmp.eq.s32.totalorder %v2136, %v2073
        %v2138 = vsel %vm2137, %v2132, %v2134
        %2139 = vst [vmem:[%s2133] sm:$0xff] %v2138
        %s2140 = smov [#allocation12]
        %s2141 = smov [#allocation13]
        %v2142 = vld [vmem:[%s2141] sm:$0xff]
        %2143 = vrot.lane.b32.xlu0 %v2142, 1
        %v2144 = vpop.permute.xlu0 %2143
        %v2145 = vld [vmem:[%s2140] sm:$0xff]
        %v2146 = vld [vmem:[%s2140] sm:$0xff]
        %2147 = vrot.lane.b32.xlu0 %v2146, 1
        %v2148 = vpop.permute.xlu0 %2147
        %v2149 = vlaneseq
        %v2150 = vand.u32 %v2149, 127
        %vm2151 = vcmp.eq.s32.totalorder %v2150, 0
        %v2152 = vsel %vm2151, %v2146, %v2148
        %v2153 = vlaneseq
        %v2154 = vand.u32 %v2153, 127
        %vm2155 = vcmp.eq.s32.totalorder %v2154, 1
        %v2156 = vsel %vm2155, %v2144, %v2152
        %v2157 = vlaneseq
        %v2158 = vand.u32 %v2157, 127
        %vm2159 = vcmp.ge.s32.totalorder %v2158, 0
        %vm2160 = vcmp.lt.s32.totalorder %v2158, 64
        %vm2161 = vmand %vm2159, %vm2160
        %v2162 = vsel %vm2161, %v2156, 0.0
        %v2163 = vld [vmem:[%s2141] sm:$0xff]
        %2164 = vrot.lane.b32.xlu0 %v2163, 127
        %v2165 = vpop.permute.xlu0 %2164
        %v2166 = vlaneseq
        %v2167 = vand.u32 %v2166, 127
        %vm2168 = vcmp.eq.s32.totalorder %v2167, 63
        %v2169 = vsel %vm2168, %v2145, %v2165
        %s2170 = smov [#allocation12]
        %s2171 = scalar_lea.vmem %s2170, 8
        %s2172 = smov [#allocation13]
        %s2173 = scalar_lea.vmem %s2172, 8
        %v2174 = vld [vmem:[%s2173] sm:$0xff]
        %2175 = vrot.lane.b32.xlu0 %v2174, 1
        %v2176 = vpop.permute.xlu0 %2175
        %v2177 = vld [vmem:[%s2171] sm:$0xff]
        %v2178 = vld [vmem:[%s2171] sm:$0xff]
        %2179 = vrot.lane.b32.xlu0 %v2178, 1
        %v2180 = vpop.permute.xlu0 %2179
        %v2181 = vlaneseq
        %v2182 = vand.u32 %v2181, 127
        %vm2183 = vcmp.eq.s32.totalorder %v2182, 0
        %v2184 = vsel %vm2183, %v2178, %v2180
        %v2185 = vlaneseq
        %v2186 = vand.u32 %v2185, 127
        %vm2187 = vcmp.eq.s32.totalorder %v2186, 1
        %v2188 = vsel %vm2187, %v2176, %v2184
        %v2189 = vlaneseq
        %v2190 = vand.u32 %v2189, 127
        %vm2191 = vcmp.ge.s32.totalorder %v2190, 0
        %vm2192 = vcmp.lt.s32.totalorder %v2190, 64
        %vm2193 = vmand %vm2191, %vm2192
        %v2194 = vsel %vm2193, %v2188, 0.0
        %v2195 = vld [vmem:[%s2173] sm:$0xff]
        %2196 = vrot.lane.b32.xlu0 %v2195, 127
        %v2197 = vpop.permute.xlu0 %2196
        %v2198 = vlaneseq
        %v2199 = vand.u32 %v2198, 127
        %vm2200 = vcmp.eq.s32.totalorder %v2199, 63
        %v2201 = vsel %vm2200, %v2177, %v2197
        %s2202 = smov [#allocation12]
        %s2203 = scalar_lea.vmem %s2202, 16
        %s2204 = smov [#allocation13]
        %s2205 = scalar_lea.vmem %s2204, 16
        %v2206 = vld [vmem:[%s2205] sm:$0xff]
        %2207 = vrot.lane.b32.xlu0 %v2206, 1
        %v2208 = vpop.permute.xlu0 %2207
        %v2209 = vld [vmem:[%s2203] sm:$0xff]
        %v2210 = vld [vmem:[%s2203] sm:$0xff]
        %2211 = vrot.lane.b32.xlu0 %v2210, 1
        %v2212 = vpop.permute.xlu0 %2211
        %v2213 = vlaneseq
        %v2214 = vand.u32 %v2213, 127
        %vm2215 = vcmp.eq.s32.totalorder %v2214, 0
        %v2216 = vsel %vm2215, %v2210, %v2212
        %v2217 = vlaneseq
        %v2218 = vand.u32 %v2217, 127
        %vm2219 = vcmp.eq.s32.totalorder %v2218, 1
        %v2220 = vsel %vm2219, %v2208, %v2216
        %v2221 = vlaneseq
        %v2222 = vand.u32 %v2221, 127
        %vm2223 = vcmp.ge.s32.totalorder %v2222, 0
        %vm2224 = vcmp.lt.s32.totalorder %v2222, 64
        %vm2225 = vmand %vm2223, %vm2224
        %v2226 = vsel %vm2225, %v2220, 0.0
        %v2227 = vld [vmem:[%s2205] sm:$0xff]
        %2228 = vrot.lane.b32.xlu0 %v2227, 127
        %v2229 = vpop.permute.xlu0 %2228
        %v2230 = vlaneseq
        %v2231 = vand.u32 %v2230, 127
        %vm2232 = vcmp.eq.s32.totalorder %v2231, 63
        %v2233 = vsel %vm2232, %v2209, %v2229
        %s2234 = smov [#allocation12]
        %s2235 = scalar_lea.vmem %s2234, 24
        %s2236 = smov [#allocation13]
        %s2237 = scalar_lea.vmem %s2236, 24
        %v2238 = vld [vmem:[%s2237] sm:$0xff]
        %2239 = vrot.lane.b32.xlu0 %v2238, 1
        %v2240 = vpop.permute.xlu0 %2239
        %v2241 = vld [vmem:[%s2235] sm:$0xff]
        %v2242 = vld [vmem:[%s2235] sm:$0xff]
        %2243 = vrot.lane.b32.xlu0 %v2242, 1
        %v2244 = vpop.permute.xlu0 %2243
        %v2245 = vlaneseq
        %v2246 = vand.u32 %v2245, 127
        %vm2247 = vcmp.eq.s32.totalorder %v2246, 0
        %v2248 = vsel %vm2247, %v2242, %v2244
        %v2249 = vlaneseq
        %v2250 = vand.u32 %v2249, 127
        %vm2251 = vcmp.eq.s32.totalorder %v2250, 1
        %v2252 = vsel %vm2251, %v2240, %v2248
        %v2253 = vlaneseq
        %v2254 = vand.u32 %v2253, 127
        %vm2255 = vcmp.ge.s32.totalorder %v2254, 0
        %vm2256 = vcmp.lt.s32.totalorder %v2254, 64
        %vm2257 = vmand %vm2255, %vm2256
        %v2258 = vsel %vm2257, %v2252, 0.0
        %v2259 = vld [vmem:[%s2237] sm:$0xff]
        %2260 = vrot.lane.b32.xlu0 %v2259, 127
        %v2261 = vpop.permute.xlu0 %2260
        %v2262 = vlaneseq
        %v2263 = vand.u32 %v2262, 127
        %vm2264 = vcmp.eq.s32.totalorder %v2263, 63
        %v2265 = vsel %vm2264, %v2241, %v2261
        %s2266 = smov [#allocation12]
        %s2267 = scalar_lea.vmem %s2266, 32
        %s2268 = smov [#allocation13]
        %s2269 = scalar_lea.vmem %s2268, 32
        %v2270 = vld [vmem:[%s2269] sm:$0xff]
        %2271 = vrot.lane.b32.xlu0 %v2270, 1
        %v2272 = vpop.permute.xlu0 %2271
        %v2273 = vld [vmem:[%s2267] sm:$0xff]
        %v2274 = vld [vmem:[%s2267] sm:$0xff]
        %2275 = vrot.lane.b32.xlu0 %v2274, 1
        %v2276 = vpop.permute.xlu0 %2275
        %v2277 = vlaneseq
        %v2278 = vand.u32 %v2277, 127
        %vm2279 = vcmp.eq.s32.totalorder %v2278, 0
        %v2280 = vsel %vm2279, %v2274, %v2276
        %v2281 = vlaneseq
        %v2282 = vand.u32 %v2281, 127
        %vm2283 = vcmp.eq.s32.totalorder %v2282, 1
        %v2284 = vsel %vm2283, %v2272, %v2280
        %v2285 = vlaneseq
        %v2286 = vand.u32 %v2285, 127
        %vm2287 = vcmp.ge.s32.totalorder %v2286, 0
        %vm2288 = vcmp.lt.s32.totalorder %v2286, 64
        %vm2289 = vmand %vm2287, %vm2288
        %v2290 = vsel %vm2289, %v2284, 0.0
        %v2291 = vld [vmem:[%s2269] sm:$0xff]
        %2292 = vrot.lane.b32.xlu0 %v2291, 127
        %v2293 = vpop.permute.xlu0 %2292
        %v2294 = vlaneseq
        %v2295 = vand.u32 %v2294, 127
        %vm2296 = vcmp.eq.s32.totalorder %v2295, 63
        %v2297 = vsel %vm2296, %v2273, %v2293
        %s2298 = smov [#allocation12]
        %s2299 = scalar_lea.vmem %s2298, 40
        %s2300 = smov [#allocation13]
        %s2301 = scalar_lea.vmem %s2300, 40
        %v2302 = vld [vmem:[%s2301] sm:$0xff]
        %2303 = vrot.lane.b32.xlu0 %v2302, 1
        %v2304 = vpop.permute.xlu0 %2303
        %v2305 = vld [vmem:[%s2299] sm:$0xff]
        %v2306 = vld [vmem:[%s2299] sm:$0xff]
        %2307 = vrot.lane.b32.xlu0 %v2306, 1
        %v2308 = vpop.permute.xlu0 %2307
        %v2309 = vlaneseq
        %v2310 = vand.u32 %v2309, 127
        %vm2311 = vcmp.eq.s32.totalorder %v2310, 0
        %v2312 = vsel %vm2311, %v2306, %v2308
        %v2313 = vlaneseq
        %v2314 = vand.u32 %v2313, 127
        %vm2315 = vcmp.eq.s32.totalorder %v2314, 1
        %v2316 = vsel %vm2315, %v2304, %v2312
        %v2317 = vlaneseq
        %v2318 = vand.u32 %v2317, 127
        %vm2319 = vcmp.ge.s32.totalorder %v2318, 0
        %vm2320 = vcmp.lt.s32.totalorder %v2318, 64
        %vm2321 = vmand %vm2319, %vm2320
        %v2322 = vsel %vm2321, %v2316, 0.0
        %v2323 = vld [vmem:[%s2301] sm:$0xff]
        %2324 = vrot.lane.b32.xlu0 %v2323, 127
        %v2325 = vpop.permute.xlu0 %2324
        %v2326 = vlaneseq
        %v2327 = vand.u32 %v2326, 127
        %vm2328 = vcmp.eq.s32.totalorder %v2327, 63
        %v2329 = vsel %vm2328, %v2305, %v2325
        %s2330 = smov [#allocation12]
        %s2331 = scalar_lea.vmem %s2330, 48
        %s2332 = smov [#allocation13]
        %s2333 = scalar_lea.vmem %s2332, 48
        %v2334 = vld [vmem:[%s2333] sm:$0xff]
        %2335 = vrot.lane.b32.xlu0 %v2334, 1
        %v2336 = vpop.permute.xlu0 %2335
        %v2337 = vld [vmem:[%s2331] sm:$0xff]
        %v2338 = vld [vmem:[%s2331] sm:$0xff]
        %2339 = vrot.lane.b32.xlu0 %v2338, 1
        %v2340 = vpop.permute.xlu0 %2339
        %v2341 = vlaneseq
        %v2342 = vand.u32 %v2341, 127
        %vm2343 = vcmp.eq.s32.totalorder %v2342, 0
        %v2344 = vsel %vm2343, %v2338, %v2340
        %v2345 = vlaneseq
        %v2346 = vand.u32 %v2345, 127
        %vm2347 = vcmp.eq.s32.totalorder %v2346, 1
        %v2348 = vsel %vm2347, %v2336, %v2344
        %v2349 = vlaneseq
        %v2350 = vand.u32 %v2349, 127
        %vm2351 = vcmp.ge.s32.totalorder %v2350, 0
        %vm2352 = vcmp.lt.s32.totalorder %v2350, 64
        %vm2353 = vmand %vm2351, %vm2352
        %v2354 = vsel %vm2353, %v2348, 0.0
        %v2355 = vld [vmem:[%s2333] sm:$0xff]
        %2356 = vrot.lane.b32.xlu0 %v2355, 127
        %v2357 = vpop.permute.xlu0 %2356
        %v2358 = vlaneseq
        %v2359 = vand.u32 %v2358, 127
        %vm2360 = vcmp.eq.s32.totalorder %v2359, 63
        %v2361 = vsel %vm2360, %v2337, %v2357
        %s2362 = smov [#allocation12]
        %s2363 = scalar_lea.vmem %s2362, 56
        %s2364 = smov [#allocation13]
        %s2365 = scalar_lea.vmem %s2364, 56
        %v2366 = vld [vmem:[%s2365] sm:$0xff]
        %2367 = vrot.lane.b32.xlu0 %v2366, 1
        %v2368 = vpop.permute.xlu0 %2367
        %v2369 = vld [vmem:[%s2363] sm:$0xff]
        %v2370 = vld [vmem:[%s2363] sm:$0xff]
        %2371 = vrot.lane.b32.xlu0 %v2370, 1
        %v2372 = vpop.permute.xlu0 %2371
        %v2373 = vlaneseq
        %v2374 = vand.u32 %v2373, 127
        %vm2375 = vcmp.eq.s32.totalorder %v2374, 0
        %v2376 = vsel %vm2375, %v2370, %v2372
        %v2377 = vlaneseq
        %v2378 = vand.u32 %v2377, 127
        %vm2379 = vcmp.eq.s32.totalorder %v2378, 1
        %v2380 = vsel %vm2379, %v2368, %v2376
        %v2381 = vlaneseq
        %v2382 = vand.u32 %v2381, 127
        %vm2383 = vcmp.ge.s32.totalorder %v2382, 0
        %vm2384 = vcmp.lt.s32.totalorder %v2382, 64
        %vm2385 = vmand %vm2383, %vm2384
        %v2386 = vsel %vm2385, %v2380, 0.0
        %v2387 = vld [vmem:[%s2365] sm:$0xff]
        %2388 = vrot.lane.b32.xlu0 %v2387, 127
        %v2389 = vpop.permute.xlu0 %2388
        %v2390 = vlaneseq
        %v2391 = vand.u32 %v2390, 127
        %vm2392 = vcmp.eq.s32.totalorder %v2391, 63
        %v2393 = vsel %vm2392, %v2369, %v2389
        %2394 = vst [vmem:[%s2140] sm:$0xff] %v2162
        %2395 = vst [vmem:[%s2141] sm:$0xff] %v2169
        %2396 = vst [vmem:[%s2171] sm:$0xff] %v2194
        %2397 = vst [vmem:[%s2173] sm:$0xff] %v2201
        %2398 = vst [vmem:[%s2203] sm:$0xff] %v2226
        %2399 = vst [vmem:[%s2205] sm:$0xff] %v2233
        %2400 = vst [vmem:[%s2235] sm:$0xff] %v2258
        %2401 = vst [vmem:[%s2237] sm:$0xff] %v2265
        %2402 = vst [vmem:[%s2267] sm:$0xff] %v2290
        %2403 = vst [vmem:[%s2269] sm:$0xff] %v2297
        %2404 = vst [vmem:[%s2299] sm:$0xff] %v2322
        %2405 = vst [vmem:[%s2301] sm:$0xff] %v2329
        %2406 = vst [vmem:[%s2331] sm:$0xff] %v2354
        %2407 = vst [vmem:[%s2333] sm:$0xff] %v2361
        %2408 = vst [vmem:[%s2363] sm:$0xff] %v2386
        %2409 = vst [vmem:[%s2365] sm:$0xff] %v2393
        %s2410 = smov [#allocation14]
        %s2411 = smov [#allocation15]
        %v2412 = vld [vmem:[%s2411] sm:$0xff]
        %2413 = vrot.lane.b32.xlu0 %v2412, 1
        %v2414 = vpop.permute.xlu0 %2413
        %v2415 = vld [vmem:[%s2410] sm:$0xff]
        %v2416 = vld [vmem:[%s2410] sm:$0xff]
        %2417 = vrot.lane.b32.xlu0 %v2416, 1
        %v2418 = vpop.permute.xlu0 %2417
        %v2419 = vlaneseq
        %v2420 = vand.u32 %v2419, 127
        %vm2421 = vcmp.eq.s32.totalorder %v2420, 0
        %v2422 = vsel %vm2421, %v2416, %v2418
        %v2423 = vlaneseq
        %v2424 = vand.u32 %v2423, 127
        %vm2425 = vcmp.eq.s32.totalorder %v2424, 1
        %v2426 = vsel %vm2425, %v2414, %v2422
        %v2427 = vlaneseq
        %v2428 = vand.u32 %v2427, 127
        %vm2429 = vcmp.ge.s32.totalorder %v2428, 0
        %vm2430 = vcmp.lt.s32.totalorder %v2428, 64
        %vm2431 = vmand %vm2429, %vm2430
        %v2432 = vsel %vm2431, %v2426, 0.0
        %v2433 = vld [vmem:[%s2411] sm:$0xff]
        %2434 = vrot.lane.b32.xlu0 %v2433, 127
        %v2435 = vpop.permute.xlu0 %2434
        %v2436 = vlaneseq
        %v2437 = vand.u32 %v2436, 127
        %vm2438 = vcmp.eq.s32.totalorder %v2437, 63
        %v2439 = vsel %vm2438, %v2415, %v2435
        %s2440 = smov [#allocation14]
        %s2441 = scalar_lea.vmem %s2440, 8
        %s2442 = smov [#allocation15]
        %s2443 = scalar_lea.vmem %s2442, 8
        %v2444 = vld [vmem:[%s2443] sm:$0xff]
        %2445 = vrot.lane.b32.xlu0 %v2444, 1
        %v2446 = vpop.permute.xlu0 %2445
        %v2447 = vld [vmem:[%s2441] sm:$0xff]
        %v2448 = vld [vmem:[%s2441] sm:$0xff]
        %2449 = vrot.lane.b32.xlu0 %v2448, 1
        %v2450 = vpop.permute.xlu0 %2449
        %v2451 = vlaneseq
        %v2452 = vand.u32 %v2451, 127
        %vm2453 = vcmp.eq.s32.totalorder %v2452, 0
        %v2454 = vsel %vm2453, %v2448, %v2450
        %v2455 = vlaneseq
        %v2456 = vand.u32 %v2455, 127
        %vm2457 = vcmp.eq.s32.totalorder %v2456, 1
        %v2458 = vsel %vm2457, %v2446, %v2454
        %v2459 = vlaneseq
        %v2460 = vand.u32 %v2459, 127
        %vm2461 = vcmp.ge.s32.totalorder %v2460, 0
        %vm2462 = vcmp.lt.s32.totalorder %v2460, 64
        %vm2463 = vmand %vm2461, %vm2462
        %v2464 = vsel %vm2463, %v2458, 0.0
        %v2465 = vld [vmem:[%s2443] sm:$0xff]
        %2466 = vrot.lane.b32.xlu0 %v2465, 127
        %v2467 = vpop.permute.xlu0 %2466
        %v2468 = vlaneseq
        %v2469 = vand.u32 %v2468, 127
        %vm2470 = vcmp.eq.s32.totalorder %v2469, 63
        %v2471 = vsel %vm2470, %v2447, %v2467
        %s2472 = smov [#allocation14]
        %s2473 = scalar_lea.vmem %s2472, 16
        %s2474 = smov [#allocation15]
        %s2475 = scalar_lea.vmem %s2474, 16
        %v2476 = vld [vmem:[%s2475] sm:$0xff]
        %2477 = vrot.lane.b32.xlu0 %v2476, 1
        %v2478 = vpop.permute.xlu0 %2477
        %v2479 = vld [vmem:[%s2473] sm:$0xff]
        %v2480 = vld [vmem:[%s2473] sm:$0xff]
        %2481 = vrot.lane.b32.xlu0 %v2480, 1
        %v2482 = vpop.permute.xlu0 %2481
        %v2483 = vlaneseq
        %v2484 = vand.u32 %v2483, 127
        %vm2485 = vcmp.eq.s32.totalorder %v2484, 0
        %v2486 = vsel %vm2485, %v2480, %v2482
        %v2487 = vlaneseq
        %v2488 = vand.u32 %v2487, 127
        %vm2489 = vcmp.eq.s32.totalorder %v2488, 1
        %v2490 = vsel %vm2489, %v2478, %v2486
        %v2491 = vlaneseq
        %v2492 = vand.u32 %v2491, 127
        %vm2493 = vcmp.ge.s32.totalorder %v2492, 0
        %vm2494 = vcmp.lt.s32.totalorder %v2492, 64
        %vm2495 = vmand %vm2493, %vm2494
        %v2496 = vsel %vm2495, %v2490, 0.0
        %v2497 = vld [vmem:[%s2475] sm:$0xff]
        %2498 = vrot.lane.b32.xlu0 %v2497, 127
        %v2499 = vpop.permute.xlu0 %2498
        %v2500 = vlaneseq
        %v2501 = vand.u32 %v2500, 127
        %vm2502 = vcmp.eq.s32.totalorder %v2501, 63
        %v2503 = vsel %vm2502, %v2479, %v2499
        %s2504 = smov [#allocation14]
        %s2505 = scalar_lea.vmem %s2504, 24
        %s2506 = smov [#allocation15]
        %s2507 = scalar_lea.vmem %s2506, 24
        %v2508 = vld [vmem:[%s2507] sm:$0xff]
        %2509 = vrot.lane.b32.xlu0 %v2508, 1
        %v2510 = vpop.permute.xlu0 %2509
        %v2511 = vld [vmem:[%s2505] sm:$0xff]
        %v2512 = vld [vmem:[%s2505] sm:$0xff]
        %2513 = vrot.lane.b32.xlu0 %v2512, 1
        %v2514 = vpop.permute.xlu0 %2513
        %v2515 = vlaneseq
        %v2516 = vand.u32 %v2515, 127
        %vm2517 = vcmp.eq.s32.totalorder %v2516, 0
        %v2518 = vsel %vm2517, %v2512, %v2514
        %v2519 = vlaneseq
        %v2520 = vand.u32 %v2519, 127
        %vm2521 = vcmp.eq.s32.totalorder %v2520, 1
        %v2522 = vsel %vm2521, %v2510, %v2518
        %v2523 = vlaneseq
        %v2524 = vand.u32 %v2523, 127
        %vm2525 = vcmp.ge.s32.totalorder %v2524, 0
        %vm2526 = vcmp.lt.s32.totalorder %v2524, 64
        %vm2527 = vmand %vm2525, %vm2526
        %v2528 = vsel %vm2527, %v2522, 0.0
        %v2529 = vld [vmem:[%s2507] sm:$0xff]
        %2530 = vrot.lane.b32.xlu0 %v2529, 127
        %v2531 = vpop.permute.xlu0 %2530
        %v2532 = vlaneseq
        %v2533 = vand.u32 %v2532, 127
        %vm2534 = vcmp.eq.s32.totalorder %v2533, 63
        %v2535 = vsel %vm2534, %v2511, %v2531
        %s2536 = smov [#allocation14]
        %s2537 = scalar_lea.vmem %s2536, 32
        %s2538 = smov [#allocation15]
        %s2539 = scalar_lea.vmem %s2538, 32
        %v2540 = vld [vmem:[%s2539] sm:$0xff]
        %2541 = vrot.lane.b32.xlu0 %v2540, 1
        %v2542 = vpop.permute.xlu0 %2541
        %v2543 = vld [vmem:[%s2537] sm:$0xff]
        %v2544 = vld [vmem:[%s2537] sm:$0xff]
        %2545 = vrot.lane.b32.xlu0 %v2544, 1
        %v2546 = vpop.permute.xlu0 %2545
        %v2547 = vlaneseq
        %v2548 = vand.u32 %v2547, 127
        %vm2549 = vcmp.eq.s32.totalorder %v2548, 0
        %v2550 = vsel %vm2549, %v2544, %v2546
        %v2551 = vlaneseq
        %v2552 = vand.u32 %v2551, 127
        %vm2553 = vcmp.eq.s32.totalorder %v2552, 1
        %v2554 = vsel %vm2553, %v2542, %v2550
        %v2555 = vlaneseq
        %v2556 = vand.u32 %v2555, 127
        %vm2557 = vcmp.ge.s32.totalorder %v2556, 0
        %vm2558 = vcmp.lt.s32.totalorder %v2556, 64
        %vm2559 = vmand %vm2557, %vm2558
        %v2560 = vsel %vm2559, %v2554, 0.0
        %v2561 = vld [vmem:[%s2539] sm:$0xff]
        %2562 = vrot.lane.b32.xlu0 %v2561, 127
        %v2563 = vpop.permute.xlu0 %2562
        %v2564 = vlaneseq
        %v2565 = vand.u32 %v2564, 127
        %vm2566 = vcmp.eq.s32.totalorder %v2565, 63
        %v2567 = vsel %vm2566, %v2543, %v2563
        %s2568 = smov [#allocation14]
        %s2569 = scalar_lea.vmem %s2568, 40
        %s2570 = smov [#allocation15]
        %s2571 = scalar_lea.vmem %s2570, 40
        %v2572 = vld [vmem:[%s2571] sm:$0xff]
        %2573 = vrot.lane.b32.xlu0 %v2572, 1
        %v2574 = vpop.permute.xlu0 %2573
        %v2575 = vld [vmem:[%s2569] sm:$0xff]
        %v2576 = vld [vmem:[%s2569] sm:$0xff]
        %2577 = vrot.lane.b32.xlu0 %v2576, 1
        %v2578 = vpop.permute.xlu0 %2577
        %v2579 = vlaneseq
        %v2580 = vand.u32 %v2579, 127
        %vm2581 = vcmp.eq.s32.totalorder %v2580, 0
        %v2582 = vsel %vm2581, %v2576, %v2578
        %v2583 = vlaneseq
        %v2584 = vand.u32 %v2583, 127
        %vm2585 = vcmp.eq.s32.totalorder %v2584, 1
        %v2586 = vsel %vm2585, %v2574, %v2582
        %v2587 = vlaneseq
        %v2588 = vand.u32 %v2587, 127
        %vm2589 = vcmp.ge.s32.totalorder %v2588, 0
        %vm2590 = vcmp.lt.s32.totalorder %v2588, 64
        %vm2591 = vmand %vm2589, %vm2590
        %v2592 = vsel %vm2591, %v2586, 0.0
        %v2593 = vld [vmem:[%s2571] sm:$0xff]
        %2594 = vrot.lane.b32.xlu0 %v2593, 127
        %v2595 = vpop.permute.xlu0 %2594
        %v2596 = vlaneseq
        %v2597 = vand.u32 %v2596, 127
        %vm2598 = vcmp.eq.s32.totalorder %v2597, 63
        %v2599 = vsel %vm2598, %v2575, %v2595
        %s2600 = smov [#allocation14]
        %s2601 = scalar_lea.vmem %s2600, 48
        %s2602 = smov [#allocation15]
        %s2603 = scalar_lea.vmem %s2602, 48
        %v2604 = vld [vmem:[%s2603] sm:$0xff]
        %2605 = vrot.lane.b32.xlu0 %v2604, 1
        %v2606 = vpop.permute.xlu0 %2605
        %v2607 = vld [vmem:[%s2601] sm:$0xff]
        %v2608 = vld [vmem:[%s2601] sm:$0xff]
        %2609 = vrot.lane.b32.xlu0 %v2608, 1
        %v2610 = vpop.permute.xlu0 %2609
        %v2611 = vlaneseq
        %v2612 = vand.u32 %v2611, 127
        %vm2613 = vcmp.eq.s32.totalorder %v2612, 0
        %v2614 = vsel %vm2613, %v2608, %v2610
        %v2615 = vlaneseq
        %v2616 = vand.u32 %v2615, 127
        %vm2617 = vcmp.eq.s32.totalorder %v2616, 1
        %v2618 = vsel %vm2617, %v2606, %v2614
        %v2619 = vlaneseq
        %v2620 = vand.u32 %v2619, 127
        %vm2621 = vcmp.ge.s32.totalorder %v2620, 0
        %vm2622 = vcmp.lt.s32.totalorder %v2620, 64
        %vm2623 = vmand %vm2621, %vm2622
        %v2624 = vsel %vm2623, %v2618, 0.0
        %v2625 = vld [vmem:[%s2603] sm:$0xff]
        %2626 = vrot.lane.b32.xlu0 %v2625, 127
        %v2627 = vpop.permute.xlu0 %2626
        %v2628 = vlaneseq
        %v2629 = vand.u32 %v2628, 127
        %vm2630 = vcmp.eq.s32.totalorder %v2629, 63
        %v2631 = vsel %vm2630, %v2607, %v2627
        %s2632 = smov [#allocation14]
        %s2633 = scalar_lea.vmem %s2632, 56
        %s2634 = smov [#allocation15]
        %s2635 = scalar_lea.vmem %s2634, 56
        %v2636 = vld [vmem:[%s2635] sm:$0xff]
        %2637 = vrot.lane.b32.xlu0 %v2636, 1
        %v2638 = vpop.permute.xlu0 %2637
        %v2639 = vld [vmem:[%s2633] sm:$0xff]
        %v2640 = vld [vmem:[%s2633] sm:$0xff]
        %2641 = vrot.lane.b32.xlu0 %v2640, 1
        %v2642 = vpop.permute.xlu0 %2641
        %v2643 = vlaneseq
        %v2644 = vand.u32 %v2643, 127
        %vm2645 = vcmp.eq.s32.totalorder %v2644, 0
        %v2646 = vsel %vm2645, %v2640, %v2642
        %v2647 = vlaneseq
        %v2648 = vand.u32 %v2647, 127
        %vm2649 = vcmp.eq.s32.totalorder %v2648, 1
        %v2650 = vsel %vm2649, %v2638, %v2646
        %v2651 = vlaneseq
        %v2652 = vand.u32 %v2651, 127
        %vm2653 = vcmp.ge.s32.totalorder %v2652, 0
        %vm2654 = vcmp.lt.s32.totalorder %v2652, 64
        %vm2655 = vmand %vm2653, %vm2654
        %v2656 = vsel %vm2655, %v2650, 0.0
        %v2657 = vld [vmem:[%s2635] sm:$0xff]
        %2658 = vrot.lane.b32.xlu0 %v2657, 127
        %v2659 = vpop.permute.xlu0 %2658
        %v2660 = vlaneseq
        %v2661 = vand.u32 %v2660, 127
        %vm2662 = vcmp.eq.s32.totalorder %v2661, 63
        %v2663 = vsel %vm2662, %v2639, %v2659
        %2664 = vst [vmem:[%s2410] sm:$0xff] %v2432
        %2665 = vst [vmem:[%s2411] sm:$0xff] %v2439
        %2666 = vst [vmem:[%s2441] sm:$0xff] %v2464
        %2667 = vst [vmem:[%s2443] sm:$0xff] %v2471
        %2668 = vst [vmem:[%s2473] sm:$0xff] %v2496
        %2669 = vst [vmem:[%s2475] sm:$0xff] %v2503
        %2670 = vst [vmem:[%s2505] sm:$0xff] %v2528
        %2671 = vst [vmem:[%s2507] sm:$0xff] %v2535
        %2672 = vst [vmem:[%s2537] sm:$0xff] %v2560
        %2673 = vst [vmem:[%s2539] sm:$0xff] %v2567
        %2674 = vst [vmem:[%s2569] sm:$0xff] %v2592
        %2675 = vst [vmem:[%s2571] sm:$0xff] %v2599
        %2676 = vst [vmem:[%s2601] sm:$0xff] %v2624
        %2677 = vst [vmem:[%s2603] sm:$0xff] %v2631
        %2678 = vst [vmem:[%s2633] sm:$0xff] %v2656
        %2679 = vst [vmem:[%s2635] sm:$0xff] %v2663
        %s2680 = smov [#allocation12]
        %s2681 = smov [#allocation14]
        %v2682 = vld [vmem:[%s2680] ss:$0 sm:$0xff]
        %s2684 = scalar_lea.vmem %s2680, 4294967295
        %v2685 = vld [vmem:[%s2684] sm:$0xfe]
        %v2686 = vlaneseq
        %v2687 = vshrl.u32 %v2686, 7
        %vm2688 = vcmp.eq.s32.totalorder %v2687, 0
        %v2689 = vsel %vm2688, %v2682, %v2685
        %s2690 = scalar_lea.vmem %s2680, 7
        %v2691 = vld [vmem:[%s2690] ss:$0 sm:$0xff]
        %2692 = vst [vmem:[%s2680] sm:$0xff] %v2689
        %s2693 = scalar_lea.vmem %s2680, 8
        %s2695 = scalar_lea.vmem %s2693, 4294967295
        %v2696 = vld [vmem:[%s2695] sm:$0xfe]
        %v2697 = vlaneseq
        %v2698 = vshrl.u32 %v2697, 7
        %vm2699 = vcmp.eq.s32.totalorder %v2698, 0
        %v2700 = vsel %vm2699, %v2691, %v2696
        %s2701 = scalar_lea.vmem %s2693, 7
        %v2702 = vld [vmem:[%s2701] ss:$0 sm:$0xff]
        %2703 = vst [vmem:[%s2693] sm:$0xff] %v2700
        %s2704 = scalar_lea.vmem %s2680, 16
        %s2706 = scalar_lea.vmem %s2704, 4294967295
        %v2707 = vld [vmem:[%s2706] sm:$0xfe]
        %v2708 = vlaneseq
        %v2709 = vshrl.u32 %v2708, 7
        %vm2710 = vcmp.eq.s32.totalorder %v2709, 0
        %v2711 = vsel %vm2710, %v2702, %v2707
        %s2712 = scalar_lea.vmem %s2704, 7
        %v2713 = vld [vmem:[%s2712] ss:$0 sm:$0xff]
        %2714 = vst [vmem:[%s2704] sm:$0xff] %v2711
        %s2715 = scalar_lea.vmem %s2680, 24
        %s2717 = scalar_lea.vmem %s2715, 4294967295
        %v2718 = vld [vmem:[%s2717] sm:$0xfe]
        %v2719 = vlaneseq
        %v2720 = vshrl.u32 %v2719, 7
        %vm2721 = vcmp.eq.s32.totalorder %v2720, 0
        %v2722 = vsel %vm2721, %v2713, %v2718
        %s2723 = scalar_lea.vmem %s2715, 7
        %v2724 = vld [vmem:[%s2723] ss:$0 sm:$0xff]
        %2725 = vst [vmem:[%s2715] sm:$0xff] %v2722
        %s2726 = scalar_lea.vmem %s2680, 32
        %s2728 = scalar_lea.vmem %s2726, 4294967295
        %v2729 = vld [vmem:[%s2728] sm:$0xfe]
        %v2730 = vlaneseq
        %v2731 = vshrl.u32 %v2730, 7
        %vm2732 = vcmp.eq.s32.totalorder %v2731, 0
        %v2733 = vsel %vm2732, %v2724, %v2729
        %s2734 = scalar_lea.vmem %s2726, 7
        %v2735 = vld [vmem:[%s2734] ss:$0 sm:$0xff]
        %2736 = vst [vmem:[%s2726] sm:$0xff] %v2733
        %s2737 = scalar_lea.vmem %s2680, 40
        %s2739 = scalar_lea.vmem %s2737, 4294967295
        %v2740 = vld [vmem:[%s2739] sm:$0xfe]
        %v2741 = vlaneseq
        %v2742 = vshrl.u32 %v2741, 7
        %vm2743 = vcmp.eq.s32.totalorder %v2742, 0
        %v2744 = vsel %vm2743, %v2735, %v2740
        %s2745 = scalar_lea.vmem %s2737, 7
        %v2746 = vld [vmem:[%s2745] ss:$0 sm:$0xff]
        %2747 = vst [vmem:[%s2737] sm:$0xff] %v2744
        %s2748 = scalar_lea.vmem %s2680, 48
        %s2750 = scalar_lea.vmem %s2748, 4294967295
        %v2751 = vld [vmem:[%s2750] sm:$0xfe]
        %v2752 = vlaneseq
        %v2753 = vshrl.u32 %v2752, 7
        %vm2754 = vcmp.eq.s32.totalorder %v2753, 0
        %v2755 = vsel %vm2754, %v2746, %v2751
        %s2756 = scalar_lea.vmem %s2748, 7
        %v2757 = vld [vmem:[%s2756] ss:$0 sm:$0xff]
        %2758 = vst [vmem:[%s2748] sm:$0xff] %v2755
        %s2759 = scalar_lea.vmem %s2680, 56
        %s2761 = scalar_lea.vmem %s2759, 4294967295
        %v2762 = vld [vmem:[%s2761] sm:$0xfe]
        %v2763 = vlaneseq
        %v2764 = vshrl.u32 %v2763, 7
        %vm2765 = vcmp.eq.s32.totalorder %v2764, 0
        %v2766 = vsel %vm2765, %v2757, %v2762
        %s2767 = scalar_lea.vmem %s2759, 7
        %v2768 = vld [vmem:[%s2767] ss:$0 sm:$0xff]
        %2769 = vst [vmem:[%s2759] sm:$0xff] %v2766
        %v2770 = vld [vmem:[%s2681] ss:$0 sm:$0xff]
        %s2771 = scalar_lea.vmem %s2680, 1
        %2772 = vst [vmem:[%s2771] sm:$0x1] %v2770
        %s2773 = scalar_lea.vmem %s2681, 56
        %s2774 = scalar_lea.vmem %s2773, 1
        %v2775 = vld [vmem:[%s2774] sm:$0x7f]
        %v2776 = vlaneseq
        %v2777 = vshrl.u32 %v2776, 7
        %vm2778 = vcmp.eq.s32.totalorder %v2777, 7
        %v2779 = vsel %vm2778, %v2768, %v2775
        %v2780 = vld [vmem:[%s2773] ss:$0 sm:$0xff]
        %2781 = vst [vmem:[%s2773] sm:$0xff] %v2779
        %s2782 = scalar_lea.vmem %s2681, 48
        %s2783 = scalar_lea.vmem %s2782, 1
        %v2784 = vld [vmem:[%s2783] sm:$0x7f]
        %v2785 = vlaneseq
        %v2786 = vshrl.u32 %v2785, 7
        %vm2787 = vcmp.eq.s32.totalorder %v2786, 7
        %v2788 = vsel %vm2787, %v2780, %v2784
        %v2789 = vld [vmem:[%s2782] ss:$0 sm:$0xff]
        %2790 = vst [vmem:[%s2782] sm:$0xff] %v2788
        %s2791 = scalar_lea.vmem %s2681, 40
        %s2792 = scalar_lea.vmem %s2791, 1
        %v2793 = vld [vmem:[%s2792] sm:$0x7f]
        %v2794 = vlaneseq
        %v2795 = vshrl.u32 %v2794, 7
        %vm2796 = vcmp.eq.s32.totalorder %v2795, 7
        %v2797 = vsel %vm2796, %v2789, %v2793
        %v2798 = vld [vmem:[%s2791] ss:$0 sm:$0xff]
        %2799 = vst [vmem:[%s2791] sm:$0xff] %v2797
        %s2800 = scalar_lea.vmem %s2681, 32
        %s2801 = scalar_lea.vmem %s2800, 1
        %v2802 = vld [vmem:[%s2801] sm:$0x7f]
        %v2803 = vlaneseq
        %v2804 = vshrl.u32 %v2803, 7
        %vm2805 = vcmp.eq.s32.totalorder %v2804, 7
        %v2806 = vsel %vm2805, %v2798, %v2802
        %v2807 = vld [vmem:[%s2800] ss:$0 sm:$0xff]
        %2808 = vst [vmem:[%s2800] sm:$0xff] %v2806
        %s2809 = scalar_lea.vmem %s2681, 24
        %s2810 = scalar_lea.vmem %s2809, 1
        %v2811 = vld [vmem:[%s2810] sm:$0x7f]
        %v2812 = vlaneseq
        %v2813 = vshrl.u32 %v2812, 7
        %vm2814 = vcmp.eq.s32.totalorder %v2813, 7
        %v2815 = vsel %vm2814, %v2807, %v2811
        %v2816 = vld [vmem:[%s2809] ss:$0 sm:$0xff]
        %2817 = vst [vmem:[%s2809] sm:$0xff] %v2815
        %s2818 = scalar_lea.vmem %s2681, 16
        %s2819 = scalar_lea.vmem %s2818, 1
        %v2820 = vld [vmem:[%s2819] sm:$0x7f]
        %v2821 = vlaneseq
        %v2822 = vshrl.u32 %v2821, 7
        %vm2823 = vcmp.eq.s32.totalorder %v2822, 7
        %v2824 = vsel %vm2823, %v2816, %v2820
        %v2825 = vld [vmem:[%s2818] ss:$0 sm:$0xff]
        %2826 = vst [vmem:[%s2818] sm:$0xff] %v2824
        %s2827 = scalar_lea.vmem %s2681, 8
        %s2828 = scalar_lea.vmem %s2827, 1
        %v2829 = vld [vmem:[%s2828] sm:$0x7f]
        %v2830 = vlaneseq
        %v2831 = vshrl.u32 %v2830, 7
        %vm2832 = vcmp.eq.s32.totalorder %v2831, 7
        %v2833 = vsel %vm2832, %v2825, %v2829
        %v2834 = vld [vmem:[%s2827] ss:$0 sm:$0xff]
        %2835 = vst [vmem:[%s2827] sm:$0xff] %v2833
        %s2836 = scalar_lea.vmem %s2681, 1
        %v2837 = vld [vmem:[%s2836] sm:$0x7f]
        %v2838 = vlaneseq
        %v2839 = vshrl.u32 %v2838, 7
        %vm2840 = vcmp.eq.s32.totalorder %v2839, 7
        %v2841 = vsel %vm2840, %v2834, %v2837
        %v2842 = vld [vmem:[%s2681] ss:$0 sm:$0xff]
        %2843 = vst [vmem:[%s2681] sm:$0xff] %v2841
        %s2844 = smov [#allocation13]
        %s2845 = smov [#allocation15]
        %v2846 = vld [vmem:[%s2844] ss:$0 sm:$0xff]
        %s2848 = scalar_lea.vmem %s2844, 4294967295
        %v2849 = vld [vmem:[%s2848] sm:$0xfe]
        %v2850 = vlaneseq
        %v2851 = vshrl.u32 %v2850, 7
        %vm2852 = vcmp.eq.s32.totalorder %v2851, 0
        %v2853 = vsel %vm2852, %v2846, %v2849
        %s2854 = scalar_lea.vmem %s2844, 7
        %v2855 = vld [vmem:[%s2854] ss:$0 sm:$0xff]
        %2856 = vst [vmem:[%s2844] sm:$0xff] %v2853
        %s2857 = scalar_lea.vmem %s2844, 8
        %s2859 = scalar_lea.vmem %s2857, 4294967295
        %v2860 = vld [vmem:[%s2859] sm:$0xfe]
        %v2861 = vlaneseq
        %v2862 = vshrl.u32 %v2861, 7
        %vm2863 = vcmp.eq.s32.totalorder %v2862, 0
        %v2864 = vsel %vm2863, %v2855, %v2860
        %s2865 = scalar_lea.vmem %s2857, 7
        %v2866 = vld [vmem:[%s2865] ss:$0 sm:$0xff]
        %2867 = vst [vmem:[%s2857] sm:$0xff] %v2864
        %s2868 = scalar_lea.vmem %s2844, 16
        %s2870 = scalar_lea.vmem %s2868, 4294967295
        %v2871 = vld [vmem:[%s2870] sm:$0xfe]
        %v2872 = vlaneseq
        %v2873 = vshrl.u32 %v2872, 7
        %vm2874 = vcmp.eq.s32.totalorder %v2873, 0
        %v2875 = vsel %vm2874, %v2866, %v2871
        %s2876 = scalar_lea.vmem %s2868, 7
        %v2877 = vld [vmem:[%s2876] ss:$0 sm:$0xff]
        %2878 = vst [vmem:[%s2868] sm:$0xff] %v2875
        %s2879 = scalar_lea.vmem %s2844, 24
        %s2881 = scalar_lea.vmem %s2879, 4294967295
        %v2882 = vld [vmem:[%s2881] sm:$0xfe]
        %v2883 = vlaneseq
        %v2884 = vshrl.u32 %v2883, 7
        %vm2885 = vcmp.eq.s32.totalorder %v2884, 0
        %v2886 = vsel %vm2885, %v2877, %v2882
        %s2887 = scalar_lea.vmem %s2879, 7
        %v2888 = vld [vmem:[%s2887] ss:$0 sm:$0xff]
        %2889 = vst [vmem:[%s2879] sm:$0xff] %v2886
        %s2890 = scalar_lea.vmem %s2844, 32
        %s2892 = scalar_lea.vmem %s2890, 4294967295
        %v2893 = vld [vmem:[%s2892] sm:$0xfe]
        %v2894 = vlaneseq
        %v2895 = vshrl.u32 %v2894, 7
        %vm2896 = vcmp.eq.s32.totalorder %v2895, 0
        %v2897 = vsel %vm2896, %v2888, %v2893
        %s2898 = scalar_lea.vmem %s2890, 7
        %v2899 = vld [vmem:[%s2898] ss:$0 sm:$0xff]
        %2900 = vst [vmem:[%s2890] sm:$0xff] %v2897
        %s2901 = scalar_lea.vmem %s2844, 40
        %s2903 = scalar_lea.vmem %s2901, 4294967295
        %v2904 = vld [vmem:[%s2903] sm:$0xfe]
        %v2905 = vlaneseq
        %v2906 = vshrl.u32 %v2905, 7
        %vm2907 = vcmp.eq.s32.totalorder %v2906, 0
        %v2908 = vsel %vm2907, %v2899, %v2904
        %s2909 = scalar_lea.vmem %s2901, 7
        %v2910 = vld [vmem:[%s2909] ss:$0 sm:$0xff]
        %2911 = vst [vmem:[%s2901] sm:$0xff] %v2908
        %s2912 = scalar_lea.vmem %s2844, 48
        %s2914 = scalar_lea.vmem %s2912, 4294967295
        %v2915 = vld [vmem:[%s2914] sm:$0xfe]
        %v2916 = vlaneseq
        %v2917 = vshrl.u32 %v2916, 7
        %vm2918 = vcmp.eq.s32.totalorder %v2917, 0
        %v2919 = vsel %vm2918, %v2910, %v2915
        %s2920 = scalar_lea.vmem %s2912, 7
        %v2921 = vld [vmem:[%s2920] ss:$0 sm:$0xff]
        %2922 = vst [vmem:[%s2912] sm:$0xff] %v2919
        %s2923 = scalar_lea.vmem %s2844, 56
        %s2925 = scalar_lea.vmem %s2923, 4294967295
        %v2926 = vld [vmem:[%s2925] sm:$0xfe]
        %v2927 = vlaneseq
        %v2928 = vshrl.u32 %v2927, 7
        %vm2929 = vcmp.eq.s32.totalorder %v2928, 0
        %v2930 = vsel %vm2929, %v2921, %v2926
        %s2931 = scalar_lea.vmem %s2923, 7
        %v2932 = vld [vmem:[%s2931] ss:$0 sm:$0xff]
        %2933 = vst [vmem:[%s2923] sm:$0xff] %v2930
        %v2934 = vld [vmem:[%s2845] ss:$0 sm:$0xff]
        %s2935 = scalar_lea.vmem %s2844, 1
        %2936 = vst [vmem:[%s2935] sm:$0x1] %v2934
        %s2937 = scalar_lea.vmem %s2845, 56
        %s2938 = scalar_lea.vmem %s2937, 1
        %v2939 = vld [vmem:[%s2938] sm:$0x7f]
        %v2940 = vlaneseq
        %v2941 = vshrl.u32 %v2940, 7
        %vm2942 = vcmp.eq.s32.totalorder %v2941, 7
        %v2943 = vsel %vm2942, %v2932, %v2939
        %v2944 = vld [vmem:[%s2937] ss:$0 sm:$0xff]
        %2945 = vst [vmem:[%s2937] sm:$0xff] %v2943
        %s2946 = scalar_lea.vmem %s2845, 48
        %s2947 = scalar_lea.vmem %s2946, 1
        %v2948 = vld [vmem:[%s2947] sm:$0x7f]
        %v2949 = vlaneseq
        %v2950 = vshrl.u32 %v2949, 7
        %vm2951 = vcmp.eq.s32.totalorder %v2950, 7
        %v2952 = vsel %vm2951, %v2944, %v2948
        %v2953 = vld [vmem:[%s2946] ss:$0 sm:$0xff]
        %2954 = vst [vmem:[%s2946] sm:$0xff] %v2952
        %s2955 = scalar_lea.vmem %s2845, 40
        %s2956 = scalar_lea.vmem %s2955, 1
        %v2957 = vld [vmem:[%s2956] sm:$0x7f]
        %v2958 = vlaneseq
        %v2959 = vshrl.u32 %v2958, 7
        %vm2960 = vcmp.eq.s32.totalorder %v2959, 7
        %v2961 = vsel %vm2960, %v2953, %v2957
        %v2962 = vld [vmem:[%s2955] ss:$0 sm:$0xff]
        %2963 = vst [vmem:[%s2955] sm:$0xff] %v2961
        %s2964 = scalar_lea.vmem %s2845, 32
        %s2965 = scalar_lea.vmem %s2964, 1
        %v2966 = vld [vmem:[%s2965] sm:$0x7f]
        %v2967 = vlaneseq
        %v2968 = vshrl.u32 %v2967, 7
        %vm2969 = vcmp.eq.s32.totalorder %v2968, 7
        %v2970 = vsel %vm2969, %v2962, %v2966
        %v2971 = vld [vmem:[%s2964] ss:$0 sm:$0xff]
        %2972 = vst [vmem:[%s2964] sm:$0xff] %v2970
        %s2973 = scalar_lea.vmem %s2845, 24
        %s2974 = scalar_lea.vmem %s2973, 1
        %v2975 = vld [vmem:[%s2974] sm:$0x7f]
        %v2976 = vlaneseq
        %v2977 = vshrl.u32 %v2976, 7
        %vm2978 = vcmp.eq.s32.totalorder %v2977, 7
        %v2979 = vsel %vm2978, %v2971, %v2975
        %v2980 = vld [vmem:[%s2973] ss:$0 sm:$0xff]
        %2981 = vst [vmem:[%s2973] sm:$0xff] %v2979
        %s2982 = scalar_lea.vmem %s2845, 16
        %s2983 = scalar_lea.vmem %s2982, 1
        %v2984 = vld [vmem:[%s2983] sm:$0x7f]
        %v2985 = vlaneseq
        %v2986 = vshrl.u32 %v2985, 7
        %vm2987 = vcmp.eq.s32.totalorder %v2986, 7
        %v2988 = vsel %vm2987, %v2980, %v2984
        %v2989 = vld [vmem:[%s2982] ss:$0 sm:$0xff]
        %2990 = vst [vmem:[%s2982] sm:$0xff] %v2988
        %s2991 = scalar_lea.vmem %s2845, 8
        %s2992 = scalar_lea.vmem %s2991, 1
        %v2993 = vld [vmem:[%s2992] sm:$0x7f]
        %v2994 = vlaneseq
        %v2995 = vshrl.u32 %v2994, 7
        %vm2996 = vcmp.eq.s32.totalorder %v2995, 7
        %v2997 = vsel %vm2996, %v2989, %v2993
        %v2998 = vld [vmem:[%s2991] ss:$0 sm:$0xff]
        %2999 = vst [vmem:[%s2991] sm:$0xff] %v2997
        %s3000 = scalar_lea.vmem %s2845, 1
        %v3001 = vld [vmem:[%s3000] sm:$0x7f]
        %v3002 = vlaneseq
        %v3003 = vshrl.u32 %v3002, 7
        %vm3004 = vcmp.eq.s32.totalorder %v3003, 7
        %v3005 = vsel %vm3004, %v2998, %v3001
        %v3006 = vld [vmem:[%s2845] ss:$0 sm:$0xff]
        %3007 = vst [vmem:[%s2845] sm:$0xff] %v3005
        %s3008 = smov [#allocation23]
        %v3009 = vld [vmem:[%s3008] sm:$0xff]
        %s3010 = smov [#allocation24]
        %v3011 = vld [vmem:[%s3010] sm:$0xff]
        %s3012 = smov [#allocation8]
        %s3013 = smov [#allocation9]
        %s3014 = smov [#allocation10]
        %s3015 = smov [#allocation11]
        %v3016 = vld [vmem:[%s3012] sm:$0xff]
        %v3017 = vld [vmem:[%s3013] sm:$0xff]
        %v3018 = vld [vmem:[%s3014] sm:$0xff]
        %v3019 = vld [vmem:[%s3015] sm:$0xff]
        %v3020 = vmul.f32 %v3009, %v3016
        %v3021 = vmul.f32 %v3011, %v3018
        %v3022 = vsub.f32 %v3020, %v3021
        %v3023 = vmul.f32 %v3009, %v3017
        %v3024 = vmul.f32 %v3011, %v3019
        %v3025 = vsub.f32 %v3023, %v3024
        %v3026 = vmul.f32 %v3011, %v3016
        %v3027 = vmul.f32 %v3009, %v3018
        %v3028 = vadd.f32 %v3026, %v3027
        %v3029 = vmul.f32 %v3011, %v3017
        %v3030 = vmul.f32 %v3009, %v3019
        %v3031 = vadd.f32 %v3029, %v3030
        %3032 = vst [vmem:[%s3012] sm:$0xff] %v3022
        %3033 = vst [vmem:[%s3013] sm:$0xff] %v3025
        %3034 = vst [vmem:[%s3014] sm:$0xff] %v3028
        %3035 = vst [vmem:[%s3015] sm:$0xff] %v3031
        %s3036 = smov [#allocation23]
        %s3037 = scalar_lea.vmem %s3036, 8
        %v3038 = vld [vmem:[%s3037] sm:$0xff]
        %s3039 = smov [#allocation24]
        %s3040 = scalar_lea.vmem %s3039, 8
        %v3041 = vld [vmem:[%s3040] sm:$0xff]
        %s3042 = smov [#allocation8]
        %s3043 = scalar_lea.vmem %s3042, 8
        %s3044 = smov [#allocation9]
        %s3045 = scalar_lea.vmem %s3044, 8
        %s3046 = smov [#allocation10]
        %s3047 = scalar_lea.vmem %s3046, 8
        %s3048 = smov [#allocation11]
        %s3049 = scalar_lea.vmem %s3048, 8
        %v3050 = vld [vmem:[%s3043] sm:$0xff]
        %v3051 = vld [vmem:[%s3045] sm:$0xff]
        %v3052 = vld [vmem:[%s3047] sm:$0xff]
        %v3053 = vld [vmem:[%s3049] sm:$0xff]
        %v3054 = vmul.f32 %v3038, %v3050
        %v3055 = vmul.f32 %v3041, %v3052
        %v3056 = vsub.f32 %v3054, %v3055
        %v3057 = vmul.f32 %v3038, %v3051
        %v3058 = vmul.f32 %v3041, %v3053
        %v3059 = vsub.f32 %v3057, %v3058
        %v3060 = vmul.f32 %v3041, %v3050
        %v3061 = vmul.f32 %v3038, %v3052
        %v3062 = vadd.f32 %v3060, %v3061
        %v3063 = vmul.f32 %v3041, %v3051
        %v3064 = vmul.f32 %v3038, %v3053
        %v3065 = vadd.f32 %v3063, %v3064
        %3066 = vst [vmem:[%s3043] sm:$0xff] %v3056
        %3067 = vst [vmem:[%s3045] sm:$0xff] %v3059
        %3068 = vst [vmem:[%s3047] sm:$0xff] %v3062
        %3069 = vst [vmem:[%s3049] sm:$0xff] %v3065
        %s3070 = smov [#allocation23]
        %s3071 = scalar_lea.vmem %s3070, 16
        %v3072 = vld [vmem:[%s3071] sm:$0xff]
        %s3073 = smov [#allocation24]
        %s3074 = scalar_lea.vmem %s3073, 16
        %v3075 = vld [vmem:[%s3074] sm:$0xff]
        %s3076 = smov [#allocation8]
        %s3077 = scalar_lea.vmem %s3076, 16
        %s3078 = smov [#allocation9]
        %s3079 = scalar_lea.vmem %s3078, 16
        %s3080 = smov [#allocation10]
        %s3081 = scalar_lea.vmem %s3080, 16
        %s3082 = smov [#allocation11]
        %s3083 = scalar_lea.vmem %s3082, 16
        %v3084 = vld [vmem:[%s3077] sm:$0xff]
        %v3085 = vld [vmem:[%s3079] sm:$0xff]
        %v3086 = vld [vmem:[%s3081] sm:$0xff]
        %v3087 = vld [vmem:[%s3083] sm:$0xff]
        %v3088 = vmul.f32 %v3072, %v3084
        %v3089 = vmul.f32 %v3075, %v3086
        %v3090 = vsub.f32 %v3088, %v3089
        %v3091 = vmul.f32 %v3072, %v3085
        %v3092 = vmul.f32 %v3075, %v3087
        %v3093 = vsub.f32 %v3091, %v3092
        %v3094 = vmul.f32 %v3075, %v3084
        %v3095 = vmul.f32 %v3072, %v3086
        %v3096 = vadd.f32 %v3094, %v3095
        %v3097 = vmul.f32 %v3075, %v3085
        %v3098 = vmul.f32 %v3072, %v3087
        %v3099 = vadd.f32 %v3097, %v3098
        %3100 = vst [vmem:[%s3077] sm:$0xff] %v3090
        %3101 = vst [vmem:[%s3079] sm:$0xff] %v3093
        %3102 = vst [vmem:[%s3081] sm:$0xff] %v3096
        %3103 = vst [vmem:[%s3083] sm:$0xff] %v3099
        %s3104 = smov [#allocation23]
        %s3105 = scalar_lea.vmem %s3104, 24
        %v3106 = vld [vmem:[%s3105] sm:$0xff]
        %s3107 = smov [#allocation24]
        %s3108 = scalar_lea.vmem %s3107, 24
        %v3109 = vld [vmem:[%s3108] sm:$0xff]
        %s3110 = smov [#allocation8]
        %s3111 = scalar_lea.vmem %s3110, 24
        %s3112 = smov [#allocation9]
        %s3113 = scalar_lea.vmem %s3112, 24
        %s3114 = smov [#allocation10]
        %s3115 = scalar_lea.vmem %s3114, 24
        %s3116 = smov [#allocation11]
        %s3117 = scalar_lea.vmem %s3116, 24
        %v3118 = vld [vmem:[%s3111] sm:$0xff]
        %v3119 = vld [vmem:[%s3113] sm:$0xff]
        %v3120 = vld [vmem:[%s3115] sm:$0xff]
        %v3121 = vld [vmem:[%s3117] sm:$0xff]
        %v3122 = vmul.f32 %v3106, %v3118
        %v3123 = vmul.f32 %v3109, %v3120
        %v3124 = vsub.f32 %v3122, %v3123
        %v3125 = vmul.f32 %v3106, %v3119
        %v3126 = vmul.f32 %v3109, %v3121
        %v3127 = vsub.f32 %v3125, %v3126
        %v3128 = vmul.f32 %v3109, %v3118
        %v3129 = vmul.f32 %v3106, %v3120
        %v3130 = vadd.f32 %v3128, %v3129
        %v3131 = vmul.f32 %v3109, %v3119
        %v3132 = vmul.f32 %v3106, %v3121
        %v3133 = vadd.f32 %v3131, %v3132
        %3134 = vst [vmem:[%s3111] sm:$0xff] %v3124
        %3135 = vst [vmem:[%s3113] sm:$0xff] %v3127
        %3136 = vst [vmem:[%s3115] sm:$0xff] %v3130
        %3137 = vst [vmem:[%s3117] sm:$0xff] %v3133
        %s3138 = smov [#allocation23]
        %s3139 = scalar_lea.vmem %s3138, 32
        %v3140 = vld [vmem:[%s3139] sm:$0xff]
        %s3141 = smov [#allocation24]
        %s3142 = scalar_lea.vmem %s3141, 32
        %v3143 = vld [vmem:[%s3142] sm:$0xff]
        %s3144 = smov [#allocation8]
        %s3145 = scalar_lea.vmem %s3144, 32
        %s3146 = smov [#allocation9]
        %s3147 = scalar_lea.vmem %s3146, 32
        %s3148 = smov [#allocation10]
        %s3149 = scalar_lea.vmem %s3148, 32
        %s3150 = smov [#allocation11]
        %s3151 = scalar_lea.vmem %s3150, 32
        %v3152 = vld [vmem:[%s3145] sm:$0xff]
        %v3153 = vld [vmem:[%s3147] sm:$0xff]
        %v3154 = vld [vmem:[%s3149] sm:$0xff]
        %v3155 = vld [vmem:[%s3151] sm:$0xff]
        %v3156 = vmul.f32 %v3140, %v3152
        %v3157 = vmul.f32 %v3143, %v3154
        %v3158 = vsub.f32 %v3156, %v3157
        %v3159 = vmul.f32 %v3140, %v3153
        %v3160 = vmul.f32 %v3143, %v3155
        %v3161 = vsub.f32 %v3159, %v3160
        %v3162 = vmul.f32 %v3143, %v3152
        %v3163 = vmul.f32 %v3140, %v3154
        %v3164 = vadd.f32 %v3162, %v3163
        %v3165 = vmul.f32 %v3143, %v3153
        %v3166 = vmul.f32 %v3140, %v3155
        %v3167 = vadd.f32 %v3165, %v3166
        %3168 = vst [vmem:[%s3145] sm:$0xff] %v3158
        %3169 = vst [vmem:[%s3147] sm:$0xff] %v3161
        %3170 = vst [vmem:[%s3149] sm:$0xff] %v3164
        %3171 = vst [vmem:[%s3151] sm:$0xff] %v3167
        %s3172 = smov [#allocation23]
        %s3173 = scalar_lea.vmem %s3172, 40
        %v3174 = vld [vmem:[%s3173] sm:$0xff]
        %s3175 = smov [#allocation24]
        %s3176 = scalar_lea.vmem %s3175, 40
        %v3177 = vld [vmem:[%s3176] sm:$0xff]
        %s3178 = smov [#allocation8]
        %s3179 = scalar_lea.vmem %s3178, 40
        %s3180 = smov [#allocation9]
        %s3181 = scalar_lea.vmem %s3180, 40
        %s3182 = smov [#allocation10]
        %s3183 = scalar_lea.vmem %s3182, 40
        %s3184 = smov [#allocation11]
        %s3185 = scalar_lea.vmem %s3184, 40
        %v3186 = vld [vmem:[%s3179] sm:$0xff]
        %v3187 = vld [vmem:[%s3181] sm:$0xff]
        %v3188 = vld [vmem:[%s3183] sm:$0xff]
        %v3189 = vld [vmem:[%s3185] sm:$0xff]
        %v3190 = vmul.f32 %v3174, %v3186
        %v3191 = vmul.f32 %v3177, %v3188
        %v3192 = vsub.f32 %v3190, %v3191
        %v3193 = vmul.f32 %v3174, %v3187
        %v3194 = vmul.f32 %v3177, %v3189
        %v3195 = vsub.f32 %v3193, %v3194
        %v3196 = vmul.f32 %v3177, %v3186
        %v3197 = vmul.f32 %v3174, %v3188
        %v3198 = vadd.f32 %v3196, %v3197
        %v3199 = vmul.f32 %v3177, %v3187
        %v3200 = vmul.f32 %v3174, %v3189
        %v3201 = vadd.f32 %v3199, %v3200
        %3202 = vst [vmem:[%s3179] sm:$0xff] %v3192
        %3203 = vst [vmem:[%s3181] sm:$0xff] %v3195
        %3204 = vst [vmem:[%s3183] sm:$0xff] %v3198
        %3205 = vst [vmem:[%s3185] sm:$0xff] %v3201
        %s3206 = smov [#allocation23]
        %s3207 = scalar_lea.vmem %s3206, 48
        %v3208 = vld [vmem:[%s3207] sm:$0xff]
        %s3209 = smov [#allocation24]
        %s3210 = scalar_lea.vmem %s3209, 48
        %v3211 = vld [vmem:[%s3210] sm:$0xff]
        %s3212 = smov [#allocation8]
        %s3213 = scalar_lea.vmem %s3212, 48
        %s3214 = smov [#allocation9]
        %s3215 = scalar_lea.vmem %s3214, 48
        %s3216 = smov [#allocation10]
        %s3217 = scalar_lea.vmem %s3216, 48
        %s3218 = smov [#allocation11]
        %s3219 = scalar_lea.vmem %s3218, 48
        %v3220 = vld [vmem:[%s3213] sm:$0xff]
        %v3221 = vld [vmem:[%s3215] sm:$0xff]
        %v3222 = vld [vmem:[%s3217] sm:$0xff]
        %v3223 = vld [vmem:[%s3219] sm:$0xff]
        %v3224 = vmul.f32 %v3208, %v3220
        %v3225 = vmul.f32 %v3211, %v3222
        %v3226 = vsub.f32 %v3224, %v3225
        %v3227 = vmul.f32 %v3208, %v3221
        %v3228 = vmul.f32 %v3211, %v3223
        %v3229 = vsub.f32 %v3227, %v3228
        %v3230 = vmul.f32 %v3211, %v3220
        %v3231 = vmul.f32 %v3208, %v3222
        %v3232 = vadd.f32 %v3230, %v3231
        %v3233 = vmul.f32 %v3211, %v3221
        %v3234 = vmul.f32 %v3208, %v3223
        %v3235 = vadd.f32 %v3233, %v3234
        %3236 = vst [vmem:[%s3213] sm:$0xff] %v3226
        %3237 = vst [vmem:[%s3215] sm:$0xff] %v3229
        %3238 = vst [vmem:[%s3217] sm:$0xff] %v3232
        %3239 = vst [vmem:[%s3219] sm:$0xff] %v3235
        %s3240 = smov [#allocation23]
        %s3241 = scalar_lea.vmem %s3240, 56
        %v3242 = vld [vmem:[%s3241] sm:$0xff]
        %s3243 = smov [#allocation24]
        %s3244 = scalar_lea.vmem %s3243, 56
        %v3245 = vld [vmem:[%s3244] sm:$0xff]
        %s3246 = smov [#allocation8]
        %s3247 = scalar_lea.vmem %s3246, 56
        %s3248 = smov [#allocation9]
        %s3249 = scalar_lea.vmem %s3248, 56
        %s3250 = smov [#allocation10]
        %s3251 = scalar_lea.vmem %s3250, 56
        %s3252 = smov [#allocation11]
        %s3253 = scalar_lea.vmem %s3252, 56
        %v3254 = vld [vmem:[%s3247] sm:$0xff]
        %v3255 = vld [vmem:[%s3249] sm:$0xff]
        %v3256 = vld [vmem:[%s3251] sm:$0xff]
        %v3257 = vld [vmem:[%s3253] sm:$0xff]
        %v3258 = vmul.f32 %v3242, %v3254
        %v3259 = vmul.f32 %v3245, %v3256
        %v3260 = vsub.f32 %v3258, %v3259
        %v3261 = vmul.f32 %v3242, %v3255
        %v3262 = vmul.f32 %v3245, %v3257
        %v3263 = vsub.f32 %v3261, %v3262
        %v3264 = vmul.f32 %v3245, %v3254
        %v3265 = vmul.f32 %v3242, %v3256
        %v3266 = vadd.f32 %v3264, %v3265
        %v3267 = vmul.f32 %v3245, %v3255
        %v3268 = vmul.f32 %v3242, %v3257
        %v3269 = vadd.f32 %v3267, %v3268
        %3270 = vst [vmem:[%s3247] sm:$0xff] %v3260
        %3271 = vst [vmem:[%s3249] sm:$0xff] %v3263
        %3272 = vst [vmem:[%s3251] sm:$0xff] %v3266
        %3273 = vst [vmem:[%s3253] sm:$0xff] %v3269
        %s3274 = smov [#allocation8]
        %s3275 = smov [#allocation10]
        %v3276 = vld [vmem:[%s3274] ss:$0 sm:$0xff]
        %s3278 = scalar_lea.vmem %s3274, 4294967295
        %v3279 = vld [vmem:[%s3278] sm:$0xfe]
        %v3280 = vlaneseq
        %v3281 = vshrl.u32 %v3280, 7
        %vm3282 = vcmp.eq.s32.totalorder %v3281, 0
        %v3283 = vsel %vm3282, %v3276, %v3279
        %s3284 = scalar_lea.vmem %s3274, 7
        %v3285 = vld [vmem:[%s3284] ss:$0 sm:$0xff]
        %3286 = vst [vmem:[%s3274] sm:$0xff] %v3283
        %s3287 = scalar_lea.vmem %s3274, 8
        %s3289 = scalar_lea.vmem %s3287, 4294967295
        %v3290 = vld [vmem:[%s3289] sm:$0xfe]
        %v3291 = vlaneseq
        %v3292 = vshrl.u32 %v3291, 7
        %vm3293 = vcmp.eq.s32.totalorder %v3292, 0
        %v3294 = vsel %vm3293, %v3285, %v3290
        %s3295 = scalar_lea.vmem %s3287, 7
        %v3296 = vld [vmem:[%s3295] ss:$0 sm:$0xff]
        %3297 = vst [vmem:[%s3287] sm:$0xff] %v3294
        %s3298 = scalar_lea.vmem %s3274, 16
        %s3300 = scalar_lea.vmem %s3298, 4294967295
        %v3301 = vld [vmem:[%s3300] sm:$0xfe]
        %v3302 = vlaneseq
        %v3303 = vshrl.u32 %v3302, 7
        %vm3304 = vcmp.eq.s32.totalorder %v3303, 0
        %v3305 = vsel %vm3304, %v3296, %v3301
        %s3306 = scalar_lea.vmem %s3298, 7
        %v3307 = vld [vmem:[%s3306] ss:$0 sm:$0xff]
        %3308 = vst [vmem:[%s3298] sm:$0xff] %v3305
        %s3309 = scalar_lea.vmem %s3274, 24
        %s3311 = scalar_lea.vmem %s3309, 4294967295
        %v3312 = vld [vmem:[%s3311] sm:$0xfe]
        %v3313 = vlaneseq
        %v3314 = vshrl.u32 %v3313, 7
        %vm3315 = vcmp.eq.s32.totalorder %v3314, 0
        %v3316 = vsel %vm3315, %v3307, %v3312
        %s3317 = scalar_lea.vmem %s3309, 7
        %v3318 = vld [vmem:[%s3317] ss:$0 sm:$0xff]
        %3319 = vst [vmem:[%s3309] sm:$0xff] %v3316
        %s3320 = scalar_lea.vmem %s3274, 32
        %s3322 = scalar_lea.vmem %s3320, 4294967295
        %v3323 = vld [vmem:[%s3322] sm:$0xfe]
        %v3324 = vlaneseq
        %v3325 = vshrl.u32 %v3324, 7
        %vm3326 = vcmp.eq.s32.totalorder %v3325, 0
        %v3327 = vsel %vm3326, %v3318, %v3323
        %s3328 = scalar_lea.vmem %s3320, 7
        %v3329 = vld [vmem:[%s3328] ss:$0 sm:$0xff]
        %3330 = vst [vmem:[%s3320] sm:$0xff] %v3327
        %s3331 = scalar_lea.vmem %s3274, 40
        %s3333 = scalar_lea.vmem %s3331, 4294967295
        %v3334 = vld [vmem:[%s3333] sm:$0xfe]
        %v3335 = vlaneseq
        %v3336 = vshrl.u32 %v3335, 7
        %vm3337 = vcmp.eq.s32.totalorder %v3336, 0
        %v3338 = vsel %vm3337, %v3329, %v3334
        %s3339 = scalar_lea.vmem %s3331, 7
        %v3340 = vld [vmem:[%s3339] ss:$0 sm:$0xff]
        %3341 = vst [vmem:[%s3331] sm:$0xff] %v3338
        %s3342 = scalar_lea.vmem %s3274, 48
        %s3344 = scalar_lea.vmem %s3342, 4294967295
        %v3345 = vld [vmem:[%s3344] sm:$0xfe]
        %v3346 = vlaneseq
        %v3347 = vshrl.u32 %v3346, 7
        %vm3348 = vcmp.eq.s32.totalorder %v3347, 0
        %v3349 = vsel %vm3348, %v3340, %v3345
        %s3350 = scalar_lea.vmem %s3342, 7
        %v3351 = vld [vmem:[%s3350] ss:$0 sm:$0xff]
        %3352 = vst [vmem:[%s3342] sm:$0xff] %v3349
        %s3353 = scalar_lea.vmem %s3274, 56
        %s3355 = scalar_lea.vmem %s3353, 4294967295
        %v3356 = vld [vmem:[%s3355] sm:$0xfe]
        %v3357 = vlaneseq
        %v3358 = vshrl.u32 %v3357, 7
        %vm3359 = vcmp.eq.s32.totalorder %v3358, 0
        %v3360 = vsel %vm3359, %v3351, %v3356
        %s3361 = scalar_lea.vmem %s3353, 7
        %v3362 = vld [vmem:[%s3361] ss:$0 sm:$0xff]
        %3363 = vst [vmem:[%s3353] sm:$0xff] %v3360
        %v3364 = vld [vmem:[%s3275] ss:$0 sm:$0xff]
        %s3365 = scalar_lea.vmem %s3274, 1
        %3366 = vst [vmem:[%s3365] sm:$0x1] %v3364
        %s3367 = scalar_lea.vmem %s3275, 56
        %s3368 = scalar_lea.vmem %s3367, 1
        %v3369 = vld [vmem:[%s3368] sm:$0x7f]
        %v3370 = vlaneseq
        %v3371 = vshrl.u32 %v3370, 7
        %vm3372 = vcmp.eq.s32.totalorder %v3371, 7
        %v3373 = vsel %vm3372, %v3362, %v3369
        %v3374 = vld [vmem:[%s3367] ss:$0 sm:$0xff]
        %3375 = vst [vmem:[%s3367] sm:$0xff] %v3373
        %s3376 = scalar_lea.vmem %s3275, 48
        %s3377 = scalar_lea.vmem %s3376, 1
        %v3378 = vld [vmem:[%s3377] sm:$0x7f]
        %v3379 = vlaneseq
        %v3380 = vshrl.u32 %v3379, 7
        %vm3381 = vcmp.eq.s32.totalorder %v3380, 7
        %v3382 = vsel %vm3381, %v3374, %v3378
        %v3383 = vld [vmem:[%s3376] ss:$0 sm:$0xff]
        %3384 = vst [vmem:[%s3376] sm:$0xff] %v3382
        %s3385 = scalar_lea.vmem %s3275, 40
        %s3386 = scalar_lea.vmem %s3385, 1
        %v3387 = vld [vmem:[%s3386] sm:$0x7f]
        %v3388 = vlaneseq
        %v3389 = vshrl.u32 %v3388, 7
        %vm3390 = vcmp.eq.s32.totalorder %v3389, 7
        %v3391 = vsel %vm3390, %v3383, %v3387
        %v3392 = vld [vmem:[%s3385] ss:$0 sm:$0xff]
        %3393 = vst [vmem:[%s3385] sm:$0xff] %v3391
        %s3394 = scalar_lea.vmem %s3275, 32
        %s3395 = scalar_lea.vmem %s3394, 1
        %v3396 = vld [vmem:[%s3395] sm:$0x7f]
        %v3397 = vlaneseq
        %v3398 = vshrl.u32 %v3397, 7
        %vm3399 = vcmp.eq.s32.totalorder %v3398, 7
        %v3400 = vsel %vm3399, %v3392, %v3396
        %v3401 = vld [vmem:[%s3394] ss:$0 sm:$0xff]
        %3402 = vst [vmem:[%s3394] sm:$0xff] %v3400
        %s3403 = scalar_lea.vmem %s3275, 24
        %s3404 = scalar_lea.vmem %s3403, 1
        %v3405 = vld [vmem:[%s3404] sm:$0x7f]
        %v3406 = vlaneseq
        %v3407 = vshrl.u32 %v3406, 7
        %vm3408 = vcmp.eq.s32.totalorder %v3407, 7
        %v3409 = vsel %vm3408, %v3401, %v3405
        %v3410 = vld [vmem:[%s3403] ss:$0 sm:$0xff]
        %3411 = vst [vmem:[%s3403] sm:$0xff] %v3409
        %s3412 = scalar_lea.vmem %s3275, 16
        %s3413 = scalar_lea.vmem %s3412, 1
        %v3414 = vld [vmem:[%s3413] sm:$0x7f]
        %v3415 = vlaneseq
        %v3416 = vshrl.u32 %v3415, 7
        %vm3417 = vcmp.eq.s32.totalorder %v3416, 7
        %v3418 = vsel %vm3417, %v3410, %v3414
        %v3419 = vld [vmem:[%s3412] ss:$0 sm:$0xff]
        %3420 = vst [vmem:[%s3412] sm:$0xff] %v3418
        %s3421 = scalar_lea.vmem %s3275, 8
        %s3422 = scalar_lea.vmem %s3421, 1
        %v3423 = vld [vmem:[%s3422] sm:$0x7f]
        %v3424 = vlaneseq
        %v3425 = vshrl.u32 %v3424, 7
        %vm3426 = vcmp.eq.s32.totalorder %v3425, 7
        %v3427 = vsel %vm3426, %v3419, %v3423
        %v3428 = vld [vmem:[%s3421] ss:$0 sm:$0xff]
        %3429 = vst [vmem:[%s3421] sm:$0xff] %v3427
        %s3430 = scalar_lea.vmem %s3275, 1
        %v3431 = vld [vmem:[%s3430] sm:$0x7f]
        %v3432 = vlaneseq
        %v3433 = vshrl.u32 %v3432, 7
        %vm3434 = vcmp.eq.s32.totalorder %v3433, 7
        %v3435 = vsel %vm3434, %v3428, %v3431
        %v3436 = vld [vmem:[%s3275] ss:$0 sm:$0xff]
        %3437 = vst [vmem:[%s3275] sm:$0xff] %v3435
        %s3438 = smov [#allocation9]
        %s3439 = smov [#allocation11]
        %v3440 = vld [vmem:[%s3438] ss:$0 sm:$0xff]
        %s3442 = scalar_lea.vmem %s3438, 4294967295
        %v3443 = vld [vmem:[%s3442] sm:$0xfe]
        %v3444 = vlaneseq
        %v3445 = vshrl.u32 %v3444, 7
        %vm3446 = vcmp.eq.s32.totalorder %v3445, 0
        %v3447 = vsel %vm3446, %v3440, %v3443
        %s3448 = scalar_lea.vmem %s3438, 7
        %v3449 = vld [vmem:[%s3448] ss:$0 sm:$0xff]
        %3450 = vst [vmem:[%s3438] sm:$0xff] %v3447
        %s3451 = scalar_lea.vmem %s3438, 8
        %s3453 = scalar_lea.vmem %s3451, 4294967295
        %v3454 = vld [vmem:[%s3453] sm:$0xfe]
        %v3455 = vlaneseq
        %v3456 = vshrl.u32 %v3455, 7
        %vm3457 = vcmp.eq.s32.totalorder %v3456, 0
        %v3458 = vsel %vm3457, %v3449, %v3454
        %s3459 = scalar_lea.vmem %s3451, 7
        %v3460 = vld [vmem:[%s3459] ss:$0 sm:$0xff]
        %3461 = vst [vmem:[%s3451] sm:$0xff] %v3458
        %s3462 = scalar_lea.vmem %s3438, 16
        %s3464 = scalar_lea.vmem %s3462, 4294967295
        %v3465 = vld [vmem:[%s3464] sm:$0xfe]
        %v3466 = vlaneseq
        %v3467 = vshrl.u32 %v3466, 7
        %vm3468 = vcmp.eq.s32.totalorder %v3467, 0
        %v3469 = vsel %vm3468, %v3460, %v3465
        %s3470 = scalar_lea.vmem %s3462, 7
        %v3471 = vld [vmem:[%s3470] ss:$0 sm:$0xff]
        %3472 = vst [vmem:[%s3462] sm:$0xff] %v3469
        %s3473 = scalar_lea.vmem %s3438, 24
        %s3475 = scalar_lea.vmem %s3473, 4294967295
        %v3476 = vld [vmem:[%s3475] sm:$0xfe]
        %v3477 = vlaneseq
        %v3478 = vshrl.u32 %v3477, 7
        %vm3479 = vcmp.eq.s32.totalorder %v3478, 0
        %v3480 = vsel %vm3479, %v3471, %v3476
        %s3481 = scalar_lea.vmem %s3473, 7
        %v3482 = vld [vmem:[%s3481] ss:$0 sm:$0xff]
        %3483 = vst [vmem:[%s3473] sm:$0xff] %v3480
        %s3484 = scalar_lea.vmem %s3438, 32
        %s3486 = scalar_lea.vmem %s3484, 4294967295
        %v3487 = vld [vmem:[%s3486] sm:$0xfe]
        %v3488 = vlaneseq
        %v3489 = vshrl.u32 %v3488, 7
        %vm3490 = vcmp.eq.s32.totalorder %v3489, 0
        %v3491 = vsel %vm3490, %v3482, %v3487
        %s3492 = scalar_lea.vmem %s3484, 7
        %v3493 = vld [vmem:[%s3492] ss:$0 sm:$0xff]
        %3494 = vst [vmem:[%s3484] sm:$0xff] %v3491
        %s3495 = scalar_lea.vmem %s3438, 40
        %s3497 = scalar_lea.vmem %s3495, 4294967295
        %v3498 = vld [vmem:[%s3497] sm:$0xfe]
        %v3499 = vlaneseq
        %v3500 = vshrl.u32 %v3499, 7
        %vm3501 = vcmp.eq.s32.totalorder %v3500, 0
        %v3502 = vsel %vm3501, %v3493, %v3498
        %s3503 = scalar_lea.vmem %s3495, 7
        %v3504 = vld [vmem:[%s3503] ss:$0 sm:$0xff]
        %3505 = vst [vmem:[%s3495] sm:$0xff] %v3502
        %s3506 = scalar_lea.vmem %s3438, 48
        %s3508 = scalar_lea.vmem %s3506, 4294967295
        %v3509 = vld [vmem:[%s3508] sm:$0xfe]
        %v3510 = vlaneseq
        %v3511 = vshrl.u32 %v3510, 7
        %vm3512 = vcmp.eq.s32.totalorder %v3511, 0
        %v3513 = vsel %vm3512, %v3504, %v3509
        %s3514 = scalar_lea.vmem %s3506, 7
        %v3515 = vld [vmem:[%s3514] ss:$0 sm:$0xff]
        %3516 = vst [vmem:[%s3506] sm:$0xff] %v3513
        %s3517 = scalar_lea.vmem %s3438, 56
        %s3519 = scalar_lea.vmem %s3517, 4294967295
        %v3520 = vld [vmem:[%s3519] sm:$0xfe]
        %v3521 = vlaneseq
        %v3522 = vshrl.u32 %v3521, 7
        %vm3523 = vcmp.eq.s32.totalorder %v3522, 0
        %v3524 = vsel %vm3523, %v3515, %v3520
        %s3525 = scalar_lea.vmem %s3517, 7
        %v3526 = vld [vmem:[%s3525] ss:$0 sm:$0xff]
        %3527 = vst [vmem:[%s3517] sm:$0xff] %v3524
        %v3528 = vld [vmem:[%s3439] ss:$0 sm:$0xff]
        %s3529 = scalar_lea.vmem %s3438, 1
        %3530 = vst [vmem:[%s3529] sm:$0x1] %v3528
        %s3531 = scalar_lea.vmem %s3439, 56
        %s3532 = scalar_lea.vmem %s3531, 1
        %v3533 = vld [vmem:[%s3532] sm:$0x7f]
        %v3534 = vlaneseq
        %v3535 = vshrl.u32 %v3534, 7
        %vm3536 = vcmp.eq.s32.totalorder %v3535, 7
        %v3537 = vsel %vm3536, %v3526, %v3533
        %v3538 = vld [vmem:[%s3531] ss:$0 sm:$0xff]
        %3539 = vst [vmem:[%s3531] sm:$0xff] %v3537
        %s3540 = scalar_lea.vmem %s3439, 48
        %s3541 = scalar_lea.vmem %s3540, 1
        %v3542 = vld [vmem:[%s3541] sm:$0x7f]
        %v3543 = vlaneseq
        %v3544 = vshrl.u32 %v3543, 7
        %vm3545 = vcmp.eq.s32.totalorder %v3544, 7
        %v3546 = vsel %vm3545, %v3538, %v3542
        %v3547 = vld [vmem:[%s3540] ss:$0 sm:$0xff]
        %3548 = vst [vmem:[%s3540] sm:$0xff] %v3546
        %s3549 = scalar_lea.vmem %s3439, 40
        %s3550 = scalar_lea.vmem %s3549, 1
        %v3551 = vld [vmem:[%s3550] sm:$0x7f]
        %v3552 = vlaneseq
        %v3553 = vshrl.u32 %v3552, 7
        %vm3554 = vcmp.eq.s32.totalorder %v3553, 7
        %v3555 = vsel %vm3554, %v3547, %v3551
        %v3556 = vld [vmem:[%s3549] ss:$0 sm:$0xff]
        %3557 = vst [vmem:[%s3549] sm:$0xff] %v3555
        %s3558 = scalar_lea.vmem %s3439, 32
        %s3559 = scalar_lea.vmem %s3558, 1
        %v3560 = vld [vmem:[%s3559] sm:$0x7f]
        %v3561 = vlaneseq
        %v3562 = vshrl.u32 %v3561, 7
        %vm3563 = vcmp.eq.s32.totalorder %v3562, 7
        %v3564 = vsel %vm3563, %v3556, %v3560
        %v3565 = vld [vmem:[%s3558] ss:$0 sm:$0xff]
        %3566 = vst [vmem:[%s3558] sm:$0xff] %v3564
        %s3567 = scalar_lea.vmem %s3439, 24
        %s3568 = scalar_lea.vmem %s3567, 1
        %v3569 = vld [vmem:[%s3568] sm:$0x7f]
        %v3570 = vlaneseq
        %v3571 = vshrl.u32 %v3570, 7
        %vm3572 = vcmp.eq.s32.totalorder %v3571, 7
        %v3573 = vsel %vm3572, %v3565, %v3569
        %v3574 = vld [vmem:[%s3567] ss:$0 sm:$0xff]
        %3575 = vst [vmem:[%s3567] sm:$0xff] %v3573
        %s3576 = scalar_lea.vmem %s3439, 16
        %s3577 = scalar_lea.vmem %s3576, 1
        %v3578 = vld [vmem:[%s3577] sm:$0x7f]
        %v3579 = vlaneseq
        %v3580 = vshrl.u32 %v3579, 7
        %vm3581 = vcmp.eq.s32.totalorder %v3580, 7
        %v3582 = vsel %vm3581, %v3574, %v3578
        %v3583 = vld [vmem:[%s3576] ss:$0 sm:$0xff]
        %3584 = vst [vmem:[%s3576] sm:$0xff] %v3582
        %s3585 = scalar_lea.vmem %s3439, 8
        %s3586 = scalar_lea.vmem %s3585, 1
        %v3587 = vld [vmem:[%s3586] sm:$0x7f]
        %v3588 = vlaneseq
        %v3589 = vshrl.u32 %v3588, 7
        %vm3590 = vcmp.eq.s32.totalorder %v3589, 7
        %v3591 = vsel %vm3590, %v3583, %v3587
        %v3592 = vld [vmem:[%s3585] ss:$0 sm:$0xff]
        %3593 = vst [vmem:[%s3585] sm:$0xff] %v3591
        %s3594 = scalar_lea.vmem %s3439, 1
        %v3595 = vld [vmem:[%s3594] sm:$0x7f]
        %v3596 = vlaneseq
        %v3597 = vshrl.u32 %v3596, 7
        %vm3598 = vcmp.eq.s32.totalorder %v3597, 7
        %v3599 = vsel %vm3598, %v3592, %v3595
        %v3600 = vld [vmem:[%s3439] ss:$0 sm:$0xff]
        %3601 = vst [vmem:[%s3439] sm:$0xff] %v3599
      $region101: #{custom-call.2} parent=93 // loop_footer
        %s894 = sadd.s32 1, %s890
      $region102: #{custom-call.2} parent=93 // loop_footer_branch
        %889 = sbr.rel target = $region98
      $region103: #{custom-call.2} parent=93 // loop_exit
        _
      %s3602 = sadd.s32 %s568, 1
    $region94: #{custom-call.2} parent=1 // loop_footer
      _
    $region95: #{custom-call.2} parent=1 // loop_footer_branch
      %567 = sbr.rel target = $region91
    $region96: #{custom-call.2} parent=1 // loop_exit
      _
    %s3605 = smov [#allocation12]
    %s3606 = smov [#allocation4]
    %v3607 = vlaneseq
    %v3608 = vand.u32 %v3607, 127
    %v3609 = vmov %v3608
    %v3610 = vlaneseq
    %v3611 = vshrl.u32 %v3610, 7
    %v3612 = vmov %v3611
    %v3613 = vld [vmem:[%s3605] sm:$0xff]
    %vm3616 = vcmp.eq.s32.totalorder %v3612, %v3609
    %v3617 = vsel %vm3616, %v3613, 0.0
    %s3618 = scalar_lea.vmem %s3605, 8
    %v3619 = vld [vmem:[%s3618] sm:$0xff]
    %v3621 = vadd.s32 %v3612, 8
    %vm3622 = vcmp.eq.s32.totalorder %v3621, %v3609
    %v3623 = vsel %vm3622, %v3619, %v3617
    %s3624 = scalar_lea.vmem %s3605, 16
    %v3625 = vld [vmem:[%s3624] sm:$0xff]
    %v3627 = vadd.s32 %v3612, 16
    %vm3628 = vcmp.eq.s32.totalorder %v3627, %v3609
    %v3629 = vsel %vm3628, %v3625, %v3623
    %s3630 = scalar_lea.vmem %s3605, 24
    %v3631 = vld [vmem:[%s3630] sm:$0xff]
    %v3633 = vadd.s32 %v3612, 24
    %vm3634 = vcmp.eq.s32.totalorder %v3633, %v3609
    %v3635 = vsel %vm3634, %v3631, %v3629
    %s3636 = scalar_lea.vmem %s3605, 32
    %v3637 = vld [vmem:[%s3636] sm:$0xff]
    %v3639 = vadd.s32 %v3612, 32
    %vm3640 = vcmp.eq.s32.totalorder %v3639, %v3609
    %v3641 = vsel %vm3640, %v3637, %v3635
    %s3642 = scalar_lea.vmem %s3605, 40
    %v3643 = vld [vmem:[%s3642] sm:$0xff]
    %v3645 = vadd.s32 %v3612, 40
    %vm3646 = vcmp.eq.s32.totalorder %v3645, %v3609
    %v3647 = vsel %vm3646, %v3643, %v3641
    %s3648 = scalar_lea.vmem %s3605, 48
    %v3649 = vld [vmem:[%s3648] sm:$0xff]
    %v3651 = vadd.s32 %v3612, 48
    %vm3652 = vcmp.eq.s32.totalorder %v3651, %v3609
    %v3653 = vsel %vm3652, %v3649, %v3647
    %s3654 = scalar_lea.vmem %s3605, 56
    %v3655 = vld [vmem:[%s3654] sm:$0xff]
    %v3657 = vadd.s32 %v3612, 56
    %vm3658 = vcmp.eq.s32.totalorder %v3657, %v3609
    %v3659 = vsel %vm3658, %v3655, %v3653
    %v3660 = vrot.slane %v3659, 4
    %v3661 = vadd.f32 %v3659, %v3660
    %v3662 = vrot.slane %v3661, 2
    %v3663 = vadd.f32 %v3661, %v3662
    %v3664 = vrot.slane %v3663, 1
    %v3665 = vadd.f32 %v3663, %v3664
    %3666 = vst [vmem:[%s3606] sm:$0x1] %v3665
    %s3667 = smov [#allocation15]
    %s3668 = smov [#allocation6]
    %v3669 = vlaneseq
    %v3670 = vand.u32 %v3669, 127
    %v3671 = vmov %v3670
    %v3672 = vlaneseq
    %v3673 = vshrl.u32 %v3672, 7
    %v3674 = vmov %v3673
    %v3675 = vld [vmem:[%s3667] sm:$0xff]
    %vm3678 = vcmp.eq.s32.totalorder %v3674, %v3671
    %v3679 = vsel %vm3678, %v3675, 0.0
    %s3680 = scalar_lea.vmem %s3667, 8
    %v3681 = vld [vmem:[%s3680] sm:$0xff]
    %v3683 = vadd.s32 %v3674, 8
    %vm3684 = vcmp.eq.s32.totalorder %v3683, %v3671
    %v3685 = vsel %vm3684, %v3681, %v3679
    %s3686 = scalar_lea.vmem %s3667, 16
    %v3687 = vld [vmem:[%s3686] sm:$0xff]
    %v3689 = vadd.s32 %v3674, 16
    %vm3690 = vcmp.eq.s32.totalorder %v3689, %v3671
    %v3691 = vsel %vm3690, %v3687, %v3685
    %s3692 = scalar_lea.vmem %s3667, 24
    %v3693 = vld [vmem:[%s3692] sm:$0xff]
    %v3695 = vadd.s32 %v3674, 24
    %vm3696 = vcmp.eq.s32.totalorder %v3695, %v3671
    %v3697 = vsel %vm3696, %v3693, %v3691
    %s3698 = scalar_lea.vmem %s3667, 32
    %v3699 = vld [vmem:[%s3698] sm:$0xff]
    %v3701 = vadd.s32 %v3674, 32
    %vm3702 = vcmp.eq.s32.totalorder %v3701, %v3671
    %v3703 = vsel %vm3702, %v3699, %v3697
    %s3704 = scalar_lea.vmem %s3667, 40
    %v3705 = vld [vmem:[%s3704] sm:$0xff]
    %v3707 = vadd.s32 %v3674, 40
    %vm3708 = vcmp.eq.s32.totalorder %v3707, %v3671
    %v3709 = vsel %vm3708, %v3705, %v3703
    %s3710 = scalar_lea.vmem %s3667, 48
    %v3711 = vld [vmem:[%s3710] sm:$0xff]
    %v3713 = vadd.s32 %v3674, 48
    %vm3714 = vcmp.eq.s32.totalorder %v3713, %v3671
    %v3715 = vsel %vm3714, %v3711, %v3709
    %s3716 = scalar_lea.vmem %s3667, 56
    %v3717 = vld [vmem:[%s3716] sm:$0xff]
    %v3719 = vadd.s32 %v3674, 56
    %vm3720 = vcmp.eq.s32.totalorder %v3719, %v3671
    %v3721 = vsel %vm3720, %v3717, %v3715
    %v3722 = vrot.slane %v3721, 4
    %v3723 = vadd.f32 %v3721, %v3722
    %v3724 = vrot.slane %v3723, 2
    %v3725 = vadd.f32 %v3723, %v3724
    %v3726 = vrot.slane %v3725, 1
    %v3727 = vadd.f32 %v3725, %v3726
    %3728 = vst [vmem:[%s3668] sm:$0x1] %v3727
    %s3730 = sshllo.u32 0, 1
    %v3732 = vld [vmem:[#allocation4] sm:%s3730]
    %s3733 = sshllo.u32 0, 1
    %3734 = vst [vmem:[#allocation5] sm:%s3733] %v3732
    %s3736 = sshllo.u32 0, 1
    %v3738 = vld [vmem:[#allocation6] sm:%s3736]
    %s3739 = sshllo.u32 0, 1
    %3740 = vst [vmem:[#allocation7] sm:%s3739] %v3738
    // Predicated region
    $region104: #{custom-call.2} parent=1 // pred_check
      _
    $region105: #{custom-call.2} parent=1 // pred_check_branch
      %3742 = sbr.rel (0) target = $region107
    $region106: #{custom-call.2} parent=1 // pred_region
      %p3744 = scmp.gt.s32.totalorder 1, 0
      // Predicated region
      $region108: #{custom-call.2} parent=106 // pred_check
        %p3745 = pneg %p3744
      $region109: #{custom-call.2} parent=106 // pred_check_branch
        %3747 = sbr.rel (%p3745) target = $region111
      $region110: #{custom-call.2} parent=106 // pred_region
        %s3748 = sshra.s32 1, 3
        %p3749 = scmp.gt.s32.totalorder %s3748, 0
        // Predicated region
        $region112: #{custom-call.2} parent=110 // pred_check
          %p3750 = pneg %p3749
        $region113: #{custom-call.2} parent=110 // pred_check_branch
          %3752 = sbr.rel (%p3750) target = $region115
        $region114: #{custom-call.2} parent=110 // pred_region
          %s3753 = ssub.s32 %s3748, 1
          %s3754 = smul.u32 %s3753, 128
          %s3755 = sshra.s32 %s3754, 4
          %s3756 = scalar_lea.vmem [#allocation5], %s3755
          %v3757 = vld [vmem:[#allocation5] sm:$0xff]
          // While loop
          $region116: #{custom-call.2} parent=114 // loop_pre_header
            _
          $region117: #{custom-call.2} parent=114 // loop_header
            %s3758 = sphi [#allocation5], %s3780
            %s3759 = sphi %s4, %s3781
            %v3760 = vphi %v3757, %v3782
            %s3761 = ssub.s32 %s3756, 64
            %p3762 = scmp.gt.s32.totalorder %s3758, %s3761
          $region118: #{custom-call.2} parent=114 // loop_header_branch
            %3764 = sbr.rel (%p3762) target = $region122
          $region119: #{custom-call.2} parent=114 // loop_body
            %3765 = vst [vmem:[%s3759] sm:$0xff] %v3760
            %v3766 = vld [vmem:[%s3758 + $0x8] sm:$0xff]
            %3767 = vst [vmem:[%s3759 + $0x8] sm:$0xff] %v3766
            %v3768 = vld [vmem:[%s3758 + $0x10] sm:$0xff]
            %3769 = vst [vmem:[%s3759 + $0x10] sm:$0xff] %v3768
            %v3770 = vld [vmem:[%s3758 + $0x18] sm:$0xff]
            %3771 = vst [vmem:[%s3759 + $0x18] sm:$0xff] %v3770
            %v3772 = vld [vmem:[%s3758 + $0x20] sm:$0xff]
            %3773 = vst [vmem:[%s3759 + $0x20] sm:$0xff] %v3772
            %v3774 = vld [vmem:[%s3758 + $0x28] sm:$0xff]
            %3775 = vst [vmem:[%s3759 + $0x28] sm:$0xff] %v3774
            %v3776 = vld [vmem:[%s3758 + $0x30] sm:$0xff]
            %3777 = vst [vmem:[%s3759 + $0x30] sm:$0xff] %v3776
            %v3778 = vld [vmem:[%s3758 + $0x38] sm:$0xff]
            %3779 = vst [vmem:[%s3759 + $0x38] sm:$0xff] %v3778
          $region120: #{custom-call.2} parent=114 // loop_footer
            %s3780 = scalar_lea.vmem %s3758, 64
            %s3781 = scalar_lea.vmem %s3759, 64
            %v3782 = vld [vmem:[%s3758 + $0x40] sm:$0xff]
          $region121: #{custom-call.2} parent=114 // loop_footer_branch
            %3783 = sbr.rel target = $region117
          $region122: #{custom-call.2} parent=114 // loop_exit
            _
          // While loop
          $region123: #{custom-call.2} parent=114 // loop_pre_header
            _
          $region124: #{custom-call.2} parent=114 // loop_header
            %s3784 = sphi %s3758, %s3792
            %s3785 = sphi %s3759, %s3793
            %v3786 = vphi %v3760, %v3786
            %p3787 = scmp.gt.s32.totalorder %s3784, %s3756
          $region125: #{custom-call.2} parent=114 // loop_header_branch
            %3789 = sbr.rel (%p3787) target = $region129
          $region126: #{custom-call.2} parent=114 // loop_body
            %v3790 = vld [vmem:[%s3784] sm:$0xff]
            %3791 = vst [vmem:[%s3785] sm:$0xff] %v3790
          $region127: #{custom-call.2} parent=114 // loop_footer
            %s3792 = scalar_lea.vmem %s3784, 8
            %s3793 = scalar_lea.vmem %s3785, 8
          $region128: #{custom-call.2} parent=114 // loop_footer_branch
            %3794 = sbr.rel target = $region124
          $region129: #{custom-call.2} parent=114 // loop_exit
            _
        $region115: #{custom-call.2} parent=110 // pred_fallthru
          _
        %s3795 = sand.u32 1, 7
        %s3796 = sshllo.u32 0, %s3795
        %s3797 = smul.u32 %s3748, 128
        %s3798 = sshra.s32 %s3797, 4
        %s3799 = scalar_lea.vmem %s4, %s3798
        %s3800 = smul.u32 %s3748, 128
        %s3801 = sshra.s32 %s3800, 4
        %s3802 = scalar_lea.vmem [#allocation5], %s3801
        %v3803 = vld [vmem:[%s3802] sm:%s3796]
        %3804 = vst [vmem:[%s3799] sm:%s3796] %v3803
      $region111: #{custom-call.2} parent=106 // pred_fallthru
        _
    $region107: #{custom-call.2} parent=1 // pred_fallthru
      _
    // Predicated region
    $region130: #{custom-call.2} parent=1 // pred_check
      _
    $region131: #{custom-call.2} parent=1 // pred_check_branch
      %3806 = sbr.rel (0) target = $region133
    $region132: #{custom-call.2} parent=1 // pred_region
      %p3808 = scmp.gt.s32.totalorder 1, 0
      // Predicated region
      $region134: #{custom-call.2} parent=132 // pred_check
        %p3809 = pneg %p3808
      $region135: #{custom-call.2} parent=132 // pred_check_branch
        %3811 = sbr.rel (%p3809) target = $region137
      $region136: #{custom-call.2} parent=132 // pred_region
        %s3812 = sshra.s32 1, 3
        %p3813 = scmp.gt.s32.totalorder %s3812, 0
        // Predicated region
        $region138: #{custom-call.2} parent=136 // pred_check
          %p3814 = pneg %p3813
        $region139: #{custom-call.2} parent=136 // pred_check_branch
          %3816 = sbr.rel (%p3814) target = $region141
        $region140: #{custom-call.2} parent=136 // pred_region
          %s3817 = ssub.s32 %s3812, 1
          %s3818 = smul.u32 %s3817, 128
          %s3819 = sshra.s32 %s3818, 4
          %s3820 = scalar_lea.vmem [#allocation7], %s3819
          %v3821 = vld [vmem:[#allocation7] sm:$0xff]
          // While loop
          $region142: #{custom-call.2} parent=140 // loop_pre_header
            _
          $region143: #{custom-call.2} parent=140 // loop_header
            %s3822 = sphi [#allocation7], %s3844
            %s3823 = sphi %s5, %s3845
            %v3824 = vphi %v3821, %v3846
            %s3825 = ssub.s32 %s3820, 64
            %p3826 = scmp.gt.s32.totalorder %s3822, %s3825
          $region144: #{custom-call.2} parent=140 // loop_header_branch
            %3828 = sbr.rel (%p3826) target = $region148
          $region145: #{custom-call.2} parent=140 // loop_body
            %3829 = vst [vmem:[%s3823] sm:$0xff] %v3824
            %v3830 = vld [vmem:[%s3822 + $0x8] sm:$0xff]
            %3831 = vst [vmem:[%s3823 + $0x8] sm:$0xff] %v3830
            %v3832 = vld [vmem:[%s3822 + $0x10] sm:$0xff]
            %3833 = vst [vmem:[%s3823 + $0x10] sm:$0xff] %v3832
            %v3834 = vld [vmem:[%s3822 + $0x18] sm:$0xff]
            %3835 = vst [vmem:[%s3823 + $0x18] sm:$0xff] %v3834
            %v3836 = vld [vmem:[%s3822 + $0x20] sm:$0xff]
            %3837 = vst [vmem:[%s3823 + $0x20] sm:$0xff] %v3836
            %v3838 = vld [vmem:[%s3822 + $0x28] sm:$0xff]
            %3839 = vst [vmem:[%s3823 + $0x28] sm:$0xff] %v3838
            %v3840 = vld [vmem:[%s3822 + $0x30] sm:$0xff]
            %3841 = vst [vmem:[%s3823 + $0x30] sm:$0xff] %v3840
            %v3842 = vld [vmem:[%s3822 + $0x38] sm:$0xff]
            %3843 = vst [vmem:[%s3823 + $0x38] sm:$0xff] %v3842
          $region146: #{custom-call.2} parent=140 // loop_footer
            %s3844 = scalar_lea.vmem %s3822, 64
            %s3845 = scalar_lea.vmem %s3823, 64
            %v3846 = vld [vmem:[%s3822 + $0x40] sm:$0xff]
          $region147: #{custom-call.2} parent=140 // loop_footer_branch
            %3847 = sbr.rel target = $region143
          $region148: #{custom-call.2} parent=140 // loop_exit
            _
          // While loop
          $region149: #{custom-call.2} parent=140 // loop_pre_header
            _
          $region150: #{custom-call.2} parent=140 // loop_header
            %s3848 = sphi %s3822, %s3856
            %s3849 = sphi %s3823, %s3857
            %v3850 = vphi %v3824, %v3850
            %p3851 = scmp.gt.s32.totalorder %s3848, %s3820
          $region151: #{custom-call.2} parent=140 // loop_header_branch
            %3853 = sbr.rel (%p3851) target = $region155
          $region152: #{custom-call.2} parent=140 // loop_body
            %v3854 = vld [vmem:[%s3848] sm:$0xff]
            %3855 = vst [vmem:[%s3849] sm:$0xff] %v3854
          $region153: #{custom-call.2} parent=140 // loop_footer
            %s3856 = scalar_lea.vmem %s3848, 8
            %s3857 = scalar_lea.vmem %s3849, 8
          $region154: #{custom-call.2} parent=140 // loop_footer_branch
            %3858 = sbr.rel target = $region150
          $region155: #{custom-call.2} parent=140 // loop_exit
            _
        $region141: #{custom-call.2} parent=136 // pred_fallthru
          _
        %s3859 = sand.u32 1, 7
        %s3860 = sshllo.u32 0, %s3859
        %s3861 = smul.u32 %s3812, 128
        %s3862 = sshra.s32 %s3861, 4
        %s3863 = scalar_lea.vmem %s5, %s3862
        %s3864 = smul.u32 %s3812, 128
        %s3865 = sshra.s32 %s3864, 4
        %s3866 = scalar_lea.vmem [#allocation7], %s3865
        %v3867 = vld [vmem:[%s3866] sm:%s3860]
        %3868 = vst [vmem:[%s3863] sm:%s3860] %v3867
      $region137: #{custom-call.2} parent=132 // pred_fallthru
        _
    $region133: #{custom-call.2} parent=1 // pred_fallthru
      _
    %p3870 = scmp.gt.s32.totalorder 64, 0
    // Predicated region
    $region156: #{custom-call.2} parent=1 // pred_check
      %p3871 = pneg %p3870
    $region157: #{custom-call.2} parent=1 // pred_check_branch
      %3873 = sbr.rel (%p3871) target = $region159
    $region158: #{custom-call.2} parent=1 // pred_region
      %s3874 = sshra.s32 64, 3
      %p3875 = scmp.gt.s32.totalorder %s3874, 0
      // Predicated region
      $region160: #{custom-call.2} parent=158 // pred_check
        %p3876 = pneg %p3875
      $region161: #{custom-call.2} parent=158 // pred_check_branch
        %3878 = sbr.rel (%p3876) target = $region163
      $region162: #{custom-call.2} parent=158 // pred_region
        %s3879 = ssub.s32 %s3874, 1
        %s3880 = smul.u32 %s3879, 128
        %s3881 = sshra.s32 %s3880, 4
        %s3882 = scalar_lea.vmem [#allocation8], %s3881
        %v3883 = vld [vmem:[#allocation8] sm:$0xff]
        // While loop
        $region164: #{custom-call.2} parent=162 // loop_pre_header
          _
        $region165: #{custom-call.2} parent=162 // loop_header
          %s3884 = sphi [#allocation8], %s3906
          %s3885 = sphi %s6, %s3907
          %v3886 = vphi %v3883, %v3908
          %s3887 = ssub.s32 %s3882, 64
          %p3888 = scmp.gt.s32.totalorder %s3884, %s3887
        $region166: #{custom-call.2} parent=162 // loop_header_branch
          %3890 = sbr.rel (%p3888) target = $region170
        $region167: #{custom-call.2} parent=162 // loop_body
          %3891 = vst [vmem:[%s3885] sm:$0xff] %v3886
          %v3892 = vld [vmem:[%s3884 + $0x8] sm:$0xff]
          %3893 = vst [vmem:[%s3885 + $0x8] sm:$0xff] %v3892
          %v3894 = vld [vmem:[%s3884 + $0x10] sm:$0xff]
          %3895 = vst [vmem:[%s3885 + $0x10] sm:$0xff] %v3894
          %v3896 = vld [vmem:[%s3884 + $0x18] sm:$0xff]
          %3897 = vst [vmem:[%s3885 + $0x18] sm:$0xff] %v3896
          %v3898 = vld [vmem:[%s3884 + $0x20] sm:$0xff]
          %3899 = vst [vmem:[%s3885 + $0x20] sm:$0xff] %v3898
          %v3900 = vld [vmem:[%s3884 + $0x28] sm:$0xff]
          %3901 = vst [vmem:[%s3885 + $0x28] sm:$0xff] %v3900
          %v3902 = vld [vmem:[%s3884 + $0x30] sm:$0xff]
          %3903 = vst [vmem:[%s3885 + $0x30] sm:$0xff] %v3902
          %v3904 = vld [vmem:[%s3884 + $0x38] sm:$0xff]
          %3905 = vst [vmem:[%s3885 + $0x38] sm:$0xff] %v3904
        $region168: #{custom-call.2} parent=162 // loop_footer
          %s3906 = scalar_lea.vmem %s3884, 64
          %s3907 = scalar_lea.vmem %s3885, 64
          %v3908 = vld [vmem:[%s3884 + $0x40] sm:$0xff]
        $region169: #{custom-call.2} parent=162 // loop_footer_branch
          %3909 = sbr.rel target = $region165
        $region170: #{custom-call.2} parent=162 // loop_exit
          _
        // While loop
        $region171: #{custom-call.2} parent=162 // loop_pre_header
          _
        $region172: #{custom-call.2} parent=162 // loop_header
          %s3910 = sphi %s3884, %s3918
          %s3911 = sphi %s3885, %s3919
          %v3912 = vphi %v3886, %v3912
          %p3913 = scmp.gt.s32.totalorder %s3910, %s3882
        $region173: #{custom-call.2} parent=162 // loop_header_branch
          %3915 = sbr.rel (%p3913) target = $region177
        $region174: #{custom-call.2} parent=162 // loop_body
          %v3916 = vld [vmem:[%s3910] sm:$0xff]
          %3917 = vst [vmem:[%s3911] sm:$0xff] %v3916
        $region175: #{custom-call.2} parent=162 // loop_footer
          %s3918 = scalar_lea.vmem %s3910, 8
          %s3919 = scalar_lea.vmem %s3911, 8
        $region176: #{custom-call.2} parent=162 // loop_footer_branch
          %3920 = sbr.rel target = $region172
        $region177: #{custom-call.2} parent=162 // loop_exit
          _
      $region163: #{custom-call.2} parent=158 // pred_fallthru
        _
      %s3921 = sand.u32 64, 7
      %s3922 = sshllo.u32 0, %s3921
      %s3923 = smul.u32 %s3874, 128
      %s3924 = sshra.s32 %s3923, 4
      %s3925 = scalar_lea.vmem %s6, %s3924
      %s3926 = smul.u32 %s3874, 128
      %s3927 = sshra.s32 %s3926, 4
      %s3928 = scalar_lea.vmem [#allocation8], %s3927
      %v3929 = vld [vmem:[%s3928] sm:%s3922]
      %3930 = vst [vmem:[%s3925] sm:%s3922] %v3929
    $region159: #{custom-call.2} parent=1 // pred_fallthru
      _
    %p3932 = scmp.gt.s32.totalorder 64, 0
    // Predicated region
    $region178: #{custom-call.2} parent=1 // pred_check
      %p3933 = pneg %p3932
    $region179: #{custom-call.2} parent=1 // pred_check_branch
      %3935 = sbr.rel (%p3933) target = $region181
    $region180: #{custom-call.2} parent=1 // pred_region
      %s3936 = sshra.s32 64, 3
      %p3937 = scmp.gt.s32.totalorder %s3936, 0
      // Predicated region
      $region182: #{custom-call.2} parent=180 // pred_check
        %p3938 = pneg %p3937
      $region183: #{custom-call.2} parent=180 // pred_check_branch
        %3940 = sbr.rel (%p3938) target = $region185
      $region184: #{custom-call.2} parent=180 // pred_region
        %s3941 = ssub.s32 %s3936, 1
        %s3942 = smul.u32 %s3941, 128
        %s3943 = sshra.s32 %s3942, 4
        %s3944 = scalar_lea.vmem [#allocation9], %s3943
        %v3945 = vld [vmem:[#allocation9] sm:$0xff]
        // While loop
        $region186: #{custom-call.2} parent=184 // loop_pre_header
          _
        $region187: #{custom-call.2} parent=184 // loop_header
          %s3946 = sphi [#allocation9], %s3968
          %s3947 = sphi %s7, %s3969
          %v3948 = vphi %v3945, %v3970
          %s3949 = ssub.s32 %s3944, 64
          %p3950 = scmp.gt.s32.totalorder %s3946, %s3949
        $region188: #{custom-call.2} parent=184 // loop_header_branch
          %3952 = sbr.rel (%p3950) target = $region192
        $region189: #{custom-call.2} parent=184 // loop_body
          %3953 = vst [vmem:[%s3947] sm:$0xff] %v3948
          %v3954 = vld [vmem:[%s3946 + $0x8] sm:$0xff]
          %3955 = vst [vmem:[%s3947 + $0x8] sm:$0xff] %v3954
          %v3956 = vld [vmem:[%s3946 + $0x10] sm:$0xff]
          %3957 = vst [vmem:[%s3947 + $0x10] sm:$0xff] %v3956
          %v3958 = vld [vmem:[%s3946 + $0x18] sm:$0xff]
          %3959 = vst [vmem:[%s3947 + $0x18] sm:$0xff] %v3958
          %v3960 = vld [vmem:[%s3946 + $0x20] sm:$0xff]
          %3961 = vst [vmem:[%s3947 + $0x20] sm:$0xff] %v3960
          %v3962 = vld [vmem:[%s3946 + $0x28] sm:$0xff]
          %3963 = vst [vmem:[%s3947 + $0x28] sm:$0xff] %v3962
          %v3964 = vld [vmem:[%s3946 + $0x30] sm:$0xff]
          %3965 = vst [vmem:[%s3947 + $0x30] sm:$0xff] %v3964
          %v3966 = vld [vmem:[%s3946 + $0x38] sm:$0xff]
          %3967 = vst [vmem:[%s3947 + $0x38] sm:$0xff] %v3966
        $region190: #{custom-call.2} parent=184 // loop_footer
          %s3968 = scalar_lea.vmem %s3946, 64
          %s3969 = scalar_lea.vmem %s3947, 64
          %v3970 = vld [vmem:[%s3946 + $0x40] sm:$0xff]
        $region191: #{custom-call.2} parent=184 // loop_footer_branch
          %3971 = sbr.rel target = $region187
        $region192: #{custom-call.2} parent=184 // loop_exit
          _
        // While loop
        $region193: #{custom-call.2} parent=184 // loop_pre_header
          _
        $region194: #{custom-call.2} parent=184 // loop_header
          %s3972 = sphi %s3946, %s3980
          %s3973 = sphi %s3947, %s3981
          %v3974 = vphi %v3948, %v3974
          %p3975 = scmp.gt.s32.totalorder %s3972, %s3944
        $region195: #{custom-call.2} parent=184 // loop_header_branch
          %3977 = sbr.rel (%p3975) target = $region199
        $region196: #{custom-call.2} parent=184 // loop_body
          %v3978 = vld [vmem:[%s3972] sm:$0xff]
          %3979 = vst [vmem:[%s3973] sm:$0xff] %v3978
        $region197: #{custom-call.2} parent=184 // loop_footer
          %s3980 = scalar_lea.vmem %s3972, 8
          %s3981 = scalar_lea.vmem %s3973, 8
        $region198: #{custom-call.2} parent=184 // loop_footer_branch
          %3982 = sbr.rel target = $region194
        $region199: #{custom-call.2} parent=184 // loop_exit
          _
      $region185: #{custom-call.2} parent=180 // pred_fallthru
        _
      %s3983 = sand.u32 64, 7
      %s3984 = sshllo.u32 0, %s3983
      %s3985 = smul.u32 %s3936, 128
      %s3986 = sshra.s32 %s3985, 4
      %s3987 = scalar_lea.vmem %s7, %s3986
      %s3988 = smul.u32 %s3936, 128
      %s3989 = sshra.s32 %s3988, 4
      %s3990 = scalar_lea.vmem [#allocation9], %s3989
      %v3991 = vld [vmem:[%s3990] sm:%s3984]
      %3992 = vst [vmem:[%s3987] sm:%s3984] %v3991
    $region181: #{custom-call.2} parent=1 // pred_fallthru
      _
    %p3994 = scmp.gt.s32.totalorder 64, 0
    // Predicated region
    $region200: #{custom-call.2} parent=1 // pred_check
      %p3995 = pneg %p3994
    $region201: #{custom-call.2} parent=1 // pred_check_branch
      %3997 = sbr.rel (%p3995) target = $region203
    $region202: #{custom-call.2} parent=1 // pred_region
      %s3998 = sshra.s32 64, 3
      %p3999 = scmp.gt.s32.totalorder %s3998, 0
      // Predicated region
      $region204: #{custom-call.2} parent=202 // pred_check
        %p4000 = pneg %p3999
      $region205: #{custom-call.2} parent=202 // pred_check_branch
        %4002 = sbr.rel (%p4000) target = $region207
      $region206: #{custom-call.2} parent=202 // pred_region
        %s4003 = ssub.s32 %s3998, 1
        %s4004 = smul.u32 %s4003, 128
        %s4005 = sshra.s32 %s4004, 4
        %s4006 = scalar_lea.vmem [#allocation10], %s4005
        %v4007 = vld [vmem:[#allocation10] sm:$0xff]
        // While loop
        $region208: #{custom-call.2} parent=206 // loop_pre_header
          _
        $region209: #{custom-call.2} parent=206 // loop_header
          %s4008 = sphi [#allocation10], %s4030
          %s4009 = sphi %s8, %s4031
          %v4010 = vphi %v4007, %v4032
          %s4011 = ssub.s32 %s4006, 64
          %p4012 = scmp.gt.s32.totalorder %s4008, %s4011
        $region210: #{custom-call.2} parent=206 // loop_header_branch
          %4014 = sbr.rel (%p4012) target = $region214
        $region211: #{custom-call.2} parent=206 // loop_body
          %4015 = vst [vmem:[%s4009] sm:$0xff] %v4010
          %v4016 = vld [vmem:[%s4008 + $0x8] sm:$0xff]
          %4017 = vst [vmem:[%s4009 + $0x8] sm:$0xff] %v4016
          %v4018 = vld [vmem:[%s4008 + $0x10] sm:$0xff]
          %4019 = vst [vmem:[%s4009 + $0x10] sm:$0xff] %v4018
          %v4020 = vld [vmem:[%s4008 + $0x18] sm:$0xff]
          %4021 = vst [vmem:[%s4009 + $0x18] sm:$0xff] %v4020
          %v4022 = vld [vmem:[%s4008 + $0x20] sm:$0xff]
          %4023 = vst [vmem:[%s4009 + $0x20] sm:$0xff] %v4022
          %v4024 = vld [vmem:[%s4008 + $0x28] sm:$0xff]
          %4025 = vst [vmem:[%s4009 + $0x28] sm:$0xff] %v4024
          %v4026 = vld [vmem:[%s4008 + $0x30] sm:$0xff]
          %4027 = vst [vmem:[%s4009 + $0x30] sm:$0xff] %v4026
          %v4028 = vld [vmem:[%s4008 + $0x38] sm:$0xff]
          %4029 = vst [vmem:[%s4009 + $0x38] sm:$0xff] %v4028
        $region212: #{custom-call.2} parent=206 // loop_footer
          %s4030 = scalar_lea.vmem %s4008, 64
          %s4031 = scalar_lea.vmem %s4009, 64
          %v4032 = vld [vmem:[%s4008 + $0x40] sm:$0xff]
        $region213: #{custom-call.2} parent=206 // loop_footer_branch
          %4033 = sbr.rel target = $region209
        $region214: #{custom-call.2} parent=206 // loop_exit
          _
        // While loop
        $region215: #{custom-call.2} parent=206 // loop_pre_header
          _
        $region216: #{custom-call.2} parent=206 // loop_header
          %s4034 = sphi %s4008, %s4042
          %s4035 = sphi %s4009, %s4043
          %v4036 = vphi %v4010, %v4036
          %p4037 = scmp.gt.s32.totalorder %s4034, %s4006
        $region217: #{custom-call.2} parent=206 // loop_header_branch
          %4039 = sbr.rel (%p4037) target = $region221
        $region218: #{custom-call.2} parent=206 // loop_body
          %v4040 = vld [vmem:[%s4034] sm:$0xff]
          %4041 = vst [vmem:[%s4035] sm:$0xff] %v4040
        $region219: #{custom-call.2} parent=206 // loop_footer
          %s4042 = scalar_lea.vmem %s4034, 8
          %s4043 = scalar_lea.vmem %s4035, 8
        $region220: #{custom-call.2} parent=206 // loop_footer_branch
          %4044 = sbr.rel target = $region216
        $region221: #{custom-call.2} parent=206 // loop_exit
          _
      $region207: #{custom-call.2} parent=202 // pred_fallthru
        _
      %s4045 = sand.u32 64, 7
      %s4046 = sshllo.u32 0, %s4045
      %s4047 = smul.u32 %s3998, 128
      %s4048 = sshra.s32 %s4047, 4
      %s4049 = scalar_lea.vmem %s8, %s4048
      %s4050 = smul.u32 %s3998, 128
      %s4051 = sshra.s32 %s4050, 4
      %s4052 = scalar_lea.vmem [#allocation10], %s4051
      %v4053 = vld [vmem:[%s4052] sm:%s4046]
      %4054 = vst [vmem:[%s4049] sm:%s4046] %v4053
    $region203: #{custom-call.2} parent=1 // pred_fallthru
      _
    %p4056 = scmp.gt.s32.totalorder 64, 0
    // Predicated region
    $region222: #{custom-call.2} parent=1 // pred_check
      %p4057 = pneg %p4056
    $region223: #{custom-call.2} parent=1 // pred_check_branch
      %4059 = sbr.rel (%p4057) target = $region225
    $region224: #{custom-call.2} parent=1 // pred_region
      %s4060 = sshra.s32 64, 3
      %p4061 = scmp.gt.s32.totalorder %s4060, 0
      // Predicated region
      $region226: #{custom-call.2} parent=224 // pred_check
        %p4062 = pneg %p4061
      $region227: #{custom-call.2} parent=224 // pred_check_branch
        %4064 = sbr.rel (%p4062) target = $region229
      $region228: #{custom-call.2} parent=224 // pred_region
        %s4065 = ssub.s32 %s4060, 1
        %s4066 = smul.u32 %s4065, 128
        %s4067 = sshra.s32 %s4066, 4
        %s4068 = scalar_lea.vmem [#allocation11], %s4067
        %v4069 = vld [vmem:[#allocation11] sm:$0xff]
        // While loop
        $region230: #{custom-call.2} parent=228 // loop_pre_header
          _
        $region231: #{custom-call.2} parent=228 // loop_header
          %s4070 = sphi [#allocation11], %s4092
          %s4071 = sphi %s9, %s4093
          %v4072 = vphi %v4069, %v4094
          %s4073 = ssub.s32 %s4068, 64
          %p4074 = scmp.gt.s32.totalorder %s4070, %s4073
        $region232: #{custom-call.2} parent=228 // loop_header_branch
          %4076 = sbr.rel (%p4074) target = $region236
        $region233: #{custom-call.2} parent=228 // loop_body
          %4077 = vst [vmem:[%s4071] sm:$0xff] %v4072
          %v4078 = vld [vmem:[%s4070 + $0x8] sm:$0xff]
          %4079 = vst [vmem:[%s4071 + $0x8] sm:$0xff] %v4078
          %v4080 = vld [vmem:[%s4070 + $0x10] sm:$0xff]
          %4081 = vst [vmem:[%s4071 + $0x10] sm:$0xff] %v4080
          %v4082 = vld [vmem:[%s4070 + $0x18] sm:$0xff]
          %4083 = vst [vmem:[%s4071 + $0x18] sm:$0xff] %v4082
          %v4084 = vld [vmem:[%s4070 + $0x20] sm:$0xff]
          %4085 = vst [vmem:[%s4071 + $0x20] sm:$0xff] %v4084
          %v4086 = vld [vmem:[%s4070 + $0x28] sm:$0xff]
          %4087 = vst [vmem:[%s4071 + $0x28] sm:$0xff] %v4086
          %v4088 = vld [vmem:[%s4070 + $0x30] sm:$0xff]
          %4089 = vst [vmem:[%s4071 + $0x30] sm:$0xff] %v4088
          %v4090 = vld [vmem:[%s4070 + $0x38] sm:$0xff]
          %4091 = vst [vmem:[%s4071 + $0x38] sm:$0xff] %v4090
        $region234: #{custom-call.2} parent=228 // loop_footer
          %s4092 = scalar_lea.vmem %s4070, 64
          %s4093 = scalar_lea.vmem %s4071, 64
          %v4094 = vld [vmem:[%s4070 + $0x40] sm:$0xff]
        $region235: #{custom-call.2} parent=228 // loop_footer_branch
          %4095 = sbr.rel target = $region231
        $region236: #{custom-call.2} parent=228 // loop_exit
          _
        // While loop
        $region237: #{custom-call.2} parent=228 // loop_pre_header
          _
        $region238: #{custom-call.2} parent=228 // loop_header
          %s4096 = sphi %s4070, %s4104
          %s4097 = sphi %s4071, %s4105
          %v4098 = vphi %v4072, %v4098
          %p4099 = scmp.gt.s32.totalorder %s4096, %s4068
        $region239: #{custom-call.2} parent=228 // loop_header_branch
          %4101 = sbr.rel (%p4099) target = $region243
        $region240: #{custom-call.2} parent=228 // loop_body
          %v4102 = vld [vmem:[%s4096] sm:$0xff]
          %4103 = vst [vmem:[%s4097] sm:$0xff] %v4102
        $region241: #{custom-call.2} parent=228 // loop_footer
          %s4104 = scalar_lea.vmem %s4096, 8
          %s4105 = scalar_lea.vmem %s4097, 8
        $region242: #{custom-call.2} parent=228 // loop_footer_branch
          %4106 = sbr.rel target = $region238
        $region243: #{custom-call.2} parent=228 // loop_exit
          _
      $region229: #{custom-call.2} parent=224 // pred_fallthru
        _
      %s4107 = sand.u32 64, 7
      %s4108 = sshllo.u32 0, %s4107
      %s4109 = smul.u32 %s4060, 128
      %s4110 = sshra.s32 %s4109, 4
      %s4111 = scalar_lea.vmem %s9, %s4110
      %s4112 = smul.u32 %s4060, 128
      %s4113 = sshra.s32 %s4112, 4
      %s4114 = scalar_lea.vmem [#allocation11], %s4113
      %v4115 = vld [vmem:[%s4114] sm:%s4108]
      %4116 = vst [vmem:[%s4111] sm:%s4108] %v4115
    $region225: #{custom-call.2} parent=1 // pred_fallthru
      _
    // Predicated region
    $region244: #{custom-call.2} parent=1 // pred_check
      _
    $region245: #{custom-call.2} parent=1 // pred_check_branch
      %4118 = sbr.rel (0) target = $region247
    $region246: #{custom-call.2} parent=1 // pred_region
      _
    $region247: #{custom-call.2} parent=1 // pred_fallthru
      _
    // Predicated region
    $region248: #{custom-call.2} parent=1 // pred_check
      _
    $region249: #{custom-call.2} parent=1 // pred_check_branch
      %4120 = sbr.rel (0) target = $region251
    $region250: #{custom-call.2} parent=1 // pred_region
      _
    $region251: #{custom-call.2} parent=1 // pred_fallthru
      _

// kernel: online_triplet_pca_loss.2
$region0: #{online_triplet_pca_loss.2}
  #allocation0 [shape = 'u32[]', space=smem, size = 0x4, offset = 0x4, fixed_abs, tag = 'smem constant byte address 0x4 - core index']
  #allocation1 [shape = 'u32[144,128]{1,0:T(1,128)}', space=vmem, size = 0x12000, scoped, tag = 'internal scratch']
  %s0 = inlined_call_operand.vmem [shape: f32[16,128], index: 0, kind: input, shape index: {}]
  %s1 = inlined_call_operand.vmem [shape: f32[16,128], index: 1, kind: input, shape index: {}]
  %s2 = inlined_call_operand.vmem [shape: f32[16,128], index: 2, kind: input, shape index: {}]
  %s3 = inlined_call_operand.vmem [shape: f32[1,128], index: 3, kind: input, shape index: {}]
  %s4 = inlined_call_operand.vmem [shape: f32[1,128,128], index: 4, kind: output, shape index: {}]
  %s5 = sld [smem:[#allocation0]]
  $region38: #{online_triplet_pca_loss.2} parent=0
    _
  %s7 = ssub.s32 1, %s5
  %s8 = scalar_select 0, %s7, %s5
  // Predicated region
  $region2: #{online_triplet_pca_loss.2} parent=0 // pred_check
    _
  $region3: #{online_triplet_pca_loss.2} parent=0 // pred_check_branch
    %10 = sbr.rel (0) target = $region5
  $region4: #{online_triplet_pca_loss.2} parent=0 // pred_region
    %s11 = sadd.s32 0, 0
    %s12 = smul.u32 2, %s11
    %p13 = scmp.lt.s32.totalorder %s12, 1
    %s14 = scalar_select %p13, %s12, 1
    %s15 = smul.addr %s14, 8
    %s16 = scalar_lea.vmem %s0, %s15
    %s17 = sadd.s32 0, 0
    %s18 = smul.u32 2, %s17
  $region5: #{online_triplet_pca_loss.2} parent=0 // pred_fallthru
    _
  // Predicated region
  $region6: #{online_triplet_pca_loss.2} parent=0 // pred_check
    _
  $region7: #{online_triplet_pca_loss.2} parent=0 // pred_check_branch
    %20 = sbr.rel (0) target = $region9
  $region8: #{online_triplet_pca_loss.2} parent=0 // pred_region
    %s21 = sadd.s32 0, 0
    %s22 = smul.u32 2, %s21
    %p23 = scmp.lt.s32.totalorder %s22, 1
    %s24 = scalar_select %p23, %s22, 1
    %s25 = smul.addr %s24, 8
    %s26 = scalar_lea.vmem %s1, %s25
    %s27 = sadd.s32 0, 0
    %s28 = smul.u32 2, %s27
  $region9: #{online_triplet_pca_loss.2} parent=0 // pred_fallthru
    _
  // Predicated region
  $region10: #{online_triplet_pca_loss.2} parent=0 // pred_check
    _
  $region11: #{online_triplet_pca_loss.2} parent=0 // pred_check_branch
    %30 = sbr.rel (0) target = $region13
  $region12: #{online_triplet_pca_loss.2} parent=0 // pred_region
    %s31 = sadd.s32 0, 0
    %s32 = smul.u32 2, %s31
    %p33 = scmp.lt.s32.totalorder %s32, 1
    %s34 = scalar_select %p33, %s32, 1
    %s35 = smul.addr %s34, 8
    %s36 = scalar_lea.vmem %s2, %s35
    %s37 = sadd.s32 0, 0
    %s38 = smul.u32 2, %s37
  $region13: #{online_triplet_pca_loss.2} parent=0 // pred_fallthru
    _
  // Predicated region
  $region14: #{online_triplet_pca_loss.2} parent=0 // pred_check
    _
  $region15: #{online_triplet_pca_loss.2} parent=0 // pred_check_branch
    %40 = sbr.rel (0) target = $region17
  $region16: #{online_triplet_pca_loss.2} parent=0 // pred_region
    _
  $region17: #{online_triplet_pca_loss.2} parent=0 // pred_fallthru
    _
  %s41 = sadd.s32 0, 0
  %s42 = smul.u32 2, %s41
  %p43 = scmp.lt.s32.totalorder %s42, 1
  %s44 = scalar_select %p43, %s42, 1
  %s45 = smul.addr %s44, 8
  %s46 = scalar_lea.vmem %s0, %s45
  %s47 = sadd.s32 0, 0
  %s48 = smul.u32 2, %s47
  %p49 = scmp.lt.s32.totalorder %s48, 1
  %s50 = scalar_select %p49, %s48, 1
  %s51 = smul.addr %s50, 8
  %s52 = scalar_lea.vmem %s1, %s51
  %s53 = sadd.s32 0, 0
  %s54 = smul.u32 2, %s53
  %p55 = scmp.lt.s32.totalorder %s54, 1
  %s56 = scalar_select %p55, %s54, 1
  %s57 = smul.addr %s56, 8
  %s58 = scalar_lea.vmem %s2, %s57
  %s59 = sadd.s32 0, 0
  %s60 = smul.u32 2, %s59
  %p61 = scmp.lt.s32.totalorder %s60, 1
  %s62 = scalar_select %p61, %s60, 1
  %s63 = smul.addr %s62, 8
  %s64 = scalar_lea.vmem %s0, %s63
  %s65 = sadd.s32 0, 0
  %s66 = smul.u32 2, %s65
  %s67 = sadd.s32 0, 0
  %s68 = smul.u32 2, %s67
  %p69 = scmp.lt.s32.totalorder %s68, 1
  %s70 = scalar_select %p69, %s68, 1
  %s71 = smul.addr %s70, 8
  %s72 = scalar_lea.vmem %s1, %s71
  %s73 = sadd.s32 0, 0
  %s74 = smul.u32 2, %s73
  %s75 = sadd.s32 0, 0
  %s76 = smul.u32 2, %s75
  %p77 = scmp.lt.s32.totalorder %s76, 1
  %s78 = scalar_select %p77, %s76, 1
  %s79 = smul.addr %s78, 8
  %s80 = scalar_lea.vmem %s2, %s79
  %s81 = sadd.s32 0, 0
  %s82 = smul.u32 2, %s81
  %s83 = sadd.s32 0, 0
  %p84 = scmp.eq.s32.totalorder 0, 0
  // Predicated region
  $region18: #{online_triplet_pca_loss.2} parent=0 // pred_check
    %p85 = pneg %p84
  $region19: #{online_triplet_pca_loss.2} parent=0 // pred_check_branch
    %87 = sbr.rel (%p85) target = $region21
  $region20: #{online_triplet_pca_loss.2} parent=0 // pred_region
    %88 = vst [vmem:[%s4] sm:$0xff] 0.0
    %89 = vst [vmem:[%s4 + $0x8] sm:$0xff] 0.0
    %90 = vst [vmem:[%s4 + $0x10] sm:$0xff] 0.0
    %91 = vst [vmem:[%s4 + $0x18] sm:$0xff] 0.0
    %92 = vst [vmem:[%s4 + $0x20] sm:$0xff] 0.0
    %93 = vst [vmem:[%s4 + $0x28] sm:$0xff] 0.0
    %94 = vst [vmem:[%s4 + $0x30] sm:$0xff] 0.0
    %95 = vst [vmem:[%s4 + $0x38] sm:$0xff] 0.0
    %96 = vst [vmem:[%s4 + $0x40] sm:$0xff] 0.0
    %97 = vst [vmem:[%s4 + $0x48] sm:$0xff] 0.0
    %98 = vst [vmem:[%s4 + $0x50] sm:$0xff] 0.0
    %99 = vst [vmem:[%s4 + $0x58] sm:$0xff] 0.0
    %100 = vst [vmem:[%s4 + $0x60] sm:$0xff] 0.0
    %101 = vst [vmem:[%s4 + $0x68] sm:$0xff] 0.0
    %102 = vst [vmem:[%s4 + $0x70] sm:$0xff] 0.0
    %103 = vst [vmem:[%s4 + $0x78] sm:$0xff] 0.0
  $region21: #{online_triplet_pca_loss.2} parent=0 // pred_fallthru
    _
  %v104 = vld [vmem:[%s3] sm:$0x1]
  %s105 = smul.u32 %s83, 16
  %s106 = sadd.s32 %s105, 16
  %p107 = scmp.le.s32.totalorder %s106, 16
  %p108 = scmp.lt.s32.totalorder %s105, 16
  %p109 = scmp.gt.s32.totalorder %s106, 16
  %p110 = pnand %p108, %p109
  %p111 = pneg %p110
  // Predicated region
  $region22: #{online_triplet_pca_loss.2} parent=0 // pred_check
    %p112 = pneg %p107
  $region23: #{online_triplet_pca_loss.2} parent=0 // pred_check_branch
    %114 = sbr.rel (%p112) target = $region25
  $region24: #{online_triplet_pca_loss.2} parent=0 // pred_region
    %v115 = vld [vmem:[%s64] sm:$0xff]
    %v116 = vld [vmem:[%s64 + $0x8] sm:$0xff]
    %v118 = vlaneseq
    %v119 = vshrl.u32 %v118, 7
    %v120 = vsub.s32 0, %v119
    %v121 = vrot.slane %v104, %v120
    %v123 = vsub.f32 %v115, %v121
    %v124 = vsub.f32 %v116, %v121
    %v125 = vld [vmem:[%s72] sm:$0xff]
    %v126 = vld [vmem:[%s72 + $0x8] sm:$0xff]
    %v127 = vsub.f32 %v125, %v121
    %v128 = vsub.f32 %v126, %v121
    %v129 = vld [vmem:[%s80] sm:$0xff]
    %v130 = vld [vmem:[%s80 + $0x8] sm:$0xff]
    %v131 = vsub.f32 %v129, %v121
    %v132 = vsub.f32 %v130, %v121
    %v133 = vld [vmem:[%s4] sm:$0xff]
    %v134 = vld [vmem:[%s4 + $0x8] sm:$0xff]
    %v135 = vld [vmem:[%s4 + $0x10] sm:$0xff]
    %v136 = vld [vmem:[%s4 + $0x18] sm:$0xff]
    %v137 = vld [vmem:[%s4 + $0x20] sm:$0xff]
    %v138 = vld [vmem:[%s4 + $0x28] sm:$0xff]
    %v139 = vld [vmem:[%s4 + $0x30] sm:$0xff]
    %v140 = vld [vmem:[%s4 + $0x38] sm:$0xff]
    %v141 = vld [vmem:[%s4 + $0x40] sm:$0xff]
    %v142 = vld [vmem:[%s4 + $0x48] sm:$0xff]
    %v143 = vld [vmem:[%s4 + $0x50] sm:$0xff]
    %v144 = vld [vmem:[%s4 + $0x58] sm:$0xff]
    %v145 = vld [vmem:[%s4 + $0x60] sm:$0xff]
    %v146 = vld [vmem:[%s4 + $0x68] sm:$0xff]
    %v147 = vld [vmem:[%s4 + $0x70] sm:$0xff]
    %v148 = vld [vmem:[%s4 + $0x78] sm:$0xff]
    %149 = vxpose.xlu0.b32.start [1/16] %v123, 128
    %150 = vxpose.xlu0.b32.cont [2/16] %v124, 128
    %151 = vxpose.xlu0.b32.cont [3/16] 0.0, 128
    %152 = vxpose.xlu0.b32.cont [4/16] 0.0, 128
    %153 = vxpose.xlu0.b32.cont [5/16] 0.0, 128
    %154 = vxpose.xlu0.b32.cont [6/16] 0.0, 128
    %155 = vxpose.xlu0.b32.cont [7/16] 0.0, 128
    %156 = vxpose.xlu0.b32.cont [8/16] 0.0, 128
    %157 = vxpose.xlu0.b32.cont [9/16] 0.0, 128
    %158 = vxpose.xlu0.b32.cont [10/16] 0.0, 128
    %159 = vxpose.xlu0.b32.cont [11/16] 0.0, 128
    %160 = vxpose.xlu0.b32.cont [12/16] 0.0, 128
    %161 = vxpose.xlu0.b32.cont [13/16] 0.0, 128
    %162 = vxpose.xlu0.b32.cont [14/16] 0.0, 128
    %163 = vxpose.xlu0.b32.cont [15/16] 0.0, 128
    %164 = vxpose.xlu0.b32.end [16/16] 0.0, 128
    %v165 = vpop.trf.xlu0
    %v166 = vpop.trf.xlu0
    %v167 = vpop.trf.xlu0
    %v168 = vpop.trf.xlu0
    %v169 = vpop.trf.xlu0
    %v170 = vpop.trf.xlu0
    %v171 = vpop.trf.xlu0
    %v172 = vpop.trf.xlu0
    %v173 = vpop.trf.xlu0
    %v174 = vpop.trf.xlu0
    %v175 = vpop.trf.xlu0
    %v176 = vpop.trf.xlu0
    %v177 = vpop.trf.xlu0
    %v178 = vpop.trf.xlu0
    %v179 = vpop.trf.xlu0
    %v180 = vpop.trf.xlu0
    %vm181 = vcmask 130048
    %v183 = vsel %vm181, %v165, 0
    %v186 = vsel %vm181, %v166, 0
    %v189 = vsel %vm181, %v167, 0
    %v192 = vsel %vm181, %v168, 0
    %v195 = vsel %vm181, %v169, 0
    %v198 = vsel %vm181, %v170, 0
    %v201 = vsel %vm181, %v171, 0
    %v204 = vsel %vm181, %v172, 0
    %v207 = vsel %vm181, %v173, 0
    %v210 = vsel %vm181, %v174, 0
    %v213 = vsel %vm181, %v175, 0
    %v216 = vsel %vm181, %v176, 0
    %v219 = vsel %vm181, %v177, 0
    %v222 = vsel %vm181, %v178, 0
    %v225 = vsel %vm181, %v179, 0
    %v228 = vsel %vm181, %v180, 0
    %230 = vmatprep.subr.mxu0 0.0
    %231 = vmatpush1.msra.mxu0 %v123
    %232 = vmatprep.subr.mxu0 0.0
    %233 = vmatpush1.msra.mxu0 %v124
    %234 = vmatprep.subr.mxu0 0.0
    %235 = vmatpush1.msra.mxu0 0.0
    %236 = vmatprep.subr.mxu0 0.0
    %237 = vmatpush1.msra.mxu0 0.0
    %238 = vmatprep.subr.mxu0 0.0
    %239 = vmatpush1.msra.mxu0 0.0
    %240 = vmatprep.subr.mxu0 0.0
    %241 = vmatpush1.msra.mxu0 0.0
    %242 = vmatprep.subr.mxu0 0.0
    %243 = vmatpush1.msra.mxu0 0.0
    %244 = vmatprep.subr.mxu0 0.0
    %245 = vmatpush1.msra.mxu0 0.0
    %246 = vmatprep.subr.mxu0 0.0
    %247 = vmatpush1.msra.mxu0 0.0
    %248 = vmatprep.subr.mxu0 0.0
    %249 = vmatpush1.msra.mxu0 0.0
    %250 = vmatprep.subr.mxu0 0.0
    %251 = vmatpush1.msra.mxu0 0.0
    %252 = vmatprep.subr.mxu0 0.0
    %253 = vmatpush1.msra.mxu0 0.0
    %254 = vmatprep.subr.mxu0 0.0
    %255 = vmatpush1.msra.mxu0 0.0
    %256 = vmatprep.subr.mxu0 0.0
    %257 = vmatpush1.msra.mxu0 0.0
    %258 = vmatprep.subr.mxu0 0.0
    %259 = vmatpush1.msra.mxu0 0.0
    %260 = vmatprep.subr.mxu0 0.0
    %261 = vmatpush1.msra.mxu0 0.0
    %262 = vmatprep.subr.mxu0 0.0
    %263 = vmatpush1.msra.mxu0 0.0
    %264 = vmatprep.subr.mxu0 0.0
    %265 = vmatpush1.msra.mxu0 0.0
    %266 = vmatprep.subr.mxu0 0.0
    %267 = vmatpush1.msra.mxu0 0.0
    %268 = vmatprep.subr.mxu0 0.0
    %269 = vmatpush1.msra.mxu0 0.0
    %270 = vmatprep.subr.mxu0 0.0
    %271 = vmatpush1.msra.mxu0 0.0
    %272 = vmatprep.subr.mxu0 0.0
    %273 = vmatpush1.msra.mxu0 0.0
    %274 = vmatprep.subr.mxu0 0.0
    %275 = vmatpush1.msra.mxu0 0.0
    %276 = vmatprep.subr.mxu0 0.0
    %277 = vmatpush1.msra.mxu0 0.0
    %278 = vmatprep.subr.mxu0 0.0
    %279 = vmatpush1.msra.mxu0 0.0
    %280 = vmatprep.subr.mxu0 0.0
    %281 = vmatpush1.msra.mxu0 0.0
    %282 = vmatprep.subr.mxu0 0.0
    %283 = vmatpush1.msra.mxu0 0.0
    %284 = vmatprep.subr.mxu0 0.0
    %285 = vmatpush1.msra.mxu0 0.0
    %286 = vmatprep.subr.mxu0 0.0
    %287 = vmatpush1.msra.mxu0 0.0
    %288 = vmatprep.subr.mxu0 0.0
    %289 = vmatpush1.msra.mxu0 0.0
    %290 = vmatprep.subr.mxu0 0.0
    %291 = vmatpush1.msra.mxu0 0.0
    %292 = vmatprep.subr.mxu0 0.0
    %293 = vmatpush1.msra.mxu0 0.0
    %294 = vmatprep.mubr.f32.mxu0 0.0
    %295 = vmatmul.mubr.f32.gmra.mrb[0].mxu0 %v183
    %v296 = vpop.f32.mrb[0].mxu0
    %v297 = vadd.f32 0.0, %v296
    %v298 = vpop.f32.mrb[0].mxu0
    %299 = vmatprep.mubr.f32.mxu0 0.0
    %300 = vmatmul.mubr.f32.gmra.mrb[0].mxu0 %v186
    %v301 = vpop.f32.mrb[0].mxu0
    %v302 = vadd.f32 0.0, %v301
    %v303 = vpop.f32.mrb[0].mxu0
    %304 = vmatprep.mubr.f32.mxu0 0.0
    %305 = vmatmul.mubr.f32.gmra.mrb[0].mxu0 %v189
    %v306 = vpop.f32.mrb[0].mxu0
    %v307 = vadd.f32 0.0, %v306
    %v308 = vpop.f32.mrb[0].mxu0
    %309 = vmatprep.mubr.f32.mxu0 0.0
    %310 = vmatmul.mubr.f32.gmra.mrb[0].mxu0 %v192
    %v311 = vpop.f32.mrb[0].mxu0
    %v312 = vadd.f32 0.0, %v311
    %v313 = vpop.f32.mrb[0].mxu0
    %314 = vmatprep.mubr.f32.mxu0 0.0
    %315 = vmatmul.mubr.f32.gmra.mrb[0].mxu0 %v195
    %v316 = vpop.f32.mrb[0].mxu0
    %v317 = vadd.f32 0.0, %v316
    %v318 = vpop.f32.mrb[0].mxu0
    %319 = vmatprep.mubr.f32.mxu0 0.0
    %320 = vmatmul.mubr.f32.gmra.mrb[0].mxu0 %v198
    %v321 = vpop.f32.mrb[0].mxu0
    %v322 = vadd.f32 0.0, %v321
    %v323 = vpop.f32.mrb[0].mxu0
    %324 = vmatprep.mubr.f32.mxu0 0.0
    %325 = vmatmul.mubr.f32.gmra.mrb[0].mxu0 %v201
    %v326 = vpop.f32.mrb[0].mxu0
    %v327 = vadd.f32 0.0, %v326
    %v328 = vpop.f32.mrb[0].mxu0
    %329 = vmatprep.mubr.f32.mxu0 0.0
    %330 = vmatmul.mubr.f32.gmra.mrb[0].mxu0 %v204
    %v331 = vpop.f32.mrb[0].mxu0
    %v332 = vadd.f32 0.0, %v331
    %v333 = vpop.f32.mrb[0].mxu0
    %334 = vmatprep.mubr.f32.mxu0 0.0
    %335 = vmatmul.mubr.f32.gmra.mrb[0].mxu0 %v207
    %v336 = vpop.f32.mrb[0].mxu0
    %v337 = vadd.f32 0.0, %v336
    %v338 = vpop.f32.mrb[0].mxu0
    %339 = vmatprep.mubr.f32.mxu0 0.0
    %340 = vmatmul.mubr.f32.gmra.mrb[0].mxu0 %v210
    %v341 = vpop.f32.mrb[0].mxu0
    %v342 = vadd.f32 0.0, %v341
    %v343 = vpop.f32.mrb[0].mxu0
    %344 = vmatprep.mubr.f32.mxu0 0.0
    %345 = vmatmul.mubr.f32.gmra.mrb[0].mxu0 %v213
    %v346 = vpop.f32.mrb[0].mxu0
    %v347 = vadd.f32 0.0, %v346
    %v348 = vpop.f32.mrb[0].mxu0
    %349 = vmatprep.mubr.f32.mxu0 0.0
    %350 = vmatmul.mubr.f32.gmra.mrb[0].mxu0 %v216
    %v351 = vpop.f32.mrb[0].mxu0
    %v352 = vadd.f32 0.0, %v351
    %v353 = vpop.f32.mrb[0].mxu0
    %354 = vmatprep.mubr.f32.mxu0 0.0
    %355 = vmatmul.mubr.f32.gmra.mrb[0].mxu0 %v219
    %v356 = vpop.f32.mrb[0].mxu0
    %v357 = vadd.f32 0.0, %v356
    %v358 = vpop.f32.mrb[0].mxu0
    %359 = vmatprep.mubr.f32.mxu0 0.0
    %360 = vmatmul.mubr.f32.gmra.mrb[0].mxu0 %v222
    %v361 = vpop.f32.mrb[0].mxu0
    %v362 = vadd.f32 0.0, %v361
    %v363 = vpop.f32.mrb[0].mxu0
    %364 = vmatprep.mubr.f32.mxu0 0.0
    %365 = vmatmul.mubr.f32.gmra.mrb[0].mxu0 %v225
    %v366 = vpop.f32.mrb[0].mxu0
    %v367 = vadd.f32 0.0, %v366
    %v368 = vpop.f32.mrb[0].mxu0
    %369 = vmatprep.mubr.f32.mxu0 0.0
    %370 = vmatmul.mubr.f32.gmra.mrb[0].mxu0 %v228
    %v371 = vpop.f32.mrb[0].mxu0
    %v372 = vadd.f32 0.0, %v371
    %v373 = vpop.f32.mrb[0].mxu0
    %374 = vdwg.mxu0
    %v375 = vadd.f32 %v133, %v297
    %v376 = vadd.f32 %v134, %v302
    %v377 = vadd.f32 %v135, %v307
    %v378 = vadd.f32 %v136, %v312
    %v379 = vadd.f32 %v137, %v317
    %v380 = vadd.f32 %v138, %v322
    %v381 = vadd.f32 %v139, %v327
    %v382 = vadd.f32 %v140, %v332
    %v383 = vadd.f32 %v141, %v337
    %v384 = vadd.f32 %v142, %v342
    %v385 = vadd.f32 %v143, %v347
    %v386 = vadd.f32 %v144, %v352
    %v387 = vadd.f32 %v145, %v357
    %v388 = vadd.f32 %v146, %v362
    %v389 = vadd.f32 %v147, %v367
    %v390 = vadd.f32 %v148, %v372
    %391 = vst [vmem:[%s4] sm:$0xff] %v375
    %392 = vst [vmem:[%s4 + $0x8] sm:$0xff] %v376
    %393 = vst [vmem:[%s4 + $0x10] sm:$0xff] %v377
    %394 = vst [vmem:[%s4 + $0x18] sm:$0xff] %v378
    %395 = vst [vmem:[%s4 + $0x20] sm:$0xff] %v379
    %396 = vst [vmem:[%s4 + $0x28] sm:$0xff] %v380
    %397 = vst [vmem:[%s4 + $0x30] sm:$0xff] %v381
    %398 = vst [vmem:[%s4 + $0x38] sm:$0xff] %v382
    %399 = vst [vmem:[%s4 + $0x40] sm:$0xff] %v383
    %400 = vst [vmem:[%s4 + $0x48] sm:$0xff] %v384
    %401 = vst [vmem:[%s4 + $0x50] sm:$0xff] %v385
    %402 = vst [vmem:[%s4 + $0x58] sm:$0xff] %v386
    %403 = vst [vmem:[%s4 + $0x60] sm:$0xff] %v387
    %404 = vst [vmem:[%s4 + $0x68] sm:$0xff] %v388
    %405 = vst [vmem:[%s4 + $0x70] sm:$0xff] %v389
    %406 = vst [vmem:[%s4 + $0x78] sm:$0xff] %v390
    %v407 = vld [vmem:[%s4] sm:$0xff]
    %v408 = vld [vmem:[%s4 + $0x8] sm:$0xff]
    %v409 = vld [vmem:[%s4 + $0x10] sm:$0xff]
    %v410 = vld [vmem:[%s4 + $0x18] sm:$0xff]
    %v411 = vld [vmem:[%s4 + $0x20] sm:$0xff]
    %v412 = vld [vmem:[%s4 + $0x28] sm:$0xff]
    %v413 = vld [vmem:[%s4 + $0x30] sm:$0xff]
    %v414 = vld [vmem:[%s4 + $0x38] sm:$0xff]
    %v415 = vld [vmem:[%s4 + $0x40] sm:$0xff]
    %v416 = vld [vmem:[%s4 + $0x48] sm:$0xff]
    %v417 = vld [vmem:[%s4 + $0x50] sm:$0xff]
    %v418 = vld [vmem:[%s4 + $0x58] sm:$0xff]
    %v419 = vld [vmem:[%s4 + $0x60] sm:$0xff]
    %v420 = vld [vmem:[%s4 + $0x68] sm:$0xff]
    %v421 = vld [vmem:[%s4 + $0x70] sm:$0xff]
    %v422 = vld [vmem:[%s4 + $0x78] sm:$0xff]
    %423 = vxpose.xlu0.b32.start [1/16] %v127, 128
    %424 = vxpose.xlu0.b32.cont [2/16] %v128, 128
    %425 = vxpose.xlu0.b32.cont [3/16] 0.0, 128
    %426 = vxpose.xlu0.b32.cont [4/16] 0.0, 128
    %427 = vxpose.xlu0.b32.cont [5/16] 0.0, 128
    %428 = vxpose.xlu0.b32.cont [6/16] 0.0, 128
    %429 = vxpose.xlu0.b32.cont [7/16] 0.0, 128
    %430 = vxpose.xlu0.b32.cont [8/16] 0.0, 128
    %431 = vxpose.xlu0.b32.cont [9/16] 0.0, 128
    %432 = vxpose.xlu0.b32.cont [10/16] 0.0, 128
    %433 = vxpose.xlu0.b32.cont [11/16] 0.0, 128
    %434 = vxpose.xlu0.b32.cont [12/16] 0.0, 128
    %435 = vxpose.xlu0.b32.cont [13/16] 0.0, 128
    %436 = vxpose.xlu0.b32.cont [14/16] 0.0, 128
    %437 = vxpose.xlu0.b32.cont [15/16] 0.0, 128
    %438 = vxpose.xlu0.b32.end [16/16] 0.0, 128
    %v439 = vpop.trf.xlu0
    %v440 = vpop.trf.xlu0
    %v441 = vpop.trf.xlu0
    %v442 = vpop.trf.xlu0
    %v443 = vpop.trf.xlu0
    %v444 = vpop.trf.xlu0
    %v445 = vpop.trf.xlu0
    %v446 = vpop.trf.xlu0
    %v447 = vpop.trf.xlu0
    %v448 = vpop.trf.xlu0
    %v449 = vpop.trf.xlu0
    %v450 = vpop.trf.xlu0
    %v451 = vpop.trf.xlu0
    %v452 = vpop.trf.xlu0
    %v453 = vpop.trf.xlu0
    %v454 = vpop.trf.xlu0
    %v456 = vsel %vm181, %v439, 0
    %v459 = vsel %vm181, %v440, 0
    %v462 = vsel %vm181, %v441, 0
    %v465 = vsel %vm181, %v442, 0
    %v468 = vsel %vm181, %v443, 0
    %v471 = vsel %vm181, %v444, 0
    %v474 = vsel %vm181, %v445, 0
    %v477 = vsel %vm181, %v446, 0
    %v480 = vsel %vm181, %v447, 0
    %v483 = vsel %vm181, %v448, 0
    %v486 = vsel %vm181, %v449, 0
    %v489 = vsel %vm181, %v450, 0
    %v492 = vsel %vm181, %v451, 0
    %v495 = vsel %vm181, %v452, 0
    %v498 = vsel %vm181, %v453, 0
    %v501 = vsel %vm181, %v454, 0
    %503 = vmatprep.subr.mxu0 0.0
    %504 = vmatpush1.msra.mxu0 %v127
    %505 = vmatprep.subr.mxu0 0.0
    %506 = vmatpush1.msra.mxu0 %v128
    %507 = vmatprep.subr.mxu0 0.0
    %508 = vmatpush1.msra.mxu0 0.0
    %509 = vmatprep.subr.mxu0 0.0
    %510 = vmatpush1.msra.mxu0 0.0
    %511 = vmatprep.subr.mxu0 0.0
    %512 = vmatpush1.msra.mxu0 0.0
    %513 = vmatprep.subr.mxu0 0.0
    %514 = vmatpush1.msra.mxu0 0.0
    %515 = vmatprep.subr.mxu0 0.0
    %516 = vmatpush1.msra.mxu0 0.0
    %517 = vmatprep.subr.mxu0 0.0
    %518 = vmatpush1.msra.mxu0 0.0
    %519 = vmatprep.subr.mxu0 0.0
    %520 = vmatpush1.msra.mxu0 0.0
    %521 = vmatprep.subr.mxu0 0.0
    %522 = vmatpush1.msra.mxu0 0.0
    %523 = vmatprep.subr.mxu0 0.0
    %524 = vmatpush1.msra.mxu0 0.0
    %525 = vmatprep.subr.mxu0 0.0
    %526 = vmatpush1.msra.mxu0 0.0
    %527 = vmatprep.subr.mxu0 0.0
    %528 = vmatpush1.msra.mxu0 0.0
    %529 = vmatprep.subr.mxu0 0.0
    %530 = vmatpush1.msra.mxu0 0.0
    %531 = vmatprep.subr.mxu0 0.0
    %532 = vmatpush1.msra.mxu0 0.0
    %533 = vmatprep.subr.mxu0 0.0
    %534 = vmatpush1.msra.mxu0 0.0
    %535 = vmatprep.subr.mxu0 0.0
    %536 = vmatpush1.msra.mxu0 0.0
    %537 = vmatprep.subr.mxu0 0.0
    %538 = vmatpush1.msra.mxu0 0.0
    %539 = vmatprep.subr.mxu0 0.0
    %540 = vmatpush1.msra.mxu0 0.0
    %541 = vmatprep.subr.mxu0 0.0
    %542 = vmatpush1.msra.mxu0 0.0
    %543 = vmatprep.subr.mxu0 0.0
    %544 = vmatpush1.msra.mxu0 0.0
    %545 = vmatprep.subr.mxu0 0.0
    %546 = vmatpush1.msra.mxu0 0.0
    %547 = vmatprep.subr.mxu0 0.0
    %548 = vmatpush1.msra.mxu0 0.0
    %549 = vmatprep.subr.mxu0 0.0
    %550 = vmatpush1.msra.mxu0 0.0
    %551 = vmatprep.subr.mxu0 0.0
    %552 = vmatpush1.msra.mxu0 0.0
    %553 = vmatprep.subr.mxu0 0.0
    %554 = vmatpush1.msra.mxu0 0.0
    %555 = vmatprep.subr.mxu0 0.0
    %556 = vmatpush1.msra.mxu0 0.0
    %557 = vmatprep.subr.mxu0 0.0
    %558 = vmatpush1.msra.mxu0 0.0
    %559 = vmatprep.subr.mxu0 0.0
    %560 = vmatpush1.msra.mxu0 0.0
    %561 = vmatprep.subr.mxu0 0.0
    %562 = vmatpush1.msra.mxu0 0.0
    %563 = vmatprep.subr.mxu0 0.0
    %564 = vmatpush1.msra.mxu0 0.0
    %565 = vmatprep.subr.mxu0 0.0
    %566 = vmatpush1.msra.mxu0 0.0
    %567 = vmatprep.mubr.f32.mxu0 0.0
    %568 = vmatmul.mubr.f32.gmra.mrb[0].mxu0 %v456
    %v569 = vpop.f32.mrb[0].mxu0
    %v570 = vadd.f32 0.0, %v569
    %v571 = vpop.f32.mrb[0].mxu0
    %572 = vmatprep.mubr.f32.mxu0 0.0
    %573 = vmatmul.mubr.f32.gmra.mrb[0].mxu0 %v459
    %v574 = vpop.f32.mrb[0].mxu0
    %v575 = vadd.f32 0.0, %v574
    %v576 = vpop.f32.mrb[0].mxu0
    %577 = vmatprep.mubr.f32.mxu0 0.0
    %578 = vmatmul.mubr.f32.gmra.mrb[0].mxu0 %v462
    %v579 = vpop.f32.mrb[0].mxu0
    %v580 = vadd.f32 0.0, %v579
    %v581 = vpop.f32.mrb[0].mxu0
    %582 = vmatprep.mubr.f32.mxu0 0.0
    %583 = vmatmul.mubr.f32.gmra.mrb[0].mxu0 %v465
    %v584 = vpop.f32.mrb[0].mxu0
    %v585 = vadd.f32 0.0, %v584
    %v586 = vpop.f32.mrb[0].mxu0
    %587 = vmatprep.mubr.f32.mxu0 0.0
    %588 = vmatmul.mubr.f32.gmra.mrb[0].mxu0 %v468
    %v589 = vpop.f32.mrb[0].mxu0
    %v590 = vadd.f32 0.0, %v589
    %v591 = vpop.f32.mrb[0].mxu0
    %592 = vmatprep.mubr.f32.mxu0 0.0
    %593 = vmatmul.mubr.f32.gmra.mrb[0].mxu0 %v471
    %v594 = vpop.f32.mrb[0].mxu0
    %v595 = vadd.f32 0.0, %v594
    %v596 = vpop.f32.mrb[0].mxu0
    %597 = vmatprep.mubr.f32.mxu0 0.0
    %598 = vmatmul.mubr.f32.gmra.mrb[0].mxu0 %v474
    %v599 = vpop.f32.mrb[0].mxu0
    %v600 = vadd.f32 0.0, %v599
    %v601 = vpop.f32.mrb[0].mxu0
    %602 = vmatprep.mubr.f32.mxu0 0.0
    %603 = vmatmul.mubr.f32.gmra.mrb[0].mxu0 %v477
    %v604 = vpop.f32.mrb[0].mxu0
    %v605 = vadd.f32 0.0, %v604
    %v606 = vpop.f32.mrb[0].mxu0
    %607 = vmatprep.mubr.f32.mxu0 0.0
    %608 = vmatmul.mubr.f32.gmra.mrb[0].mxu0 %v480
    %v609 = vpop.f32.mrb[0].mxu0
    %v610 = vadd.f32 0.0, %v609
    %v611 = vpop.f32.mrb[0].mxu0
    %612 = vmatprep.mubr.f32.mxu0 0.0
    %613 = vmatmul.mubr.f32.gmra.mrb[0].mxu0 %v483
    %v614 = vpop.f32.mrb[0].mxu0
    %v615 = vadd.f32 0.0, %v614
    %v616 = vpop.f32.mrb[0].mxu0
    %617 = vmatprep.mubr.f32.mxu0 0.0
    %618 = vmatmul.mubr.f32.gmra.mrb[0].mxu0 %v486
    %v619 = vpop.f32.mrb[0].mxu0
    %v620 = vadd.f32 0.0, %v619
    %v621 = vpop.f32.mrb[0].mxu0
    %622 = vmatprep.mubr.f32.mxu0 0.0
    %623 = vmatmul.mubr.f32.gmra.mrb[0].mxu0 %v489
    %v624 = vpop.f32.mrb[0].mxu0
    %v625 = vadd.f32 0.0, %v624
    %v626 = vpop.f32.mrb[0].mxu0
    %627 = vmatprep.mubr.f32.mxu0 0.0
    %628 = vmatmul.mubr.f32.gmra.mrb[0].mxu0 %v492
    %v629 = vpop.f32.mrb[0].mxu0
    %v630 = vadd.f32 0.0, %v629
    %v631 = vpop.f32.mrb[0].mxu0
    %632 = vmatprep.mubr.f32.mxu0 0.0
    %633 = vmatmul.mubr.f32.gmra.mrb[0].mxu0 %v495
    %v634 = vpop.f32.mrb[0].mxu0
    %v635 = vadd.f32 0.0, %v634
    %v636 = vpop.f32.mrb[0].mxu0
    %637 = vmatprep.mubr.f32.mxu0 0.0
    %638 = vmatmul.mubr.f32.gmra.mrb[0].mxu0 %v498
    %v639 = vpop.f32.mrb[0].mxu0
    %v640 = vadd.f32 0.0, %v639
    %v641 = vpop.f32.mrb[0].mxu0
    %642 = vmatprep.mubr.f32.mxu0 0.0
    %643 = vmatmul.mubr.f32.gmra.mrb[0].mxu0 %v501
    %v644 = vpop.f32.mrb[0].mxu0
    %v645 = vadd.f32 0.0, %v644
    %v646 = vpop.f32.mrb[0].mxu0
    %647 = vdwg.mxu0
    %v648 = vadd.f32 %v407, %v570
    %v649 = vadd.f32 %v408, %v575
    %v650 = vadd.f32 %v409, %v580
    %v651 = vadd.f32 %v410, %v585
    %v652 = vadd.f32 %v411, %v590
    %v653 = vadd.f32 %v412, %v595
    %v654 = vadd.f32 %v413, %v600
    %v655 = vadd.f32 %v414, %v605
    %v656 = vadd.f32 %v415, %v610
    %v657 = vadd.f32 %v416, %v615
    %v658 = vadd.f32 %v417, %v620
    %v659 = vadd.f32 %v418, %v625
    %v660 = vadd.f32 %v419, %v630
    %v661 = vadd.f32 %v420, %v635
    %v662 = vadd.f32 %v421, %v640
    %v663 = vadd.f32 %v422, %v645
    %664 = vst [vmem:[%s4] sm:$0xff] %v648
    %665 = vst [vmem:[%s4 + $0x8] sm:$0xff] %v649
    %666 = vst [vmem:[%s4 + $0x10] sm:$0xff] %v650
    %667 = vst [vmem:[%s4 + $0x18] sm:$0xff] %v651
    %668 = vst [vmem:[%s4 + $0x20] sm:$0xff] %v652
    %669 = vst [vmem:[%s4 + $0x28] sm:$0xff] %v653
    %670 = vst [vmem:[%s4 + $0x30] sm:$0xff] %v654
    %671 = vst [vmem:[%s4 + $0x38] sm:$0xff] %v655
    %672 = vst [vmem:[%s4 + $0x40] sm:$0xff] %v656
    %673 = vst [vmem:[%s4 + $0x48] sm:$0xff] %v657
    %674 = vst [vmem:[%s4 + $0x50] sm:$0xff] %v658
    %675 = vst [vmem:[%s4 + $0x58] sm:$0xff] %v659
    %676 = vst [vmem:[%s4 + $0x60] sm:$0xff] %v660
    %677 = vst [vmem:[%s4 + $0x68] sm:$0xff] %v661
    %678 = vst [vmem:[%s4 + $0x70] sm:$0xff] %v662
    %679 = vst [vmem:[%s4 + $0x78] sm:$0xff] %v663
    %v680 = vld [vmem:[%s4] sm:$0xff]
    %v681 = vld [vmem:[%s4 + $0x8] sm:$0xff]
    %v682 = vld [vmem:[%s4 + $0x10] sm:$0xff]
    %v683 = vld [vmem:[%s4 + $0x18] sm:$0xff]
    %v684 = vld [vmem:[%s4 + $0x20] sm:$0xff]
    %v685 = vld [vmem:[%s4 + $0x28] sm:$0xff]
    %v686 = vld [vmem:[%s4 + $0x30] sm:$0xff]
    %v687 = vld [vmem:[%s4 + $0x38] sm:$0xff]
    %v688 = vld [vmem:[%s4 + $0x40] sm:$0xff]
    %v689 = vld [vmem:[%s4 + $0x48] sm:$0xff]
    %v690 = vld [vmem:[%s4 + $0x50] sm:$0xff]
    %v691 = vld [vmem:[%s4 + $0x58] sm:$0xff]
    %v692 = vld [vmem:[%s4 + $0x60] sm:$0xff]
    %v693 = vld [vmem:[%s4 + $0x68] sm:$0xff]
    %v694 = vld [vmem:[%s4 + $0x70] sm:$0xff]
    %v695 = vld [vmem:[%s4 + $0x78] sm:$0xff]
    %696 = vxpose.xlu0.b32.start [1/16] %v131, 128
    %697 = vxpose.xlu0.b32.cont [2/16] %v132, 128
    %698 = vxpose.xlu0.b32.cont [3/16] 0.0, 128
    %699 = vxpose.xlu0.b32.cont [4/16] 0.0, 128
    %700 = vxpose.xlu0.b32.cont [5/16] 0.0, 128
    %701 = vxpose.xlu0.b32.cont [6/16] 0.0, 128
    %702 = vxpose.xlu0.b32.cont [7/16] 0.0, 128
    %703 = vxpose.xlu0.b32.cont [8/16] 0.0, 128
    %704 = vxpose.xlu0.b32.cont [9/16] 0.0, 128
    %705 = vxpose.xlu0.b32.cont [10/16] 0.0, 128
    %706 = vxpose.xlu0.b32.cont [11/16] 0.0, 128
    %707 = vxpose.xlu0.b32.cont [12/16] 0.0, 128
    %708 = vxpose.xlu0.b32.cont [13/16] 0.0, 128
    %709 = vxpose.xlu0.b32.cont [14/16] 0.0, 128
    %710 = vxpose.xlu0.b32.cont [15/16] 0.0, 128
    %711 = vxpose.xlu0.b32.end [16/16] 0.0, 128
    %v712 = vpop.trf.xlu0
    %v713 = vpop.trf.xlu0
    %v714 = vpop.trf.xlu0
    %v715 = vpop.trf.xlu0
    %v716 = vpop.trf.xlu0
    %v717 = vpop.trf.xlu0
    %v718 = vpop.trf.xlu0
    %v719 = vpop.trf.xlu0
    %v720 = vpop.trf.xlu0
    %v721 = vpop.trf.xlu0
    %v722 = vpop.trf.xlu0
    %v723 = vpop.trf.xlu0
    %v724 = vpop.trf.xlu0
    %v725 = vpop.trf.xlu0
    %v726 = vpop.trf.xlu0
    %v727 = vpop.trf.xlu0
    %v729 = vsel %vm181, %v712, 0
    %v732 = vsel %vm181, %v713, 0
    %v735 = vsel %vm181, %v714, 0
    %v738 = vsel %vm181, %v715, 0
    %v741 = vsel %vm181, %v716, 0
    %v744 = vsel %vm181, %v717, 0
    %v747 = vsel %vm181, %v718, 0
    %v750 = vsel %vm181, %v719, 0
    %v753 = vsel %vm181, %v720, 0
    %v756 = vsel %vm181, %v721, 0
    %v759 = vsel %vm181, %v722, 0
    %v762 = vsel %vm181, %v723, 0
    %v765 = vsel %vm181, %v724, 0
    %v768 = vsel %vm181, %v725, 0
    %v771 = vsel %vm181, %v726, 0
    %v774 = vsel %vm181, %v727, 0
    %776 = vmatprep.subr.mxu0 0.0
    %777 = vmatpush1.msra.mxu0 %v131
    %778 = vmatprep.subr.mxu0 0.0
    %779 = vmatpush1.msra.mxu0 %v132
    %780 = vmatprep.subr.mxu0 0.0
    %781 = vmatpush1.msra.mxu0 0.0
    %782 = vmatprep.subr.mxu0 0.0
    %783 = vmatpush1.msra.mxu0 0.0
    %784 = vmatprep.subr.mxu0 0.0
    %785 = vmatpush1.msra.mxu0 0.0
    %786 = vmatprep.subr.mxu0 0.0
    %787 = vmatpush1.msra.mxu0 0.0
    %788 = vmatprep.subr.mxu0 0.0
    %789 = vmatpush1.msra.mxu0 0.0
    %790 = vmatprep.subr.mxu0 0.0
    %791 = vmatpush1.msra.mxu0 0.0
    %792 = vmatprep.subr.mxu0 0.0
    %793 = vmatpush1.msra.mxu0 0.0
    %794 = vmatprep.subr.mxu0 0.0
    %795 = vmatpush1.msra.mxu0 0.0
    %796 = vmatprep.subr.mxu0 0.0
    %797 = vmatpush1.msra.mxu0 0.0
    %798 = vmatprep.subr.mxu0 0.0
    %799 = vmatpush1.msra.mxu0 0.0
    %800 = vmatprep.subr.mxu0 0.0
    %801 = vmatpush1.msra.mxu0 0.0
    %802 = vmatprep.subr.mxu0 0.0
    %803 = vmatpush1.msra.mxu0 0.0
    %804 = vmatprep.subr.mxu0 0.0
    %805 = vmatpush1.msra.mxu0 0.0
    %806 = vmatprep.subr.mxu0 0.0
    %807 = vmatpush1.msra.mxu0 0.0
    %808 = vmatprep.subr.mxu0 0.0
    %809 = vmatpush1.msra.mxu0 0.0
    %810 = vmatprep.subr.mxu0 0.0
    %811 = vmatpush1.msra.mxu0 0.0
    %812 = vmatprep.subr.mxu0 0.0
    %813 = vmatpush1.msra.mxu0 0.0
    %814 = vmatprep.subr.mxu0 0.0
    %815 = vmatpush1.msra.mxu0 0.0
    %816 = vmatprep.subr.mxu0 0.0
    %817 = vmatpush1.msra.mxu0 0.0
    %818 = vmatprep.subr.mxu0 0.0
    %819 = vmatpush1.msra.mxu0 0.0
    %820 = vmatprep.subr.mxu0 0.0
    %821 = vmatpush1.msra.mxu0 0.0
    %822 = vmatprep.subr.mxu0 0.0
    %823 = vmatpush1.msra.mxu0 0.0
    %824 = vmatprep.subr.mxu0 0.0
    %825 = vmatpush1.msra.mxu0 0.0
    %826 = vmatprep.subr.mxu0 0.0
    %827 = vmatpush1.msra.mxu0 0.0
    %828 = vmatprep.subr.mxu0 0.0
    %829 = vmatpush1.msra.mxu0 0.0
    %830 = vmatprep.subr.mxu0 0.0
    %831 = vmatpush1.msra.mxu0 0.0
    %832 = vmatprep.subr.mxu0 0.0
    %833 = vmatpush1.msra.mxu0 0.0
    %834 = vmatprep.subr.mxu0 0.0
    %835 = vmatpush1.msra.mxu0 0.0
    %836 = vmatprep.subr.mxu0 0.0
    %837 = vmatpush1.msra.mxu0 0.0
    %838 = vmatprep.subr.mxu0 0.0
    %839 = vmatpush1.msra.mxu0 0.0
    %840 = vmatprep.mubr.f32.mxu0 0.0
    %841 = vmatmul.mubr.f32.gmra.mrb[0].mxu0 %v729
    %v842 = vpop.f32.mrb[0].mxu0
    %v843 = vadd.f32 0.0, %v842
    %v844 = vpop.f32.mrb[0].mxu0
    %845 = vmatprep.mubr.f32.mxu0 0.0
    %846 = vmatmul.mubr.f32.gmra.mrb[0].mxu0 %v732
    %v847 = vpop.f32.mrb[0].mxu0
    %v848 = vadd.f32 0.0, %v847
    %v849 = vpop.f32.mrb[0].mxu0
    %850 = vmatprep.mubr.f32.mxu0 0.0
    %851 = vmatmul.mubr.f32.gmra.mrb[0].mxu0 %v735
    %v852 = vpop.f32.mrb[0].mxu0
    %v853 = vadd.f32 0.0, %v852
    %v854 = vpop.f32.mrb[0].mxu0
    %855 = vmatprep.mubr.f32.mxu0 0.0
    %856 = vmatmul.mubr.f32.gmra.mrb[0].mxu0 %v738
    %v857 = vpop.f32.mrb[0].mxu0
    %v858 = vadd.f32 0.0, %v857
    %v859 = vpop.f32.mrb[0].mxu0
    %860 = vmatprep.mubr.f32.mxu0 0.0
    %861 = vmatmul.mubr.f32.gmra.mrb[0].mxu0 %v741
    %v862 = vpop.f32.mrb[0].mxu0
    %v863 = vadd.f32 0.0, %v862
    %v864 = vpop.f32.mrb[0].mxu0
    %865 = vmatprep.mubr.f32.mxu0 0.0
    %866 = vmatmul.mubr.f32.gmra.mrb[0].mxu0 %v744
    %v867 = vpop.f32.mrb[0].mxu0
    %v868 = vadd.f32 0.0, %v867
    %v869 = vpop.f32.mrb[0].mxu0
    %870 = vmatprep.mubr.f32.mxu0 0.0
    %871 = vmatmul.mubr.f32.gmra.mrb[0].mxu0 %v747
    %v872 = vpop.f32.mrb[0].mxu0
    %v873 = vadd.f32 0.0, %v872
    %v874 = vpop.f32.mrb[0].mxu0
    %875 = vmatprep.mubr.f32.mxu0 0.0
    %876 = vmatmul.mubr.f32.gmra.mrb[0].mxu0 %v750
    %v877 = vpop.f32.mrb[0].mxu0
    %v878 = vadd.f32 0.0, %v877
    %v879 = vpop.f32.mrb[0].mxu0
    %880 = vmatprep.mubr.f32.mxu0 0.0
    %881 = vmatmul.mubr.f32.gmra.mrb[0].mxu0 %v753
    %v882 = vpop.f32.mrb[0].mxu0
    %v883 = vadd.f32 0.0, %v882
    %v884 = vpop.f32.mrb[0].mxu0
    %885 = vmatprep.mubr.f32.mxu0 0.0
    %886 = vmatmul.mubr.f32.gmra.mrb[0].mxu0 %v756
    %v887 = vpop.f32.mrb[0].mxu0
    %v888 = vadd.f32 0.0, %v887
    %v889 = vpop.f32.mrb[0].mxu0
    %890 = vmatprep.mubr.f32.mxu0 0.0
    %891 = vmatmul.mubr.f32.gmra.mrb[0].mxu0 %v759
    %v892 = vpop.f32.mrb[0].mxu0
    %v893 = vadd.f32 0.0, %v892
    %v894 = vpop.f32.mrb[0].mxu0
    %895 = vmatprep.mubr.f32.mxu0 0.0
    %896 = vmatmul.mubr.f32.gmra.mrb[0].mxu0 %v762
    %v897 = vpop.f32.mrb[0].mxu0
    %v898 = vadd.f32 0.0, %v897
    %v899 = vpop.f32.mrb[0].mxu0
    %900 = vmatprep.mubr.f32.mxu0 0.0
    %901 = vmatmul.mubr.f32.gmra.mrb[0].mxu0 %v765
    %v902 = vpop.f32.mrb[0].mxu0
    %v903 = vadd.f32 0.0, %v902
    %v904 = vpop.f32.mrb[0].mxu0
    %905 = vmatprep.mubr.f32.mxu0 0.0
    %906 = vmatmul.mubr.f32.gmra.mrb[0].mxu0 %v768
    %v907 = vpop.f32.mrb[0].mxu0
    %v908 = vadd.f32 0.0, %v907
    %v909 = vpop.f32.mrb[0].mxu0
    %910 = vmatprep.mubr.f32.mxu0 0.0
    %911 = vmatmul.mubr.f32.gmra.mrb[0].mxu0 %v771
    %v912 = vpop.f32.mrb[0].mxu0
    %v913 = vadd.f32 0.0, %v912
    %v914 = vpop.f32.mrb[0].mxu0
    %915 = vmatprep.mubr.f32.mxu0 0.0
    %916 = vmatmul.mubr.f32.gmra.mrb[0].mxu0 %v774
    %v917 = vpop.f32.mrb[0].mxu0
    %v918 = vadd.f32 0.0, %v917
    %v919 = vpop.f32.mrb[0].mxu0
    %920 = vdwg.mxu0
    %v921 = vadd.f32 %v680, %v843
    %v922 = vadd.f32 %v681, %v848
    %v923 = vadd.f32 %v682, %v853
    %v924 = vadd.f32 %v683, %v858
    %v925 = vadd.f32 %v684, %v863
    %v926 = vadd.f32 %v685, %v868
    %v927 = vadd.f32 %v686, %v873
    %v928 = vadd.f32 %v687, %v878
    %v929 = vadd.f32 %v688, %v883
    %v930 = vadd.f32 %v689, %v888
    %v931 = vadd.f32 %v690, %v893
    %v932 = vadd.f32 %v691, %v898
    %v933 = vadd.f32 %v692, %v903
    %v934 = vadd.f32 %v693, %v908
    %v935 = vadd.f32 %v694, %v913
    %v936 = vadd.f32 %v695, %v918
    %937 = vst [vmem:[%s4] sm:$0xff] %v921
    %938 = vst [vmem:[%s4 + $0x8] sm:$0xff] %v922
    %939 = vst [vmem:[%s4 + $0x10] sm:$0xff] %v923
    %940 = vst [vmem:[%s4 + $0x18] sm:$0xff] %v924
    %941 = vst [vmem:[%s4 + $0x20] sm:$0xff] %v925
    %942 = vst [vmem:[%s4 + $0x28] sm:$0xff] %v926
    %943 = vst [vmem:[%s4 + $0x30] sm:$0xff] %v927
    %944 = vst [vmem:[%s4 + $0x38] sm:$0xff] %v928
    %945 = vst [vmem:[%s4 + $0x40] sm:$0xff] %v929
    %946 = vst [vmem:[%s4 + $0x48] sm:$0xff] %v930
    %947 = vst [vmem:[%s4 + $0x50] sm:$0xff] %v931
    %948 = vst [vmem:[%s4 + $0x58] sm:$0xff] %v932
    %949 = vst [vmem:[%s4 + $0x60] sm:$0xff] %v933
    %950 = vst [vmem:[%s4 + $0x68] sm:$0xff] %v934
    %951 = vst [vmem:[%s4 + $0x70] sm:$0xff] %v935
    %952 = vst [vmem:[%s4 + $0x78] sm:$0xff] %v936
  $region25: #{online_triplet_pca_loss.2} parent=0 // pred_fallthru
    _
  // Predicated region
  $region26: #{online_triplet_pca_loss.2} parent=0 // pred_check
    _
  $region27: #{online_triplet_pca_loss.2} parent=0 // pred_check_branch
    %954 = sbr.rel (%p110) target = $region29
  $region28: #{online_triplet_pca_loss.2} parent=0 // pred_region
    %v955 = vld [vmem:[%s64] sm:$0xff]
    %v956 = vld [vmem:[%s64 + $0x8] sm:$0xff]
    %v958 = vlaneseq
    %v959 = vshrl.u32 %v958, 7
    %v960 = vsub.s32 0, %v959
    %v961 = vrot.slane %v104, %v960
    %v963 = vsub.f32 %v955, %v961
    %v964 = vsub.f32 %v956, %v961
    %v965 = vld [vmem:[%s72] sm:$0xff]
    %v966 = vld [vmem:[%s72 + $0x8] sm:$0xff]
    %v967 = vsub.f32 %v965, %v961
    %v968 = vsub.f32 %v966, %v961
    %v969 = vld [vmem:[%s80] sm:$0xff]
    %v970 = vld [vmem:[%s80 + $0x8] sm:$0xff]
    %v971 = vsub.f32 %v969, %v961
    %v972 = vsub.f32 %v970, %v961
    %v973 = vlaneseq
    %v974 = vshrl.u32 %v973, 7
    %v975 = vadd.s32 %v974, 8
    %v976 = vstv %s105
    %v977 = vadd.s32 %v976, %v974
    %v978 = vadd.s32 %v976, %v975
    %vm979 = vcmp.lt.s32.totalorder %v977, 16
    %vm980 = vcmp.lt.s32.totalorder %v978, 16
    %v981 = vsel %vm979, 1, 0
    %v982 = vsel %vm980, 1, 0
    %vm983 = vcmp.eq.s32.totalorder %v981, 1
    %vm984 = vcmp.eq.s32.totalorder %v982, 1
    %v985 = vsel %vm983, %v963, 0.0
    %v986 = vsel %vm984, %v964, 0.0
    %v987 = vsel %vm983, %v967, 0.0
    %v988 = vsel %vm984, %v968, 0.0
    %v989 = vsel %vm983, %v971, 0.0
    %v990 = vsel %vm984, %v972, 0.0
    %v991 = vld [vmem:[%s4] sm:$0xff]
    %v992 = vld [vmem:[%s4 + $0x8] sm:$0xff]
    %v993 = vld [vmem:[%s4 + $0x10] sm:$0xff]
    %v994 = vld [vmem:[%s4 + $0x18] sm:$0xff]
    %v995 = vld [vmem:[%s4 + $0x20] sm:$0xff]
    %v996 = vld [vmem:[%s4 + $0x28] sm:$0xff]
    %v997 = vld [vmem:[%s4 + $0x30] sm:$0xff]
    %v998 = vld [vmem:[%s4 + $0x38] sm:$0xff]
    %v999 = vld [vmem:[%s4 + $0x40] sm:$0xff]
    %v1000 = vld [vmem:[%s4 + $0x48] sm:$0xff]
    %v1001 = vld [vmem:[%s4 + $0x50] sm:$0xff]
    %v1002 = vld [vmem:[%s4 + $0x58] sm:$0xff]
    %v1003 = vld [vmem:[%s4 + $0x60] sm:$0xff]
    %v1004 = vld [vmem:[%s4 + $0x68] sm:$0xff]
    %v1005 = vld [vmem:[%s4 + $0x70] sm:$0xff]
    %v1006 = vld [vmem:[%s4 + $0x78] sm:$0xff]
    %1007 = vxpose.xlu0.b32.start [1/16] %v985, 128
    %1008 = vxpose.xlu0.b32.cont [2/16] %v986, 128
    %1009 = vxpose.xlu0.b32.cont [3/16] 0.0, 128
    %1010 = vxpose.xlu0.b32.cont [4/16] 0.0, 128
    %1011 = vxpose.xlu0.b32.cont [5/16] 0.0, 128
    %1012 = vxpose.xlu0.b32.cont [6/16] 0.0, 128
    %1013 = vxpose.xlu0.b32.cont [7/16] 0.0, 128
    %1014 = vxpose.xlu0.b32.cont [8/16] 0.0, 128
    %1015 = vxpose.xlu0.b32.cont [9/16] 0.0, 128
    %1016 = vxpose.xlu0.b32.cont [10/16] 0.0, 128
    %1017 = vxpose.xlu0.b32.cont [11/16] 0.0, 128
    %1018 = vxpose.xlu0.b32.cont [12/16] 0.0, 128
    %1019 = vxpose.xlu0.b32.cont [13/16] 0.0, 128
    %1020 = vxpose.xlu0.b32.cont [14/16] 0.0, 128
    %1021 = vxpose.xlu0.b32.cont [15/16] 0.0, 128
    %1022 = vxpose.xlu0.b32.end [16/16] 0.0, 128
    %v1023 = vpop.trf.xlu0
    %v1024 = vpop.trf.xlu0
    %v1025 = vpop.trf.xlu0
    %v1026 = vpop.trf.xlu0
    %v1027 = vpop.trf.xlu0
    %v1028 = vpop.trf.xlu0
    %v1029 = vpop.trf.xlu0
    %v1030 = vpop.trf.xlu0
    %v1031 = vpop.trf.xlu0
    %v1032 = vpop.trf.xlu0
    %v1033 = vpop.trf.xlu0
    %v1034 = vpop.trf.xlu0
    %v1035 = vpop.trf.xlu0
    %v1036 = vpop.trf.xlu0
    %v1037 = vpop.trf.xlu0
    %v1038 = vpop.trf.xlu0
    %vm1039 = vcmask 130048
    %v1041 = vsel %vm1039, %v1023, 0
    %v1044 = vsel %vm1039, %v1024, 0
    %v1047 = vsel %vm1039, %v1025, 0
    %v1050 = vsel %vm1039, %v1026, 0
    %v1053 = vsel %vm1039, %v1027, 0
    %v1056 = vsel %vm1039, %v1028, 0
    %v1059 = vsel %vm1039, %v1029, 0
    %v1062 = vsel %vm1039, %v1030, 0
    %v1065 = vsel %vm1039, %v1031, 0
    %v1068 = vsel %vm1039, %v1032, 0
    %v1071 = vsel %vm1039, %v1033, 0
    %v1074 = vsel %vm1039, %v1034, 0
    %v1077 = vsel %vm1039, %v1035, 0
    %v1080 = vsel %vm1039, %v1036, 0
    %v1083 = vsel %vm1039, %v1037, 0
    %v1086 = vsel %vm1039, %v1038, 0
    %1088 = vmatprep.subr.mxu0 0.0
    %1089 = vmatpush1.msra.mxu0 %v985
    %1090 = vmatprep.subr.mxu0 0.0
    %1091 = vmatpush1.msra.mxu0 %v986
    %1092 = vmatprep.subr.mxu0 0.0
    %1093 = vmatpush1.msra.mxu0 0.0
    %1094 = vmatprep.subr.mxu0 0.0
    %1095 = vmatpush1.msra.mxu0 0.0
    %1096 = vmatprep.subr.mxu0 0.0
    %1097 = vmatpush1.msra.mxu0 0.0
    %1098 = vmatprep.subr.mxu0 0.0
    %1099 = vmatpush1.msra.mxu0 0.0
    %1100 = vmatprep.subr.mxu0 0.0
    %1101 = vmatpush1.msra.mxu0 0.0
    %1102 = vmatprep.subr.mxu0 0.0
    %1103 = vmatpush1.msra.mxu0 0.0
    %1104 = vmatprep.subr.mxu0 0.0
    %1105 = vmatpush1.msra.mxu0 0.0
    %1106 = vmatprep.subr.mxu0 0.0
    %1107 = vmatpush1.msra.mxu0 0.0
    %1108 = vmatprep.subr.mxu0 0.0
    %1109 = vmatpush1.msra.mxu0 0.0
    %1110 = vmatprep.subr.mxu0 0.0
    %1111 = vmatpush1.msra.mxu0 0.0
    %1112 = vmatprep.subr.mxu0 0.0
    %1113 = vmatpush1.msra.mxu0 0.0
    %1114 = vmatprep.subr.mxu0 0.0
    %1115 = vmatpush1.msra.mxu0 0.0
    %1116 = vmatprep.subr.mxu0 0.0
    %1117 = vmatpush1.msra.mxu0 0.0
    %1118 = vmatprep.subr.mxu0 0.0
    %1119 = vmatpush1.msra.mxu0 0.0
    %1120 = vmatprep.subr.mxu0 0.0
    %1121 = vmatpush1.msra.mxu0 0.0
    %1122 = vmatprep.subr.mxu0 0.0
    %1123 = vmatpush1.msra.mxu0 0.0
    %1124 = vmatprep.subr.mxu0 0.0
    %1125 = vmatpush1.msra.mxu0 0.0
    %1126 = vmatprep.subr.mxu0 0.0
    %1127 = vmatpush1.msra.mxu0 0.0
    %1128 = vmatprep.subr.mxu0 0.0
    %1129 = vmatpush1.msra.mxu0 0.0
    %1130 = vmatprep.subr.mxu0 0.0
    %1131 = vmatpush1.msra.mxu0 0.0
    %1132 = vmatprep.subr.mxu0 0.0
    %1133 = vmatpush1.msra.mxu0 0.0
    %1134 = vmatprep.subr.mxu0 0.0
    %1135 = vmatpush1.msra.mxu0 0.0
    %1136 = vmatprep.subr.mxu0 0.0
    %1137 = vmatpush1.msra.mxu0 0.0
    %1138 = vmatprep.subr.mxu0 0.0
    %1139 = vmatpush1.msra.mxu0 0.0
    %1140 = vmatprep.subr.mxu0 0.0
    %1141 = vmatpush1.msra.mxu0 0.0
    %1142 = vmatprep.subr.mxu0 0.0
    %1143 = vmatpush1.msra.mxu0 0.0
    %1144 = vmatprep.subr.mxu0 0.0
    %1145 = vmatpush1.msra.mxu0 0.0
    %1146 = vmatprep.subr.mxu0 0.0
    %1147 = vmatpush1.msra.mxu0 0.0
    %1148 = vmatprep.subr.mxu0 0.0
    %1149 = vmatpush1.msra.mxu0 0.0
    %1150 = vmatprep.subr.mxu0 0.0
    %1151 = vmatpush1.msra.mxu0 0.0
    %1152 = vmatprep.mubr.f32.mxu0 0.0
    %1153 = vmatmul.mubr.f32.gmra.mrb[0].mxu0 %v1041
    %v1154 = vpop.f32.mrb[0].mxu0
    %v1155 = vadd.f32 0.0, %v1154
    %v1156 = vpop.f32.mrb[0].mxu0
    %1157 = vmatprep.mubr.f32.mxu0 0.0
    %1158 = vmatmul.mubr.f32.gmra.mrb[0].mxu0 %v1044
    %v1159 = vpop.f32.mrb[0].mxu0
    %v1160 = vadd.f32 0.0, %v1159
    %v1161 = vpop.f32.mrb[0].mxu0
    %1162 = vmatprep.mubr.f32.mxu0 0.0
    %1163 = vmatmul.mubr.f32.gmra.mrb[0].mxu0 %v1047
    %v1164 = vpop.f32.mrb[0].mxu0
    %v1165 = vadd.f32 0.0, %v1164
    %v1166 = vpop.f32.mrb[0].mxu0
    %1167 = vmatprep.mubr.f32.mxu0 0.0
    %1168 = vmatmul.mubr.f32.gmra.mrb[0].mxu0 %v1050
    %v1169 = vpop.f32.mrb[0].mxu0
    %v1170 = vadd.f32 0.0, %v1169
    %v1171 = vpop.f32.mrb[0].mxu0
    %1172 = vmatprep.mubr.f32.mxu0 0.0
    %1173 = vmatmul.mubr.f32.gmra.mrb[0].mxu0 %v1053
    %v1174 = vpop.f32.mrb[0].mxu0
    %v1175 = vadd.f32 0.0, %v1174
    %v1176 = vpop.f32.mrb[0].mxu0
    %1177 = vmatprep.mubr.f32.mxu0 0.0
    %1178 = vmatmul.mubr.f32.gmra.mrb[0].mxu0 %v1056
    %v1179 = vpop.f32.mrb[0].mxu0
    %v1180 = vadd.f32 0.0, %v1179
    %v1181 = vpop.f32.mrb[0].mxu0
    %1182 = vmatprep.mubr.f32.mxu0 0.0
    %1183 = vmatmul.mubr.f32.gmra.mrb[0].mxu0 %v1059
    %v1184 = vpop.f32.mrb[0].mxu0
    %v1185 = vadd.f32 0.0, %v1184
    %v1186 = vpop.f32.mrb[0].mxu0
    %1187 = vmatprep.mubr.f32.mxu0 0.0
    %1188 = vmatmul.mubr.f32.gmra.mrb[0].mxu0 %v1062
    %v1189 = vpop.f32.mrb[0].mxu0
    %v1190 = vadd.f32 0.0, %v1189
    %v1191 = vpop.f32.mrb[0].mxu0
    %1192 = vmatprep.mubr.f32.mxu0 0.0
    %1193 = vmatmul.mubr.f32.gmra.mrb[0].mxu0 %v1065
    %v1194 = vpop.f32.mrb[0].mxu0
    %v1195 = vadd.f32 0.0, %v1194
    %v1196 = vpop.f32.mrb[0].mxu0
    %1197 = vmatprep.mubr.f32.mxu0 0.0
    %1198 = vmatmul.mubr.f32.gmra.mrb[0].mxu0 %v1068
    %v1199 = vpop.f32.mrb[0].mxu0
    %v1200 = vadd.f32 0.0, %v1199
    %v1201 = vpop.f32.mrb[0].mxu0
    %1202 = vmatprep.mubr.f32.mxu0 0.0
    %1203 = vmatmul.mubr.f32.gmra.mrb[0].mxu0 %v1071
    %v1204 = vpop.f32.mrb[0].mxu0
    %v1205 = vadd.f32 0.0, %v1204
    %v1206 = vpop.f32.mrb[0].mxu0
    %1207 = vmatprep.mubr.f32.mxu0 0.0
    %1208 = vmatmul.mubr.f32.gmra.mrb[0].mxu0 %v1074
    %v1209 = vpop.f32.mrb[0].mxu0
    %v1210 = vadd.f32 0.0, %v1209
    %v1211 = vpop.f32.mrb[0].mxu0
    %1212 = vmatprep.mubr.f32.mxu0 0.0
    %1213 = vmatmul.mubr.f32.gmra.mrb[0].mxu0 %v1077
    %v1214 = vpop.f32.mrb[0].mxu0
    %v1215 = vadd.f32 0.0, %v1214
    %v1216 = vpop.f32.mrb[0].mxu0
    %1217 = vmatprep.mubr.f32.mxu0 0.0
    %1218 = vmatmul.mubr.f32.gmra.mrb[0].mxu0 %v1080
    %v1219 = vpop.f32.mrb[0].mxu0
    %v1220 = vadd.f32 0.0, %v1219
    %v1221 = vpop.f32.mrb[0].mxu0
    %1222 = vmatprep.mubr.f32.mxu0 0.0
    %1223 = vmatmul.mubr.f32.gmra.mrb[0].mxu0 %v1083
    %v1224 = vpop.f32.mrb[0].mxu0
    %v1225 = vadd.f32 0.0, %v1224
    %v1226 = vpop.f32.mrb[0].mxu0
    %1227 = vmatprep.mubr.f32.mxu0 0.0
    %1228 = vmatmul.mubr.f32.gmra.mrb[0].mxu0 %v1086
    %v1229 = vpop.f32.mrb[0].mxu0
    %v1230 = vadd.f32 0.0, %v1229
    %v1231 = vpop.f32.mrb[0].mxu0
    %1232 = vdwg.mxu0
    %v1233 = vadd.f32 %v991, %v1155
    %v1234 = vadd.f32 %v992, %v1160
    %v1235 = vadd.f32 %v993, %v1165
    %v1236 = vadd.f32 %v994, %v1170
    %v1237 = vadd.f32 %v995, %v1175
    %v1238 = vadd.f32 %v996, %v1180
    %v1239 = vadd.f32 %v997, %v1185
    %v1240 = vadd.f32 %v998, %v1190
    %v1241 = vadd.f32 %v999, %v1195
    %v1242 = vadd.f32 %v1000, %v1200
    %v1243 = vadd.f32 %v1001, %v1205
    %v1244 = vadd.f32 %v1002, %v1210
    %v1245 = vadd.f32 %v1003, %v1215
    %v1246 = vadd.f32 %v1004, %v1220
    %v1247 = vadd.f32 %v1005, %v1225
    %v1248 = vadd.f32 %v1006, %v1230
    %1249 = vst [vmem:[%s4] sm:$0xff] %v1233
    %1250 = vst [vmem:[%s4 + $0x8] sm:$0xff] %v1234
    %1251 = vst [vmem:[%s4 + $0x10] sm:$0xff] %v1235
    %1252 = vst [vmem:[%s4 + $0x18] sm:$0xff] %v1236
    %1253 = vst [vmem:[%s4 + $0x20] sm:$0xff] %v1237
    %1254 = vst [vmem:[%s4 + $0x28] sm:$0xff] %v1238
    %1255 = vst [vmem:[%s4 + $0x30] sm:$0xff] %v1239
    %1256 = vst [vmem:[%s4 + $0x38] sm:$0xff] %v1240
    %1257 = vst [vmem:[%s4 + $0x40] sm:$0xff] %v1241
    %1258 = vst [vmem:[%s4 + $0x48] sm:$0xff] %v1242
    %1259 = vst [vmem:[%s4 + $0x50] sm:$0xff] %v1243
    %1260 = vst [vmem:[%s4 + $0x58] sm:$0xff] %v1244
    %1261 = vst [vmem:[%s4 + $0x60] sm:$0xff] %v1245
    %1262 = vst [vmem:[%s4 + $0x68] sm:$0xff] %v1246
    %1263 = vst [vmem:[%s4 + $0x70] sm:$0xff] %v1247
    %1264 = vst [vmem:[%s4 + $0x78] sm:$0xff] %v1248
    %v1265 = vld [vmem:[%s4] sm:$0xff]
    %v1266 = vld [vmem:[%s4 + $0x8] sm:$0xff]
    %v1267 = vld [vmem:[%s4 + $0x10] sm:$0xff]
    %v1268 = vld [vmem:[%s4 + $0x18] sm:$0xff]
    %v1269 = vld [vmem:[%s4 + $0x20] sm:$0xff]
    %v1270 = vld [vmem:[%s4 + $0x28] sm:$0xff]
    %v1271 = vld [vmem:[%s4 + $0x30] sm:$0xff]
    %v1272 = vld [vmem:[%s4 + $0x38] sm:$0xff]
    %v1273 = vld [vmem:[%s4 + $0x40] sm:$0xff]
    %v1274 = vld [vmem:[%s4 + $0x48] sm:$0xff]
    %v1275 = vld [vmem:[%s4 + $0x50] sm:$0xff]
    %v1276 = vld [vmem:[%s4 + $0x58] sm:$0xff]
    %v1277 = vld [vmem:[%s4 + $0x60] sm:$0xff]
    %v1278 = vld [vmem:[%s4 + $0x68] sm:$0xff]
    %v1279 = vld [vmem:[%s4 + $0x70] sm:$0xff]
    %v1280 = vld [vmem:[%s4 + $0x78] sm:$0xff]
    %1281 = vxpose.xlu0.b32.start [1/16] %v987, 128
    %1282 = vxpose.xlu0.b32.cont [2/16] %v988, 128
    %1283 = vxpose.xlu0.b32.cont [3/16] 0.0, 128
    %1284 = vxpose.xlu0.b32.cont [4/16] 0.0, 128
    %1285 = vxpose.xlu0.b32.cont [5/16] 0.0, 128
    %1286 = vxpose.xlu0.b32.cont [6/16] 0.0, 128
    %1287 = vxpose.xlu0.b32.cont [7/16] 0.0, 128
    %1288 = vxpose.xlu0.b32.cont [8/16] 0.0, 128
    %1289 = vxpose.xlu0.b32.cont [9/16] 0.0, 128
    %1290 = vxpose.xlu0.b32.cont [10/16] 0.0, 128
    %1291 = vxpose.xlu0.b32.cont [11/16] 0.0, 128
    %1292 = vxpose.xlu0.b32.cont [12/16] 0.0, 128
    %1293 = vxpose.xlu0.b32.cont [13/16] 0.0, 128
    %1294 = vxpose.xlu0.b32.cont [14/16] 0.0, 128
    %1295 = vxpose.xlu0.b32.cont [15/16] 0.0, 128
    %1296 = vxpose.xlu0.b32.end [16/16] 0.0, 128
    %v1297 = vpop.trf.xlu0
    %v1298 = vpop.trf.xlu0
    %v1299 = vpop.trf.xlu0
    %v1300 = vpop.trf.xlu0
    %v1301 = vpop.trf.xlu0
    %v1302 = vpop.trf.xlu0
    %v1303 = vpop.trf.xlu0
    %v1304 = vpop.trf.xlu0
    %v1305 = vpop.trf.xlu0
    %v1306 = vpop.trf.xlu0
    %v1307 = vpop.trf.xlu0
    %v1308 = vpop.trf.xlu0
    %v1309 = vpop.trf.xlu0
    %v1310 = vpop.trf.xlu0
    %v1311 = vpop.trf.xlu0
    %v1312 = vpop.trf.xlu0
    %v1314 = vsel %vm1039, %v1297, 0
    %v1317 = vsel %vm1039, %v1298, 0
    %v1320 = vsel %vm1039, %v1299, 0
    %v1323 = vsel %vm1039, %v1300, 0
    %v1326 = vsel %vm1039, %v1301, 0
    %v1329 = vsel %vm1039, %v1302, 0
    %v1332 = vsel %vm1039, %v1303, 0
    %v1335 = vsel %vm1039, %v1304, 0
    %v1338 = vsel %vm1039, %v1305, 0
    %v1341 = vsel %vm1039, %v1306, 0
    %v1344 = vsel %vm1039, %v1307, 0
    %v1347 = vsel %vm1039, %v1308, 0
    %v1350 = vsel %vm1039, %v1309, 0
    %v1353 = vsel %vm1039, %v1310, 0
    %v1356 = vsel %vm1039, %v1311, 0
    %v1359 = vsel %vm1039, %v1312, 0
    %1361 = vmatprep.subr.mxu0 0.0
    %1362 = vmatpush1.msra.mxu0 %v987
    %1363 = vmatprep.subr.mxu0 0.0
    %1364 = vmatpush1.msra.mxu0 %v988
    %1365 = vmatprep.subr.mxu0 0.0
    %1366 = vmatpush1.msra.mxu0 0.0
    %1367 = vmatprep.subr.mxu0 0.0
    %1368 = vmatpush1.msra.mxu0 0.0
    %1369 = vmatprep.subr.mxu0 0.0
    %1370 = vmatpush1.msra.mxu0 0.0
    %1371 = vmatprep.subr.mxu0 0.0
    %1372 = vmatpush1.msra.mxu0 0.0
    %1373 = vmatprep.subr.mxu0 0.0
    %1374 = vmatpush1.msra.mxu0 0.0
    %1375 = vmatprep.subr.mxu0 0.0
    %1376 = vmatpush1.msra.mxu0 0.0
    %1377 = vmatprep.subr.mxu0 0.0
    %1378 = vmatpush1.msra.mxu0 0.0
    %1379 = vmatprep.subr.mxu0 0.0
    %1380 = vmatpush1.msra.mxu0 0.0
    %1381 = vmatprep.subr.mxu0 0.0
    %1382 = vmatpush1.msra.mxu0 0.0
    %1383 = vmatprep.subr.mxu0 0.0
    %1384 = vmatpush1.msra.mxu0 0.0
    %1385 = vmatprep.subr.mxu0 0.0
    %1386 = vmatpush1.msra.mxu0 0.0
    %1387 = vmatprep.subr.mxu0 0.0
    %1388 = vmatpush1.msra.mxu0 0.0
    %1389 = vmatprep.subr.mxu0 0.0
    %1390 = vmatpush1.msra.mxu0 0.0
    %1391 = vmatprep.subr.mxu0 0.0
    %1392 = vmatpush1.msra.mxu0 0.0
    %1393 = vmatprep.subr.mxu0 0.0
    %1394 = vmatpush1.msra.mxu0 0.0
    %1395 = vmatprep.subr.mxu0 0.0
    %1396 = vmatpush1.msra.mxu0 0.0
    %1397 = vmatprep.subr.mxu0 0.0
    %1398 = vmatpush1.msra.mxu0 0.0
    %1399 = vmatprep.subr.mxu0 0.0
    %1400 = vmatpush1.msra.mxu0 0.0
    %1401 = vmatprep.subr.mxu0 0.0
    %1402 = vmatpush1.msra.mxu0 0.0
    %1403 = vmatprep.subr.mxu0 0.0
    %1404 = vmatpush1.msra.mxu0 0.0
    %1405 = vmatprep.subr.mxu0 0.0
    %1406 = vmatpush1.msra.mxu0 0.0
    %1407 = vmatprep.subr.mxu0 0.0
    %1408 = vmatpush1.msra.mxu0 0.0
    %1409 = vmatprep.subr.mxu0 0.0
    %1410 = vmatpush1.msra.mxu0 0.0
    %1411 = vmatprep.subr.mxu0 0.0
    %1412 = vmatpush1.msra.mxu0 0.0
    %1413 = vmatprep.subr.mxu0 0.0
    %1414 = vmatpush1.msra.mxu0 0.0
    %1415 = vmatprep.subr.mxu0 0.0
    %1416 = vmatpush1.msra.mxu0 0.0
    %1417 = vmatprep.subr.mxu0 0.0
    %1418 = vmatpush1.msra.mxu0 0.0
    %1419 = vmatprep.subr.mxu0 0.0
    %1420 = vmatpush1.msra.mxu0 0.0
    %1421 = vmatprep.subr.mxu0 0.0
    %1422 = vmatpush1.msra.mxu0 0.0
    %1423 = vmatprep.subr.mxu0 0.0
    %1424 = vmatpush1.msra.mxu0 0.0
    %1425 = vmatprep.mubr.f32.mxu0 0.0
    %1426 = vmatmul.mubr.f32.gmra.mrb[0].mxu0 %v1314
    %v1427 = vpop.f32.mrb[0].mxu0
    %v1428 = vadd.f32 0.0, %v1427
    %v1429 = vpop.f32.mrb[0].mxu0
    %1430 = vmatprep.mubr.f32.mxu0 0.0
    %1431 = vmatmul.mubr.f32.gmra.mrb[0].mxu0 %v1317
    %v1432 = vpop.f32.mrb[0].mxu0
    %v1433 = vadd.f32 0.0, %v1432
    %v1434 = vpop.f32.mrb[0].mxu0
    %1435 = vmatprep.mubr.f32.mxu0 0.0
    %1436 = vmatmul.mubr.f32.gmra.mrb[0].mxu0 %v1320
    %v1437 = vpop.f32.mrb[0].mxu0
    %v1438 = vadd.f32 0.0, %v1437
    %v1439 = vpop.f32.mrb[0].mxu0
    %1440 = vmatprep.mubr.f32.mxu0 0.0
    %1441 = vmatmul.mubr.f32.gmra.mrb[0].mxu0 %v1323
    %v1442 = vpop.f32.mrb[0].mxu0
    %v1443 = vadd.f32 0.0, %v1442
    %v1444 = vpop.f32.mrb[0].mxu0
    %1445 = vmatprep.mubr.f32.mxu0 0.0
    %1446 = vmatmul.mubr.f32.gmra.mrb[0].mxu0 %v1326
    %v1447 = vpop.f32.mrb[0].mxu0
    %v1448 = vadd.f32 0.0, %v1447
    %v1449 = vpop.f32.mrb[0].mxu0
    %1450 = vmatprep.mubr.f32.mxu0 0.0
    %1451 = vmatmul.mubr.f32.gmra.mrb[0].mxu0 %v1329
    %v1452 = vpop.f32.mrb[0].mxu0
    %v1453 = vadd.f32 0.0, %v1452
    %v1454 = vpop.f32.mrb[0].mxu0
    %1455 = vmatprep.mubr.f32.mxu0 0.0
    %1456 = vmatmul.mubr.f32.gmra.mrb[0].mxu0 %v1332
    %v1457 = vpop.f32.mrb[0].mxu0
    %v1458 = vadd.f32 0.0, %v1457
    %v1459 = vpop.f32.mrb[0].mxu0
    %1460 = vmatprep.mubr.f32.mxu0 0.0
    %1461 = vmatmul.mubr.f32.gmra.mrb[0].mxu0 %v1335
    %v1462 = vpop.f32.mrb[0].mxu0
    %v1463 = vadd.f32 0.0, %v1462
    %v1464 = vpop.f32.mrb[0].mxu0
    %1465 = vmatprep.mubr.f32.mxu0 0.0
    %1466 = vmatmul.mubr.f32.gmra.mrb[0].mxu0 %v1338
    %v1467 = vpop.f32.mrb[0].mxu0
    %v1468 = vadd.f32 0.0, %v1467
    %v1469 = vpop.f32.mrb[0].mxu0
    %1470 = vmatprep.mubr.f32.mxu0 0.0
    %1471 = vmatmul.mubr.f32.gmra.mrb[0].mxu0 %v1341
    %v1472 = vpop.f32.mrb[0].mxu0
    %v1473 = vadd.f32 0.0, %v1472
    %v1474 = vpop.f32.mrb[0].mxu0
    %1475 = vmatprep.mubr.f32.mxu0 0.0
    %1476 = vmatmul.mubr.f32.gmra.mrb[0].mxu0 %v1344
    %v1477 = vpop.f32.mrb[0].mxu0
    %v1478 = vadd.f32 0.0, %v1477
    %v1479 = vpop.f32.mrb[0].mxu0
    %1480 = vmatprep.mubr.f32.mxu0 0.0
    %1481 = vmatmul.mubr.f32.gmra.mrb[0].mxu0 %v1347
    %v1482 = vpop.f32.mrb[0].mxu0
    %v1483 = vadd.f32 0.0, %v1482
    %v1484 = vpop.f32.mrb[0].mxu0
    %1485 = vmatprep.mubr.f32.mxu0 0.0
    %1486 = vmatmul.mubr.f32.gmra.mrb[0].mxu0 %v1350
    %v1487 = vpop.f32.mrb[0].mxu0
    %v1488 = vadd.f32 0.0, %v1487
    %v1489 = vpop.f32.mrb[0].mxu0
    %1490 = vmatprep.mubr.f32.mxu0 0.0
    %1491 = vmatmul.mubr.f32.gmra.mrb[0].mxu0 %v1353
    %v1492 = vpop.f32.mrb[0].mxu0
    %v1493 = vadd.f32 0.0, %v1492
    %v1494 = vpop.f32.mrb[0].mxu0
    %1495 = vmatprep.mubr.f32.mxu0 0.0
    %1496 = vmatmul.mubr.f32.gmra.mrb[0].mxu0 %v1356
    %v1497 = vpop.f32.mrb[0].mxu0
    %v1498 = vadd.f32 0.0, %v1497
    %v1499 = vpop.f32.mrb[0].mxu0
    %1500 = vmatprep.mubr.f32.mxu0 0.0
    %1501 = vmatmul.mubr.f32.gmra.mrb[0].mxu0 %v1359
    %v1502 = vpop.f32.mrb[0].mxu0
    %v1503 = vadd.f32 0.0, %v1502
    %v1504 = vpop.f32.mrb[0].mxu0
    %1505 = vdwg.mxu0
    %v1506 = vadd.f32 %v1265, %v1428
    %v1507 = vadd.f32 %v1266, %v1433
    %v1508 = vadd.f32 %v1267, %v1438
    %v1509 = vadd.f32 %v1268, %v1443
    %v1510 = vadd.f32 %v1269, %v1448
    %v1511 = vadd.f32 %v1270, %v1453
    %v1512 = vadd.f32 %v1271, %v1458
    %v1513 = vadd.f32 %v1272, %v1463
    %v1514 = vadd.f32 %v1273, %v1468
    %v1515 = vadd.f32 %v1274, %v1473
    %v1516 = vadd.f32 %v1275, %v1478
    %v1517 = vadd.f32 %v1276, %v1483
    %v1518 = vadd.f32 %v1277, %v1488
    %v1519 = vadd.f32 %v1278, %v1493
    %v1520 = vadd.f32 %v1279, %v1498
    %v1521 = vadd.f32 %v1280, %v1503
    %1522 = vst [vmem:[%s4] sm:$0xff] %v1506
    %1523 = vst [vmem:[%s4 + $0x8] sm:$0xff] %v1507
    %1524 = vst [vmem:[%s4 + $0x10] sm:$0xff] %v1508
    %1525 = vst [vmem:[%s4 + $0x18] sm:$0xff] %v1509
    %1526 = vst [vmem:[%s4 + $0x20] sm:$0xff] %v1510
    %1527 = vst [vmem:[%s4 + $0x28] sm:$0xff] %v1511
    %1528 = vst [vmem:[%s4 + $0x30] sm:$0xff] %v1512
    %1529 = vst [vmem:[%s4 + $0x38] sm:$0xff] %v1513
    %1530 = vst [vmem:[%s4 + $0x40] sm:$0xff] %v1514
    %1531 = vst [vmem:[%s4 + $0x48] sm:$0xff] %v1515
    %1532 = vst [vmem:[%s4 + $0x50] sm:$0xff] %v1516
    %1533 = vst [vmem:[%s4 + $0x58] sm:$0xff] %v1517
    %1534 = vst [vmem:[%s4 + $0x60] sm:$0xff] %v1518
    %1535 = vst [vmem:[%s4 + $0x68] sm:$0xff] %v1519
    %1536 = vst [vmem:[%s4 + $0x70] sm:$0xff] %v1520
    %1537 = vst [vmem:[%s4 + $0x78] sm:$0xff] %v1521
    %v1538 = vld [vmem:[%s4] sm:$0xff]
    %v1539 = vld [vmem:[%s4 + $0x8] sm:$0xff]
    %v1540 = vld [vmem:[%s4 + $0x10] sm:$0xff]
    %v1541 = vld [vmem:[%s4 + $0x18] sm:$0xff]
    %v1542 = vld [vmem:[%s4 + $0x20] sm:$0xff]
    %v1543 = vld [vmem:[%s4 + $0x28] sm:$0xff]
    %v1544 = vld [vmem:[%s4 + $0x30] sm:$0xff]
    %v1545 = vld [vmem:[%s4 + $0x38] sm:$0xff]
    %v1546 = vld [vmem:[%s4 + $0x40] sm:$0xff]
    %v1547 = vld [vmem:[%s4 + $0x48] sm:$0xff]
    %v1548 = vld [vmem:[%s4 + $0x50] sm:$0xff]
    %v1549 = vld [vmem:[%s4 + $0x58] sm:$0xff]
    %v1550 = vld [vmem:[%s4 + $0x60] sm:$0xff]
    %v1551 = vld [vmem:[%s4 + $0x68] sm:$0xff]
    %v1552 = vld [vmem:[%s4 + $0x70] sm:$0xff]
    %v1553 = vld [vmem:[%s4 + $0x78] sm:$0xff]
    %1554 = vxpose.xlu0.b32.start [1/16] %v989, 128
    %1555 = vxpose.xlu0.b32.cont [2/16] %v990, 128
    %1556 = vxpose.xlu0.b32.cont [3/16] 0.0, 128
    %1557 = vxpose.xlu0.b32.cont [4/16] 0.0, 128
    %1558 = vxpose.xlu0.b32.cont [5/16] 0.0, 128
    %1559 = vxpose.xlu0.b32.cont [6/16] 0.0, 128
    %1560 = vxpose.xlu0.b32.cont [7/16] 0.0, 128
    %1561 = vxpose.xlu0.b32.cont [8/16] 0.0, 128
    %1562 = vxpose.xlu0.b32.cont [9/16] 0.0, 128
    %1563 = vxpose.xlu0.b32.cont [10/16] 0.0, 128
    %1564 = vxpose.xlu0.b32.cont [11/16] 0.0, 128
    %1565 = vxpose.xlu0.b32.cont [12/16] 0.0, 128
    %1566 = vxpose.xlu0.b32.cont [13/16] 0.0, 128
    %1567 = vxpose.xlu0.b32.cont [14/16] 0.0, 128
    %1568 = vxpose.xlu0.b32.cont [15/16] 0.0, 128
    %1569 = vxpose.xlu0.b32.end [16/16] 0.0, 128
    %v1570 = vpop.trf.xlu0
    %v1571 = vpop.trf.xlu0
    %v1572 = vpop.trf.xlu0
    %v1573 = vpop.trf.xlu0
    %v1574 = vpop.trf.xlu0
    %v1575 = vpop.trf.xlu0
    %v1576 = vpop.trf.xlu0
    %v1577 = vpop.trf.xlu0
    %v1578 = vpop.trf.xlu0
    %v1579 = vpop.trf.xlu0
    %v1580 = vpop.trf.xlu0
    %v1581 = vpop.trf.xlu0
    %v1582 = vpop.trf.xlu0
    %v1583 = vpop.trf.xlu0
    %v1584 = vpop.trf.xlu0
    %v1585 = vpop.trf.xlu0
    %v1587 = vsel %vm1039, %v1570, 0
    %v1590 = vsel %vm1039, %v1571, 0
    %v1593 = vsel %vm1039, %v1572, 0
    %v1596 = vsel %vm1039, %v1573, 0
    %v1599 = vsel %vm1039, %v1574, 0
    %v1602 = vsel %vm1039, %v1575, 0
    %v1605 = vsel %vm1039, %v1576, 0
    %v1608 = vsel %vm1039, %v1577, 0
    %v1611 = vsel %vm1039, %v1578, 0
    %v1614 = vsel %vm1039, %v1579, 0
    %v1617 = vsel %vm1039, %v1580, 0
    %v1620 = vsel %vm1039, %v1581, 0
    %v1623 = vsel %vm1039, %v1582, 0
    %v1626 = vsel %vm1039, %v1583, 0
    %v1629 = vsel %vm1039, %v1584, 0
    %v1632 = vsel %vm1039, %v1585, 0
    %1634 = vmatprep.subr.mxu0 0.0
    %1635 = vmatpush1.msra.mxu0 %v989
    %1636 = vmatprep.subr.mxu0 0.0
    %1637 = vmatpush1.msra.mxu0 %v990
    %1638 = vmatprep.subr.mxu0 0.0
    %1639 = vmatpush1.msra.mxu0 0.0
    %1640 = vmatprep.subr.mxu0 0.0
    %1641 = vmatpush1.msra.mxu0 0.0
    %1642 = vmatprep.subr.mxu0 0.0
    %1643 = vmatpush1.msra.mxu0 0.0
    %1644 = vmatprep.subr.mxu0 0.0
    %1645 = vmatpush1.msra.mxu0 0.0
    %1646 = vmatprep.subr.mxu0 0.0
    %1647 = vmatpush1.msra.mxu0 0.0
    %1648 = vmatprep.subr.mxu0 0.0
    %1649 = vmatpush1.msra.mxu0 0.0
    %1650 = vmatprep.subr.mxu0 0.0
    %1651 = vmatpush1.msra.mxu0 0.0
    %1652 = vmatprep.subr.mxu0 0.0
    %1653 = vmatpush1.msra.mxu0 0.0
    %1654 = vmatprep.subr.mxu0 0.0
    %1655 = vmatpush1.msra.mxu0 0.0
    %1656 = vmatprep.subr.mxu0 0.0
    %1657 = vmatpush1.msra.mxu0 0.0
    %1658 = vmatprep.subr.mxu0 0.0
    %1659 = vmatpush1.msra.mxu0 0.0
    %1660 = vmatprep.subr.mxu0 0.0
    %1661 = vmatpush1.msra.mxu0 0.0
    %1662 = vmatprep.subr.mxu0 0.0
    %1663 = vmatpush1.msra.mxu0 0.0
    %1664 = vmatprep.subr.mxu0 0.0
    %1665 = vmatpush1.msra.mxu0 0.0
    %1666 = vmatprep.subr.mxu0 0.0
    %1667 = vmatpush1.msra.mxu0 0.0
    %1668 = vmatprep.subr.mxu0 0.0
    %1669 = vmatpush1.msra.mxu0 0.0
    %1670 = vmatprep.subr.mxu0 0.0
    %1671 = vmatpush1.msra.mxu0 0.0
    %1672 = vmatprep.subr.mxu0 0.0
    %1673 = vmatpush1.msra.mxu0 0.0
    %1674 = vmatprep.subr.mxu0 0.0
    %1675 = vmatpush1.msra.mxu0 0.0
    %1676 = vmatprep.subr.mxu0 0.0
    %1677 = vmatpush1.msra.mxu0 0.0
    %1678 = vmatprep.subr.mxu0 0.0
    %1679 = vmatpush1.msra.mxu0 0.0
    %1680 = vmatprep.subr.mxu0 0.0
    %1681 = vmatpush1.msra.mxu0 0.0
    %1682 = vmatprep.subr.mxu0 0.0
    %1683 = vmatpush1.msra.mxu0 0.0
    %1684 = vmatprep.subr.mxu0 0.0
    %1685 = vmatpush1.msra.mxu0 0.0
    %1686 = vmatprep.subr.mxu0 0.0
    %1687 = vmatpush1.msra.mxu0 0.0
    %1688 = vmatprep.subr.mxu0 0.0
    %1689 = vmatpush1.msra.mxu0 0.0
    %1690 = vmatprep.subr.mxu0 0.0
    %1691 = vmatpush1.msra.mxu0 0.0
    %1692 = vmatprep.subr.mxu0 0.0
    %1693 = vmatpush1.msra.mxu0 0.0
    %1694 = vmatprep.subr.mxu0 0.0
    %1695 = vmatpush1.msra.mxu0 0.0
    %1696 = vmatprep.subr.mxu0 0.0
    %1697 = vmatpush1.msra.mxu0 0.0
    %1698 = vmatprep.mubr.f32.mxu0 0.0
    %1699 = vmatmul.mubr.f32.gmra.mrb[0].mxu0 %v1587
    %v1700 = vpop.f32.mrb[0].mxu0
    %v1701 = vadd.f32 0.0, %v1700
    %v1702 = vpop.f32.mrb[0].mxu0
    %1703 = vmatprep.mubr.f32.mxu0 0.0
    %1704 = vmatmul.mubr.f32.gmra.mrb[0].mxu0 %v1590
    %v1705 = vpop.f32.mrb[0].mxu0
    %v1706 = vadd.f32 0.0, %v1705
    %v1707 = vpop.f32.mrb[0].mxu0
    %1708 = vmatprep.mubr.f32.mxu0 0.0
    %1709 = vmatmul.mubr.f32.gmra.mrb[0].mxu0 %v1593
    %v1710 = vpop.f32.mrb[0].mxu0
    %v1711 = vadd.f32 0.0, %v1710
    %v1712 = vpop.f32.mrb[0].mxu0
    %1713 = vmatprep.mubr.f32.mxu0 0.0
    %1714 = vmatmul.mubr.f32.gmra.mrb[0].mxu0 %v1596
    %v1715 = vpop.f32.mrb[0].mxu0
    %v1716 = vadd.f32 0.0, %v1715
    %v1717 = vpop.f32.mrb[0].mxu0
    %1718 = vmatprep.mubr.f32.mxu0 0.0
    %1719 = vmatmul.mubr.f32.gmra.mrb[0].mxu0 %v1599
    %v1720 = vpop.f32.mrb[0].mxu0
    %v1721 = vadd.f32 0.0, %v1720
    %v1722 = vpop.f32.mrb[0].mxu0
    %1723 = vmatprep.mubr.f32.mxu0 0.0
    %1724 = vmatmul.mubr.f32.gmra.mrb[0].mxu0 %v1602
    %v1725 = vpop.f32.mrb[0].mxu0
    %v1726 = vadd.f32 0.0, %v1725
    %v1727 = vpop.f32.mrb[0].mxu0
    %1728 = vmatprep.mubr.f32.mxu0 0.0
    %1729 = vmatmul.mubr.f32.gmra.mrb[0].mxu0 %v1605
    %v1730 = vpop.f32.mrb[0].mxu0
    %v1731 = vadd.f32 0.0, %v1730
    %v1732 = vpop.f32.mrb[0].mxu0
    %1733 = vmatprep.mubr.f32.mxu0 0.0
    %1734 = vmatmul.mubr.f32.gmra.mrb[0].mxu0 %v1608
    %v1735 = vpop.f32.mrb[0].mxu0
    %v1736 = vadd.f32 0.0, %v1735
    %v1737 = vpop.f32.mrb[0].mxu0
    %1738 = vmatprep.mubr.f32.mxu0 0.0
    %1739 = vmatmul.mubr.f32.gmra.mrb[0].mxu0 %v1611
    %v1740 = vpop.f32.mrb[0].mxu0
    %v1741 = vadd.f32 0.0, %v1740
    %v1742 = vpop.f32.mrb[0].mxu0
    %1743 = vmatprep.mubr.f32.mxu0 0.0
    %1744 = vmatmul.mubr.f32.gmra.mrb[0].mxu0 %v1614
    %v1745 = vpop.f32.mrb[0].mxu0
    %v1746 = vadd.f32 0.0, %v1745
    %v1747 = vpop.f32.mrb[0].mxu0
    %1748 = vmatprep.mubr.f32.mxu0 0.0
    %1749 = vmatmul.mubr.f32.gmra.mrb[0].mxu0 %v1617
    %v1750 = vpop.f32.mrb[0].mxu0
    %v1751 = vadd.f32 0.0, %v1750
    %v1752 = vpop.f32.mrb[0].mxu0
    %1753 = vmatprep.mubr.f32.mxu0 0.0
    %1754 = vmatmul.mubr.f32.gmra.mrb[0].mxu0 %v1620
    %v1755 = vpop.f32.mrb[0].mxu0
    %v1756 = vadd.f32 0.0, %v1755
    %v1757 = vpop.f32.mrb[0].mxu0
    %1758 = vmatprep.mubr.f32.mxu0 0.0
    %1759 = vmatmul.mubr.f32.gmra.mrb[0].mxu0 %v1623
    %v1760 = vpop.f32.mrb[0].mxu0
    %v1761 = vadd.f32 0.0, %v1760
    %v1762 = vpop.f32.mrb[0].mxu0
    %1763 = vmatprep.mubr.f32.mxu0 0.0
    %1764 = vmatmul.mubr.f32.gmra.mrb[0].mxu0 %v1626
    %v1765 = vpop.f32.mrb[0].mxu0
    %v1766 = vadd.f32 0.0, %v1765
    %v1767 = vpop.f32.mrb[0].mxu0
    %1768 = vmatprep.mubr.f32.mxu0 0.0
    %1769 = vmatmul.mubr.f32.gmra.mrb[0].mxu0 %v1629
    %v1770 = vpop.f32.mrb[0].mxu0
    %v1771 = vadd.f32 0.0, %v1770
    %v1772 = vpop.f32.mrb[0].mxu0
    %1773 = vmatprep.mubr.f32.mxu0 0.0
    %1774 = vmatmul.mubr.f32.gmra.mrb[0].mxu0 %v1632
    %v1775 = vpop.f32.mrb[0].mxu0
    %v1776 = vadd.f32 0.0, %v1775
    %v1777 = vpop.f32.mrb[0].mxu0
    %1778 = vdwg.mxu0
    %v1779 = vadd.f32 %v1538, %v1701
    %v1780 = vadd.f32 %v1539, %v1706
    %v1781 = vadd.f32 %v1540, %v1711
    %v1782 = vadd.f32 %v1541, %v1716
    %v1783 = vadd.f32 %v1542, %v1721
    %v1784 = vadd.f32 %v1543, %v1726
    %v1785 = vadd.f32 %v1544, %v1731
    %v1786 = vadd.f32 %v1545, %v1736
    %v1787 = vadd.f32 %v1546, %v1741
    %v1788 = vadd.f32 %v1547, %v1746
    %v1789 = vadd.f32 %v1548, %v1751
    %v1790 = vadd.f32 %v1549, %v1756
    %v1791 = vadd.f32 %v1550, %v1761
    %v1792 = vadd.f32 %v1551, %v1766
    %v1793 = vadd.f32 %v1552, %v1771
    %v1794 = vadd.f32 %v1553, %v1776
    %1795 = vst [vmem:[%s4] sm:$0xff] %v1779
    %1796 = vst [vmem:[%s4 + $0x8] sm:$0xff] %v1780
    %1797 = vst [vmem:[%s4 + $0x10] sm:$0xff] %v1781
    %1798 = vst [vmem:[%s4 + $0x18] sm:$0xff] %v1782
    %1799 = vst [vmem:[%s4 + $0x20] sm:$0xff] %v1783
    %1800 = vst [vmem:[%s4 + $0x28] sm:$0xff] %v1784
    %1801 = vst [vmem:[%s4 + $0x30] sm:$0xff] %v1785
    %1802 = vst [vmem:[%s4 + $0x38] sm:$0xff] %v1786
    %1803 = vst [vmem:[%s4 + $0x40] sm:$0xff] %v1787
    %1804 = vst [vmem:[%s4 + $0x48] sm:$0xff] %v1788
    %1805 = vst [vmem:[%s4 + $0x50] sm:$0xff] %v1789
    %1806 = vst [vmem:[%s4 + $0x58] sm:$0xff] %v1790
    %1807 = vst [vmem:[%s4 + $0x60] sm:$0xff] %v1791
    %1808 = vst [vmem:[%s4 + $0x68] sm:$0xff] %v1792
    %1809 = vst [vmem:[%s4 + $0x70] sm:$0xff] %v1793
    %1810 = vst [vmem:[%s4 + $0x78] sm:$0xff] %v1794
  $region29: #{online_triplet_pca_loss.2} parent=0 // pred_fallthru
    _
  // Predicated region
  $region30: #{online_triplet_pca_loss.2} parent=0 // pred_check
    _
  $region31: #{online_triplet_pca_loss.2} parent=0 // pred_check_branch
    %1812 = sbr.rel (0) target = $region33
  $region32: #{online_triplet_pca_loss.2} parent=0 // pred_region
    _
  $region33: #{online_triplet_pca_loss.2} parent=0 // pred_fallthru
    _
  // Predicated region
  $region34: #{online_triplet_pca_loss.2} parent=0 // pred_check
    _
  $region35: #{online_triplet_pca_loss.2} parent=0 // pred_check_branch
    %1814 = sbr.rel (0) target = $region37
  $region36: #{online_triplet_pca_loss.2} parent=0 // pred_region
    _
  $region37: #{online_triplet_pca_loss.2} parent=0 // pred_fallthru
    _

// kernel: online_triplet_pca_loss.3
$region0: #{online_triplet_pca_loss.3}
  #allocation0 [shape = 'u32[]', space=smem, size = 0x4, offset = 0x4, fixed_abs, tag = 'smem constant byte address 0x4 - core index']
  #allocation1 [shape = 'u32[144,128]{1,0:T(1,128)}', space=vmem, size = 0x12000, scoped, tag = 'internal scratch']
  #allocation2 [shape = 'f32[1,1]{1,0:T(1,128)}', space=vmem, size = 0x200, scoped, tag = 'scratch operand']
  %s0 = inlined_call_operand.vmem [shape: f32[16,128], index: 0, kind: input, shape index: {}]
  %s1 = inlined_call_operand.vmem [shape: f32[16,128], index: 1, kind: input, shape index: {}]
  %s2 = inlined_call_operand.vmem [shape: f32[16,128], index: 2, kind: input, shape index: {}]
  %s3 = inlined_call_operand.vmem [shape: bf16[128,128], index: 3, kind: input, shape index: {}]
  %s4 = inlined_call_operand.hbm [shape: f32[1,1,1], index: 4, kind: output, shape index: {}]
  %s5 = sld [smem:[#allocation0]]
  $region42: #{online_triplet_pca_loss.3} parent=0
    _
  %s7 = ssub.s32 1, %s5
  %s8 = scalar_select 0, %s7, %s5
  $region1: #{online_triplet_pca_loss.3} parent=0
    #allocation3 [shape = 'u8[512]{0}', space=vmem, size = 0x400, scoped, tag = 'output window, operand 0, single buffered']
    #allocation4 [shape = 's32[1]{0}', space=sflag, size = 0x4, scoped, tag = 'scoped memory for online_triplet_pca_loss.3']
    %9 = vsyncpa [#allocation4], 0
    // Predicated region
    $region2: #{online_triplet_pca_loss.3} parent=1 // pred_check
      _
    $region3: #{online_triplet_pca_loss.3} parent=1 // pred_check_branch
      %11 = sbr.rel (0) target = $region5
    $region4: #{online_triplet_pca_loss.3} parent=1 // pred_region
      %s12 = sadd.s32 0, 0
      %s13 = smul.u32 2, %s12
      %p14 = scmp.lt.s32.totalorder %s13, 1
      %s15 = scalar_select %p14, %s13, 1
      %s16 = smul.addr %s15, 8
      %s17 = scalar_lea.vmem %s0, %s16
      %s18 = sadd.s32 0, 0
      %s19 = smul.u32 2, %s18
    $region5: #{online_triplet_pca_loss.3} parent=1 // pred_fallthru
      _
    // Predicated region
    $region6: #{online_triplet_pca_loss.3} parent=1 // pred_check
      _
    $region7: #{online_triplet_pca_loss.3} parent=1 // pred_check_branch
      %21 = sbr.rel (0) target = $region9
    $region8: #{online_triplet_pca_loss.3} parent=1 // pred_region
      %s22 = sadd.s32 0, 0
      %s23 = smul.u32 2, %s22
      %p24 = scmp.lt.s32.totalorder %s23, 1
      %s25 = scalar_select %p24, %s23, 1
      %s26 = smul.addr %s25, 8
      %s27 = scalar_lea.vmem %s1, %s26
      %s28 = sadd.s32 0, 0
      %s29 = smul.u32 2, %s28
    $region9: #{online_triplet_pca_loss.3} parent=1 // pred_fallthru
      _
    // Predicated region
    $region10: #{online_triplet_pca_loss.3} parent=1 // pred_check
      _
    $region11: #{online_triplet_pca_loss.3} parent=1 // pred_check_branch
      %31 = sbr.rel (0) target = $region13
    $region12: #{online_triplet_pca_loss.3} parent=1 // pred_region
      %s32 = sadd.s32 0, 0
      %s33 = smul.u32 2, %s32
      %p34 = scmp.lt.s32.totalorder %s33, 1
      %s35 = scalar_select %p34, %s33, 1
      %s36 = smul.addr %s35, 8
      %s37 = scalar_lea.vmem %s2, %s36
      %s38 = sadd.s32 0, 0
      %s39 = smul.u32 2, %s38
    $region13: #{online_triplet_pca_loss.3} parent=1 // pred_fallthru
      _
    // Predicated region
    $region14: #{online_triplet_pca_loss.3} parent=1 // pred_check
      _
    $region15: #{online_triplet_pca_loss.3} parent=1 // pred_check_branch
      %41 = sbr.rel (0) target = $region17
    $region16: #{online_triplet_pca_loss.3} parent=1 // pred_region
      _
    $region17: #{online_triplet_pca_loss.3} parent=1 // pred_fallthru
      _
    %s42 = sadd.s32 0, 0
    %s43 = smul.u32 2, %s42
    %p44 = scmp.lt.s32.totalorder %s43, 1
    %s45 = scalar_select %p44, %s43, 1
    %s46 = smul.addr %s45, 8
    %s47 = scalar_lea.vmem %s0, %s46
    %s48 = sadd.s32 0, 0
    %s49 = smul.u32 2, %s48
    %p50 = scmp.lt.s32.totalorder %s49, 1
    %s51 = scalar_select %p50, %s49, 1
    %s52 = smul.addr %s51, 8
    %s53 = scalar_lea.vmem %s1, %s52
    %s54 = sadd.s32 0, 0
    %s55 = smul.u32 2, %s54
    %p56 = scmp.lt.s32.totalorder %s55, 1
    %s57 = scalar_select %p56, %s55, 1
    %s58 = smul.addr %s57, 8
    %s59 = scalar_lea.vmem %s2, %s58
    %s60 = sadd.s32 0, 0
    %s61 = smul.u32 2, %s60
    %p62 = scmp.lt.s32.totalorder %s61, 1
    %s63 = scalar_select %p62, %s61, 1
    %s64 = smul.addr %s63, 8
    %s65 = scalar_lea.vmem %s0, %s64
    %s66 = sadd.s32 0, 0
    %s67 = smul.u32 2, %s66
    %s68 = sadd.s32 0, 0
    %s69 = smul.u32 2, %s68
    %p70 = scmp.lt.s32.totalorder %s69, 1
    %s71 = scalar_select %p70, %s69, 1
    %s72 = smul.addr %s71, 8
    %s73 = scalar_lea.vmem %s1, %s72
    %s74 = sadd.s32 0, 0
    %s75 = smul.u32 2, %s74
    %s76 = sadd.s32 0, 0
    %s77 = smul.u32 2, %s76
    %p78 = scmp.lt.s32.totalorder %s77, 1
    %s79 = scalar_select %p78, %s77, 1
    %s80 = smul.addr %s79, 8
    %s81 = scalar_lea.vmem %s2, %s80
    %s82 = sadd.s32 0, 0
    %s83 = smul.u32 2, %s82
    %s85 = sadd.s32 0, 0
    %p86 = scmp.eq.s32.totalorder 0, 0
    // Predicated region
    $region18: #{online_triplet_pca_loss.3} parent=1 // pred_check
      %p87 = pneg %p86
    $region19: #{online_triplet_pca_loss.3} parent=1 // pred_check_branch
      %89 = sbr.rel (%p87) target = $region21
    $region20: #{online_triplet_pca_loss.3} parent=1 // pred_region
      %vm90 = vcmask 0
      %91 = vst.msk [vmem:[#allocation2] sm:$0x1] %vm90, 0.0
    $region21: #{online_triplet_pca_loss.3} parent=1 // pred_fallthru
      _
    %v92 = vld [vmem:[%s3] sm:$0xf]
    %v93 = vld [vmem:[%s3 + $0x4] sm:$0xf]
    %v94 = vld [vmem:[%s3 + $0x8] sm:$0xf]
    %v95 = vld [vmem:[%s3 + $0xc] sm:$0xf]
    %v96 = vld [vmem:[%s3 + $0x10] sm:$0xf]
    %v97 = vld [vmem:[%s3 + $0x14] sm:$0xf]
    %v98 = vld [vmem:[%s3 + $0x18] sm:$0xf]
    %v99 = vld [vmem:[%s3 + $0x1c] sm:$0xf]
    %v100 = vld [vmem:[%s3 + $0x20] sm:$0xf]
    %v101 = vld [vmem:[%s3 + $0x24] sm:$0xf]
    %v102 = vld [vmem:[%s3 + $0x28] sm:$0xf]
    %v103 = vld [vmem:[%s3 + $0x2c] sm:$0xf]
    %v104 = vld [vmem:[%s3 + $0x30] sm:$0xf]
    %v105 = vld [vmem:[%s3 + $0x34] sm:$0xf]
    %v106 = vld [vmem:[%s3 + $0x38] sm:$0xf]
    %v107 = vld [vmem:[%s3 + $0x3c] sm:$0xf]
    %s108 = smul.u32 %s85, 16
    %s109 = sadd.s32 %s108, 16
    %p110 = scmp.le.s32.totalorder %s109, 16
    %p111 = scmp.lt.s32.totalorder %s108, 16
    %p112 = scmp.gt.s32.totalorder %s109, 16
    %p113 = pnand %p111, %p112
    %p114 = pneg %p113
    // Predicated region
    $region22: #{online_triplet_pca_loss.3} parent=1 // pred_check
      %p115 = pneg %p110
    $region23: #{online_triplet_pca_loss.3} parent=1 // pred_check_branch
      %117 = sbr.rel (%p115) target = $region25
    $region24: #{online_triplet_pca_loss.3} parent=1 // pred_region
      %v118 = vld [vmem:[%s65] sm:$0xff]
      %v119 = vld [vmem:[%s65 + $0x8] sm:$0xff]
      %v120 = vld [vmem:[%s73] sm:$0xff]
      %v121 = vld [vmem:[%s73 + $0x8] sm:$0xff]
      %v122 = vsub.f32 %v118, %v120
      %v123 = vsub.f32 %v119, %v121
      %v124 = vpack.c.bf16 %v123, %v122
      %v125 = vld [vmem:[%s81] sm:$0xff]
      %v126 = vld [vmem:[%s81 + $0x8] sm:$0xff]
      %v127 = vsub.f32 %v118, %v125
      %v128 = vsub.f32 %v119, %v126
      %v129 = vpack.c.bf16 %v128, %v127
      %v146 = vunpack.c.l.b16 %v92
      %v147 = vunpack.c.l.b16 %v93
      %v148 = vunpack.c.l.b16 %v94
      %v149 = vunpack.c.l.b16 %v95
      %v150 = vunpack.c.l.b16 %v96
      %v151 = vunpack.c.l.b16 %v97
      %v152 = vunpack.c.l.b16 %v98
      %v153 = vunpack.c.l.b16 %v99
      %v154 = vunpack.c.l.b16 %v100
      %v155 = vunpack.c.l.b16 %v101
      %v156 = vunpack.c.l.b16 %v102
      %v157 = vunpack.c.l.b16 %v103
      %v158 = vunpack.c.l.b16 %v104
      %v159 = vunpack.c.l.b16 %v105
      %v160 = vunpack.c.l.b16 %v106
      %v161 = vunpack.c.l.b16 %v107
      %v162 = vpack.c.b16 %v147, %v146
      %v163 = vpack.c.b16 %v149, %v148
      %v164 = vpack.c.b16 %v151, %v150
      %v165 = vpack.c.b16 %v153, %v152
      %v166 = vpack.c.b16 %v155, %v154
      %v167 = vpack.c.b16 %v157, %v156
      %v168 = vpack.c.b16 %v159, %v158
      %v169 = vpack.c.b16 %v161, %v160
      %178 = vmatprep.subr.bf16.mxu0 0
      %179 = vmatpush1.bf16.msra.mxu0 %v162
      %180 = vmatprep.subr.bf16.mxu0 0
      %181 = vmatpush1.bf16.msra.mxu0 %v163
      %182 = vmatprep.subr.bf16.mxu0 0
      %183 = vmatpush1.bf16.msra.mxu0 %v164
      %184 = vmatprep.subr.bf16.mxu0 0
      %185 = vmatpush1.bf16.msra.mxu0 %v165
      %186 = vmatprep.subr.bf16.mxu0 0
      %187 = vmatpush1.bf16.msra.mxu0 %v166
      %188 = vmatprep.subr.bf16.mxu0 0
      %189 = vmatpush1.bf16.msra.mxu0 %v167
      %190 = vmatprep.subr.bf16.mxu0 0
      %191 = vmatpush1.bf16.msra.mxu0 %v168
      %192 = vmatprep.subr.bf16.mxu0 0
      %193 = vmatpush1.bf16.msra.mxu0 %v169
      %194 = vmatprep.subr.bf16.mxu0 0
      %195 = vmatpush1.bf16.msra.mxu0 0
      %196 = vmatprep.subr.bf16.mxu0 0
      %197 = vmatpush1.bf16.msra.mxu0 0
      %198 = vmatprep.subr.bf16.mxu0 0
      %199 = vmatpush1.bf16.msra.mxu0 0
      %200 = vmatprep.subr.bf16.mxu0 0
      %201 = vmatpush1.bf16.msra.mxu0 0
      %202 = vmatprep.subr.bf16.mxu0 0
      %203 = vmatpush1.bf16.msra.mxu0 0
      %204 = vmatprep.subr.bf16.mxu0 0
      %205 = vmatpush1.bf16.msra.mxu0 0
      %206 = vmatprep.subr.bf16.mxu0 0
      %207 = vmatpush1.bf16.msra.mxu0 0
      %208 = vmatprep.subr.bf16.mxu0 0
      %209 = vmatpush1.bf16.msra.mxu0 0
      %210 = vmatprep.mubr.bf16.mxu0 0
      %211 = vmatmul.mubr.bf16.gmra.mrb[0].mxu0 %v124
      %v212 = vpop.f32.mrb[0].mxu0
      %v213 = vadd.f32 0.0, %v212
      %v214 = vpop.f32.mrb[0].mxu0
      %v215 = vpop.f32.mrb[0].mxu0
      %v216 = vadd.f32 0.0, %v215
      %v217 = vpop.f32.mrb[0].mxu0
      %218 = vdwg.mxu0
      %219 = vmatprep.subr.bf16.mxu0 0
      %220 = vmatpush1.bf16.msra.mxu0 %v162
      %221 = vmatprep.subr.bf16.mxu0 0
      %222 = vmatpush1.bf16.msra.mxu0 %v163
      %223 = vmatprep.subr.bf16.mxu0 0
      %224 = vmatpush1.bf16.msra.mxu0 %v164
      %225 = vmatprep.subr.bf16.mxu0 0
      %226 = vmatpush1.bf16.msra.mxu0 %v165
      %227 = vmatprep.subr.bf16.mxu0 0
      %228 = vmatpush1.bf16.msra.mxu0 %v166
      %229 = vmatprep.subr.bf16.mxu0 0
      %230 = vmatpush1.bf16.msra.mxu0 %v167
      %231 = vmatprep.subr.bf16.mxu0 0
      %232 = vmatpush1.bf16.msra.mxu0 %v168
      %233 = vmatprep.subr.bf16.mxu0 0
      %234 = vmatpush1.bf16.msra.mxu0 %v169
      %235 = vmatprep.subr.bf16.mxu0 0
      %236 = vmatpush1.bf16.msra.mxu0 0
      %237 = vmatprep.subr.bf16.mxu0 0
      %238 = vmatpush1.bf16.msra.mxu0 0
      %239 = vmatprep.subr.bf16.mxu0 0
      %240 = vmatpush1.bf16.msra.mxu0 0
      %241 = vmatprep.subr.bf16.mxu0 0
      %242 = vmatpush1.bf16.msra.mxu0 0
      %243 = vmatprep.subr.bf16.mxu0 0
      %244 = vmatpush1.bf16.msra.mxu0 0
      %245 = vmatprep.subr.bf16.mxu0 0
      %246 = vmatpush1.bf16.msra.mxu0 0
      %247 = vmatprep.subr.bf16.mxu0 0
      %248 = vmatpush1.bf16.msra.mxu0 0
      %249 = vmatprep.subr.bf16.mxu0 0
      %250 = vmatpush1.bf16.msra.mxu0 0
      %251 = vmatprep.mubr.bf16.mxu0 0
      %252 = vmatmul.mubr.bf16.gmra.mrb[0].mxu0 %v129
      %v253 = vpop.f32.mrb[0].mxu0
      %v254 = vadd.f32 0.0, %v253
      %v255 = vpop.f32.mrb[0].mxu0
      %v256 = vpop.f32.mrb[0].mxu0
      %v257 = vadd.f32 0.0, %v256
      %v258 = vpop.f32.mrb[0].mxu0
      %259 = vdwg.mxu0
      %v260 = vmul.f32 %v213, %v213
      %v261 = vmul.f32 %v216, %v216
      %262 = vadd.xlane.f32.xlu0 %v260
      %v263 = vpop.xlane.xlu0 %262
      %264 = vadd.xlane.f32.xlu0 %v261
      %v265 = vpop.xlane.xlu0 %264
      %v266 = vmul.f32 %v254, %v254
      %v267 = vmul.f32 %v257, %v257
      %268 = vadd.xlane.f32.xlu0 %v266
      %v269 = vpop.xlane.xlu0 %268
      %270 = vadd.xlane.f32.xlu0 %v267
      %v271 = vpop.xlane.xlu0 %270
      %v272 = vsub.f32 %v263, %v269
      %v273 = vsub.f32 %v265, %v271
      %v274 = vadd.f32 %v272, 1.0
      %v275 = vadd.f32 %v273, 1.0
      %v276 = vmax.f32 %v274, 0.0
      %v277 = vmax.f32 %v275, 0.0
      %v278 = vld [vmem:[#allocation2] sm:$0x1]
      %v279 = vadd.f32 %v276, %v277
      %v280 = vrot.slane %v279, 4
      %v281 = vadd.f32 %v279, %v280
      %v282 = vrot.slane %v281, 2
      %v283 = vadd.f32 %v281, %v282
      %v284 = vrot.slane %v283, 1
      %v285 = vadd.f32 %v283, %v284
      %v286 = vadd.f32 %v278, %v285
      %vm287 = vcmask 0
      %288 = vst.msk [vmem:[#allocation2] sm:$0x1] %vm287, %v286
    $region25: #{online_triplet_pca_loss.3} parent=1 // pred_fallthru
      _
    // Predicated region
    $region26: #{online_triplet_pca_loss.3} parent=1 // pred_check
      _
    $region27: #{online_triplet_pca_loss.3} parent=1 // pred_check_branch
      %290 = sbr.rel (%p113) target = $region29
    $region28: #{online_triplet_pca_loss.3} parent=1 // pred_region
      %v291 = vld [vmem:[%s65] sm:$0xff]
      %v292 = vld [vmem:[%s65 + $0x8] sm:$0xff]
      %v293 = vld [vmem:[%s73] sm:$0xff]
      %v294 = vld [vmem:[%s73 + $0x8] sm:$0xff]
      %v295 = vsub.f32 %v291, %v293
      %v296 = vsub.f32 %v292, %v294
      %v297 = vpack.c.bf16 %v296, %v295
      %v298 = vld [vmem:[%s81] sm:$0xff]
      %v299 = vld [vmem:[%s81 + $0x8] sm:$0xff]
      %v300 = vsub.f32 %v291, %v298
      %v301 = vsub.f32 %v292, %v299
      %v302 = vpack.c.bf16 %v301, %v300
      %v319 = vunpack.c.l.b16 %v92
      %v320 = vunpack.c.l.b16 %v93
      %v321 = vunpack.c.l.b16 %v94
      %v322 = vunpack.c.l.b16 %v95
      %v323 = vunpack.c.l.b16 %v96
      %v324 = vunpack.c.l.b16 %v97
      %v325 = vunpack.c.l.b16 %v98
      %v326 = vunpack.c.l.b16 %v99
      %v327 = vunpack.c.l.b16 %v100
      %v328 = vunpack.c.l.b16 %v101
      %v329 = vunpack.c.l.b16 %v102
      %v330 = vunpack.c.l.b16 %v103
      %v331 = vunpack.c.l.b16 %v104
      %v332 = vunpack.c.l.b16 %v105
      %v333 = vunpack.c.l.b16 %v106
      %v334 = vunpack.c.l.b16 %v107
      %v335 = vpack.c.b16 %v320, %v319
      %v336 = vpack.c.b16 %v322, %v321
      %v337 = vpack.c.b16 %v324, %v323
      %v338 = vpack.c.b16 %v326, %v325
      %v339 = vpack.c.b16 %v328, %v327
      %v340 = vpack.c.b16 %v330, %v329
      %v341 = vpack.c.b16 %v332, %v331
      %v342 = vpack.c.b16 %v334, %v333
      %351 = vmatprep.subr.bf16.mxu0 0
      %352 = vmatpush1.bf16.msra.mxu0 %v335
      %353 = vmatprep.subr.bf16.mxu0 0
      %354 = vmatpush1.bf16.msra.mxu0 %v336
      %355 = vmatprep.subr.bf16.mxu0 0
      %356 = vmatpush1.bf16.msra.mxu0 %v337
      %357 = vmatprep.subr.bf16.mxu0 0
      %358 = vmatpush1.bf16.msra.mxu0 %v338
      %359 = vmatprep.subr.bf16.mxu0 0
      %360 = vmatpush1.bf16.msra.mxu0 %v339
      %361 = vmatprep.subr.bf16.mxu0 0
      %362 = vmatpush1.bf16.msra.mxu0 %v340
      %363 = vmatprep.subr.bf16.mxu0 0
      %364 = vmatpush1.bf16.msra.mxu0 %v341
      %365 = vmatprep.subr.bf16.mxu0 0
      %366 = vmatpush1.bf16.msra.mxu0 %v342
      %367 = vmatprep.subr.bf16.mxu0 0
      %368 = vmatpush1.bf16.msra.mxu0 0
      %369 = vmatprep.subr.bf16.mxu0 0
      %370 = vmatpush1.bf16.msra.mxu0 0
      %371 = vmatprep.subr.bf16.mxu0 0
      %372 = vmatpush1.bf16.msra.mxu0 0
      %373 = vmatprep.subr.bf16.mxu0 0
      %374 = vmatpush1.bf16.msra.mxu0 0
      %375 = vmatprep.subr.bf16.mxu0 0
      %376 = vmatpush1.bf16.msra.mxu0 0
      %377 = vmatprep.subr.bf16.mxu0 0
      %378 = vmatpush1.bf16.msra.mxu0 0
      %379 = vmatprep.subr.bf16.mxu0 0
      %380 = vmatpush1.bf16.msra.mxu0 0
      %381 = vmatprep.subr.bf16.mxu0 0
      %382 = vmatpush1.bf16.msra.mxu0 0
      %383 = vmatprep.mubr.bf16.mxu0 0
      %384 = vmatmul.mubr.bf16.gmra.mrb[0].mxu0 %v297
      %v385 = vpop.f32.mrb[0].mxu0
      %v386 = vadd.f32 0.0, %v385
      %v387 = vpop.f32.mrb[0].mxu0
      %v388 = vpop.f32.mrb[0].mxu0
      %v389 = vadd.f32 0.0, %v388
      %v390 = vpop.f32.mrb[0].mxu0
      %391 = vdwg.mxu0
      %392 = vmatprep.subr.bf16.mxu0 0
      %393 = vmatpush1.bf16.msra.mxu0 %v335
      %394 = vmatprep.subr.bf16.mxu0 0
      %395 = vmatpush1.bf16.msra.mxu0 %v336
      %396 = vmatprep.subr.bf16.mxu0 0
      %397 = vmatpush1.bf16.msra.mxu0 %v337
      %398 = vmatprep.subr.bf16.mxu0 0
      %399 = vmatpush1.bf16.msra.mxu0 %v338
      %400 = vmatprep.subr.bf16.mxu0 0
      %401 = vmatpush1.bf16.msra.mxu0 %v339
      %402 = vmatprep.subr.bf16.mxu0 0
      %403 = vmatpush1.bf16.msra.mxu0 %v340
      %404 = vmatprep.subr.bf16.mxu0 0
      %405 = vmatpush1.bf16.msra.mxu0 %v341
      %406 = vmatprep.subr.bf16.mxu0 0
      %407 = vmatpush1.bf16.msra.mxu0 %v342
      %408 = vmatprep.subr.bf16.mxu0 0
      %409 = vmatpush1.bf16.msra.mxu0 0
      %410 = vmatprep.subr.bf16.mxu0 0
      %411 = vmatpush1.bf16.msra.mxu0 0
      %412 = vmatprep.subr.bf16.mxu0 0
      %413 = vmatpush1.bf16.msra.mxu0 0
      %414 = vmatprep.subr.bf16.mxu0 0
      %415 = vmatpush1.bf16.msra.mxu0 0
      %416 = vmatprep.subr.bf16.mxu0 0
      %417 = vmatpush1.bf16.msra.mxu0 0
      %418 = vmatprep.subr.bf16.mxu0 0
      %419 = vmatpush1.bf16.msra.mxu0 0
      %420 = vmatprep.subr.bf16.mxu0 0
      %421 = vmatpush1.bf16.msra.mxu0 0
      %422 = vmatprep.subr.bf16.mxu0 0
      %423 = vmatpush1.bf16.msra.mxu0 0
      %424 = vmatprep.mubr.bf16.mxu0 0
      %425 = vmatmul.mubr.bf16.gmra.mrb[0].mxu0 %v302
      %v426 = vpop.f32.mrb[0].mxu0
      %v427 = vadd.f32 0.0, %v426
      %v428 = vpop.f32.mrb[0].mxu0
      %v429 = vpop.f32.mrb[0].mxu0
      %v430 = vadd.f32 0.0, %v429
      %v431 = vpop.f32.mrb[0].mxu0
      %432 = vdwg.mxu0
      %v433 = vmul.f32 %v386, %v386
      %v434 = vmul.f32 %v389, %v389
      %435 = vadd.xlane.f32.xlu0 %v433
      %v436 = vpop.xlane.xlu0 %435
      %437 = vadd.xlane.f32.xlu0 %v434
      %v438 = vpop.xlane.xlu0 %437
      %v439 = vmul.f32 %v427, %v427
      %v440 = vmul.f32 %v430, %v430
      %441 = vadd.xlane.f32.xlu0 %v439
      %v442 = vpop.xlane.xlu0 %441
      %443 = vadd.xlane.f32.xlu0 %v440
      %v444 = vpop.xlane.xlu0 %443
      %v445 = vsub.f32 %v436, %v442
      %v446 = vsub.f32 %v438, %v444
      %v447 = vadd.f32 %v445, 1.0
      %v448 = vadd.f32 %v446, 1.0
      %v449 = vmax.f32 %v447, 0.0
      %v450 = vmax.f32 %v448, 0.0
      %v451 = vlaneseq
      %v452 = vshrl.u32 %v451, 7
      %v453 = vadd.s32 %v452, 8
      %v454 = vstv %s108
      %v455 = vadd.s32 %v454, %v452
      %v456 = vadd.s32 %v454, %v453
      %vm457 = vcmp.lt.s32.totalorder %v455, 16
      %vm458 = vcmp.lt.s32.totalorder %v456, 16
      %v459 = vsel %vm457, %v449, 0.0
      %v460 = vsel %vm458, %v450, 0.0
      %v461 = vld [vmem:[#allocation2] sm:$0x1]
      %v462 = vadd.f32 %v459, %v460
      %v463 = vrot.slane %v462, 4
      %v464 = vadd.f32 %v462, %v463
      %v465 = vrot.slane %v464, 2
      %v466 = vadd.f32 %v464, %v465
      %v467 = vrot.slane %v466, 1
      %v468 = vadd.f32 %v466, %v467
      %v469 = vadd.f32 %v461, %v468
      %vm470 = vcmask 0
      %471 = vst.msk [vmem:[#allocation2] sm:$0x1] %vm470, %v469
    $region29: #{online_triplet_pca_loss.3} parent=1 // pred_fallthru
      _
    // Predicated region
    $region30: #{online_triplet_pca_loss.3} parent=1 // pred_check
      %p472 = pneg %p86
    $region31: #{online_triplet_pca_loss.3} parent=1 // pred_check_branch
      %474 = sbr.rel (%p472) target = $region33
    $region32: #{online_triplet_pca_loss.3} parent=1 // pred_region
      %v475 = vld [vmem:[#allocation2] sm:$0x1]
      %vm476 = vcmask 0
      %477 = vst.msk [vmem:[#allocation3] sm:$0x1] %vm476, %v475
    $region33: #{online_triplet_pca_loss.3} parent=1 // pred_fallthru
      _
    // Predicated region
    $region34: #{online_triplet_pca_loss.3} parent=1 // pred_check
      _
    $region35: #{online_triplet_pca_loss.3} parent=1 // pred_check_branch
      %479 = sbr.rel (0) target = $region37
    $region36: #{online_triplet_pca_loss.3} parent=1 // pred_region
      %s481 = ssub.s32 16, 16
      %482 = vsyncadd [#allocation4], %s481
      %s484 = sshll.u32 [#allocation3], 4
      %s485 = int_to_ptr.vmem [resolvable:$true] %s484
      %487 = dma.vmem_to_hbm [thread:$0]  %s485, 16, %s4, [#allocation4]
    $region37: #{online_triplet_pca_loss.3} parent=1 // pred_fallthru
      _
    // Predicated region
    $region38: #{online_triplet_pca_loss.3} parent=1 // pred_check
      _
    $region39: #{online_triplet_pca_loss.3} parent=1 // pred_check_branch
      %489 = sbr.rel (0) target = $region41
    $region40: #{online_triplet_pca_loss.3} parent=1 // pred_region
      %490 = dma.done [#allocation4], 16
    $region41: #{online_triplet_pca_loss.3} parent=1 // pred_fallthru
      _
    %491 = vsyncpa [#allocation4], 1

</llo_original>
